<compile_context>
chip_gen: v7x
topology: tpu7x:2x2x1
jax: 0.10.0
libtpu: 0.0.40
codegen_flags: <defaults>
</compile_context>

<pallas_src>
import functools

import jax
import jax.numpy as jnp
import numpy as np
from jax.experimental import pallas as pl
from jax.experimental.pallas import tpu as pltpu

BN_EPS = 1e-5


def _two_layer_group_conv_kernel(xpad_ref, w1_ref, b1_ref, gamma_ref, beta_ref,
                                 w2_ref, b2_ref, o_ref,
                                 p1_ref, apad_ref, p2_ref):
    """One chunk of k packed groups: conv3x3 -> BN(batch stats) -> ReLU -> conv3x3."""
    N, Hp, Wp, kCin = xpad_ref.shape
    H, W = Hp - 2, Wp - 2
    kCmid = w1_ref.shape[-1]
    kCout = w2_ref.shape[-1]
    rows = N * H * W

    # ---- conv1: im2col (tap-major, channel-minor columns) + single MXU matmul ----
    for tap in range(9):
        dy, dx = tap // 3, tap % 3
        p1_ref[:, :, :, tap * kCin:(tap + 1) * kCin] = (
            xpad_ref[:, dy:dy + H, dx:dx + W, :].astype(p1_ref.dtype))
    acc1 = jnp.dot(p1_ref[...].reshape(rows, 9 * kCin), w1_ref[...],
                   preferred_element_type=jnp.float32)
    acc1 = acc1 + b1_ref[...]                                  # (1, kCmid) broadcast

    # ---- BatchNorm2d (training-mode batch statistics), single reduction pass ----
    inv_cnt = 1.0 / rows
    mean = jnp.sum(acc1, axis=0, keepdims=True) * inv_cnt
    ex2 = jnp.sum(acc1 * acc1, axis=0, keepdims=True) * inv_cnt
    var = ex2 - mean * mean                                    # biased variance
    scale = jax.lax.rsqrt(var + BN_EPS) * gamma_ref[...]
    y = (acc1 - mean) * scale + beta_ref[...]
    y = jnp.maximum(y, 0.0)                                    # ReLU (f32)

    # ---- pad activations for conv2: zero ONLY the 1-px halo, then write interior ----
    apad_ref[:, 0:1, :, :] = jnp.zeros((N, 1, Wp, kCmid), apad_ref.dtype)
    apad_ref[:, H + 1:H + 2, :, :] = jnp.zeros((N, 1, Wp, kCmid), apad_ref.dtype)
    apad_ref[:, 1:H + 1, 0:1, :] = jnp.zeros((N, H, 1, kCmid), apad_ref.dtype)
    apad_ref[:, 1:H + 1, W + 1:W + 2, :] = jnp.zeros((N, H, 1, kCmid), apad_ref.dtype)
    apad_ref[:, 1:H + 1, 1:W + 1, :] = y.reshape(N, H, W, kCmid)

    # ---- conv2: im2col + single MXU matmul ----
    for tap in range(9):
        dy, dx = tap // 3, tap % 3
        p2_ref[:, :, :, tap * kCmid:(tap + 1) * kCmid] = (
            apad_ref[:, dy:dy + H, dx:dx + W, :].astype(p2_ref.dtype))
    acc2 = jnp.dot(p2_ref[...].reshape(rows, 9 * kCmid), w2_ref[...],
                   preferred_element_type=jnp.float32)
    acc2 = acc2 + b2_ref[...]                                  # (1, kCout)

    o_ref[...] = acc2.reshape(N, H, W, kCout).astype(o_ref.dtype)


def _choose_pack(bands, cmid, cout, target=128):
    """Smallest divisor k of `bands` whose packed narrow channel dim reaches `target` lanes."""
    c = max(1, min(cmid, cout))
    for k in range(1, bands + 1):
        if bands % k == 0 and k * c >= target:
            return k
    return bands


def _im2col_block_diag_weight(w_torch, bands, k):
    """PyTorch grouped OIHW (Cout_g*bands, Cin_g, 3, 3) ->
       (bands//k, 9*k*Cin_g, k*Cout_g) block-diagonal im2col weight (tap-major rows)."""
    cout_b, cin_g = w_torch.shape[0], w_torch.shape[1]
    cout_g = cout_b // bands
    nc = bands // k
    w = w_torch.reshape(bands, cout_g, cin_g, 3, 3).transpose(0, 3, 4, 2, 1)  # (g,ky,kx,i,o)
    w = w.reshape(nc, k, 3, 3, cin_g, cout_g)                                  # (c,j,y,x,i,o)
    eye = jnp.eye(k, dtype=w.dtype)
    wbd = jnp.einsum('cjyxio,jl->cyxjilo', w, eye)            # block-diag over packed groups
    wbd = wbd.reshape(nc, 3, 3, k * cin_g, k * cout_g)
    return wbd.reshape(nc, 9 * k * cin_g, k * cout_g)


@functools.partial(jax.jit, static_argnames=("bands",))
def two_layer_group_conv(x, w1_t, b1_t, gamma_t, beta_t, w2_t, b2_t, *, bands):
    """x: (N, in_channels*bands, H, W) NCHW; params in native PyTorch layouts."""
    N, cin_b, H, W = x.shape
    Cin = cin_b // bands
    Cmid = w1_t.shape[0] // bands
    Cout = w2_t.shape[0] // bands
    k = _choose_pack(bands, Cmid, Cout)
    nc = bands // k
    kCin, kCmid, kCout = k * Cin, k * Cmid, k * Cout

    # NCHW -> (chunks, N, H+2, W+2, k*Cin); zero padding done here (fuses with transpose).
    xg = x.reshape(N, nc, kCin, H, W).transpose(1, 0, 3, 4, 2)
    xg = jnp.pad(xg, ((0, 0), (0, 0), (1, 1), (1, 1), (0, 0)))

    mxu_dtype = jnp.bfloat16
    w1 = _im2col_block_diag_weight(w1_t, bands, k).astype(mxu_dtype)
    w2 = _im2col_block_diag_weight(w2_t, bands, k).astype(mxu_dtype)
    b1 = b1_t.reshape(nc, 1, kCmid)
    gamma = gamma_t.reshape(nc, 1, kCmid)
    beta = beta_t.reshape(nc, 1, kCmid)
    b2 = b2_t.reshape(nc, 1, kCout)

    out = pl.pallas_call(
        _two_layer_group_conv_kernel,
        out_shape=jax.ShapeDtypeStruct((nc, N, H, W, kCout), jnp.float32),
        grid_spec=pltpu.PrefetchScalarGridSpec(
            num_scalar_prefetch=0,
            grid=(nc,),
            in_specs=[
                pl.BlockSpec((None, N, H + 2, W + 2, kCin), lambda c: (c, 0, 0, 0, 0)),
                pl.BlockSpec((None, 9 * kCin, kCmid), lambda c: (c, 0, 0)),
                pl.BlockSpec((None, 1, kCmid), lambda c: (c, 0, 0)),
                pl.BlockSpec((None, 1, kCmid), lambda c: (c, 0, 0)),
                pl.BlockSpec((None, 1, kCmid), lambda c: (c, 0, 0)),
                pl.BlockSpec((None, 9 * kCmid, kCout), lambda c: (c, 0, 0)),
                pl.BlockSpec((None, 1, kCout), lambda c: (c, 0, 0)),
            ],
            out_specs=pl.BlockSpec((None, N, H, W, kCout),
                                   lambda c: (c, 0, 0, 0, 0)),
            scratch_shapes=[
                pltpu.VMEM((N, H, W, 9 * kCin), mxu_dtype),        # im2col patches, conv1
                pltpu.VMEM((N, H + 2, W + 2, kCmid), jnp.float32),  # padded activations
                pltpu.VMEM((N, H, W, 9 * kCmid), mxu_dtype),       # im2col patches, conv2
            ],
        ),
        compiler_params=pltpu.CompilerParams(
            dimension_semantics=("parallel",)),   # chunks independent -> v7x 2-TC sharding
    )(xg, w1, b1, gamma, beta, w2, b2)

    # (chunks, N, H, W, k*Cout) -> NCHW with PyTorch grouped-channel ordering.
    return out.transpose(1, 0, 4, 2, 3).reshape(N, bands * Cout, H, W)


def _reference(x, w1_t, b1_t, gamma, beta, w2_t, b2_t, bands):
    """Pure-JAX f32 replica of the PyTorch forward (training-mode BatchNorm)."""
    dn = ("NCHW", "OIHW", "NCHW")
    y = jax.lax.conv_general_dilated(x, w1_t, (1, 1), ((1, 1), (1, 1)),
                                     dimension_numbers=dn,
                                     feature_group_count=bands)
    y = y + b1_t[None, :, None, None]
    mean = y.mean(axis=(0, 2, 3), keepdims=True)
    var = ((y - mean) ** 2).mean(axis=(0, 2, 3), keepdims=True)
    y = (y - mean) / jnp.sqrt(var + BN_EPS)
    y = y * gamma[None, :, None, None] + beta[None, :, None, None]
    y = jnp.maximum(y, 0.0)
    z = jax.lax.conv_general_dilated(y, w2_t, (1, 1), ((1, 1), (1, 1)),
                                     dimension_numbers=dn,
                                     feature_group_count=bands)
    return z + b2_t[None, :, None, None]


if __name__ == "__main__":
    # Module hyper-parameters (small, consistent with the PyTorch module).
    in_channels, mid_channels, out_channels, bands = 4, 8, 4, 2
    N, H, W = 2, 16, 16

    key = jax.random.PRNGKey(0)
    k = jax.random.split(key, 8)

    # Deterministic parameter init in native PyTorch layouts.
    w1_t = 0.1 * jax.random.normal(k[0], (mid_channels * bands, in_channels, 3, 3), jnp.float32)
    b1_t = 0.1 * jax.random.normal(k[1], (mid_channels * bands,), jnp.float32)
    gamma_t = 1.0 + 0.1 * jax.random.normal(k[2], (mid_channels * bands,), jnp.float32)
    beta_t = 0.1 * jax.random.normal(k[3], (mid_channels * bands,), jnp.float32)
    w2_t = 0.1 * jax.random.normal(k[4], (out_channels * bands, mid_channels, 3, 3), jnp.float32)
    b2_t = 0.1 * jax.random.normal(k[5], (out_channels * bands,), jnp.float32)

    x = jax.random.normal(k[6], (N, in_channels * bands, H, W), jnp.float32)

    out = two_layer_group_conv(x, w1_t, b1_t, gamma_t, beta_t, w2_t, b2_t, bands=bands)
    out = jax.block_until_ready(out)

    ref = _reference(x, w1_t, b1_t, gamma_t, beta_t, w2_t, b2_t, bands)
    # 2e-2 tolerance accounts for bf16 MXU operands (patches + weights) vs the f32 reference.
    np.testing.assert_allclose(np.asarray(out), np.asarray(ref), rtol=2e-2, atol=2e-2)

    print("KERNEL_OK")
</pallas_src>

<mosaic_0001>
module attributes {stable_mosaic.version = 11 : i64} {
  func.func @_two_layer_group_conv_kernel(%arg0: i32, %arg1: memref<1x2x18x18x8xf32, #tpu.memory_space<vmem>>, %arg2: memref<1x72x16xbf16, #tpu.memory_space<vmem>>, %arg3: memref<1x1x16xf32, #tpu.memory_space<vmem>>, %arg4: memref<1x1x16xf32, #tpu.memory_space<vmem>>, %arg5: memref<1x1x16xf32, #tpu.memory_space<vmem>>, %arg6: memref<1x144x8xbf16, #tpu.memory_space<vmem>>, %arg7: memref<1x1x8xf32, #tpu.memory_space<vmem>>, %arg8: memref<1x2x16x16x8xf32, #tpu.memory_space<vmem>>, %arg9: memref<2x16x16x72xbf16, #tpu.memory_space<vmem>>, %arg10: memref<2x18x18x16xf32, #tpu.memory_space<vmem>>, %arg11: memref<2x16x16x144xbf16, #tpu.memory_space<vmem>>) attributes {dimension_semantics = [#tpu.dimension_semantics<parallel>], iteration_bounds = array<i64: 1>, scalar_prefetch = 0 : i64, scratch_operands = 3 : i64, tpu.core_type = #tpu.core_type<tc>, window_params = [{transform_indices = @transform_0, window_bounds = array<i64: 1, 2, 18, 18, 8>}, {transform_indices = @transform_1, window_bounds = array<i64: 1, 72, 16>}, {transform_indices = @transform_2, window_bounds = array<i64: 1, 1, 16>}, {transform_indices = @transform_3, window_bounds = array<i64: 1, 1, 16>}, {transform_indices = @transform_4, window_bounds = array<i64: 1, 1, 16>}, {transform_indices = @transform_5, window_bounds = array<i64: 1, 144, 8>}, {transform_indices = @transform_6, window_bounds = array<i64: 1, 1, 8>}, {transform_indices = @transform_7, window_bounds = array<i64: 1, 2, 16, 16, 8>}]} {
    %c0 = arith.constant 0 : index
    %c0_0 = arith.constant 0 : index
    %c0_1 = arith.constant 0 : index
    %c0_2 = arith.constant 0 : index
    %c0_3 = arith.constant 0 : index
    %0 = vector.load %arg1[%c0, %c0_0, %c0_1, %c0_2, %c0_3] : memref<1x2x18x18x8xf32, #tpu.memory_space<vmem>>, vector<1x2x16x16x8xf32>
    %1 = vector.shape_cast %0 : vector<1x2x16x16x8xf32> to vector<2x16x16x8xf32>
    %2 = arith.truncf %1 : vector<2x16x16x8xf32> to vector<2x16x16x8xbf16>
    %c0_4 = arith.constant 0 : index
    %c0_5 = arith.constant 0 : index
    %c0_6 = arith.constant 0 : index
    %c0_7 = arith.constant 0 : index
    %3 = vector.load %arg9[%c0_4, %c0_5, %c0_6, %c0_7] : memref<2x16x16x72xbf16, #tpu.memory_space<vmem>>, vector<2x16x16x8xbf16>
    tpu.vector_store %arg9[%c0_4, %c0_5, %c0_6, %c0_7], %2 {strides = array<i32>} : memref<2x16x16x72xbf16, #tpu.memory_space<vmem>>, vector<2x16x16x8xbf16>,
    %c0_8 = arith.constant 0 : index
    %c0_9 = arith.constant 0 : index
    %c0_10 = arith.constant 0 : index
    %c1 = arith.constant 1 : index
    %c0_11 = arith.constant 0 : index
    %4 = vector.load %arg1[%c0_8, %c0_9, %c0_10, %c1, %c0_11] : memref<1x2x18x18x8xf32, #tpu.memory_space<vmem>>, vector<1x2x16x16x8xf32>
    %5 = vector.shape_cast %4 : vector<1x2x16x16x8xf32> to vector<2x16x16x8xf32>
    %6 = arith.truncf %5 : vector<2x16x16x8xf32> to vector<2x16x16x8xbf16>
    %c0_12 = arith.constant 0 : index
    %c0_13 = arith.constant 0 : index
    %c0_14 = arith.constant 0 : index
    %c8 = arith.constant 8 : index
    %7 = vector.load %arg9[%c0_12, %c0_13, %c0_14, %c8] : memref<2x16x16x72xbf16, #tpu.memory_space<vmem>>, vector<2x16x16x8xbf16>
    tpu.vector_store %arg9[%c0_12, %c0_13, %c0_14, %c8], %6 {strides = array<i32>} : memref<2x16x16x72xbf16, #tpu.memory_space<vmem>>, vector<2x16x16x8xbf16>,
    %c0_15 = arith.constant 0 : index
    %c0_16 = arith.constant 0 : index
    %c0_17 = arith.constant 0 : index
    %c2 = arith.constant 2 : index
    %c0_18 = arith.constant 0 : index
    %8 = vector.load %arg1[%c0_15, %c0_16, %c0_17, %c2, %c0_18] : memref<1x2x18x18x8xf32, #tpu.memory_space<vmem>>, vector<1x2x16x16x8xf32>
    %9 = vector.shape_cast %8 : vector<1x2x16x16x8xf32> to vector<2x16x16x8xf32>
    %10 = arith.truncf %9 : vector<2x16x16x8xf32> to vector<2x16x16x8xbf16>
    %c0_19 = arith.constant 0 : index
    %c0_20 = arith.constant 0 : index
    %c0_21 = arith.constant 0 : index
    %c16 = arith.constant 16 : index
    %11 = vector.load %arg9[%c0_19, %c0_20, %c0_21, %c16] : memref<2x16x16x72xbf16, #tpu.memory_space<vmem>>, vector<2x16x16x8xbf16>
    tpu.vector_store %arg9[%c0_19, %c0_20, %c0_21, %c16], %10 {strides = array<i32>} : memref<2x16x16x72xbf16, #tpu.memory_space<vmem>>, vector<2x16x16x8xbf16>,
    %c0_22 = arith.constant 0 : index
    %c0_23 = arith.constant 0 : index
    %c1_24 = arith.constant 1 : index
    %c0_25 = arith.constant 0 : index
    %c0_26 = arith.constant 0 : index
    %12 = vector.load %arg1[%c0_22, %c0_23, %c1_24, %c0_25, %c0_26] : memref<1x2x18x18x8xf32, #tpu.memory_space<vmem>>, vector<1x2x16x16x8xf32>
    %13 = vector.shape_cast %12 : vector<1x2x16x16x8xf32> to vector<2x16x16x8xf32>
    %14 = arith.truncf %13 : vector<2x16x16x8xf32> to vector<2x16x16x8xbf16>
    %c0_27 = arith.constant 0 : index
    %c0_28 = arith.constant 0 : index
    %c0_29 = arith.constant 0 : index
    %c24 = arith.constant 24 : index
    %15 = vector.load %arg9[%c0_27, %c0_28, %c0_29, %c24] : memref<2x16x16x72xbf16, #tpu.memory_space<vmem>>, vector<2x16x16x8xbf16>
    tpu.vector_store %arg9[%c0_27, %c0_28, %c0_29, %c24], %14 {strides = array<i32>} : memref<2x16x16x72xbf16, #tpu.memory_space<vmem>>, vector<2x16x16x8xbf16>,
    %c0_30 = arith.constant 0 : index
    %c0_31 = arith.constant 0 : index
    %c1_32 = arith.constant 1 : index
    %c1_33 = arith.constant 1 : index
    %c0_34 = arith.constant 0 : index
    %16 = vector.load %arg1[%c0_30, %c0_31, %c1_32, %c1_33, %c0_34] : memref<1x2x18x18x8xf32, #tpu.memory_space<vmem>>, vector<1x2x16x16x8xf32>
    %17 = vector.shape_cast %16 : vector<1x2x16x16x8xf32> to vector<2x16x16x8xf32>
    %18 = arith.truncf %17 : vector<2x16x16x8xf32> to vector<2x16x16x8xbf16>
    %c0_35 = arith.constant 0 : index
    %c0_36 = arith.constant 0 : index
    %c0_37 = arith.constant 0 : index
    %c32 = arith.constant 32 : index
    %19 = vector.load %arg9[%c0_35, %c0_36, %c0_37, %c32] : memref<2x16x16x72xbf16, #tpu.memory_space<vmem>>, vector<2x16x16x8xbf16>
    tpu.vector_store %arg9[%c0_35, %c0_36, %c0_37, %c32], %18 {strides = array<i32>} : memref<2x16x16x72xbf16, #tpu.memory_space<vmem>>, vector<2x16x16x8xbf16>,
    %c0_38 = arith.constant 0 : index
    %c0_39 = arith.constant 0 : index
    %c1_40 = arith.constant 1 : index
    %c2_41 = arith.constant 2 : index
    %c0_42 = arith.constant 0 : index
    %20 = vector.load %arg1[%c0_38, %c0_39, %c1_40, %c2_41, %c0_42] : memref<1x2x18x18x8xf32, #tpu.memory_space<vmem>>, vector<1x2x16x16x8xf32>
    %21 = vector.shape_cast %20 : vector<1x2x16x16x8xf32> to vector<2x16x16x8xf32>
    %22 = arith.truncf %21 : vector<2x16x16x8xf32> to vector<2x16x16x8xbf16>
    %c0_43 = arith.constant 0 : index
    %c0_44 = arith.constant 0 : index
    %c0_45 = arith.constant 0 : index
    %c40 = arith.constant 40 : index
    %23 = vector.load %arg9[%c0_43, %c0_44, %c0_45, %c40] : memref<2x16x16x72xbf16, #tpu.memory_space<vmem>>, vector<2x16x16x8xbf16>
    tpu.vector_store %arg9[%c0_43, %c0_44, %c0_45, %c40], %22 {strides = array<i32>} : memref<2x16x16x72xbf16, #tpu.memory_space<vmem>>, vector<2x16x16x8xbf16>,
    %c0_46 = arith.constant 0 : index
    %c0_47 = arith.constant 0 : index
    %c2_48 = arith.constant 2 : index
    %c0_49 = arith.constant 0 : index
    %c0_50 = arith.constant 0 : index
    %24 = vector.load %arg1[%c0_46, %c0_47, %c2_48, %c0_49, %c0_50] : memref<1x2x18x18x8xf32, #tpu.memory_space<vmem>>, vector<1x2x16x16x8xf32>
    %25 = vector.shape_cast %24 : vector<1x2x16x16x8xf32> to vector<2x16x16x8xf32>
    %26 = arith.truncf %25 : vector<2x16x16x8xf32> to vector<2x16x16x8xbf16>
    %c0_51 = arith.constant 0 : index
    %c0_52 = arith.constant 0 : index
    %c0_53 = arith.constant 0 : index
    %c48 = arith.constant 48 : index
    %27 = vector.load %arg9[%c0_51, %c0_52, %c0_53, %c48] : memref<2x16x16x72xbf16, #tpu.memory_space<vmem>>, vector<2x16x16x8xbf16>
    tpu.vector_store %arg9[%c0_51, %c0_52, %c0_53, %c48], %26 {strides = array<i32>} : memref<2x16x16x72xbf16, #tpu.memory_space<vmem>>, vector<2x16x16x8xbf16>,
    %c0_54 = arith.constant 0 : index
    %c0_55 = arith.constant 0 : index
    %c2_56 = arith.constant 2 : index
    %c1_57 = arith.constant 1 : index
    %c0_58 = arith.constant 0 : index
    %28 = vector.load %arg1[%c0_54, %c0_55, %c2_56, %c1_57, %c0_58] : memref<1x2x18x18x8xf32, #tpu.memory_space<vmem>>, vector<1x2x16x16x8xf32>
    %29 = vector.shape_cast %28 : vector<1x2x16x16x8xf32> to vector<2x16x16x8xf32>
    %30 = arith.truncf %29 : vector<2x16x16x8xf32> to vector<2x16x16x8xbf16>
    %c0_59 = arith.constant 0 : index
    %c0_60 = arith.constant 0 : index
    %c0_61 = arith.constant 0 : index
    %c56 = arith.constant 56 : index
    %31 = vector.load %arg9[%c0_59, %c0_60, %c0_61, %c56] : memref<2x16x16x72xbf16, #tpu.memory_space<vmem>>, vector<2x16x16x8xbf16>
    tpu.vector_store %arg9[%c0_59, %c0_60, %c0_61, %c56], %30 {strides = array<i32>} : memref<2x16x16x72xbf16, #tpu.memory_space<vmem>>, vector<2x16x16x8xbf16>,
    %c0_62 = arith.constant 0 : index
    %c0_63 = arith.constant 0 : index
    %c2_64 = arith.constant 2 : index
    %c2_65 = arith.constant 2 : index
    %c0_66 = arith.constant 0 : index
    %32 = vector.load %arg1[%c0_62, %c0_63, %c2_64, %c2_65, %c0_66] : memref<1x2x18x18x8xf32, #tpu.memory_space<vmem>>, vector<1x2x16x16x8xf32>
    %33 = vector.shape_cast %32 : vector<1x2x16x16x8xf32> to vector<2x16x16x8xf32>
    %34 = arith.truncf %33 : vector<2x16x16x8xf32> to vector<2x16x16x8xbf16>
    %c0_67 = arith.constant 0 : index
    %c0_68 = arith.constant 0 : index
    %c0_69 = arith.constant 0 : index
    %c64 = arith.constant 64 : index
    %35 = vector.load %arg9[%c0_67, %c0_68, %c0_69, %c64] : memref<2x16x16x72xbf16, #tpu.memory_space<vmem>>, vector<2x16x16x8xbf16>
    tpu.vector_store %arg9[%c0_67, %c0_68, %c0_69, %c64], %34 {strides = array<i32>} : memref<2x16x16x72xbf16, #tpu.memory_space<vmem>>, vector<2x16x16x8xbf16>,
    %c0_70 = arith.constant 0 : index
    %c0_71 = arith.constant 0 : index
    %c0_72 = arith.constant 0 : index
    %c0_73 = arith.constant 0 : index
    %36 = vector.load %arg9[%c0_70, %c0_71, %c0_72, %c0_73] : memref<2x16x16x72xbf16, #tpu.memory_space<vmem>>, vector<2x16x16x72xbf16>
    %37 = vector.shape_cast %36 : vector<2x16x16x72xbf16> to vector<512x72xbf16>
    %c0_74 = arith.constant 0 : index
    %c0_75 = arith.constant 0 : index
    %c0_76 = arith.constant 0 : index
    %38 = vector.load %arg2[%c0_74, %c0_75, %c0_76] : memref<1x72x16xbf16, #tpu.memory_space<vmem>>, vector<1x72x16xbf16>
    %39 = vector.shape_cast %38 : vector<1x72x16xbf16> to vector<72x16xbf16>
    %cst = arith.constant dense<0.000000e+00> : vector<512x16xf32>
    %40 = tpu.matmul %37, %39, %cst {dimension_numbers = #tpu.dot_dimension_numbers<[1], [0], [0], [1], [0, 0, 1, 1], [], []>} : vector<512x72xbf16>, vector<72x16xbf16>, vector<512x16xf32> -> vector<512x16xf32>
    %c0_77 = arith.constant 0 : index
    %c0_78 = arith.constant 0 : index
    %c0_79 = arith.constant 0 : index
    %41 = vector.load %arg3[%c0_77, %c0_78, %c0_79] : memref<1x1x16xf32, #tpu.memory_space<vmem>>, vector<1x1x16xf32>
    %42 = vector.shape_cast %41 : vector<1x1x16xf32> to vector<1x16xf32>
    %43 = vector.broadcast %42 : vector<1x16xf32> to vector<512x16xf32>
    %44 = arith.addf %40, %43 : vector<512x16xf32>
    %cst_80 = arith.constant dense<0.000000e+00> : vector<16xf32>
    %45 = vector.multi_reduction <add>, %44, %cst_80 [0] : vector<512x16xf32> to vector<16xf32>
    %46 = vector.shape_cast %45 : vector<16xf32> to vector<1x16xf32>
    %cst_81 = arith.constant 0.001953125 : f32
    %47 = vector.broadcast %cst_81 : f32 to vector<1x16xf32>
    %48 = arith.mulf %46, %47 : vector<1x16xf32>
    %49 = arith.mulf %44, %44 : vector<512x16xf32>
    %cst_82 = arith.constant dense<0.000000e+00> : vector<16xf32>
    %50 = vector.multi_reduction <add>, %49, %cst_82 [0] : vector<512x16xf32> to vector<16xf32>
    %51 = vector.shape_cast %50 : vector<16xf32> to vector<1x16xf32>
    %cst_83 = arith.constant 0.001953125 : f32
    %52 = vector.broadcast %cst_83 : f32 to vector<1x16xf32>
    %53 = arith.mulf %51, %52 : vector<1x16xf32>
    %54 = arith.mulf %48, %48 : vector<1x16xf32>
    %55 = arith.subf %53, %54 : vector<1x16xf32>
    %cst_84 = arith.constant 9.99999974E-6 : f32
    %56 = vector.broadcast %cst_84 : f32 to vector<1x16xf32>
    %57 = arith.addf %55, %56 : vector<1x16xf32>
    %58 = math.rsqrt %57 : vector<1x16xf32>
    %c0_85 = arith.constant 0 : index
    %c0_86 = arith.constant 0 : index
    %c0_87 = arith.constant 0 : index
    %59 = vector.load %arg4[%c0_85, %c0_86, %c0_87] : memref<1x1x16xf32, #tpu.memory_space<vmem>>, vector<1x1x16xf32>
    %60 = vector.shape_cast %59 : vector<1x1x16xf32> to vector<1x16xf32>
    %61 = arith.mulf %58, %60 : vector<1x16xf32>
    %62 = vector.broadcast %48 : vector<1x16xf32> to vector<512x16xf32>
    %63 = arith.subf %44, %62 : vector<512x16xf32>
    %64 = vector.broadcast %61 : vector<1x16xf32> to vector<512x16xf32>
    %65 = arith.mulf %63, %64 : vector<512x16xf32>
    %c0_88 = arith.constant 0 : index
    %c0_89 = arith.constant 0 : index
    %c0_90 = arith.constant 0 : index
    %66 = vector.load %arg5[%c0_88, %c0_89, %c0_90] : memref<1x1x16xf32, #tpu.memory_space<vmem>>, vector<1x1x16xf32>
    %67 = vector.shape_cast %66 : vector<1x1x16xf32> to vector<1x16xf32>
    %68 = vector.broadcast %67 : vector<1x16xf32> to vector<512x16xf32>
    %69 = arith.addf %65, %68 : vector<512x16xf32>
    %cst_91 = arith.constant 0.000000e+00 : f32
    %70 = vector.broadcast %cst_91 : f32 to vector<512x16xf32>
    %71 = arith.maximumf %69, %70 : vector<512x16xf32>
    %cst_92 = arith.constant 0.000000e+00 : f32
    %72 = vector.broadcast %cst_92 : f32 to vector<2x1x18x16xf32>
    %c0_93 = arith.constant 0 : index
    %c0_94 = arith.constant 0 : index
    %c0_95 = arith.constant 0 : index
    %c0_96 = arith.constant 0 : index
    %73 = vector.load %arg10[%c0_93, %c0_94, %c0_95, %c0_96] : memref<2x18x18x16xf32, #tpu.memory_space<vmem>>, vector<2x1x18x16xf32>
    tpu.vector_store %arg10[%c0_93, %c0_94, %c0_95, %c0_96], %72 {strides = array<i32>} : memref<2x18x18x16xf32, #tpu.memory_space<vmem>>, vector<2x1x18x16xf32>,
    %cst_97 = arith.constant 0.000000e+00 : f32
    %74 = vector.broadcast %cst_97 : f32 to vector<2x1x18x16xf32>
    %c0_98 = arith.constant 0 : index
    %c17 = arith.constant 17 : index
    %c0_99 = arith.constant 0 : index
    %c0_100 = arith.constant 0 : index
    %75 = vector.load %arg10[%c0_98, %c17, %c0_99, %c0_100] : memref<2x18x18x16xf32, #tpu.memory_space<vmem>>, vector<2x1x18x16xf32>
    tpu.vector_store %arg10[%c0_98, %c17, %c0_99, %c0_100], %74 {strides = array<i32>} : memref<2x18x18x16xf32, #tpu.memory_space<vmem>>, vector<2x1x18x16xf32>,
    %cst_101 = arith.constant 0.000000e+00 : f32
    %76 = vector.broadcast %cst_101 : f32 to vector<2x16x1x16xf32>
    %c0_102 = arith.constant 0 : index
    %c1_103 = arith.constant 1 : index
    %c0_104 = arith.constant 0 : index
    %c0_105 = arith.constant 0 : index
    %77 = vector.load %arg10[%c0_102, %c1_103, %c0_104, %c0_105] : memref<2x18x18x16xf32, #tpu.memory_space<vmem>>, vector<2x16x1x16xf32>
    tpu.vector_store %arg10[%c0_102, %c1_103, %c0_104, %c0_105], %76 {strides = array<i32>} : memref<2x18x18x16xf32, #tpu.memory_space<vmem>>, vector<2x16x1x16xf32>,
    %cst_106 = arith.constant 0.000000e+00 : f32
    %78 = vector.broadcast %cst_106 : f32 to vector<2x16x1x16xf32>
    %c0_107 = arith.constant 0 : index
    %c1_108 = arith.constant 1 : index
    %c17_109 = arith.constant 17 : index
    %c0_110 = arith.constant 0 : index
    %79 = vector.load %arg10[%c0_107, %c1_108, %c17_109, %c0_110] : memref<2x18x18x16xf32, #tpu.memory_space<vmem>>, vector<2x16x1x16xf32>
    tpu.vector_store %arg10[%c0_107, %c1_108, %c17_109, %c0_110], %78 {strides = array<i32>} : memref<2x18x18x16xf32, #tpu.memory_space<vmem>>, vector<2x16x1x16xf32>,
    %80 = vector.shape_cast %71 : vector<512x16xf32> to vector<2x16x16x16xf32>
    %c0_111 = arith.constant 0 : index
    %c1_112 = arith.constant 1 : index
    %c1_113 = arith.constant 1 : index
    %c0_114 = arith.constant 0 : index
    %81 = vector.load %arg10[%c0_111, %c1_112, %c1_113, %c0_114] : memref<2x18x18x16xf32, #tpu.memory_space<vmem>>, vector<2x16x16x16xf32>
    tpu.vector_store %arg10[%c0_111, %c1_112, %c1_113, %c0_114], %80 {strides = array<i32>} : memref<2x18x18x16xf32, #tpu.memory_space<vmem>>, vector<2x16x16x16xf32>,
    %c0_115 = arith.constant 0 : index
    %c0_116 = arith.constant 0 : index
    %c0_117 = arith.constant 0 : index
    %c0_118 = arith.constant 0 : index
    %82 = vector.load %arg10[%c0_115, %c0_116, %c0_117, %c0_118] : memref<2x18x18x16xf32, #tpu.memory_space<vmem>>, vector<2x16x16x16xf32>
    %83 = arith.truncf %82 : vector<2x16x16x16xf32> to vector<2x16x16x16xbf16>
    %c0_119 = arith.constant 0 : index
    %c0_120 = arith.constant 0 : index
    %c0_121 = arith.constant 0 : index
    %c0_122 = arith.constant 0 : index
    %84 = vector.load %arg11[%c0_119, %c0_120, %c0_121, %c0_122] : memref<2x16x16x144xbf16, #tpu.memory_space<vmem>>, vector<2x16x16x16xbf16>
    tpu.vector_store %arg11[%c0_119, %c0_120, %c0_121, %c0_122], %83 {strides = array<i32>} : memref<2x16x16x144xbf16, #tpu.memory_space<vmem>>, vector<2x16x16x16xbf16>,
    %c0_123 = arith.constant 0 : index
    %c0_124 = arith.constant 0 : index
    %c1_125 = arith.constant 1 : index
    %c0_126 = arith.constant 0 : index
    %85 = vector.load %arg10[%c0_123, %c0_124, %c1_125, %c0_126] : memref<2x18x18x16xf32, #tpu.memory_space<vmem>>, vector<2x16x16x16xf32>
    %86 = arith.truncf %85 : vector<2x16x16x16xf32> to vector<2x16x16x16xbf16>
    %c0_127 = arith.constant 0 : index
    %c0_128 = arith.constant 0 : index
    %c0_129 = arith.constant 0 : index
    %c16_130 = arith.constant 16 : index
    %87 = vector.load %arg11[%c0_127, %c0_128, %c0_129, %c16_130] : memref<2x16x16x144xbf16, #tpu.memory_space<vmem>>, vector<2x16x16x16xbf16>
    tpu.vector_store %arg11[%c0_127, %c0_128, %c0_129, %c16_130], %86 {strides = array<i32>} : memref<2x16x16x144xbf16, #tpu.memory_space<vmem>>, vector<2x16x16x16xbf16>,
    %c0_131 = arith.constant 0 : index
    %c0_132 = arith.constant 0 : index
    %c2_133 = arith.constant 2 : index
    %c0_134 = arith.constant 0 : index
    %88 = vector.load %arg10[%c0_131, %c0_132, %c2_133, %c0_134] : memref<2x18x18x16xf32, #tpu.memory_space<vmem>>, vector<2x16x16x16xf32>
    %89 = arith.truncf %88 : vector<2x16x16x16xf32> to vector<2x16x16x16xbf16>
    %c0_135 = arith.constant 0 : index
    %c0_136 = arith.constant 0 : index
    %c0_137 = arith.constant 0 : index
    %c32_138 = arith.constant 32 : index
    %90 = vector.load %arg11[%c0_135, %c0_136, %c0_137, %c32_138] : memref<2x16x16x144xbf16, #tpu.memory_space<vmem>>, vector<2x16x16x16xbf16>
    tpu.vector_store %arg11[%c0_135, %c0_136, %c0_137, %c32_138], %89 {strides = array<i32>} : memref<2x16x16x144xbf16, #tpu.memory_space<vmem>>, vector<2x16x16x16xbf16>,
    %c0_139 = arith.constant 0 : index
    %c1_140 = arith.constant 1 : index
    %c0_141 = arith.constant 0 : index
    %c0_142 = arith.constant 0 : index
    %91 = vector.load %arg10[%c0_139, %c1_140, %c0_141, %c0_142] : memref<2x18x18x16xf32, #tpu.memory_space<vmem>>, vector<2x16x16x16xf32>
    %92 = arith.truncf %91 : vector<2x16x16x16xf32> to vector<2x16x16x16xbf16>
    %c0_143 = arith.constant 0 : index
    %c0_144 = arith.constant 0 : index
    %c0_145 = arith.constant 0 : index
    %c48_146 = arith.constant 48 : index
    %93 = vector.load %arg11[%c0_143, %c0_144, %c0_145, %c48_146] : memref<2x16x16x144xbf16, #tpu.memory_space<vmem>>, vector<2x16x16x16xbf16>
    tpu.vector_store %arg11[%c0_143, %c0_144, %c0_145, %c48_146], %92 {strides = array<i32>} : memref<2x16x16x144xbf16, #tpu.memory_space<vmem>>, vector<2x16x16x16xbf16>,
    %c0_147 = arith.constant 0 : index
    %c1_148 = arith.constant 1 : index
    %c1_149 = arith.constant 1 : index
    %c0_150 = arith.constant 0 : index
    %94 = vector.load %arg10[%c0_147, %c1_148, %c1_149, %c0_150] : memref<2x18x18x16xf32, #tpu.memory_space<vmem>>, vector<2x16x16x16xf32>
    %95 = arith.truncf %94 : vector<2x16x16x16xf32> to vector<2x16x16x16xbf16>
    %c0_151 = arith.constant 0 : index
    %c0_152 = arith.constant 0 : index
    %c0_153 = arith.constant 0 : index
    %c64_154 = arith.constant 64 : index
    %96 = vector.load %arg11[%c0_151, %c0_152, %c0_153, %c64_154] : memref<2x16x16x144xbf16, #tpu.memory_space<vmem>>, vector<2x16x16x16xbf16>
    tpu.vector_store %arg11[%c0_151, %c0_152, %c0_153, %c64_154], %95 {strides = array<i32>} : memref<2x16x16x144xbf16, #tpu.memory_space<vmem>>, vector<2x16x16x16xbf16>,
    %c0_155 = arith.constant 0 : index
    %c1_156 = arith.constant 1 : index
    %c2_157 = arith.constant 2 : index
    %c0_158 = arith.constant 0 : index
    %97 = vector.load %arg10[%c0_155, %c1_156, %c2_157, %c0_158] : memref<2x18x18x16xf32, #tpu.memory_space<vmem>>, vector<2x16x16x16xf32>
    %98 = arith.truncf %97 : vector<2x16x16x16xf32> to vector<2x16x16x16xbf16>
    %c0_159 = arith.constant 0 : index
    %c0_160 = arith.constant 0 : index
    %c0_161 = arith.constant 0 : index
    %c80 = arith.constant 80 : index
    %99 = vector.load %arg11[%c0_159, %c0_160, %c0_161, %c80] : memref<2x16x16x144xbf16, #tpu.memory_space<vmem>>, vector<2x16x16x16xbf16>
    tpu.vector_store %arg11[%c0_159, %c0_160, %c0_161, %c80], %98 {strides = array<i32>} : memref<2x16x16x144xbf16, #tpu.memory_space<vmem>>, vector<2x16x16x16xbf16>,
    %c0_162 = arith.constant 0 : index
    %c2_163 = arith.constant 2 : index
    %c0_164 = arith.constant 0 : index
    %c0_165 = arith.constant 0 : index
    %100 = vector.load %arg10[%c0_162, %c2_163, %c0_164, %c0_165] : memref<2x18x18x16xf32, #tpu.memory_space<vmem>>, vector<2x16x16x16xf32>
    %101 = arith.truncf %100 : vector<2x16x16x16xf32> to vector<2x16x16x16xbf16>
    %c0_166 = arith.constant 0 : index
    %c0_167 = arith.constant 0 : index
    %c0_168 = arith.constant 0 : index
    %c96 = arith.constant 96 : index
    %102 = vector.load %arg11[%c0_166, %c0_167, %c0_168, %c96] : memref<2x16x16x144xbf16, #tpu.memory_space<vmem>>, vector<2x16x16x16xbf16>
    tpu.vector_store %arg11[%c0_166, %c0_167, %c0_168, %c96], %101 {strides = array<i32>} : memref<2x16x16x144xbf16, #tpu.memory_space<vmem>>, vector<2x16x16x16xbf16>,
    %c0_169 = arith.constant 0 : index
    %c2_170 = arith.constant 2 : index
    %c1_171 = arith.constant 1 : index
    %c0_172 = arith.constant 0 : index
    %103 = vector.load %arg10[%c0_169, %c2_170, %c1_171, %c0_172] : memref<2x18x18x16xf32, #tpu.memory_space<vmem>>, vector<2x16x16x16xf32>
    %104 = arith.truncf %103 : vector<2x16x16x16xf32> to vector<2x16x16x16xbf16>
    %c0_173 = arith.constant 0 : index
    %c0_174 = arith.constant 0 : index
    %c0_175 = arith.constant 0 : index
    %c112 = arith.constant 112 : index
    %105 = vector.load %arg11[%c0_173, %c0_174, %c0_175, %c112] : memref<2x16x16x144xbf16, #tpu.memory_space<vmem>>, vector<2x16x16x16xbf16>
    tpu.vector_store %arg11[%c0_173, %c0_174, %c0_175, %c112], %104 {strides = array<i32>} : memref<2x16x16x144xbf16, #tpu.memory_space<vmem>>, vector<2x16x16x16xbf16>,
    %c0_176 = arith.constant 0 : index
    %c2_177 = arith.constant 2 : index
    %c2_178 = arith.constant 2 : index
    %c0_179 = arith.constant 0 : index
    %106 = vector.load %arg10[%c0_176, %c2_177, %c2_178, %c0_179] : memref<2x18x18x16xf32, #tpu.memory_space<vmem>>, vector<2x16x16x16xf32>
    %107 = arith.truncf %106 : vector<2x16x16x16xf32> to vector<2x16x16x16xbf16>
    %c0_180 = arith.constant 0 : index
    %c0_181 = arith.constant 0 : index
    %c0_182 = arith.constant 0 : index
    %c128 = arith.constant 128 : index
    %108 = vector.load %arg11[%c0_180, %c0_181, %c0_182, %c128] : memref<2x16x16x144xbf16, #tpu.memory_space<vmem>>, vector<2x16x16x16xbf16>
    tpu.vector_store %arg11[%c0_180, %c0_181, %c0_182, %c128], %107 {strides = array<i32>} : memref<2x16x16x144xbf16, #tpu.memory_space<vmem>>, vector<2x16x16x16xbf16>,
    %c0_183 = arith.constant 0 : index
    %c0_184 = arith.constant 0 : index
    %c0_185 = arith.constant 0 : index
    %c0_186 = arith.constant 0 : index
    %109 = vector.load %arg11[%c0_183, %c0_184, %c0_185, %c0_186] : memref<2x16x16x144xbf16, #tpu.memory_space<vmem>>, vector<2x16x16x144xbf16>
    %110 = vector.shape_cast %109 : vector<2x16x16x144xbf16> to vector<512x144xbf16>
    %c0_187 = arith.constant 0 : index
    %c0_188 = arith.constant 0 : index
    %c0_189 = arith.constant 0 : index
    %111 = vector.load %arg6[%c0_187, %c0_188, %c0_189] : memref<1x144x8xbf16, #tpu.memory_space<vmem>>, vector<1x144x8xbf16>
    %112 = vector.shape_cast %111 : vector<1x144x8xbf16> to vector<144x8xbf16>
    %cst_190 = arith.constant dense<0.000000e+00> : vector<512x8xf32>
    %113 = tpu.matmul %110, %112, %cst_190 {dimension_numbers = #tpu.dot_dimension_numbers<[1], [0], [0], [1], [0, 0, 1, 1], [], []>} : vector<512x144xbf16>, vector<144x8xbf16>, vector<512x8xf32> -> vector<512x8xf32>
    %c0_191 = arith.constant 0 : index
    %c0_192 = arith.constant 0 : index
    %c0_193 = arith.constant 0 : index
    %114 = vector.load %arg7[%c0_191, %c0_192, %c0_193] : memref<1x1x8xf32, #tpu.memory_space<vmem>>, vector<1x1x8xf32>
    %115 = vector.shape_cast %114 : vector<1x1x8xf32> to vector<1x8xf32>
    %116 = vector.broadcast %115 : vector<1x8xf32> to vector<512x8xf32>
    %117 = arith.addf %113, %116 : vector<512x8xf32>
    %118 = vector.shape_cast %117 : vector<512x8xf32> to vector<2x16x16x8xf32>
    %c0_194 = arith.constant 0 : index
    %c0_195 = arith.constant 0 : index
    %c0_196 = arith.constant 0 : index
    %c0_197 = arith.constant 0 : index
    %c0_198 = arith.constant 0 : index
    %119 = vector.load %arg8[%c0_194, %c0_195, %c0_196, %c0_197, %c0_198] : memref<1x2x16x16x8xf32, #tpu.memory_space<vmem>>, vector<1x2x16x16x8xf32>
    %120 = vector.shape_cast %119 : vector<1x2x16x16x8xf32> to vector<2x16x16x8xf32>
    %121 = vector.shape_cast %118 : vector<2x16x16x8xf32> to vector<1x2x16x16x8xf32>
    tpu.vector_store %arg8[%c0_194, %c0_195, %c0_196, %c0_197, %c0_198], %121 {strides = array<i32>} : memref<1x2x16x16x8xf32, #tpu.memory_space<vmem>>, vector<1x2x16x16x8xf32>,
    return
  }
  func.func @transform_0(%arg0: i32) -> (i32, i32, i32, i32, i32) {
    %c0_i32 = arith.constant 0 : i32
    %c0_i32_0 = arith.constant 0 : i32
    %c0_i32_1 = arith.constant 0 : i32
    %c0_i32_2 = arith.constant 0 : i32
    %c0_i32_3 = arith.constant 0 : i32
    return %arg0, %c0_i32, %c0_i32_0, %c0_i32_1, %c0_i32_2 : i32, i32, i32, i32, i32
  }
  func.func @transform_1(%arg0: i32) -> (i32, i32, i32) {
    %c0_i32 = arith.constant 0 : i32
    %c0_i32_0 = arith.constant 0 : i32
    %c0_i32_1 = arith.constant 0 : i32
    return %arg0, %c0_i32, %c0_i32_0 : i32, i32, i32
  }
  func.func @transform_2(%arg0: i32) -> (i32, i32, i32) {
    %c0_i32 = arith.constant 0 : i32
    %c0_i32_0 = arith.constant 0 : i32
    %c0_i32_1 = arith.constant 0 : i32
    return %arg0, %c0_i32, %c0_i32_0 : i32, i32, i32
  }
  func.func @transform_3(%arg0: i32) -> (i32, i32, i32) {
    %c0_i32 = arith.constant 0 : i32
    %c0_i32_0 = arith.constant 0 : i32
    %c0_i32_1 = arith.constant 0 : i32
    return %arg0, %c0_i32, %c0_i32_0 : i32, i32, i32
  }
  func.func @transform_4(%arg0: i32) -> (i32, i32, i32) {
    %c0_i32 = arith.constant 0 : i32
    %c0_i32_0 = arith.constant 0 : i32
    %c0_i32_1 = arith.constant 0 : i32
    return %arg0, %c0_i32, %c0_i32_0 : i32, i32, i32
  }
  func.func @transform_5(%arg0: i32) -> (i32, i32, i32) {
    %c0_i32 = arith.constant 0 : i32
    %c0_i32_0 = arith.constant 0 : i32
    %c0_i32_1 = arith.constant 0 : i32
    return %arg0, %c0_i32, %c0_i32_0 : i32, i32, i32
  }
  func.func @transform_6(%arg0: i32) -> (i32, i32, i32) {
    %c0_i32 = arith.constant 0 : i32
    %c0_i32_0 = arith.constant 0 : i32
    %c0_i32_1 = arith.constant 0 : i32
    return %arg0, %c0_i32, %c0_i32_0 : i32, i32, i32
  }
  func.func @transform_7(%arg0: i32) -> (i32, i32, i32, i32, i32) {
    %c0_i32 = arith.constant 0 : i32
    %c0_i32_0 = arith.constant 0 : i32
    %c0_i32_1 = arith.constant 0 : i32
    %c0_i32_2 = arith.constant 0 : i32
    %c0_i32_3 = arith.constant 0 : i32
    return %arg0, %c0_i32, %c0_i32_0, %c0_i32_1, %c0_i32_2 : i32, i32, i32, i32, i32
  }
}

</mosaic_0001>

<llo_original>
// kernel: two_layer_group_conv.1
$region0: #{two_layer_group_conv.1}
  #allocation0 [shape = 'u32[]', space=smem, size = 0x4, offset = 0x4, fixed_abs, tag = 'smem constant byte address 0x4 - core index']
  #allocation1 [shape = 'u32[144,128]{1,0:T(1,128)}', space=vmem, size = 0x12000, scoped, tag = 'internal scratch']
  #allocation2 [shape = 'bf16[2,16,16,72]{3,2,1,0:T(16,128)(2,1)}', space=vmem, size = 0x20000, scoped, tag = 'scratch operand']
  #allocation3 [shape = 'f32[2,18,18,16]{3,2,1,0:T(8,128)}', space=vmem, size = 0x6c000, scoped, tag = 'scratch operand']
  #allocation4 [shape = 'bf16[2,16,16,144]{3,2,1,0:T(16,128)(2,1)}', space=vmem, size = 0x40000, scoped, tag = 'scratch operand']
  %s0 = inlined_call_operand.vmem [shape: f32[1,2,18,18,8], index: 0, kind: input, shape index: {}]
  %s1 = inlined_call_operand.vmem [shape: bf16[1,72,16], index: 1, kind: input, shape index: {}]
  %s2 = inlined_call_operand.vmem [shape: f32[1,1,16], index: 2, kind: input, shape index: {}]
  %s3 = inlined_call_operand.vmem [shape: f32[1,1,16], index: 3, kind: input, shape index: {}]
  %s4 = inlined_call_operand.vmem [shape: f32[1,1,16], index: 4, kind: input, shape index: {}]
  %s5 = inlined_call_operand.vmem [shape: bf16[1,144,8], index: 5, kind: input, shape index: {}]
  %s6 = inlined_call_operand.vmem [shape: f32[1,1,8], index: 6, kind: input, shape index: {}]
  %s7 = inlined_call_operand.vmem [shape: f32[1,2,16,16,8], index: 7, kind: output, shape index: {}]
  %s8 = sld [smem:[#allocation0]]
  $region38: #{two_layer_group_conv.1} parent=0
    _
  %s10 = ssub.s32 1, %s8
  %s11 = scalar_select 0, %s10, %s8
  // Predicated region
  $region2: #{two_layer_group_conv.1} parent=0 // pred_check
    _
  $region3: #{two_layer_group_conv.1} parent=0 // pred_check_branch
    %13 = sbr.rel (0) target = $region5
  $region4: #{two_layer_group_conv.1} parent=0 // pred_region
    _
  $region5: #{two_layer_group_conv.1} parent=0 // pred_fallthru
    _
  // Predicated region
  $region6: #{two_layer_group_conv.1} parent=0 // pred_check
    _
  $region7: #{two_layer_group_conv.1} parent=0 // pred_check_branch
    %15 = sbr.rel (0) target = $region9
  $region8: #{two_layer_group_conv.1} parent=0 // pred_region
    _
  $region9: #{two_layer_group_conv.1} parent=0 // pred_fallthru
    _
  // Predicated region
  $region10: #{two_layer_group_conv.1} parent=0 // pred_check
    _
  $region11: #{two_layer_group_conv.1} parent=0 // pred_check_branch
    %17 = sbr.rel (0) target = $region13
  $region12: #{two_layer_group_conv.1} parent=0 // pred_region
    _
  $region13: #{two_layer_group_conv.1} parent=0 // pred_fallthru
    _
  // Predicated region
  $region14: #{two_layer_group_conv.1} parent=0 // pred_check
    _
  $region15: #{two_layer_group_conv.1} parent=0 // pred_check_branch
    %19 = sbr.rel (0) target = $region17
  $region16: #{two_layer_group_conv.1} parent=0 // pred_region
    _
  $region17: #{two_layer_group_conv.1} parent=0 // pred_fallthru
    _
  // Predicated region
  $region18: #{two_layer_group_conv.1} parent=0 // pred_check
    _
  $region19: #{two_layer_group_conv.1} parent=0 // pred_check_branch
    %21 = sbr.rel (0) target = $region21
  $region20: #{two_layer_group_conv.1} parent=0 // pred_region
    _
  $region21: #{two_layer_group_conv.1} parent=0 // pred_fallthru
    _
  // Predicated region
  $region22: #{two_layer_group_conv.1} parent=0 // pred_check
    _
  $region23: #{two_layer_group_conv.1} parent=0 // pred_check_branch
    %23 = sbr.rel (0) target = $region25
  $region24: #{two_layer_group_conv.1} parent=0 // pred_region
    _
  $region25: #{two_layer_group_conv.1} parent=0 // pred_fallthru
    _
  // Predicated region
  $region26: #{two_layer_group_conv.1} parent=0 // pred_check
    _
  $region27: #{two_layer_group_conv.1} parent=0 // pred_check_branch
    %25 = sbr.rel (0) target = $region29
  $region28: #{two_layer_group_conv.1} parent=0 // pred_region
    _
  $region29: #{two_layer_group_conv.1} parent=0 // pred_fallthru
    _
  %v27 = vld [vmem:[%s0] sm:$0xff]
  %v28 = vld [vmem:[%s0 + $0x8] sm:$0xff]
  %v29 = vld [vmem:[%s0 + $0x18] sm:$0xff]
  %v30 = vld [vmem:[%s0 + $0x20] sm:$0xff]
  %v31 = vld [vmem:[%s0 + $0x30] sm:$0xff]
  %v32 = vld [vmem:[%s0 + $0x38] sm:$0xff]
  %v33 = vld [vmem:[%s0 + $0x48] sm:$0xff]
  %v34 = vld [vmem:[%s0 + $0x50] sm:$0xff]
  %v35 = vld [vmem:[%s0 + $0x60] sm:$0xff]
  %v36 = vld [vmem:[%s0 + $0x68] sm:$0xff]
  %v37 = vld [vmem:[%s0 + $0x78] sm:$0xff]
  %v38 = vld [vmem:[%s0 + $0x80] sm:$0xff]
  %v39 = vld [vmem:[%s0 + $0x90] sm:$0xff]
  %v40 = vld [vmem:[%s0 + $0x98] sm:$0xff]
  %v41 = vld [vmem:[%s0 + $0xa8] sm:$0xff]
  %v42 = vld [vmem:[%s0 + $0xb0] sm:$0xff]
  %v43 = vld [vmem:[%s0 + $0xc0] sm:$0xff]
  %v44 = vld [vmem:[%s0 + $0xc8] sm:$0xff]
  %v45 = vld [vmem:[%s0 + $0xd8] sm:$0xff]
  %v46 = vld [vmem:[%s0 + $0xe0] sm:$0xff]
  %v47 = vld [vmem:[%s0 + $0xf0] sm:$0xff]
  %v48 = vld [vmem:[%s0 + $0xf8] sm:$0xff]
  %v49 = vld [vmem:[%s0 + $0x108] sm:$0xff]
  %v50 = vld [vmem:[%s0 + $0x110] sm:$0xff]
  %v51 = vld [vmem:[%s0 + $0x120] sm:$0xff]
  %v52 = vld [vmem:[%s0 + $0x128] sm:$0xff]
  %v53 = vld [vmem:[%s0 + $0x138] sm:$0xff]
  %v54 = vld [vmem:[%s0 + $0x140] sm:$0xff]
  %v55 = vld [vmem:[%s0 + $0x150] sm:$0xff]
  %v56 = vld [vmem:[%s0 + $0x158] sm:$0xff]
  %v57 = vld [vmem:[%s0 + $0x168] sm:$0xff]
  %v58 = vld [vmem:[%s0 + $0x170] sm:$0xff]
  %v59 = vld [vmem:[%s0 + $0x1b0] sm:$0xff]
  %v60 = vld [vmem:[%s0 + $0x1b8] sm:$0xff]
  %v61 = vld [vmem:[%s0 + $0x1c8] sm:$0xff]
  %v62 = vld [vmem:[%s0 + $0x1d0] sm:$0xff]
  %v63 = vld [vmem:[%s0 + $0x1e0] sm:$0xff]
  %v64 = vld [vmem:[%s0 + $0x1e8] sm:$0xff]
  %v65 = vld [vmem:[%s0 + $0x1f8] sm:$0xff]
  %v66 = vld [vmem:[%s0 + $0x200] sm:$0xff]
  %v67 = vld [vmem:[%s0 + $0x210] sm:$0xff]
  %v68 = vld [vmem:[%s0 + $0x218] sm:$0xff]
  %v69 = vld [vmem:[%s0 + $0x228] sm:$0xff]
  %v70 = vld [vmem:[%s0 + $0x230] sm:$0xff]
  %v71 = vld [vmem:[%s0 + $0x240] sm:$0xff]
  %v72 = vld [vmem:[%s0 + $0x248] sm:$0xff]
  %v73 = vld [vmem:[%s0 + $0x258] sm:$0xff]
  %v74 = vld [vmem:[%s0 + $0x260] sm:$0xff]
  %v75 = vld [vmem:[%s0 + $0x270] sm:$0xff]
  %v76 = vld [vmem:[%s0 + $0x278] sm:$0xff]
  %v77 = vld [vmem:[%s0 + $0x288] sm:$0xff]
  %v78 = vld [vmem:[%s0 + $0x290] sm:$0xff]
  %v79 = vld [vmem:[%s0 + $0x2a0] sm:$0xff]
  %v80 = vld [vmem:[%s0 + $0x2a8] sm:$0xff]
  %v81 = vld [vmem:[%s0 + $0x2b8] sm:$0xff]
  %v82 = vld [vmem:[%s0 + $0x2c0] sm:$0xff]
  %v83 = vld [vmem:[%s0 + $0x2d0] sm:$0xff]
  %v84 = vld [vmem:[%s0 + $0x2d8] sm:$0xff]
  %v85 = vld [vmem:[%s0 + $0x2e8] sm:$0xff]
  %v86 = vld [vmem:[%s0 + $0x2f0] sm:$0xff]
  %v87 = vld [vmem:[%s0 + $0x300] sm:$0xff]
  %v88 = vld [vmem:[%s0 + $0x308] sm:$0xff]
  %v89 = vld [vmem:[%s0 + $0x318] sm:$0xff]
  %v90 = vld [vmem:[%s0 + $0x320] sm:$0xff]
  %v91 = vpack.c.bf16 %v28, %v27
  %v92 = vpack.c.bf16 %v30, %v29
  %v93 = vpack.c.bf16 %v32, %v31
  %v94 = vpack.c.bf16 %v34, %v33
  %v95 = vpack.c.bf16 %v36, %v35
  %v96 = vpack.c.bf16 %v38, %v37
  %v97 = vpack.c.bf16 %v40, %v39
  %v98 = vpack.c.bf16 %v42, %v41
  %v99 = vpack.c.bf16 %v44, %v43
  %v100 = vpack.c.bf16 %v46, %v45
  %v101 = vpack.c.bf16 %v48, %v47
  %v102 = vpack.c.bf16 %v50, %v49
  %v103 = vpack.c.bf16 %v52, %v51
  %v104 = vpack.c.bf16 %v54, %v53
  %v105 = vpack.c.bf16 %v56, %v55
  %v106 = vpack.c.bf16 %v58, %v57
  %v107 = vpack.c.bf16 %v60, %v59
  %v108 = vpack.c.bf16 %v62, %v61
  %v109 = vpack.c.bf16 %v64, %v63
  %v110 = vpack.c.bf16 %v66, %v65
  %v111 = vpack.c.bf16 %v68, %v67
  %v112 = vpack.c.bf16 %v70, %v69
  %v113 = vpack.c.bf16 %v72, %v71
  %v114 = vpack.c.bf16 %v74, %v73
  %v115 = vpack.c.bf16 %v76, %v75
  %v116 = vpack.c.bf16 %v78, %v77
  %v117 = vpack.c.bf16 %v80, %v79
  %v118 = vpack.c.bf16 %v82, %v81
  %v119 = vpack.c.bf16 %v84, %v83
  %v120 = vpack.c.bf16 %v86, %v85
  %v121 = vpack.c.bf16 %v88, %v87
  %v122 = vpack.c.bf16 %v90, %v89
  %vm123 = vcmask 64512
  %124 = vst.msk [vmem:[#allocation2] sm:$0xff] %vm123, %v91
  %125 = vst.msk [vmem:[#allocation2 + $0x8] sm:$0xff] %vm123, %v92
  %126 = vst.msk [vmem:[#allocation2 + $0x10] sm:$0xff] %vm123, %v93
  %127 = vst.msk [vmem:[#allocation2 + $0x18] sm:$0xff] %vm123, %v94
  %128 = vst.msk [vmem:[#allocation2 + $0x20] sm:$0xff] %vm123, %v95
  %129 = vst.msk [vmem:[#allocation2 + $0x28] sm:$0xff] %vm123, %v96
  %130 = vst.msk [vmem:[#allocation2 + $0x30] sm:$0xff] %vm123, %v97
  %131 = vst.msk [vmem:[#allocation2 + $0x38] sm:$0xff] %vm123, %v98
  %132 = vst.msk [vmem:[#allocation2 + $0x40] sm:$0xff] %vm123, %v99
  %133 = vst.msk [vmem:[#allocation2 + $0x48] sm:$0xff] %vm123, %v100
  %134 = vst.msk [vmem:[#allocation2 + $0x50] sm:$0xff] %vm123, %v101
  %135 = vst.msk [vmem:[#allocation2 + $0x58] sm:$0xff] %vm123, %v102
  %136 = vst.msk [vmem:[#allocation2 + $0x60] sm:$0xff] %vm123, %v103
  %137 = vst.msk [vmem:[#allocation2 + $0x68] sm:$0xff] %vm123, %v104
  %138 = vst.msk [vmem:[#allocation2 + $0x70] sm:$0xff] %vm123, %v105
  %139 = vst.msk [vmem:[#allocation2 + $0x78] sm:$0xff] %vm123, %v106
  %140 = vst.msk [vmem:[#allocation2 + $0x80] sm:$0xff] %vm123, %v107
  %141 = vst.msk [vmem:[#allocation2 + $0x88] sm:$0xff] %vm123, %v108
  %142 = vst.msk [vmem:[#allocation2 + $0x90] sm:$0xff] %vm123, %v109
  %143 = vst.msk [vmem:[#allocation2 + $0x98] sm:$0xff] %vm123, %v110
  %144 = vst.msk [vmem:[#allocation2 + $0xa0] sm:$0xff] %vm123, %v111
  %145 = vst.msk [vmem:[#allocation2 + $0xa8] sm:$0xff] %vm123, %v112
  %146 = vst.msk [vmem:[#allocation2 + $0xb0] sm:$0xff] %vm123, %v113
  %147 = vst.msk [vmem:[#allocation2 + $0xb8] sm:$0xff] %vm123, %v114
  %148 = vst.msk [vmem:[#allocation2 + $0xc0] sm:$0xff] %vm123, %v115
  %149 = vst.msk [vmem:[#allocation2 + $0xc8] sm:$0xff] %vm123, %v116
  %150 = vst.msk [vmem:[#allocation2 + $0xd0] sm:$0xff] %vm123, %v117
  %151 = vst.msk [vmem:[#allocation2 + $0xd8] sm:$0xff] %vm123, %v118
  %152 = vst.msk [vmem:[#allocation2 + $0xe0] sm:$0xff] %vm123, %v119
  %153 = vst.msk [vmem:[#allocation2 + $0xe8] sm:$0xff] %vm123, %v120
  %154 = vst.msk [vmem:[#allocation2 + $0xf0] sm:$0xff] %vm123, %v121
  %155 = vst.msk [vmem:[#allocation2 + $0xf8] sm:$0xff] %vm123, %v122
  %v156 = vld [vmem:[%s0 + $0x1] sm:$0xff]
  %v157 = vld [vmem:[%s0 + $0x9] sm:$0xff]
  %v158 = vld [vmem:[%s0 + $0x19] sm:$0xff]
  %v159 = vld [vmem:[%s0 + $0x21] sm:$0xff]
  %v160 = vld [vmem:[%s0 + $0x31] sm:$0xff]
  %v161 = vld [vmem:[%s0 + $0x39] sm:$0xff]
  %v162 = vld [vmem:[%s0 + $0x49] sm:$0xff]
  %v163 = vld [vmem:[%s0 + $0x51] sm:$0xff]
  %v164 = vld [vmem:[%s0 + $0x61] sm:$0xff]
  %v165 = vld [vmem:[%s0 + $0x69] sm:$0xff]
  %v166 = vld [vmem:[%s0 + $0x79] sm:$0xff]
  %v167 = vld [vmem:[%s0 + $0x81] sm:$0xff]
  %v168 = vld [vmem:[%s0 + $0x91] sm:$0xff]
  %v169 = vld [vmem:[%s0 + $0x99] sm:$0xff]
  %v170 = vld [vmem:[%s0 + $0xa9] sm:$0xff]
  %v171 = vld [vmem:[%s0 + $0xb1] sm:$0xff]
  %v172 = vld [vmem:[%s0 + $0xc1] sm:$0xff]
  %v173 = vld [vmem:[%s0 + $0xc9] sm:$0xff]
  %v174 = vld [vmem:[%s0 + $0xd9] sm:$0xff]
  %v175 = vld [vmem:[%s0 + $0xe1] sm:$0xff]
  %v176 = vld [vmem:[%s0 + $0xf1] sm:$0xff]
  %v177 = vld [vmem:[%s0 + $0xf9] sm:$0xff]
  %v178 = vld [vmem:[%s0 + $0x109] sm:$0xff]
  %v179 = vld [vmem:[%s0 + $0x111] sm:$0xff]
  %v180 = vld [vmem:[%s0 + $0x121] sm:$0xff]
  %v181 = vld [vmem:[%s0 + $0x129] sm:$0xff]
  %v182 = vld [vmem:[%s0 + $0x139] sm:$0xff]
  %v183 = vld [vmem:[%s0 + $0x141] sm:$0xff]
  %v184 = vld [vmem:[%s0 + $0x151] sm:$0xff]
  %v185 = vld [vmem:[%s0 + $0x159] sm:$0xff]
  %v186 = vld [vmem:[%s0 + $0x169] sm:$0xff]
  %v187 = vld [vmem:[%s0 + $0x171] sm:$0xff]
  %v188 = vld [vmem:[%s0 + $0x1b1] sm:$0xff]
  %v189 = vld [vmem:[%s0 + $0x1b9] sm:$0xff]
  %v190 = vld [vmem:[%s0 + $0x1c9] sm:$0xff]
  %v191 = vld [vmem:[%s0 + $0x1d1] sm:$0xff]
  %v192 = vld [vmem:[%s0 + $0x1e1] sm:$0xff]
  %v193 = vld [vmem:[%s0 + $0x1e9] sm:$0xff]
  %v194 = vld [vmem:[%s0 + $0x1f9] sm:$0xff]
  %v195 = vld [vmem:[%s0 + $0x201] sm:$0xff]
  %v196 = vld [vmem:[%s0 + $0x211] sm:$0xff]
  %v197 = vld [vmem:[%s0 + $0x219] sm:$0xff]
  %v198 = vld [vmem:[%s0 + $0x229] sm:$0xff]
  %v199 = vld [vmem:[%s0 + $0x231] sm:$0xff]
  %v200 = vld [vmem:[%s0 + $0x241] sm:$0xff]
  %v201 = vld [vmem:[%s0 + $0x249] sm:$0xff]
  %v202 = vld [vmem:[%s0 + $0x259] sm:$0xff]
  %v203 = vld [vmem:[%s0 + $0x261] sm:$0xff]
  %v204 = vld [vmem:[%s0 + $0x271] sm:$0xff]
  %v205 = vld [vmem:[%s0 + $0x279] sm:$0xff]
  %v206 = vld [vmem:[%s0 + $0x289] sm:$0xff]
  %v207 = vld [vmem:[%s0 + $0x291] sm:$0xff]
  %v208 = vld [vmem:[%s0 + $0x2a1] sm:$0xff]
  %v209 = vld [vmem:[%s0 + $0x2a9] sm:$0xff]
  %v210 = vld [vmem:[%s0 + $0x2b9] sm:$0xff]
  %v211 = vld [vmem:[%s0 + $0x2c1] sm:$0xff]
  %v212 = vld [vmem:[%s0 + $0x2d1] sm:$0xff]
  %v213 = vld [vmem:[%s0 + $0x2d9] sm:$0xff]
  %v214 = vld [vmem:[%s0 + $0x2e9] sm:$0xff]
  %v215 = vld [vmem:[%s0 + $0x2f1] sm:$0xff]
  %v216 = vld [vmem:[%s0 + $0x301] sm:$0xff]
  %v217 = vld [vmem:[%s0 + $0x309] sm:$0xff]
  %v218 = vld [vmem:[%s0 + $0x319] sm:$0xff]
  %v219 = vld [vmem:[%s0 + $0x321] sm:$0xff]
  %v220 = vpack.c.bf16 %v157, %v156
  %v221 = vpack.c.bf16 %v159, %v158
  %v222 = vpack.c.bf16 %v161, %v160
  %v223 = vpack.c.bf16 %v163, %v162
  %v224 = vpack.c.bf16 %v165, %v164
  %v225 = vpack.c.bf16 %v167, %v166
  %v226 = vpack.c.bf16 %v169, %v168
  %v227 = vpack.c.bf16 %v171, %v170
  %v228 = vpack.c.bf16 %v173, %v172
  %v229 = vpack.c.bf16 %v175, %v174
  %v230 = vpack.c.bf16 %v177, %v176
  %v231 = vpack.c.bf16 %v179, %v178
  %v232 = vpack.c.bf16 %v181, %v180
  %v233 = vpack.c.bf16 %v183, %v182
  %v234 = vpack.c.bf16 %v185, %v184
  %v235 = vpack.c.bf16 %v187, %v186
  %v236 = vpack.c.bf16 %v189, %v188
  %v237 = vpack.c.bf16 %v191, %v190
  %v238 = vpack.c.bf16 %v193, %v192
  %v239 = vpack.c.bf16 %v195, %v194
  %v240 = vpack.c.bf16 %v197, %v196
  %v241 = vpack.c.bf16 %v199, %v198
  %v242 = vpack.c.bf16 %v201, %v200
  %v243 = vpack.c.bf16 %v203, %v202
  %v244 = vpack.c.bf16 %v205, %v204
  %v245 = vpack.c.bf16 %v207, %v206
  %v246 = vpack.c.bf16 %v209, %v208
  %v247 = vpack.c.bf16 %v211, %v210
  %v248 = vpack.c.bf16 %v213, %v212
  %v249 = vpack.c.bf16 %v215, %v214
  %v250 = vpack.c.bf16 %v217, %v216
  %v251 = vpack.c.bf16 %v219, %v218
  %284 = vrot.lane.b32.xlu0 %v220, 8
  %v285 = vpop.permute.xlu0 %284
  %286 = vrot.lane.b32.xlu0 %v221, 8
  %v287 = vpop.permute.xlu0 %286
  %288 = vrot.lane.b32.xlu0 %v222, 8
  %v289 = vpop.permute.xlu0 %288
  %290 = vrot.lane.b32.xlu0 %v223, 8
  %v291 = vpop.permute.xlu0 %290
  %292 = vrot.lane.b32.xlu0 %v224, 8
  %v293 = vpop.permute.xlu0 %292
  %294 = vrot.lane.b32.xlu0 %v225, 8
  %v295 = vpop.permute.xlu0 %294
  %296 = vrot.lane.b32.xlu0 %v226, 8
  %v297 = vpop.permute.xlu0 %296
  %298 = vrot.lane.b32.xlu0 %v227, 8
  %v299 = vpop.permute.xlu0 %298
  %300 = vrot.lane.b32.xlu0 %v228, 8
  %v301 = vpop.permute.xlu0 %300
  %302 = vrot.lane.b32.xlu0 %v229, 8
  %v303 = vpop.permute.xlu0 %302
  %304 = vrot.lane.b32.xlu0 %v230, 8
  %v305 = vpop.permute.xlu0 %304
  %306 = vrot.lane.b32.xlu0 %v231, 8
  %v307 = vpop.permute.xlu0 %306
  %308 = vrot.lane.b32.xlu0 %v232, 8
  %v309 = vpop.permute.xlu0 %308
  %310 = vrot.lane.b32.xlu0 %v233, 8
  %v311 = vpop.permute.xlu0 %310
  %312 = vrot.lane.b32.xlu0 %v234, 8
  %v313 = vpop.permute.xlu0 %312
  %314 = vrot.lane.b32.xlu0 %v235, 8
  %v315 = vpop.permute.xlu0 %314
  %316 = vrot.lane.b32.xlu0 %v236, 8
  %v317 = vpop.permute.xlu0 %316
  %318 = vrot.lane.b32.xlu0 %v237, 8
  %v319 = vpop.permute.xlu0 %318
  %320 = vrot.lane.b32.xlu0 %v238, 8
  %v321 = vpop.permute.xlu0 %320
  %322 = vrot.lane.b32.xlu0 %v239, 8
  %v323 = vpop.permute.xlu0 %322
  %324 = vrot.lane.b32.xlu0 %v240, 8
  %v325 = vpop.permute.xlu0 %324
  %326 = vrot.lane.b32.xlu0 %v241, 8
  %v327 = vpop.permute.xlu0 %326
  %328 = vrot.lane.b32.xlu0 %v242, 8
  %v329 = vpop.permute.xlu0 %328
  %330 = vrot.lane.b32.xlu0 %v243, 8
  %v331 = vpop.permute.xlu0 %330
  %332 = vrot.lane.b32.xlu0 %v244, 8
  %v333 = vpop.permute.xlu0 %332
  %334 = vrot.lane.b32.xlu0 %v245, 8
  %v335 = vpop.permute.xlu0 %334
  %336 = vrot.lane.b32.xlu0 %v246, 8
  %v337 = vpop.permute.xlu0 %336
  %338 = vrot.lane.b32.xlu0 %v247, 8
  %v339 = vpop.permute.xlu0 %338
  %340 = vrot.lane.b32.xlu0 %v248, 8
  %v341 = vpop.permute.xlu0 %340
  %342 = vrot.lane.b32.xlu0 %v249, 8
  %v343 = vpop.permute.xlu0 %342
  %344 = vrot.lane.b32.xlu0 %v250, 8
  %v345 = vpop.permute.xlu0 %344
  %346 = vrot.lane.b32.xlu0 %v251, 8
  %v347 = vpop.permute.xlu0 %346
  %vm380 = vcmask 130112
  %381 = vst.msk [vmem:[#allocation2] sm:$0xff] %vm380, %v285
  %382 = vst.msk [vmem:[#allocation2 + $0x8] sm:$0xff] %vm380, %v287
  %383 = vst.msk [vmem:[#allocation2 + $0x10] sm:$0xff] %vm380, %v289
  %384 = vst.msk [vmem:[#allocation2 + $0x18] sm:$0xff] %vm380, %v291
  %385 = vst.msk [vmem:[#allocation2 + $0x20] sm:$0xff] %vm380, %v293
  %386 = vst.msk [vmem:[#allocation2 + $0x28] sm:$0xff] %vm380, %v295
  %387 = vst.msk [vmem:[#allocation2 + $0x30] sm:$0xff] %vm380, %v297
  %388 = vst.msk [vmem:[#allocation2 + $0x38] sm:$0xff] %vm380, %v299
  %389 = vst.msk [vmem:[#allocation2 + $0x40] sm:$0xff] %vm380, %v301
  %390 = vst.msk [vmem:[#allocation2 + $0x48] sm:$0xff] %vm380, %v303
  %391 = vst.msk [vmem:[#allocation2 + $0x50] sm:$0xff] %vm380, %v305
  %392 = vst.msk [vmem:[#allocation2 + $0x58] sm:$0xff] %vm380, %v307
  %393 = vst.msk [vmem:[#allocation2 + $0x60] sm:$0xff] %vm380, %v309
  %394 = vst.msk [vmem:[#allocation2 + $0x68] sm:$0xff] %vm380, %v311
  %395 = vst.msk [vmem:[#allocation2 + $0x70] sm:$0xff] %vm380, %v313
  %396 = vst.msk [vmem:[#allocation2 + $0x78] sm:$0xff] %vm380, %v315
  %397 = vst.msk [vmem:[#allocation2 + $0x80] sm:$0xff] %vm380, %v317
  %398 = vst.msk [vmem:[#allocation2 + $0x88] sm:$0xff] %vm380, %v319
  %399 = vst.msk [vmem:[#allocation2 + $0x90] sm:$0xff] %vm380, %v321
  %400 = vst.msk [vmem:[#allocation2 + $0x98] sm:$0xff] %vm380, %v323
  %401 = vst.msk [vmem:[#allocation2 + $0xa0] sm:$0xff] %vm380, %v325
  %402 = vst.msk [vmem:[#allocation2 + $0xa8] sm:$0xff] %vm380, %v327
  %403 = vst.msk [vmem:[#allocation2 + $0xb0] sm:$0xff] %vm380, %v329
  %404 = vst.msk [vmem:[#allocation2 + $0xb8] sm:$0xff] %vm380, %v331
  %405 = vst.msk [vmem:[#allocation2 + $0xc0] sm:$0xff] %vm380, %v333
  %406 = vst.msk [vmem:[#allocation2 + $0xc8] sm:$0xff] %vm380, %v335
  %407 = vst.msk [vmem:[#allocation2 + $0xd0] sm:$0xff] %vm380, %v337
  %408 = vst.msk [vmem:[#allocation2 + $0xd8] sm:$0xff] %vm380, %v339
  %409 = vst.msk [vmem:[#allocation2 + $0xe0] sm:$0xff] %vm380, %v341
  %410 = vst.msk [vmem:[#allocation2 + $0xe8] sm:$0xff] %vm380, %v343
  %411 = vst.msk [vmem:[#allocation2 + $0xf0] sm:$0xff] %vm380, %v345
  %412 = vst.msk [vmem:[#allocation2 + $0xf8] sm:$0xff] %vm380, %v347
  %v413 = vld [vmem:[%s0 + $0x2] sm:$0xff]
  %v414 = vld [vmem:[%s0 + $0xa] sm:$0xff]
  %v415 = vld [vmem:[%s0 + $0x1a] sm:$0xff]
  %v416 = vld [vmem:[%s0 + $0x22] sm:$0xff]
  %v417 = vld [vmem:[%s0 + $0x32] sm:$0xff]
  %v418 = vld [vmem:[%s0 + $0x3a] sm:$0xff]
  %v419 = vld [vmem:[%s0 + $0x4a] sm:$0xff]
  %v420 = vld [vmem:[%s0 + $0x52] sm:$0xff]
  %v421 = vld [vmem:[%s0 + $0x62] sm:$0xff]
  %v422 = vld [vmem:[%s0 + $0x6a] sm:$0xff]
  %v423 = vld [vmem:[%s0 + $0x7a] sm:$0xff]
  %v424 = vld [vmem:[%s0 + $0x82] sm:$0xff]
  %v425 = vld [vmem:[%s0 + $0x92] sm:$0xff]
  %v426 = vld [vmem:[%s0 + $0x9a] sm:$0xff]
  %v427 = vld [vmem:[%s0 + $0xaa] sm:$0xff]
  %v428 = vld [vmem:[%s0 + $0xb2] sm:$0xff]
  %v429 = vld [vmem:[%s0 + $0xc2] sm:$0xff]
  %v430 = vld [vmem:[%s0 + $0xca] sm:$0xff]
  %v431 = vld [vmem:[%s0 + $0xda] sm:$0xff]
  %v432 = vld [vmem:[%s0 + $0xe2] sm:$0xff]
  %v433 = vld [vmem:[%s0 + $0xf2] sm:$0xff]
  %v434 = vld [vmem:[%s0 + $0xfa] sm:$0xff]
  %v435 = vld [vmem:[%s0 + $0x10a] sm:$0xff]
  %v436 = vld [vmem:[%s0 + $0x112] sm:$0xff]
  %v437 = vld [vmem:[%s0 + $0x122] sm:$0xff]
  %v438 = vld [vmem:[%s0 + $0x12a] sm:$0xff]
  %v439 = vld [vmem:[%s0 + $0x13a] sm:$0xff]
  %v440 = vld [vmem:[%s0 + $0x142] sm:$0xff]
  %v441 = vld [vmem:[%s0 + $0x152] sm:$0xff]
  %v442 = vld [vmem:[%s0 + $0x15a] sm:$0xff]
  %v443 = vld [vmem:[%s0 + $0x16a] sm:$0xff]
  %v444 = vld [vmem:[%s0 + $0x172] sm:$0xff]
  %v445 = vld [vmem:[%s0 + $0x1b2] sm:$0xff]
  %v446 = vld [vmem:[%s0 + $0x1ba] sm:$0xff]
  %v447 = vld [vmem:[%s0 + $0x1ca] sm:$0xff]
  %v448 = vld [vmem:[%s0 + $0x1d2] sm:$0xff]
  %v449 = vld [vmem:[%s0 + $0x1e2] sm:$0xff]
  %v450 = vld [vmem:[%s0 + $0x1ea] sm:$0xff]
  %v451 = vld [vmem:[%s0 + $0x1fa] sm:$0xff]
  %v452 = vld [vmem:[%s0 + $0x202] sm:$0xff]
  %v453 = vld [vmem:[%s0 + $0x212] sm:$0xff]
  %v454 = vld [vmem:[%s0 + $0x21a] sm:$0xff]
  %v455 = vld [vmem:[%s0 + $0x22a] sm:$0xff]
  %v456 = vld [vmem:[%s0 + $0x232] sm:$0xff]
  %v457 = vld [vmem:[%s0 + $0x242] sm:$0xff]
  %v458 = vld [vmem:[%s0 + $0x24a] sm:$0xff]
  %v459 = vld [vmem:[%s0 + $0x25a] sm:$0xff]
  %v460 = vld [vmem:[%s0 + $0x262] sm:$0xff]
  %v461 = vld [vmem:[%s0 + $0x272] sm:$0xff]
  %v462 = vld [vmem:[%s0 + $0x27a] sm:$0xff]
  %v463 = vld [vmem:[%s0 + $0x28a] sm:$0xff]
  %v464 = vld [vmem:[%s0 + $0x292] sm:$0xff]
  %v465 = vld [vmem:[%s0 + $0x2a2] sm:$0xff]
  %v466 = vld [vmem:[%s0 + $0x2aa] sm:$0xff]
  %v467 = vld [vmem:[%s0 + $0x2ba] sm:$0xff]
  %v468 = vld [vmem:[%s0 + $0x2c2] sm:$0xff]
  %v469 = vld [vmem:[%s0 + $0x2d2] sm:$0xff]
  %v470 = vld [vmem:[%s0 + $0x2da] sm:$0xff]
  %v471 = vld [vmem:[%s0 + $0x2ea] sm:$0xff]
  %v472 = vld [vmem:[%s0 + $0x2f2] sm:$0xff]
  %v473 = vld [vmem:[%s0 + $0x302] sm:$0xff]
  %v474 = vld [vmem:[%s0 + $0x30a] sm:$0xff]
  %v475 = vld [vmem:[%s0 + $0x31a] sm:$0xff]
  %v476 = vld [vmem:[%s0 + $0x322] sm:$0xff]
  %v477 = vpack.c.bf16 %v414, %v413
  %v478 = vpack.c.bf16 %v416, %v415
  %v479 = vpack.c.bf16 %v418, %v417
  %v480 = vpack.c.bf16 %v420, %v419
  %v481 = vpack.c.bf16 %v422, %v421
  %v482 = vpack.c.bf16 %v424, %v423
  %v483 = vpack.c.bf16 %v426, %v425
  %v484 = vpack.c.bf16 %v428, %v427
  %v485 = vpack.c.bf16 %v430, %v429
  %v486 = vpack.c.bf16 %v432, %v431
  %v487 = vpack.c.bf16 %v434, %v433
  %v488 = vpack.c.bf16 %v436, %v435
  %v489 = vpack.c.bf16 %v438, %v437
  %v490 = vpack.c.bf16 %v440, %v439
  %v491 = vpack.c.bf16 %v442, %v441
  %v492 = vpack.c.bf16 %v444, %v443
  %v493 = vpack.c.bf16 %v446, %v445
  %v494 = vpack.c.bf16 %v448, %v447
  %v495 = vpack.c.bf16 %v450, %v449
  %v496 = vpack.c.bf16 %v452, %v451
  %v497 = vpack.c.bf16 %v454, %v453
  %v498 = vpack.c.bf16 %v456, %v455
  %v499 = vpack.c.bf16 %v458, %v457
  %v500 = vpack.c.bf16 %v460, %v459
  %v501 = vpack.c.bf16 %v462, %v461
  %v502 = vpack.c.bf16 %v464, %v463
  %v503 = vpack.c.bf16 %v466, %v465
  %v504 = vpack.c.bf16 %v468, %v467
  %v505 = vpack.c.bf16 %v470, %v469
  %v506 = vpack.c.bf16 %v472, %v471
  %v507 = vpack.c.bf16 %v474, %v473
  %v508 = vpack.c.bf16 %v476, %v475
  %541 = vrot.lane.b32.xlu0 %v477, 16
  %v542 = vpop.permute.xlu0 %541
  %543 = vrot.lane.b32.xlu0 %v478, 16
  %v544 = vpop.permute.xlu0 %543
  %545 = vrot.lane.b32.xlu0 %v479, 16
  %v546 = vpop.permute.xlu0 %545
  %547 = vrot.lane.b32.xlu0 %v480, 16
  %v548 = vpop.permute.xlu0 %547
  %549 = vrot.lane.b32.xlu0 %v481, 16
  %v550 = vpop.permute.xlu0 %549
  %551 = vrot.lane.b32.xlu0 %v482, 16
  %v552 = vpop.permute.xlu0 %551
  %553 = vrot.lane.b32.xlu0 %v483, 16
  %v554 = vpop.permute.xlu0 %553
  %555 = vrot.lane.b32.xlu0 %v484, 16
  %v556 = vpop.permute.xlu0 %555
  %557 = vrot.lane.b32.xlu0 %v485, 16
  %v558 = vpop.permute.xlu0 %557
  %559 = vrot.lane.b32.xlu0 %v486, 16
  %v560 = vpop.permute.xlu0 %559
  %561 = vrot.lane.b32.xlu0 %v487, 16
  %v562 = vpop.permute.xlu0 %561
  %563 = vrot.lane.b32.xlu0 %v488, 16
  %v564 = vpop.permute.xlu0 %563
  %565 = vrot.lane.b32.xlu0 %v489, 16
  %v566 = vpop.permute.xlu0 %565
  %567 = vrot.lane.b32.xlu0 %v490, 16
  %v568 = vpop.permute.xlu0 %567
  %569 = vrot.lane.b32.xlu0 %v491, 16
  %v570 = vpop.permute.xlu0 %569
  %571 = vrot.lane.b32.xlu0 %v492, 16
  %v572 = vpop.permute.xlu0 %571
  %573 = vrot.lane.b32.xlu0 %v493, 16
  %v574 = vpop.permute.xlu0 %573
  %575 = vrot.lane.b32.xlu0 %v494, 16
  %v576 = vpop.permute.xlu0 %575
  %577 = vrot.lane.b32.xlu0 %v495, 16
  %v578 = vpop.permute.xlu0 %577
  %579 = vrot.lane.b32.xlu0 %v496, 16
  %v580 = vpop.permute.xlu0 %579
  %581 = vrot.lane.b32.xlu0 %v497, 16
  %v582 = vpop.permute.xlu0 %581
  %583 = vrot.lane.b32.xlu0 %v498, 16
  %v584 = vpop.permute.xlu0 %583
  %585 = vrot.lane.b32.xlu0 %v499, 16
  %v586 = vpop.permute.xlu0 %585
  %587 = vrot.lane.b32.xlu0 %v500, 16
  %v588 = vpop.permute.xlu0 %587
  %589 = vrot.lane.b32.xlu0 %v501, 16
  %v590 = vpop.permute.xlu0 %589
  %591 = vrot.lane.b32.xlu0 %v502, 16
  %v592 = vpop.permute.xlu0 %591
  %593 = vrot.lane.b32.xlu0 %v503, 16
  %v594 = vpop.permute.xlu0 %593
  %595 = vrot.lane.b32.xlu0 %v504, 16
  %v596 = vpop.permute.xlu0 %595
  %597 = vrot.lane.b32.xlu0 %v505, 16
  %v598 = vpop.permute.xlu0 %597
  %599 = vrot.lane.b32.xlu0 %v506, 16
  %v600 = vpop.permute.xlu0 %599
  %601 = vrot.lane.b32.xlu0 %v507, 16
  %v602 = vpop.permute.xlu0 %601
  %603 = vrot.lane.b32.xlu0 %v508, 16
  %v604 = vpop.permute.xlu0 %603
  %vm637 = vcmask 195712
  %638 = vst.msk [vmem:[#allocation2] sm:$0xff] %vm637, %v542
  %639 = vst.msk [vmem:[#allocation2 + $0x8] sm:$0xff] %vm637, %v544
  %640 = vst.msk [vmem:[#allocation2 + $0x10] sm:$0xff] %vm637, %v546
  %641 = vst.msk [vmem:[#allocation2 + $0x18] sm:$0xff] %vm637, %v548
  %642 = vst.msk [vmem:[#allocation2 + $0x20] sm:$0xff] %vm637, %v550
  %643 = vst.msk [vmem:[#allocation2 + $0x28] sm:$0xff] %vm637, %v552
  %644 = vst.msk [vmem:[#allocation2 + $0x30] sm:$0xff] %vm637, %v554
  %645 = vst.msk [vmem:[#allocation2 + $0x38] sm:$0xff] %vm637, %v556
  %646 = vst.msk [vmem:[#allocation2 + $0x40] sm:$0xff] %vm637, %v558
  %647 = vst.msk [vmem:[#allocation2 + $0x48] sm:$0xff] %vm637, %v560
  %648 = vst.msk [vmem:[#allocation2 + $0x50] sm:$0xff] %vm637, %v562
  %649 = vst.msk [vmem:[#allocation2 + $0x58] sm:$0xff] %vm637, %v564
  %650 = vst.msk [vmem:[#allocation2 + $0x60] sm:$0xff] %vm637, %v566
  %651 = vst.msk [vmem:[#allocation2 + $0x68] sm:$0xff] %vm637, %v568
  %652 = vst.msk [vmem:[#allocation2 + $0x70] sm:$0xff] %vm637, %v570
  %653 = vst.msk [vmem:[#allocation2 + $0x78] sm:$0xff] %vm637, %v572
  %654 = vst.msk [vmem:[#allocation2 + $0x80] sm:$0xff] %vm637, %v574
  %655 = vst.msk [vmem:[#allocation2 + $0x88] sm:$0xff] %vm637, %v576
  %656 = vst.msk [vmem:[#allocation2 + $0x90] sm:$0xff] %vm637, %v578
  %657 = vst.msk [vmem:[#allocation2 + $0x98] sm:$0xff] %vm637, %v580
  %658 = vst.msk [vmem:[#allocation2 + $0xa0] sm:$0xff] %vm637, %v582
  %659 = vst.msk [vmem:[#allocation2 + $0xa8] sm:$0xff] %vm637, %v584
  %660 = vst.msk [vmem:[#allocation2 + $0xb0] sm:$0xff] %vm637, %v586
  %661 = vst.msk [vmem:[#allocation2 + $0xb8] sm:$0xff] %vm637, %v588
  %662 = vst.msk [vmem:[#allocation2 + $0xc0] sm:$0xff] %vm637, %v590
  %663 = vst.msk [vmem:[#allocation2 + $0xc8] sm:$0xff] %vm637, %v592
  %664 = vst.msk [vmem:[#allocation2 + $0xd0] sm:$0xff] %vm637, %v594
  %665 = vst.msk [vmem:[#allocation2 + $0xd8] sm:$0xff] %vm637, %v596
  %666 = vst.msk [vmem:[#allocation2 + $0xe0] sm:$0xff] %vm637, %v598
  %667 = vst.msk [vmem:[#allocation2 + $0xe8] sm:$0xff] %vm637, %v600
  %668 = vst.msk [vmem:[#allocation2 + $0xf0] sm:$0xff] %vm637, %v602
  %669 = vst.msk [vmem:[#allocation2 + $0xf8] sm:$0xff] %vm637, %v604
  %s670 = scalar_lea.vmem %s0, 24
  %v671 = vld [vmem:[%s670] sm:$0xff]
  %v672 = vld [vmem:[%s670 + $0x8] sm:$0xff]
  %v673 = vld [vmem:[%s670 + $0x18] sm:$0xff]
  %v674 = vld [vmem:[%s670 + $0x20] sm:$0xff]
  %v675 = vld [vmem:[%s670 + $0x30] sm:$0xff]
  %v676 = vld [vmem:[%s670 + $0x38] sm:$0xff]
  %v677 = vld [vmem:[%s670 + $0x48] sm:$0xff]
  %v678 = vld [vmem:[%s670 + $0x50] sm:$0xff]
  %v679 = vld [vmem:[%s670 + $0x60] sm:$0xff]
  %v680 = vld [vmem:[%s670 + $0x68] sm:$0xff]
  %v681 = vld [vmem:[%s670 + $0x78] sm:$0xff]
  %v682 = vld [vmem:[%s670 + $0x80] sm:$0xff]
  %v683 = vld [vmem:[%s670 + $0x90] sm:$0xff]
  %v684 = vld [vmem:[%s670 + $0x98] sm:$0xff]
  %v685 = vld [vmem:[%s670 + $0xa8] sm:$0xff]
  %v686 = vld [vmem:[%s670 + $0xb0] sm:$0xff]
  %v687 = vld [vmem:[%s670 + $0xc0] sm:$0xff]
  %v688 = vld [vmem:[%s670 + $0xc8] sm:$0xff]
  %v689 = vld [vmem:[%s670 + $0xd8] sm:$0xff]
  %v690 = vld [vmem:[%s670 + $0xe0] sm:$0xff]
  %v691 = vld [vmem:[%s670 + $0xf0] sm:$0xff]
  %v692 = vld [vmem:[%s670 + $0xf8] sm:$0xff]
  %v693 = vld [vmem:[%s670 + $0x108] sm:$0xff]
  %v694 = vld [vmem:[%s670 + $0x110] sm:$0xff]
  %v695 = vld [vmem:[%s670 + $0x120] sm:$0xff]
  %v696 = vld [vmem:[%s670 + $0x128] sm:$0xff]
  %v697 = vld [vmem:[%s670 + $0x138] sm:$0xff]
  %v698 = vld [vmem:[%s670 + $0x140] sm:$0xff]
  %v699 = vld [vmem:[%s670 + $0x150] sm:$0xff]
  %v700 = vld [vmem:[%s670 + $0x158] sm:$0xff]
  %v701 = vld [vmem:[%s670 + $0x168] sm:$0xff]
  %v702 = vld [vmem:[%s670 + $0x170] sm:$0xff]
  %v703 = vld [vmem:[%s670 + $0x1b0] sm:$0xff]
  %v704 = vld [vmem:[%s670 + $0x1b8] sm:$0xff]
  %v705 = vld [vmem:[%s670 + $0x1c8] sm:$0xff]
  %v706 = vld [vmem:[%s670 + $0x1d0] sm:$0xff]
  %v707 = vld [vmem:[%s670 + $0x1e0] sm:$0xff]
  %v708 = vld [vmem:[%s670 + $0x1e8] sm:$0xff]
  %v709 = vld [vmem:[%s670 + $0x1f8] sm:$0xff]
  %v710 = vld [vmem:[%s670 + $0x200] sm:$0xff]
  %v711 = vld [vmem:[%s670 + $0x210] sm:$0xff]
  %v712 = vld [vmem:[%s670 + $0x218] sm:$0xff]
  %v713 = vld [vmem:[%s670 + $0x228] sm:$0xff]
  %v714 = vld [vmem:[%s670 + $0x230] sm:$0xff]
  %v715 = vld [vmem:[%s670 + $0x240] sm:$0xff]
  %v716 = vld [vmem:[%s670 + $0x248] sm:$0xff]
  %v717 = vld [vmem:[%s670 + $0x258] sm:$0xff]
  %v718 = vld [vmem:[%s670 + $0x260] sm:$0xff]
  %v719 = vld [vmem:[%s670 + $0x270] sm:$0xff]
  %v720 = vld [vmem:[%s670 + $0x278] sm:$0xff]
  %v721 = vld [vmem:[%s670 + $0x288] sm:$0xff]
  %v722 = vld [vmem:[%s670 + $0x290] sm:$0xff]
  %v723 = vld [vmem:[%s670 + $0x2a0] sm:$0xff]
  %v724 = vld [vmem:[%s670 + $0x2a8] sm:$0xff]
  %v725 = vld [vmem:[%s670 + $0x2b8] sm:$0xff]
  %v726 = vld [vmem:[%s670 + $0x2c0] sm:$0xff]
  %v727 = vld [vmem:[%s670 + $0x2d0] sm:$0xff]
  %v728 = vld [vmem:[%s670 + $0x2d8] sm:$0xff]
  %v729 = vld [vmem:[%s670 + $0x2e8] sm:$0xff]
  %v730 = vld [vmem:[%s670 + $0x2f0] sm:$0xff]
  %v731 = vld [vmem:[%s670 + $0x300] sm:$0xff]
  %v732 = vld [vmem:[%s670 + $0x308] sm:$0xff]
  %v733 = vld [vmem:[%s670 + $0x318] sm:$0xff]
  %v734 = vld [vmem:[%s670 + $0x320] sm:$0xff]
  %v735 = vpack.c.bf16 %v672, %v671
  %v736 = vpack.c.bf16 %v674, %v673
  %v737 = vpack.c.bf16 %v676, %v675
  %v738 = vpack.c.bf16 %v678, %v677
  %v739 = vpack.c.bf16 %v680, %v679
  %v740 = vpack.c.bf16 %v682, %v681
  %v741 = vpack.c.bf16 %v684, %v683
  %v742 = vpack.c.bf16 %v686, %v685
  %v743 = vpack.c.bf16 %v688, %v687
  %v744 = vpack.c.bf16 %v690, %v689
  %v745 = vpack.c.bf16 %v692, %v691
  %v746 = vpack.c.bf16 %v694, %v693
  %v747 = vpack.c.bf16 %v696, %v695
  %v748 = vpack.c.bf16 %v698, %v697
  %v749 = vpack.c.bf16 %v700, %v699
  %v750 = vpack.c.bf16 %v702, %v701
  %v751 = vpack.c.bf16 %v704, %v703
  %v752 = vpack.c.bf16 %v706, %v705
  %v753 = vpack.c.bf16 %v708, %v707
  %v754 = vpack.c.bf16 %v710, %v709
  %v755 = vpack.c.bf16 %v712, %v711
  %v756 = vpack.c.bf16 %v714, %v713
  %v757 = vpack.c.bf16 %v716, %v715
  %v758 = vpack.c.bf16 %v718, %v717
  %v759 = vpack.c.bf16 %v720, %v719
  %v760 = vpack.c.bf16 %v722, %v721
  %v761 = vpack.c.bf16 %v724, %v723
  %v762 = vpack.c.bf16 %v726, %v725
  %v763 = vpack.c.bf16 %v728, %v727
  %v764 = vpack.c.bf16 %v730, %v729
  %v765 = vpack.c.bf16 %v732, %v731
  %v766 = vpack.c.bf16 %v734, %v733
  %799 = vrot.lane.b32.xlu0 %v735, 24
  %v800 = vpop.permute.xlu0 %799
  %801 = vrot.lane.b32.xlu0 %v736, 24
  %v802 = vpop.permute.xlu0 %801
  %803 = vrot.lane.b32.xlu0 %v737, 24
  %v804 = vpop.permute.xlu0 %803
  %805 = vrot.lane.b32.xlu0 %v738, 24
  %v806 = vpop.permute.xlu0 %805
  %807 = vrot.lane.b32.xlu0 %v739, 24
  %v808 = vpop.permute.xlu0 %807
  %809 = vrot.lane.b32.xlu0 %v740, 24
  %v810 = vpop.permute.xlu0 %809
  %811 = vrot.lane.b32.xlu0 %v741, 24
  %v812 = vpop.permute.xlu0 %811
  %813 = vrot.lane.b32.xlu0 %v742, 24
  %v814 = vpop.permute.xlu0 %813
  %815 = vrot.lane.b32.xlu0 %v743, 24
  %v816 = vpop.permute.xlu0 %815
  %817 = vrot.lane.b32.xlu0 %v744, 24
  %v818 = vpop.permute.xlu0 %817
  %819 = vrot.lane.b32.xlu0 %v745, 24
  %v820 = vpop.permute.xlu0 %819
  %821 = vrot.lane.b32.xlu0 %v746, 24
  %v822 = vpop.permute.xlu0 %821
  %823 = vrot.lane.b32.xlu0 %v747, 24
  %v824 = vpop.permute.xlu0 %823
  %825 = vrot.lane.b32.xlu0 %v748, 24
  %v826 = vpop.permute.xlu0 %825
  %827 = vrot.lane.b32.xlu0 %v749, 24
  %v828 = vpop.permute.xlu0 %827
  %829 = vrot.lane.b32.xlu0 %v750, 24
  %v830 = vpop.permute.xlu0 %829
  %831 = vrot.lane.b32.xlu0 %v751, 24
  %v832 = vpop.permute.xlu0 %831
  %833 = vrot.lane.b32.xlu0 %v752, 24
  %v834 = vpop.permute.xlu0 %833
  %835 = vrot.lane.b32.xlu0 %v753, 24
  %v836 = vpop.permute.xlu0 %835
  %837 = vrot.lane.b32.xlu0 %v754, 24
  %v838 = vpop.permute.xlu0 %837
  %839 = vrot.lane.b32.xlu0 %v755, 24
  %v840 = vpop.permute.xlu0 %839
  %841 = vrot.lane.b32.xlu0 %v756, 24
  %v842 = vpop.permute.xlu0 %841
  %843 = vrot.lane.b32.xlu0 %v757, 24
  %v844 = vpop.permute.xlu0 %843
  %845 = vrot.lane.b32.xlu0 %v758, 24
  %v846 = vpop.permute.xlu0 %845
  %847 = vrot.lane.b32.xlu0 %v759, 24
  %v848 = vpop.permute.xlu0 %847
  %849 = vrot.lane.b32.xlu0 %v760, 24
  %v850 = vpop.permute.xlu0 %849
  %851 = vrot.lane.b32.xlu0 %v761, 24
  %v852 = vpop.permute.xlu0 %851
  %853 = vrot.lane.b32.xlu0 %v762, 24
  %v854 = vpop.permute.xlu0 %853
  %855 = vrot.lane.b32.xlu0 %v763, 24
  %v856 = vpop.permute.xlu0 %855
  %857 = vrot.lane.b32.xlu0 %v764, 24
  %v858 = vpop.permute.xlu0 %857
  %859 = vrot.lane.b32.xlu0 %v765, 24
  %v860 = vpop.permute.xlu0 %859
  %861 = vrot.lane.b32.xlu0 %v766, 24
  %v862 = vpop.permute.xlu0 %861
  %vm895 = vcmask 261312
  %896 = vst.msk [vmem:[#allocation2] sm:$0xff] %vm895, %v800
  %897 = vst.msk [vmem:[#allocation2 + $0x8] sm:$0xff] %vm895, %v802
  %898 = vst.msk [vmem:[#allocation2 + $0x10] sm:$0xff] %vm895, %v804
  %899 = vst.msk [vmem:[#allocation2 + $0x18] sm:$0xff] %vm895, %v806
  %900 = vst.msk [vmem:[#allocation2 + $0x20] sm:$0xff] %vm895, %v808
  %901 = vst.msk [vmem:[#allocation2 + $0x28] sm:$0xff] %vm895, %v810
  %902 = vst.msk [vmem:[#allocation2 + $0x30] sm:$0xff] %vm895, %v812
  %903 = vst.msk [vmem:[#allocation2 + $0x38] sm:$0xff] %vm895, %v814
  %904 = vst.msk [vmem:[#allocation2 + $0x40] sm:$0xff] %vm895, %v816
  %905 = vst.msk [vmem:[#allocation2 + $0x48] sm:$0xff] %vm895, %v818
  %906 = vst.msk [vmem:[#allocation2 + $0x50] sm:$0xff] %vm895, %v820
  %907 = vst.msk [vmem:[#allocation2 + $0x58] sm:$0xff] %vm895, %v822
  %908 = vst.msk [vmem:[#allocation2 + $0x60] sm:$0xff] %vm895, %v824
  %909 = vst.msk [vmem:[#allocation2 + $0x68] sm:$0xff] %vm895, %v826
  %910 = vst.msk [vmem:[#allocation2 + $0x70] sm:$0xff] %vm895, %v828
  %911 = vst.msk [vmem:[#allocation2 + $0x78] sm:$0xff] %vm895, %v830
  %912 = vst.msk [vmem:[#allocation2 + $0x80] sm:$0xff] %vm895, %v832
  %913 = vst.msk [vmem:[#allocation2 + $0x88] sm:$0xff] %vm895, %v834
  %914 = vst.msk [vmem:[#allocation2 + $0x90] sm:$0xff] %vm895, %v836
  %915 = vst.msk [vmem:[#allocation2 + $0x98] sm:$0xff] %vm895, %v838
  %916 = vst.msk [vmem:[#allocation2 + $0xa0] sm:$0xff] %vm895, %v840
  %917 = vst.msk [vmem:[#allocation2 + $0xa8] sm:$0xff] %vm895, %v842
  %918 = vst.msk [vmem:[#allocation2 + $0xb0] sm:$0xff] %vm895, %v844
  %919 = vst.msk [vmem:[#allocation2 + $0xb8] sm:$0xff] %vm895, %v846
  %920 = vst.msk [vmem:[#allocation2 + $0xc0] sm:$0xff] %vm895, %v848
  %921 = vst.msk [vmem:[#allocation2 + $0xc8] sm:$0xff] %vm895, %v850
  %922 = vst.msk [vmem:[#allocation2 + $0xd0] sm:$0xff] %vm895, %v852
  %923 = vst.msk [vmem:[#allocation2 + $0xd8] sm:$0xff] %vm895, %v854
  %924 = vst.msk [vmem:[#allocation2 + $0xe0] sm:$0xff] %vm895, %v856
  %925 = vst.msk [vmem:[#allocation2 + $0xe8] sm:$0xff] %vm895, %v858
  %926 = vst.msk [vmem:[#allocation2 + $0xf0] sm:$0xff] %vm895, %v860
  %927 = vst.msk [vmem:[#allocation2 + $0xf8] sm:$0xff] %vm895, %v862
  %v928 = vld [vmem:[%s670 + $0x1] sm:$0xff]
  %v929 = vld [vmem:[%s670 + $0x9] sm:$0xff]
  %v930 = vld [vmem:[%s670 + $0x19] sm:$0xff]
  %v931 = vld [vmem:[%s670 + $0x21] sm:$0xff]
  %v932 = vld [vmem:[%s670 + $0x31] sm:$0xff]
  %v933 = vld [vmem:[%s670 + $0x39] sm:$0xff]
  %v934 = vld [vmem:[%s670 + $0x49] sm:$0xff]
  %v935 = vld [vmem:[%s670 + $0x51] sm:$0xff]
  %v936 = vld [vmem:[%s670 + $0x61] sm:$0xff]
  %v937 = vld [vmem:[%s670 + $0x69] sm:$0xff]
  %v938 = vld [vmem:[%s670 + $0x79] sm:$0xff]
  %v939 = vld [vmem:[%s670 + $0x81] sm:$0xff]
  %v940 = vld [vmem:[%s670 + $0x91] sm:$0xff]
  %v941 = vld [vmem:[%s670 + $0x99] sm:$0xff]
  %v942 = vld [vmem:[%s670 + $0xa9] sm:$0xff]
  %v943 = vld [vmem:[%s670 + $0xb1] sm:$0xff]
  %v944 = vld [vmem:[%s670 + $0xc1] sm:$0xff]
  %v945 = vld [vmem:[%s670 + $0xc9] sm:$0xff]
  %v946 = vld [vmem:[%s670 + $0xd9] sm:$0xff]
  %v947 = vld [vmem:[%s670 + $0xe1] sm:$0xff]
  %v948 = vld [vmem:[%s670 + $0xf1] sm:$0xff]
  %v949 = vld [vmem:[%s670 + $0xf9] sm:$0xff]
  %v950 = vld [vmem:[%s670 + $0x109] sm:$0xff]
  %v951 = vld [vmem:[%s670 + $0x111] sm:$0xff]
  %v952 = vld [vmem:[%s670 + $0x121] sm:$0xff]
  %v953 = vld [vmem:[%s670 + $0x129] sm:$0xff]
  %v954 = vld [vmem:[%s670 + $0x139] sm:$0xff]
  %v955 = vld [vmem:[%s670 + $0x141] sm:$0xff]
  %v956 = vld [vmem:[%s670 + $0x151] sm:$0xff]
  %v957 = vld [vmem:[%s670 + $0x159] sm:$0xff]
  %v958 = vld [vmem:[%s670 + $0x169] sm:$0xff]
  %v959 = vld [vmem:[%s670 + $0x171] sm:$0xff]
  %v960 = vld [vmem:[%s670 + $0x1b1] sm:$0xff]
  %v961 = vld [vmem:[%s670 + $0x1b9] sm:$0xff]
  %v962 = vld [vmem:[%s670 + $0x1c9] sm:$0xff]
  %v963 = vld [vmem:[%s670 + $0x1d1] sm:$0xff]
  %v964 = vld [vmem:[%s670 + $0x1e1] sm:$0xff]
  %v965 = vld [vmem:[%s670 + $0x1e9] sm:$0xff]
  %v966 = vld [vmem:[%s670 + $0x1f9] sm:$0xff]
  %v967 = vld [vmem:[%s670 + $0x201] sm:$0xff]
  %v968 = vld [vmem:[%s670 + $0x211] sm:$0xff]
  %v969 = vld [vmem:[%s670 + $0x219] sm:$0xff]
  %v970 = vld [vmem:[%s670 + $0x229] sm:$0xff]
  %v971 = vld [vmem:[%s670 + $0x231] sm:$0xff]
  %v972 = vld [vmem:[%s670 + $0x241] sm:$0xff]
  %v973 = vld [vmem:[%s670 + $0x249] sm:$0xff]
  %v974 = vld [vmem:[%s670 + $0x259] sm:$0xff]
  %v975 = vld [vmem:[%s670 + $0x261] sm:$0xff]
  %v976 = vld [vmem:[%s670 + $0x271] sm:$0xff]
  %v977 = vld [vmem:[%s670 + $0x279] sm:$0xff]
  %v978 = vld [vmem:[%s670 + $0x289] sm:$0xff]
  %v979 = vld [vmem:[%s670 + $0x291] sm:$0xff]
  %v980 = vld [vmem:[%s670 + $0x2a1] sm:$0xff]
  %v981 = vld [vmem:[%s670 + $0x2a9] sm:$0xff]
  %v982 = vld [vmem:[%s670 + $0x2b9] sm:$0xff]
  %v983 = vld [vmem:[%s670 + $0x2c1] sm:$0xff]
  %v984 = vld [vmem:[%s670 + $0x2d1] sm:$0xff]
  %v985 = vld [vmem:[%s670 + $0x2d9] sm:$0xff]
  %v986 = vld [vmem:[%s670 + $0x2e9] sm:$0xff]
  %v987 = vld [vmem:[%s670 + $0x2f1] sm:$0xff]
  %v988 = vld [vmem:[%s670 + $0x301] sm:$0xff]
  %v989 = vld [vmem:[%s670 + $0x309] sm:$0xff]
  %v990 = vld [vmem:[%s670 + $0x319] sm:$0xff]
  %v991 = vld [vmem:[%s670 + $0x321] sm:$0xff]
  %v992 = vpack.c.bf16 %v929, %v928
  %v993 = vpack.c.bf16 %v931, %v930
  %v994 = vpack.c.bf16 %v933, %v932
  %v995 = vpack.c.bf16 %v935, %v934
  %v996 = vpack.c.bf16 %v937, %v936
  %v997 = vpack.c.bf16 %v939, %v938
  %v998 = vpack.c.bf16 %v941, %v940
  %v999 = vpack.c.bf16 %v943, %v942
  %v1000 = vpack.c.bf16 %v945, %v944
  %v1001 = vpack.c.bf16 %v947, %v946
  %v1002 = vpack.c.bf16 %v949, %v948
  %v1003 = vpack.c.bf16 %v951, %v950
  %v1004 = vpack.c.bf16 %v953, %v952
  %v1005 = vpack.c.bf16 %v955, %v954
  %v1006 = vpack.c.bf16 %v957, %v956
  %v1007 = vpack.c.bf16 %v959, %v958
  %v1008 = vpack.c.bf16 %v961, %v960
  %v1009 = vpack.c.bf16 %v963, %v962
  %v1010 = vpack.c.bf16 %v965, %v964
  %v1011 = vpack.c.bf16 %v967, %v966
  %v1012 = vpack.c.bf16 %v969, %v968
  %v1013 = vpack.c.bf16 %v971, %v970
  %v1014 = vpack.c.bf16 %v973, %v972
  %v1015 = vpack.c.bf16 %v975, %v974
  %v1016 = vpack.c.bf16 %v977, %v976
  %v1017 = vpack.c.bf16 %v979, %v978
  %v1018 = vpack.c.bf16 %v981, %v980
  %v1019 = vpack.c.bf16 %v983, %v982
  %v1020 = vpack.c.bf16 %v985, %v984
  %v1021 = vpack.c.bf16 %v987, %v986
  %v1022 = vpack.c.bf16 %v989, %v988
  %v1023 = vpack.c.bf16 %v991, %v990
  %1056 = vrot.lane.b32.xlu0 %v992, 32
  %v1057 = vpop.permute.xlu0 %1056
  %1058 = vrot.lane.b32.xlu0 %v993, 32
  %v1059 = vpop.permute.xlu0 %1058
  %1060 = vrot.lane.b32.xlu0 %v994, 32
  %v1061 = vpop.permute.xlu0 %1060
  %1062 = vrot.lane.b32.xlu0 %v995, 32
  %v1063 = vpop.permute.xlu0 %1062
  %1064 = vrot.lane.b32.xlu0 %v996, 32
  %v1065 = vpop.permute.xlu0 %1064
  %1066 = vrot.lane.b32.xlu0 %v997, 32
  %v1067 = vpop.permute.xlu0 %1066
  %1068 = vrot.lane.b32.xlu0 %v998, 32
  %v1069 = vpop.permute.xlu0 %1068
  %1070 = vrot.lane.b32.xlu0 %v999, 32
  %v1071 = vpop.permute.xlu0 %1070
  %1072 = vrot.lane.b32.xlu0 %v1000, 32
  %v1073 = vpop.permute.xlu0 %1072
  %1074 = vrot.lane.b32.xlu0 %v1001, 32
  %v1075 = vpop.permute.xlu0 %1074
  %1076 = vrot.lane.b32.xlu0 %v1002, 32
  %v1077 = vpop.permute.xlu0 %1076
  %1078 = vrot.lane.b32.xlu0 %v1003, 32
  %v1079 = vpop.permute.xlu0 %1078
  %1080 = vrot.lane.b32.xlu0 %v1004, 32
  %v1081 = vpop.permute.xlu0 %1080
  %1082 = vrot.lane.b32.xlu0 %v1005, 32
  %v1083 = vpop.permute.xlu0 %1082
  %1084 = vrot.lane.b32.xlu0 %v1006, 32
  %v1085 = vpop.permute.xlu0 %1084
  %1086 = vrot.lane.b32.xlu0 %v1007, 32
  %v1087 = vpop.permute.xlu0 %1086
  %1088 = vrot.lane.b32.xlu0 %v1008, 32
  %v1089 = vpop.permute.xlu0 %1088
  %1090 = vrot.lane.b32.xlu0 %v1009, 32
  %v1091 = vpop.permute.xlu0 %1090
  %1092 = vrot.lane.b32.xlu0 %v1010, 32
  %v1093 = vpop.permute.xlu0 %1092
  %1094 = vrot.lane.b32.xlu0 %v1011, 32
  %v1095 = vpop.permute.xlu0 %1094
  %1096 = vrot.lane.b32.xlu0 %v1012, 32
  %v1097 = vpop.permute.xlu0 %1096
  %1098 = vrot.lane.b32.xlu0 %v1013, 32
  %v1099 = vpop.permute.xlu0 %1098
  %1100 = vrot.lane.b32.xlu0 %v1014, 32
  %v1101 = vpop.permute.xlu0 %1100
  %1102 = vrot.lane.b32.xlu0 %v1015, 32
  %v1103 = vpop.permute.xlu0 %1102
  %1104 = vrot.lane.b32.xlu0 %v1016, 32
  %v1105 = vpop.permute.xlu0 %1104
  %1106 = vrot.lane.b32.xlu0 %v1017, 32
  %v1107 = vpop.permute.xlu0 %1106
  %1108 = vrot.lane.b32.xlu0 %v1018, 32
  %v1109 = vpop.permute.xlu0 %1108
  %1110 = vrot.lane.b32.xlu0 %v1019, 32
  %v1111 = vpop.permute.xlu0 %1110
  %1112 = vrot.lane.b32.xlu0 %v1020, 32
  %v1113 = vpop.permute.xlu0 %1112
  %1114 = vrot.lane.b32.xlu0 %v1021, 32
  %v1115 = vpop.permute.xlu0 %1114
  %1116 = vrot.lane.b32.xlu0 %v1022, 32
  %v1117 = vpop.permute.xlu0 %1116
  %1118 = vrot.lane.b32.xlu0 %v1023, 32
  %v1119 = vpop.permute.xlu0 %1118
  %vm1152 = vcmask 326912
  %1153 = vst.msk [vmem:[#allocation2] sm:$0xff] %vm1152, %v1057
  %1154 = vst.msk [vmem:[#allocation2 + $0x8] sm:$0xff] %vm1152, %v1059
  %1155 = vst.msk [vmem:[#allocation2 + $0x10] sm:$0xff] %vm1152, %v1061
  %1156 = vst.msk [vmem:[#allocation2 + $0x18] sm:$0xff] %vm1152, %v1063
  %1157 = vst.msk [vmem:[#allocation2 + $0x20] sm:$0xff] %vm1152, %v1065
  %1158 = vst.msk [vmem:[#allocation2 + $0x28] sm:$0xff] %vm1152, %v1067
  %1159 = vst.msk [vmem:[#allocation2 + $0x30] sm:$0xff] %vm1152, %v1069
  %1160 = vst.msk [vmem:[#allocation2 + $0x38] sm:$0xff] %vm1152, %v1071
  %1161 = vst.msk [vmem:[#allocation2 + $0x40] sm:$0xff] %vm1152, %v1073
  %1162 = vst.msk [vmem:[#allocation2 + $0x48] sm:$0xff] %vm1152, %v1075
  %1163 = vst.msk [vmem:[#allocation2 + $0x50] sm:$0xff] %vm1152, %v1077
  %1164 = vst.msk [vmem:[#allocation2 + $0x58] sm:$0xff] %vm1152, %v1079
  %1165 = vst.msk [vmem:[#allocation2 + $0x60] sm:$0xff] %vm1152, %v1081
  %1166 = vst.msk [vmem:[#allocation2 + $0x68] sm:$0xff] %vm1152, %v1083
  %1167 = vst.msk [vmem:[#allocation2 + $0x70] sm:$0xff] %vm1152, %v1085
  %1168 = vst.msk [vmem:[#allocation2 + $0x78] sm:$0xff] %vm1152, %v1087
  %1169 = vst.msk [vmem:[#allocation2 + $0x80] sm:$0xff] %vm1152, %v1089
  %1170 = vst.msk [vmem:[#allocation2 + $0x88] sm:$0xff] %vm1152, %v1091
  %1171 = vst.msk [vmem:[#allocation2 + $0x90] sm:$0xff] %vm1152, %v1093
  %1172 = vst.msk [vmem:[#allocation2 + $0x98] sm:$0xff] %vm1152, %v1095
  %1173 = vst.msk [vmem:[#allocation2 + $0xa0] sm:$0xff] %vm1152, %v1097
  %1174 = vst.msk [vmem:[#allocation2 + $0xa8] sm:$0xff] %vm1152, %v1099
  %1175 = vst.msk [vmem:[#allocation2 + $0xb0] sm:$0xff] %vm1152, %v1101
  %1176 = vst.msk [vmem:[#allocation2 + $0xb8] sm:$0xff] %vm1152, %v1103
  %1177 = vst.msk [vmem:[#allocation2 + $0xc0] sm:$0xff] %vm1152, %v1105
  %1178 = vst.msk [vmem:[#allocation2 + $0xc8] sm:$0xff] %vm1152, %v1107
  %1179 = vst.msk [vmem:[#allocation2 + $0xd0] sm:$0xff] %vm1152, %v1109
  %1180 = vst.msk [vmem:[#allocation2 + $0xd8] sm:$0xff] %vm1152, %v1111
  %1181 = vst.msk [vmem:[#allocation2 + $0xe0] sm:$0xff] %vm1152, %v1113
  %1182 = vst.msk [vmem:[#allocation2 + $0xe8] sm:$0xff] %vm1152, %v1115
  %1183 = vst.msk [vmem:[#allocation2 + $0xf0] sm:$0xff] %vm1152, %v1117
  %1184 = vst.msk [vmem:[#allocation2 + $0xf8] sm:$0xff] %vm1152, %v1119
  %v1185 = vld [vmem:[%s670 + $0x2] sm:$0xff]
  %v1186 = vld [vmem:[%s670 + $0xa] sm:$0xff]
  %v1187 = vld [vmem:[%s670 + $0x1a] sm:$0xff]
  %v1188 = vld [vmem:[%s670 + $0x22] sm:$0xff]
  %v1189 = vld [vmem:[%s670 + $0x32] sm:$0xff]
  %v1190 = vld [vmem:[%s670 + $0x3a] sm:$0xff]
  %v1191 = vld [vmem:[%s670 + $0x4a] sm:$0xff]
  %v1192 = vld [vmem:[%s670 + $0x52] sm:$0xff]
  %v1193 = vld [vmem:[%s670 + $0x62] sm:$0xff]
  %v1194 = vld [vmem:[%s670 + $0x6a] sm:$0xff]
  %v1195 = vld [vmem:[%s670 + $0x7a] sm:$0xff]
  %v1196 = vld [vmem:[%s670 + $0x82] sm:$0xff]
  %v1197 = vld [vmem:[%s670 + $0x92] sm:$0xff]
  %v1198 = vld [vmem:[%s670 + $0x9a] sm:$0xff]
  %v1199 = vld [vmem:[%s670 + $0xaa] sm:$0xff]
  %v1200 = vld [vmem:[%s670 + $0xb2] sm:$0xff]
  %v1201 = vld [vmem:[%s670 + $0xc2] sm:$0xff]
  %v1202 = vld [vmem:[%s670 + $0xca] sm:$0xff]
  %v1203 = vld [vmem:[%s670 + $0xda] sm:$0xff]
  %v1204 = vld [vmem:[%s670 + $0xe2] sm:$0xff]
  %v1205 = vld [vmem:[%s670 + $0xf2] sm:$0xff]
  %v1206 = vld [vmem:[%s670 + $0xfa] sm:$0xff]
  %v1207 = vld [vmem:[%s670 + $0x10a] sm:$0xff]
  %v1208 = vld [vmem:[%s670 + $0x112] sm:$0xff]
  %v1209 = vld [vmem:[%s670 + $0x122] sm:$0xff]
  %v1210 = vld [vmem:[%s670 + $0x12a] sm:$0xff]
  %v1211 = vld [vmem:[%s670 + $0x13a] sm:$0xff]
  %v1212 = vld [vmem:[%s670 + $0x142] sm:$0xff]
  %v1213 = vld [vmem:[%s670 + $0x152] sm:$0xff]
  %v1214 = vld [vmem:[%s670 + $0x15a] sm:$0xff]
  %v1215 = vld [vmem:[%s670 + $0x16a] sm:$0xff]
  %v1216 = vld [vmem:[%s670 + $0x172] sm:$0xff]
  %v1217 = vld [vmem:[%s670 + $0x1b2] sm:$0xff]
  %v1218 = vld [vmem:[%s670 + $0x1ba] sm:$0xff]
  %v1219 = vld [vmem:[%s670 + $0x1ca] sm:$0xff]
  %v1220 = vld [vmem:[%s670 + $0x1d2] sm:$0xff]
  %v1221 = vld [vmem:[%s670 + $0x1e2] sm:$0xff]
  %v1222 = vld [vmem:[%s670 + $0x1ea] sm:$0xff]
  %v1223 = vld [vmem:[%s670 + $0x1fa] sm:$0xff]
  %v1224 = vld [vmem:[%s670 + $0x202] sm:$0xff]
  %v1225 = vld [vmem:[%s670 + $0x212] sm:$0xff]
  %v1226 = vld [vmem:[%s670 + $0x21a] sm:$0xff]
  %v1227 = vld [vmem:[%s670 + $0x22a] sm:$0xff]
  %v1228 = vld [vmem:[%s670 + $0x232] sm:$0xff]
  %v1229 = vld [vmem:[%s670 + $0x242] sm:$0xff]
  %v1230 = vld [vmem:[%s670 + $0x24a] sm:$0xff]
  %v1231 = vld [vmem:[%s670 + $0x25a] sm:$0xff]
  %v1232 = vld [vmem:[%s670 + $0x262] sm:$0xff]
  %v1233 = vld [vmem:[%s670 + $0x272] sm:$0xff]
  %v1234 = vld [vmem:[%s670 + $0x27a] sm:$0xff]
  %v1235 = vld [vmem:[%s670 + $0x28a] sm:$0xff]
  %v1236 = vld [vmem:[%s670 + $0x292] sm:$0xff]
  %v1237 = vld [vmem:[%s670 + $0x2a2] sm:$0xff]
  %v1238 = vld [vmem:[%s670 + $0x2aa] sm:$0xff]
  %v1239 = vld [vmem:[%s670 + $0x2ba] sm:$0xff]
  %v1240 = vld [vmem:[%s670 + $0x2c2] sm:$0xff]
  %v1241 = vld [vmem:[%s670 + $0x2d2] sm:$0xff]
  %v1242 = vld [vmem:[%s670 + $0x2da] sm:$0xff]
  %v1243 = vld [vmem:[%s670 + $0x2ea] sm:$0xff]
  %v1244 = vld [vmem:[%s670 + $0x2f2] sm:$0xff]
  %v1245 = vld [vmem:[%s670 + $0x302] sm:$0xff]
  %v1246 = vld [vmem:[%s670 + $0x30a] sm:$0xff]
  %v1247 = vld [vmem:[%s670 + $0x31a] sm:$0xff]
  %v1248 = vld [vmem:[%s670 + $0x322] sm:$0xff]
  %v1249 = vpack.c.bf16 %v1186, %v1185
  %v1250 = vpack.c.bf16 %v1188, %v1187
  %v1251 = vpack.c.bf16 %v1190, %v1189
  %v1252 = vpack.c.bf16 %v1192, %v1191
  %v1253 = vpack.c.bf16 %v1194, %v1193
  %v1254 = vpack.c.bf16 %v1196, %v1195
  %v1255 = vpack.c.bf16 %v1198, %v1197
  %v1256 = vpack.c.bf16 %v1200, %v1199
  %v1257 = vpack.c.bf16 %v1202, %v1201
  %v1258 = vpack.c.bf16 %v1204, %v1203
  %v1259 = vpack.c.bf16 %v1206, %v1205
  %v1260 = vpack.c.bf16 %v1208, %v1207
  %v1261 = vpack.c.bf16 %v1210, %v1209
  %v1262 = vpack.c.bf16 %v1212, %v1211
  %v1263 = vpack.c.bf16 %v1214, %v1213
  %v1264 = vpack.c.bf16 %v1216, %v1215
  %v1265 = vpack.c.bf16 %v1218, %v1217
  %v1266 = vpack.c.bf16 %v1220, %v1219
  %v1267 = vpack.c.bf16 %v1222, %v1221
  %v1268 = vpack.c.bf16 %v1224, %v1223
  %v1269 = vpack.c.bf16 %v1226, %v1225
  %v1270 = vpack.c.bf16 %v1228, %v1227
  %v1271 = vpack.c.bf16 %v1230, %v1229
  %v1272 = vpack.c.bf16 %v1232, %v1231
  %v1273 = vpack.c.bf16 %v1234, %v1233
  %v1274 = vpack.c.bf16 %v1236, %v1235
  %v1275 = vpack.c.bf16 %v1238, %v1237
  %v1276 = vpack.c.bf16 %v1240, %v1239
  %v1277 = vpack.c.bf16 %v1242, %v1241
  %v1278 = vpack.c.bf16 %v1244, %v1243
  %v1279 = vpack.c.bf16 %v1246, %v1245
  %v1280 = vpack.c.bf16 %v1248, %v1247
  %1313 = vrot.lane.b32.xlu0 %v1249, 40
  %v1314 = vpop.permute.xlu0 %1313
  %1315 = vrot.lane.b32.xlu0 %v1250, 40
  %v1316 = vpop.permute.xlu0 %1315
  %1317 = vrot.lane.b32.xlu0 %v1251, 40
  %v1318 = vpop.permute.xlu0 %1317
  %1319 = vrot.lane.b32.xlu0 %v1252, 40
  %v1320 = vpop.permute.xlu0 %1319
  %1321 = vrot.lane.b32.xlu0 %v1253, 40
  %v1322 = vpop.permute.xlu0 %1321
  %1323 = vrot.lane.b32.xlu0 %v1254, 40
  %v1324 = vpop.permute.xlu0 %1323
  %1325 = vrot.lane.b32.xlu0 %v1255, 40
  %v1326 = vpop.permute.xlu0 %1325
  %1327 = vrot.lane.b32.xlu0 %v1256, 40
  %v1328 = vpop.permute.xlu0 %1327
  %1329 = vrot.lane.b32.xlu0 %v1257, 40
  %v1330 = vpop.permute.xlu0 %1329
  %1331 = vrot.lane.b32.xlu0 %v1258, 40
  %v1332 = vpop.permute.xlu0 %1331
  %1333 = vrot.lane.b32.xlu0 %v1259, 40
  %v1334 = vpop.permute.xlu0 %1333
  %1335 = vrot.lane.b32.xlu0 %v1260, 40
  %v1336 = vpop.permute.xlu0 %1335
  %1337 = vrot.lane.b32.xlu0 %v1261, 40
  %v1338 = vpop.permute.xlu0 %1337
  %1339 = vrot.lane.b32.xlu0 %v1262, 40
  %v1340 = vpop.permute.xlu0 %1339
  %1341 = vrot.lane.b32.xlu0 %v1263, 40
  %v1342 = vpop.permute.xlu0 %1341
  %1343 = vrot.lane.b32.xlu0 %v1264, 40
  %v1344 = vpop.permute.xlu0 %1343
  %1345 = vrot.lane.b32.xlu0 %v1265, 40
  %v1346 = vpop.permute.xlu0 %1345
  %1347 = vrot.lane.b32.xlu0 %v1266, 40
  %v1348 = vpop.permute.xlu0 %1347
  %1349 = vrot.lane.b32.xlu0 %v1267, 40
  %v1350 = vpop.permute.xlu0 %1349
  %1351 = vrot.lane.b32.xlu0 %v1268, 40
  %v1352 = vpop.permute.xlu0 %1351
  %1353 = vrot.lane.b32.xlu0 %v1269, 40
  %v1354 = vpop.permute.xlu0 %1353
  %1355 = vrot.lane.b32.xlu0 %v1270, 40
  %v1356 = vpop.permute.xlu0 %1355
  %1357 = vrot.lane.b32.xlu0 %v1271, 40
  %v1358 = vpop.permute.xlu0 %1357
  %1359 = vrot.lane.b32.xlu0 %v1272, 40
  %v1360 = vpop.permute.xlu0 %1359
  %1361 = vrot.lane.b32.xlu0 %v1273, 40
  %v1362 = vpop.permute.xlu0 %1361
  %1363 = vrot.lane.b32.xlu0 %v1274, 40
  %v1364 = vpop.permute.xlu0 %1363
  %1365 = vrot.lane.b32.xlu0 %v1275, 40
  %v1366 = vpop.permute.xlu0 %1365
  %1367 = vrot.lane.b32.xlu0 %v1276, 40
  %v1368 = vpop.permute.xlu0 %1367
  %1369 = vrot.lane.b32.xlu0 %v1277, 40
  %v1370 = vpop.permute.xlu0 %1369
  %1371 = vrot.lane.b32.xlu0 %v1278, 40
  %v1372 = vpop.permute.xlu0 %1371
  %1373 = vrot.lane.b32.xlu0 %v1279, 40
  %v1374 = vpop.permute.xlu0 %1373
  %1375 = vrot.lane.b32.xlu0 %v1280, 40
  %v1376 = vpop.permute.xlu0 %1375
  %vm1409 = vcmask 392512
  %1410 = vst.msk [vmem:[#allocation2] sm:$0xff] %vm1409, %v1314
  %1411 = vst.msk [vmem:[#allocation2 + $0x8] sm:$0xff] %vm1409, %v1316
  %1412 = vst.msk [vmem:[#allocation2 + $0x10] sm:$0xff] %vm1409, %v1318
  %1413 = vst.msk [vmem:[#allocation2 + $0x18] sm:$0xff] %vm1409, %v1320
  %1414 = vst.msk [vmem:[#allocation2 + $0x20] sm:$0xff] %vm1409, %v1322
  %1415 = vst.msk [vmem:[#allocation2 + $0x28] sm:$0xff] %vm1409, %v1324
  %1416 = vst.msk [vmem:[#allocation2 + $0x30] sm:$0xff] %vm1409, %v1326
  %1417 = vst.msk [vmem:[#allocation2 + $0x38] sm:$0xff] %vm1409, %v1328
  %1418 = vst.msk [vmem:[#allocation2 + $0x40] sm:$0xff] %vm1409, %v1330
  %1419 = vst.msk [vmem:[#allocation2 + $0x48] sm:$0xff] %vm1409, %v1332
  %1420 = vst.msk [vmem:[#allocation2 + $0x50] sm:$0xff] %vm1409, %v1334
  %1421 = vst.msk [vmem:[#allocation2 + $0x58] sm:$0xff] %vm1409, %v1336
  %1422 = vst.msk [vmem:[#allocation2 + $0x60] sm:$0xff] %vm1409, %v1338
  %1423 = vst.msk [vmem:[#allocation2 + $0x68] sm:$0xff] %vm1409, %v1340
  %1424 = vst.msk [vmem:[#allocation2 + $0x70] sm:$0xff] %vm1409, %v1342
  %1425 = vst.msk [vmem:[#allocation2 + $0x78] sm:$0xff] %vm1409, %v1344
  %1426 = vst.msk [vmem:[#allocation2 + $0x80] sm:$0xff] %vm1409, %v1346
  %1427 = vst.msk [vmem:[#allocation2 + $0x88] sm:$0xff] %vm1409, %v1348
  %1428 = vst.msk [vmem:[#allocation2 + $0x90] sm:$0xff] %vm1409, %v1350
  %1429 = vst.msk [vmem:[#allocation2 + $0x98] sm:$0xff] %vm1409, %v1352
  %1430 = vst.msk [vmem:[#allocation2 + $0xa0] sm:$0xff] %vm1409, %v1354
  %1431 = vst.msk [vmem:[#allocation2 + $0xa8] sm:$0xff] %vm1409, %v1356
  %1432 = vst.msk [vmem:[#allocation2 + $0xb0] sm:$0xff] %vm1409, %v1358
  %1433 = vst.msk [vmem:[#allocation2 + $0xb8] sm:$0xff] %vm1409, %v1360
  %1434 = vst.msk [vmem:[#allocation2 + $0xc0] sm:$0xff] %vm1409, %v1362
  %1435 = vst.msk [vmem:[#allocation2 + $0xc8] sm:$0xff] %vm1409, %v1364
  %1436 = vst.msk [vmem:[#allocation2 + $0xd0] sm:$0xff] %vm1409, %v1366
  %1437 = vst.msk [vmem:[#allocation2 + $0xd8] sm:$0xff] %vm1409, %v1368
  %1438 = vst.msk [vmem:[#allocation2 + $0xe0] sm:$0xff] %vm1409, %v1370
  %1439 = vst.msk [vmem:[#allocation2 + $0xe8] sm:$0xff] %vm1409, %v1372
  %1440 = vst.msk [vmem:[#allocation2 + $0xf0] sm:$0xff] %vm1409, %v1374
  %1441 = vst.msk [vmem:[#allocation2 + $0xf8] sm:$0xff] %vm1409, %v1376
  %s1442 = scalar_lea.vmem %s0, 48
  %v1443 = vld [vmem:[%s1442] sm:$0xff]
  %v1444 = vld [vmem:[%s1442 + $0x8] sm:$0xff]
  %v1445 = vld [vmem:[%s1442 + $0x18] sm:$0xff]
  %v1446 = vld [vmem:[%s1442 + $0x20] sm:$0xff]
  %v1447 = vld [vmem:[%s1442 + $0x30] sm:$0xff]
  %v1448 = vld [vmem:[%s1442 + $0x38] sm:$0xff]
  %v1449 = vld [vmem:[%s1442 + $0x48] sm:$0xff]
  %v1450 = vld [vmem:[%s1442 + $0x50] sm:$0xff]
  %v1451 = vld [vmem:[%s1442 + $0x60] sm:$0xff]
  %v1452 = vld [vmem:[%s1442 + $0x68] sm:$0xff]
  %v1453 = vld [vmem:[%s1442 + $0x78] sm:$0xff]
  %v1454 = vld [vmem:[%s1442 + $0x80] sm:$0xff]
  %v1455 = vld [vmem:[%s1442 + $0x90] sm:$0xff]
  %v1456 = vld [vmem:[%s1442 + $0x98] sm:$0xff]
  %v1457 = vld [vmem:[%s1442 + $0xa8] sm:$0xff]
  %v1458 = vld [vmem:[%s1442 + $0xb0] sm:$0xff]
  %v1459 = vld [vmem:[%s1442 + $0xc0] sm:$0xff]
  %v1460 = vld [vmem:[%s1442 + $0xc8] sm:$0xff]
  %v1461 = vld [vmem:[%s1442 + $0xd8] sm:$0xff]
  %v1462 = vld [vmem:[%s1442 + $0xe0] sm:$0xff]
  %v1463 = vld [vmem:[%s1442 + $0xf0] sm:$0xff]
  %v1464 = vld [vmem:[%s1442 + $0xf8] sm:$0xff]
  %v1465 = vld [vmem:[%s1442 + $0x108] sm:$0xff]
  %v1466 = vld [vmem:[%s1442 + $0x110] sm:$0xff]
  %v1467 = vld [vmem:[%s1442 + $0x120] sm:$0xff]
  %v1468 = vld [vmem:[%s1442 + $0x128] sm:$0xff]
  %v1469 = vld [vmem:[%s1442 + $0x138] sm:$0xff]
  %v1470 = vld [vmem:[%s1442 + $0x140] sm:$0xff]
  %v1471 = vld [vmem:[%s1442 + $0x150] sm:$0xff]
  %v1472 = vld [vmem:[%s1442 + $0x158] sm:$0xff]
  %v1473 = vld [vmem:[%s1442 + $0x168] sm:$0xff]
  %v1474 = vld [vmem:[%s1442 + $0x170] sm:$0xff]
  %v1475 = vld [vmem:[%s1442 + $0x1b0] sm:$0xff]
  %v1476 = vld [vmem:[%s1442 + $0x1b8] sm:$0xff]
  %v1477 = vld [vmem:[%s1442 + $0x1c8] sm:$0xff]
  %v1478 = vld [vmem:[%s1442 + $0x1d0] sm:$0xff]
  %v1479 = vld [vmem:[%s1442 + $0x1e0] sm:$0xff]
  %v1480 = vld [vmem:[%s1442 + $0x1e8] sm:$0xff]
  %v1481 = vld [vmem:[%s1442 + $0x1f8] sm:$0xff]
  %v1482 = vld [vmem:[%s1442 + $0x200] sm:$0xff]
  %v1483 = vld [vmem:[%s1442 + $0x210] sm:$0xff]
  %v1484 = vld [vmem:[%s1442 + $0x218] sm:$0xff]
  %v1485 = vld [vmem:[%s1442 + $0x228] sm:$0xff]
  %v1486 = vld [vmem:[%s1442 + $0x230] sm:$0xff]
  %v1487 = vld [vmem:[%s1442 + $0x240] sm:$0xff]
  %v1488 = vld [vmem:[%s1442 + $0x248] sm:$0xff]
  %v1489 = vld [vmem:[%s1442 + $0x258] sm:$0xff]
  %v1490 = vld [vmem:[%s1442 + $0x260] sm:$0xff]
  %v1491 = vld [vmem:[%s1442 + $0x270] sm:$0xff]
  %v1492 = vld [vmem:[%s1442 + $0x278] sm:$0xff]
  %v1493 = vld [vmem:[%s1442 + $0x288] sm:$0xff]
  %v1494 = vld [vmem:[%s1442 + $0x290] sm:$0xff]
  %v1495 = vld [vmem:[%s1442 + $0x2a0] sm:$0xff]
  %v1496 = vld [vmem:[%s1442 + $0x2a8] sm:$0xff]
  %v1497 = vld [vmem:[%s1442 + $0x2b8] sm:$0xff]
  %v1498 = vld [vmem:[%s1442 + $0x2c0] sm:$0xff]
  %v1499 = vld [vmem:[%s1442 + $0x2d0] sm:$0xff]
  %v1500 = vld [vmem:[%s1442 + $0x2d8] sm:$0xff]
  %v1501 = vld [vmem:[%s1442 + $0x2e8] sm:$0xff]
  %v1502 = vld [vmem:[%s1442 + $0x2f0] sm:$0xff]
  %v1503 = vld [vmem:[%s1442 + $0x300] sm:$0xff]
  %v1504 = vld [vmem:[%s1442 + $0x308] sm:$0xff]
  %v1505 = vld [vmem:[%s1442 + $0x318] sm:$0xff]
  %v1506 = vld [vmem:[%s1442 + $0x320] sm:$0xff]
  %v1507 = vpack.c.bf16 %v1444, %v1443
  %v1508 = vpack.c.bf16 %v1446, %v1445
  %v1509 = vpack.c.bf16 %v1448, %v1447
  %v1510 = vpack.c.bf16 %v1450, %v1449
  %v1511 = vpack.c.bf16 %v1452, %v1451
  %v1512 = vpack.c.bf16 %v1454, %v1453
  %v1513 = vpack.c.bf16 %v1456, %v1455
  %v1514 = vpack.c.bf16 %v1458, %v1457
  %v1515 = vpack.c.bf16 %v1460, %v1459
  %v1516 = vpack.c.bf16 %v1462, %v1461
  %v1517 = vpack.c.bf16 %v1464, %v1463
  %v1518 = vpack.c.bf16 %v1466, %v1465
  %v1519 = vpack.c.bf16 %v1468, %v1467
  %v1520 = vpack.c.bf16 %v1470, %v1469
  %v1521 = vpack.c.bf16 %v1472, %v1471
  %v1522 = vpack.c.bf16 %v1474, %v1473
  %v1523 = vpack.c.bf16 %v1476, %v1475
  %v1524 = vpack.c.bf16 %v1478, %v1477
  %v1525 = vpack.c.bf16 %v1480, %v1479
  %v1526 = vpack.c.bf16 %v1482, %v1481
  %v1527 = vpack.c.bf16 %v1484, %v1483
  %v1528 = vpack.c.bf16 %v1486, %v1485
  %v1529 = vpack.c.bf16 %v1488, %v1487
  %v1530 = vpack.c.bf16 %v1490, %v1489
  %v1531 = vpack.c.bf16 %v1492, %v1491
  %v1532 = vpack.c.bf16 %v1494, %v1493
  %v1533 = vpack.c.bf16 %v1496, %v1495
  %v1534 = vpack.c.bf16 %v1498, %v1497
  %v1535 = vpack.c.bf16 %v1500, %v1499
  %v1536 = vpack.c.bf16 %v1502, %v1501
  %v1537 = vpack.c.bf16 %v1504, %v1503
  %v1538 = vpack.c.bf16 %v1506, %v1505
  %1571 = vrot.lane.b32.xlu0 %v1507, 48
  %v1572 = vpop.permute.xlu0 %1571
  %1573 = vrot.lane.b32.xlu0 %v1508, 48
  %v1574 = vpop.permute.xlu0 %1573
  %1575 = vrot.lane.b32.xlu0 %v1509, 48
  %v1576 = vpop.permute.xlu0 %1575
  %1577 = vrot.lane.b32.xlu0 %v1510, 48
  %v1578 = vpop.permute.xlu0 %1577
  %1579 = vrot.lane.b32.xlu0 %v1511, 48
  %v1580 = vpop.permute.xlu0 %1579
  %1581 = vrot.lane.b32.xlu0 %v1512, 48
  %v1582 = vpop.permute.xlu0 %1581
  %1583 = vrot.lane.b32.xlu0 %v1513, 48
  %v1584 = vpop.permute.xlu0 %1583
  %1585 = vrot.lane.b32.xlu0 %v1514, 48
  %v1586 = vpop.permute.xlu0 %1585
  %1587 = vrot.lane.b32.xlu0 %v1515, 48
  %v1588 = vpop.permute.xlu0 %1587
  %1589 = vrot.lane.b32.xlu0 %v1516, 48
  %v1590 = vpop.permute.xlu0 %1589
  %1591 = vrot.lane.b32.xlu0 %v1517, 48
  %v1592 = vpop.permute.xlu0 %1591
  %1593 = vrot.lane.b32.xlu0 %v1518, 48
  %v1594 = vpop.permute.xlu0 %1593
  %1595 = vrot.lane.b32.xlu0 %v1519, 48
  %v1596 = vpop.permute.xlu0 %1595
  %1597 = vrot.lane.b32.xlu0 %v1520, 48
  %v1598 = vpop.permute.xlu0 %1597
  %1599 = vrot.lane.b32.xlu0 %v1521, 48
  %v1600 = vpop.permute.xlu0 %1599
  %1601 = vrot.lane.b32.xlu0 %v1522, 48
  %v1602 = vpop.permute.xlu0 %1601
  %1603 = vrot.lane.b32.xlu0 %v1523, 48
  %v1604 = vpop.permute.xlu0 %1603
  %1605 = vrot.lane.b32.xlu0 %v1524, 48
  %v1606 = vpop.permute.xlu0 %1605
  %1607 = vrot.lane.b32.xlu0 %v1525, 48
  %v1608 = vpop.permute.xlu0 %1607
  %1609 = vrot.lane.b32.xlu0 %v1526, 48
  %v1610 = vpop.permute.xlu0 %1609
  %1611 = vrot.lane.b32.xlu0 %v1527, 48
  %v1612 = vpop.permute.xlu0 %1611
  %1613 = vrot.lane.b32.xlu0 %v1528, 48
  %v1614 = vpop.permute.xlu0 %1613
  %1615 = vrot.lane.b32.xlu0 %v1529, 48
  %v1616 = vpop.permute.xlu0 %1615
  %1617 = vrot.lane.b32.xlu0 %v1530, 48
  %v1618 = vpop.permute.xlu0 %1617
  %1619 = vrot.lane.b32.xlu0 %v1531, 48
  %v1620 = vpop.permute.xlu0 %1619
  %1621 = vrot.lane.b32.xlu0 %v1532, 48
  %v1622 = vpop.permute.xlu0 %1621
  %1623 = vrot.lane.b32.xlu0 %v1533, 48
  %v1624 = vpop.permute.xlu0 %1623
  %1625 = vrot.lane.b32.xlu0 %v1534, 48
  %v1626 = vpop.permute.xlu0 %1625
  %1627 = vrot.lane.b32.xlu0 %v1535, 48
  %v1628 = vpop.permute.xlu0 %1627
  %1629 = vrot.lane.b32.xlu0 %v1536, 48
  %v1630 = vpop.permute.xlu0 %1629
  %1631 = vrot.lane.b32.xlu0 %v1537, 48
  %v1632 = vpop.permute.xlu0 %1631
  %1633 = vrot.lane.b32.xlu0 %v1538, 48
  %v1634 = vpop.permute.xlu0 %1633
  %vm1667 = vcmask 458112
  %1668 = vst.msk [vmem:[#allocation2] sm:$0xff] %vm1667, %v1572
  %1669 = vst.msk [vmem:[#allocation2 + $0x8] sm:$0xff] %vm1667, %v1574
  %1670 = vst.msk [vmem:[#allocation2 + $0x10] sm:$0xff] %vm1667, %v1576
  %1671 = vst.msk [vmem:[#allocation2 + $0x18] sm:$0xff] %vm1667, %v1578
  %1672 = vst.msk [vmem:[#allocation2 + $0x20] sm:$0xff] %vm1667, %v1580
  %1673 = vst.msk [vmem:[#allocation2 + $0x28] sm:$0xff] %vm1667, %v1582
  %1674 = vst.msk [vmem:[#allocation2 + $0x30] sm:$0xff] %vm1667, %v1584
  %1675 = vst.msk [vmem:[#allocation2 + $0x38] sm:$0xff] %vm1667, %v1586
  %1676 = vst.msk [vmem:[#allocation2 + $0x40] sm:$0xff] %vm1667, %v1588
  %1677 = vst.msk [vmem:[#allocation2 + $0x48] sm:$0xff] %vm1667, %v1590
  %1678 = vst.msk [vmem:[#allocation2 + $0x50] sm:$0xff] %vm1667, %v1592
  %1679 = vst.msk [vmem:[#allocation2 + $0x58] sm:$0xff] %vm1667, %v1594
  %1680 = vst.msk [vmem:[#allocation2 + $0x60] sm:$0xff] %vm1667, %v1596
  %1681 = vst.msk [vmem:[#allocation2 + $0x68] sm:$0xff] %vm1667, %v1598
  %1682 = vst.msk [vmem:[#allocation2 + $0x70] sm:$0xff] %vm1667, %v1600
  %1683 = vst.msk [vmem:[#allocation2 + $0x78] sm:$0xff] %vm1667, %v1602
  %1684 = vst.msk [vmem:[#allocation2 + $0x80] sm:$0xff] %vm1667, %v1604
  %1685 = vst.msk [vmem:[#allocation2 + $0x88] sm:$0xff] %vm1667, %v1606
  %1686 = vst.msk [vmem:[#allocation2 + $0x90] sm:$0xff] %vm1667, %v1608
  %1687 = vst.msk [vmem:[#allocation2 + $0x98] sm:$0xff] %vm1667, %v1610
  %1688 = vst.msk [vmem:[#allocation2 + $0xa0] sm:$0xff] %vm1667, %v1612
  %1689 = vst.msk [vmem:[#allocation2 + $0xa8] sm:$0xff] %vm1667, %v1614
  %1690 = vst.msk [vmem:[#allocation2 + $0xb0] sm:$0xff] %vm1667, %v1616
  %1691 = vst.msk [vmem:[#allocation2 + $0xb8] sm:$0xff] %vm1667, %v1618
  %1692 = vst.msk [vmem:[#allocation2 + $0xc0] sm:$0xff] %vm1667, %v1620
  %1693 = vst.msk [vmem:[#allocation2 + $0xc8] sm:$0xff] %vm1667, %v1622
  %1694 = vst.msk [vmem:[#allocation2 + $0xd0] sm:$0xff] %vm1667, %v1624
  %1695 = vst.msk [vmem:[#allocation2 + $0xd8] sm:$0xff] %vm1667, %v1626
  %1696 = vst.msk [vmem:[#allocation2 + $0xe0] sm:$0xff] %vm1667, %v1628
  %1697 = vst.msk [vmem:[#allocation2 + $0xe8] sm:$0xff] %vm1667, %v1630
  %1698 = vst.msk [vmem:[#allocation2 + $0xf0] sm:$0xff] %vm1667, %v1632
  %1699 = vst.msk [vmem:[#allocation2 + $0xf8] sm:$0xff] %vm1667, %v1634
  %v1700 = vld [vmem:[%s1442 + $0x1] sm:$0xff]
  %v1701 = vld [vmem:[%s1442 + $0x9] sm:$0xff]
  %v1702 = vld [vmem:[%s1442 + $0x19] sm:$0xff]
  %v1703 = vld [vmem:[%s1442 + $0x21] sm:$0xff]
  %v1704 = vld [vmem:[%s1442 + $0x31] sm:$0xff]
  %v1705 = vld [vmem:[%s1442 + $0x39] sm:$0xff]
  %v1706 = vld [vmem:[%s1442 + $0x49] sm:$0xff]
  %v1707 = vld [vmem:[%s1442 + $0x51] sm:$0xff]
  %v1708 = vld [vmem:[%s1442 + $0x61] sm:$0xff]
  %v1709 = vld [vmem:[%s1442 + $0x69] sm:$0xff]
  %v1710 = vld [vmem:[%s1442 + $0x79] sm:$0xff]
  %v1711 = vld [vmem:[%s1442 + $0x81] sm:$0xff]
  %v1712 = vld [vmem:[%s1442 + $0x91] sm:$0xff]
  %v1713 = vld [vmem:[%s1442 + $0x99] sm:$0xff]
  %v1714 = vld [vmem:[%s1442 + $0xa9] sm:$0xff]
  %v1715 = vld [vmem:[%s1442 + $0xb1] sm:$0xff]
  %v1716 = vld [vmem:[%s1442 + $0xc1] sm:$0xff]
  %v1717 = vld [vmem:[%s1442 + $0xc9] sm:$0xff]
  %v1718 = vld [vmem:[%s1442 + $0xd9] sm:$0xff]
  %v1719 = vld [vmem:[%s1442 + $0xe1] sm:$0xff]
  %v1720 = vld [vmem:[%s1442 + $0xf1] sm:$0xff]
  %v1721 = vld [vmem:[%s1442 + $0xf9] sm:$0xff]
  %v1722 = vld [vmem:[%s1442 + $0x109] sm:$0xff]
  %v1723 = vld [vmem:[%s1442 + $0x111] sm:$0xff]
  %v1724 = vld [vmem:[%s1442 + $0x121] sm:$0xff]
  %v1725 = vld [vmem:[%s1442 + $0x129] sm:$0xff]
  %v1726 = vld [vmem:[%s1442 + $0x139] sm:$0xff]
  %v1727 = vld [vmem:[%s1442 + $0x141] sm:$0xff]
  %v1728 = vld [vmem:[%s1442 + $0x151] sm:$0xff]
  %v1729 = vld [vmem:[%s1442 + $0x159] sm:$0xff]
  %v1730 = vld [vmem:[%s1442 + $0x169] sm:$0xff]
  %v1731 = vld [vmem:[%s1442 + $0x171] sm:$0xff]
  %v1732 = vld [vmem:[%s1442 + $0x1b1] sm:$0xff]
  %v1733 = vld [vmem:[%s1442 + $0x1b9] sm:$0xff]
  %v1734 = vld [vmem:[%s1442 + $0x1c9] sm:$0xff]
  %v1735 = vld [vmem:[%s1442 + $0x1d1] sm:$0xff]
  %v1736 = vld [vmem:[%s1442 + $0x1e1] sm:$0xff]
  %v1737 = vld [vmem:[%s1442 + $0x1e9] sm:$0xff]
  %v1738 = vld [vmem:[%s1442 + $0x1f9] sm:$0xff]
  %v1739 = vld [vmem:[%s1442 + $0x201] sm:$0xff]
  %v1740 = vld [vmem:[%s1442 + $0x211] sm:$0xff]
  %v1741 = vld [vmem:[%s1442 + $0x219] sm:$0xff]
  %v1742 = vld [vmem:[%s1442 + $0x229] sm:$0xff]
  %v1743 = vld [vmem:[%s1442 + $0x231] sm:$0xff]
  %v1744 = vld [vmem:[%s1442 + $0x241] sm:$0xff]
  %v1745 = vld [vmem:[%s1442 + $0x249] sm:$0xff]
  %v1746 = vld [vmem:[%s1442 + $0x259] sm:$0xff]
  %v1747 = vld [vmem:[%s1442 + $0x261] sm:$0xff]
  %v1748 = vld [vmem:[%s1442 + $0x271] sm:$0xff]
  %v1749 = vld [vmem:[%s1442 + $0x279] sm:$0xff]
  %v1750 = vld [vmem:[%s1442 + $0x289] sm:$0xff]
  %v1751 = vld [vmem:[%s1442 + $0x291] sm:$0xff]
  %v1752 = vld [vmem:[%s1442 + $0x2a1] sm:$0xff]
  %v1753 = vld [vmem:[%s1442 + $0x2a9] sm:$0xff]
  %v1754 = vld [vmem:[%s1442 + $0x2b9] sm:$0xff]
  %v1755 = vld [vmem:[%s1442 + $0x2c1] sm:$0xff]
  %v1756 = vld [vmem:[%s1442 + $0x2d1] sm:$0xff]
  %v1757 = vld [vmem:[%s1442 + $0x2d9] sm:$0xff]
  %v1758 = vld [vmem:[%s1442 + $0x2e9] sm:$0xff]
  %v1759 = vld [vmem:[%s1442 + $0x2f1] sm:$0xff]
  %v1760 = vld [vmem:[%s1442 + $0x301] sm:$0xff]
  %v1761 = vld [vmem:[%s1442 + $0x309] sm:$0xff]
  %v1762 = vld [vmem:[%s1442 + $0x319] sm:$0xff]
  %v1763 = vld [vmem:[%s1442 + $0x321] sm:$0xff]
  %v1764 = vpack.c.bf16 %v1701, %v1700
  %v1765 = vpack.c.bf16 %v1703, %v1702
  %v1766 = vpack.c.bf16 %v1705, %v1704
  %v1767 = vpack.c.bf16 %v1707, %v1706
  %v1768 = vpack.c.bf16 %v1709, %v1708
  %v1769 = vpack.c.bf16 %v1711, %v1710
  %v1770 = vpack.c.bf16 %v1713, %v1712
  %v1771 = vpack.c.bf16 %v1715, %v1714
  %v1772 = vpack.c.bf16 %v1717, %v1716
  %v1773 = vpack.c.bf16 %v1719, %v1718
  %v1774 = vpack.c.bf16 %v1721, %v1720
  %v1775 = vpack.c.bf16 %v1723, %v1722
  %v1776 = vpack.c.bf16 %v1725, %v1724
  %v1777 = vpack.c.bf16 %v1727, %v1726
  %v1778 = vpack.c.bf16 %v1729, %v1728
  %v1779 = vpack.c.bf16 %v1731, %v1730
  %v1780 = vpack.c.bf16 %v1733, %v1732
  %v1781 = vpack.c.bf16 %v1735, %v1734
  %v1782 = vpack.c.bf16 %v1737, %v1736
  %v1783 = vpack.c.bf16 %v1739, %v1738
  %v1784 = vpack.c.bf16 %v1741, %v1740
  %v1785 = vpack.c.bf16 %v1743, %v1742
  %v1786 = vpack.c.bf16 %v1745, %v1744
  %v1787 = vpack.c.bf16 %v1747, %v1746
  %v1788 = vpack.c.bf16 %v1749, %v1748
  %v1789 = vpack.c.bf16 %v1751, %v1750
  %v1790 = vpack.c.bf16 %v1753, %v1752
  %v1791 = vpack.c.bf16 %v1755, %v1754
  %v1792 = vpack.c.bf16 %v1757, %v1756
  %v1793 = vpack.c.bf16 %v1759, %v1758
  %v1794 = vpack.c.bf16 %v1761, %v1760
  %v1795 = vpack.c.bf16 %v1763, %v1762
  %1828 = vrot.lane.b32.xlu0 %v1764, 56
  %v1829 = vpop.permute.xlu0 %1828
  %1830 = vrot.lane.b32.xlu0 %v1765, 56
  %v1831 = vpop.permute.xlu0 %1830
  %1832 = vrot.lane.b32.xlu0 %v1766, 56
  %v1833 = vpop.permute.xlu0 %1832
  %1834 = vrot.lane.b32.xlu0 %v1767, 56
  %v1835 = vpop.permute.xlu0 %1834
  %1836 = vrot.lane.b32.xlu0 %v1768, 56
  %v1837 = vpop.permute.xlu0 %1836
  %1838 = vrot.lane.b32.xlu0 %v1769, 56
  %v1839 = vpop.permute.xlu0 %1838
  %1840 = vrot.lane.b32.xlu0 %v1770, 56
  %v1841 = vpop.permute.xlu0 %1840
  %1842 = vrot.lane.b32.xlu0 %v1771, 56
  %v1843 = vpop.permute.xlu0 %1842
  %1844 = vrot.lane.b32.xlu0 %v1772, 56
  %v1845 = vpop.permute.xlu0 %1844
  %1846 = vrot.lane.b32.xlu0 %v1773, 56
  %v1847 = vpop.permute.xlu0 %1846
  %1848 = vrot.lane.b32.xlu0 %v1774, 56
  %v1849 = vpop.permute.xlu0 %1848
  %1850 = vrot.lane.b32.xlu0 %v1775, 56
  %v1851 = vpop.permute.xlu0 %1850
  %1852 = vrot.lane.b32.xlu0 %v1776, 56
  %v1853 = vpop.permute.xlu0 %1852
  %1854 = vrot.lane.b32.xlu0 %v1777, 56
  %v1855 = vpop.permute.xlu0 %1854
  %1856 = vrot.lane.b32.xlu0 %v1778, 56
  %v1857 = vpop.permute.xlu0 %1856
  %1858 = vrot.lane.b32.xlu0 %v1779, 56
  %v1859 = vpop.permute.xlu0 %1858
  %1860 = vrot.lane.b32.xlu0 %v1780, 56
  %v1861 = vpop.permute.xlu0 %1860
  %1862 = vrot.lane.b32.xlu0 %v1781, 56
  %v1863 = vpop.permute.xlu0 %1862
  %1864 = vrot.lane.b32.xlu0 %v1782, 56
  %v1865 = vpop.permute.xlu0 %1864
  %1866 = vrot.lane.b32.xlu0 %v1783, 56
  %v1867 = vpop.permute.xlu0 %1866
  %1868 = vrot.lane.b32.xlu0 %v1784, 56
  %v1869 = vpop.permute.xlu0 %1868
  %1870 = vrot.lane.b32.xlu0 %v1785, 56
  %v1871 = vpop.permute.xlu0 %1870
  %1872 = vrot.lane.b32.xlu0 %v1786, 56
  %v1873 = vpop.permute.xlu0 %1872
  %1874 = vrot.lane.b32.xlu0 %v1787, 56
  %v1875 = vpop.permute.xlu0 %1874
  %1876 = vrot.lane.b32.xlu0 %v1788, 56
  %v1877 = vpop.permute.xlu0 %1876
  %1878 = vrot.lane.b32.xlu0 %v1789, 56
  %v1879 = vpop.permute.xlu0 %1878
  %1880 = vrot.lane.b32.xlu0 %v1790, 56
  %v1881 = vpop.permute.xlu0 %1880
  %1882 = vrot.lane.b32.xlu0 %v1791, 56
  %v1883 = vpop.permute.xlu0 %1882
  %1884 = vrot.lane.b32.xlu0 %v1792, 56
  %v1885 = vpop.permute.xlu0 %1884
  %1886 = vrot.lane.b32.xlu0 %v1793, 56
  %v1887 = vpop.permute.xlu0 %1886
  %1888 = vrot.lane.b32.xlu0 %v1794, 56
  %v1889 = vpop.permute.xlu0 %1888
  %1890 = vrot.lane.b32.xlu0 %v1795, 56
  %v1891 = vpop.permute.xlu0 %1890
  %vm1924 = vcmask 523712
  %1925 = vst.msk [vmem:[#allocation2] sm:$0xff] %vm1924, %v1829
  %1926 = vst.msk [vmem:[#allocation2 + $0x8] sm:$0xff] %vm1924, %v1831
  %1927 = vst.msk [vmem:[#allocation2 + $0x10] sm:$0xff] %vm1924, %v1833
  %1928 = vst.msk [vmem:[#allocation2 + $0x18] sm:$0xff] %vm1924, %v1835
  %1929 = vst.msk [vmem:[#allocation2 + $0x20] sm:$0xff] %vm1924, %v1837
  %1930 = vst.msk [vmem:[#allocation2 + $0x28] sm:$0xff] %vm1924, %v1839
  %1931 = vst.msk [vmem:[#allocation2 + $0x30] sm:$0xff] %vm1924, %v1841
  %1932 = vst.msk [vmem:[#allocation2 + $0x38] sm:$0xff] %vm1924, %v1843
  %1933 = vst.msk [vmem:[#allocation2 + $0x40] sm:$0xff] %vm1924, %v1845
  %1934 = vst.msk [vmem:[#allocation2 + $0x48] sm:$0xff] %vm1924, %v1847
  %1935 = vst.msk [vmem:[#allocation2 + $0x50] sm:$0xff] %vm1924, %v1849
  %1936 = vst.msk [vmem:[#allocation2 + $0x58] sm:$0xff] %vm1924, %v1851
  %1937 = vst.msk [vmem:[#allocation2 + $0x60] sm:$0xff] %vm1924, %v1853
  %1938 = vst.msk [vmem:[#allocation2 + $0x68] sm:$0xff] %vm1924, %v1855
  %1939 = vst.msk [vmem:[#allocation2 + $0x70] sm:$0xff] %vm1924, %v1857
  %1940 = vst.msk [vmem:[#allocation2 + $0x78] sm:$0xff] %vm1924, %v1859
  %1941 = vst.msk [vmem:[#allocation2 + $0x80] sm:$0xff] %vm1924, %v1861
  %1942 = vst.msk [vmem:[#allocation2 + $0x88] sm:$0xff] %vm1924, %v1863
  %1943 = vst.msk [vmem:[#allocation2 + $0x90] sm:$0xff] %vm1924, %v1865
  %1944 = vst.msk [vmem:[#allocation2 + $0x98] sm:$0xff] %vm1924, %v1867
  %1945 = vst.msk [vmem:[#allocation2 + $0xa0] sm:$0xff] %vm1924, %v1869
  %1946 = vst.msk [vmem:[#allocation2 + $0xa8] sm:$0xff] %vm1924, %v1871
  %1947 = vst.msk [vmem:[#allocation2 + $0xb0] sm:$0xff] %vm1924, %v1873
  %1948 = vst.msk [vmem:[#allocation2 + $0xb8] sm:$0xff] %vm1924, %v1875
  %1949 = vst.msk [vmem:[#allocation2 + $0xc0] sm:$0xff] %vm1924, %v1877
  %1950 = vst.msk [vmem:[#allocation2 + $0xc8] sm:$0xff] %vm1924, %v1879
  %1951 = vst.msk [vmem:[#allocation2 + $0xd0] sm:$0xff] %vm1924, %v1881
  %1952 = vst.msk [vmem:[#allocation2 + $0xd8] sm:$0xff] %vm1924, %v1883
  %1953 = vst.msk [vmem:[#allocation2 + $0xe0] sm:$0xff] %vm1924, %v1885
  %1954 = vst.msk [vmem:[#allocation2 + $0xe8] sm:$0xff] %vm1924, %v1887
  %1955 = vst.msk [vmem:[#allocation2 + $0xf0] sm:$0xff] %vm1924, %v1889
  %1956 = vst.msk [vmem:[#allocation2 + $0xf8] sm:$0xff] %vm1924, %v1891
  %v1957 = vld [vmem:[%s1442 + $0x2] sm:$0xff]
  %v1958 = vld [vmem:[%s1442 + $0xa] sm:$0xff]
  %v1959 = vld [vmem:[%s1442 + $0x1a] sm:$0xff]
  %v1960 = vld [vmem:[%s1442 + $0x22] sm:$0xff]
  %v1961 = vld [vmem:[%s1442 + $0x32] sm:$0xff]
  %v1962 = vld [vmem:[%s1442 + $0x3a] sm:$0xff]
  %v1963 = vld [vmem:[%s1442 + $0x4a] sm:$0xff]
  %v1964 = vld [vmem:[%s1442 + $0x52] sm:$0xff]
  %v1965 = vld [vmem:[%s1442 + $0x62] sm:$0xff]
  %v1966 = vld [vmem:[%s1442 + $0x6a] sm:$0xff]
  %v1967 = vld [vmem:[%s1442 + $0x7a] sm:$0xff]
  %v1968 = vld [vmem:[%s1442 + $0x82] sm:$0xff]
  %v1969 = vld [vmem:[%s1442 + $0x92] sm:$0xff]
  %v1970 = vld [vmem:[%s1442 + $0x9a] sm:$0xff]
  %v1971 = vld [vmem:[%s1442 + $0xaa] sm:$0xff]
  %v1972 = vld [vmem:[%s1442 + $0xb2] sm:$0xff]
  %v1973 = vld [vmem:[%s1442 + $0xc2] sm:$0xff]
  %v1974 = vld [vmem:[%s1442 + $0xca] sm:$0xff]
  %v1975 = vld [vmem:[%s1442 + $0xda] sm:$0xff]
  %v1976 = vld [vmem:[%s1442 + $0xe2] sm:$0xff]
  %v1977 = vld [vmem:[%s1442 + $0xf2] sm:$0xff]
  %v1978 = vld [vmem:[%s1442 + $0xfa] sm:$0xff]
  %v1979 = vld [vmem:[%s1442 + $0x10a] sm:$0xff]
  %v1980 = vld [vmem:[%s1442 + $0x112] sm:$0xff]
  %v1981 = vld [vmem:[%s1442 + $0x122] sm:$0xff]
  %v1982 = vld [vmem:[%s1442 + $0x12a] sm:$0xff]
  %v1983 = vld [vmem:[%s1442 + $0x13a] sm:$0xff]
  %v1984 = vld [vmem:[%s1442 + $0x142] sm:$0xff]
  %v1985 = vld [vmem:[%s1442 + $0x152] sm:$0xff]
  %v1986 = vld [vmem:[%s1442 + $0x15a] sm:$0xff]
  %v1987 = vld [vmem:[%s1442 + $0x16a] sm:$0xff]
  %v1988 = vld [vmem:[%s1442 + $0x172] sm:$0xff]
  %v1989 = vld [vmem:[%s1442 + $0x1b2] sm:$0xff]
  %v1990 = vld [vmem:[%s1442 + $0x1ba] sm:$0xff]
  %v1991 = vld [vmem:[%s1442 + $0x1ca] sm:$0xff]
  %v1992 = vld [vmem:[%s1442 + $0x1d2] sm:$0xff]
  %v1993 = vld [vmem:[%s1442 + $0x1e2] sm:$0xff]
  %v1994 = vld [vmem:[%s1442 + $0x1ea] sm:$0xff]
  %v1995 = vld [vmem:[%s1442 + $0x1fa] sm:$0xff]
  %v1996 = vld [vmem:[%s1442 + $0x202] sm:$0xff]
  %v1997 = vld [vmem:[%s1442 + $0x212] sm:$0xff]
  %v1998 = vld [vmem:[%s1442 + $0x21a] sm:$0xff]
  %v1999 = vld [vmem:[%s1442 + $0x22a] sm:$0xff]
  %v2000 = vld [vmem:[%s1442 + $0x232] sm:$0xff]
  %v2001 = vld [vmem:[%s1442 + $0x242] sm:$0xff]
  %v2002 = vld [vmem:[%s1442 + $0x24a] sm:$0xff]
  %v2003 = vld [vmem:[%s1442 + $0x25a] sm:$0xff]
  %v2004 = vld [vmem:[%s1442 + $0x262] sm:$0xff]
  %v2005 = vld [vmem:[%s1442 + $0x272] sm:$0xff]
  %v2006 = vld [vmem:[%s1442 + $0x27a] sm:$0xff]
  %v2007 = vld [vmem:[%s1442 + $0x28a] sm:$0xff]
  %v2008 = vld [vmem:[%s1442 + $0x292] sm:$0xff]
  %v2009 = vld [vmem:[%s1442 + $0x2a2] sm:$0xff]
  %v2010 = vld [vmem:[%s1442 + $0x2aa] sm:$0xff]
  %v2011 = vld [vmem:[%s1442 + $0x2ba] sm:$0xff]
  %v2012 = vld [vmem:[%s1442 + $0x2c2] sm:$0xff]
  %v2013 = vld [vmem:[%s1442 + $0x2d2] sm:$0xff]
  %v2014 = vld [vmem:[%s1442 + $0x2da] sm:$0xff]
  %v2015 = vld [vmem:[%s1442 + $0x2ea] sm:$0xff]
  %v2016 = vld [vmem:[%s1442 + $0x2f2] sm:$0xff]
  %v2017 = vld [vmem:[%s1442 + $0x302] sm:$0xff]
  %v2018 = vld [vmem:[%s1442 + $0x30a] sm:$0xff]
  %v2019 = vld [vmem:[%s1442 + $0x31a] sm:$0xff]
  %v2020 = vld [vmem:[%s1442 + $0x322] sm:$0xff]
  %v2021 = vpack.c.bf16 %v1958, %v1957
  %v2022 = vpack.c.bf16 %v1960, %v1959
  %v2023 = vpack.c.bf16 %v1962, %v1961
  %v2024 = vpack.c.bf16 %v1964, %v1963
  %v2025 = vpack.c.bf16 %v1966, %v1965
  %v2026 = vpack.c.bf16 %v1968, %v1967
  %v2027 = vpack.c.bf16 %v1970, %v1969
  %v2028 = vpack.c.bf16 %v1972, %v1971
  %v2029 = vpack.c.bf16 %v1974, %v1973
  %v2030 = vpack.c.bf16 %v1976, %v1975
  %v2031 = vpack.c.bf16 %v1978, %v1977
  %v2032 = vpack.c.bf16 %v1980, %v1979
  %v2033 = vpack.c.bf16 %v1982, %v1981
  %v2034 = vpack.c.bf16 %v1984, %v1983
  %v2035 = vpack.c.bf16 %v1986, %v1985
  %v2036 = vpack.c.bf16 %v1988, %v1987
  %v2037 = vpack.c.bf16 %v1990, %v1989
  %v2038 = vpack.c.bf16 %v1992, %v1991
  %v2039 = vpack.c.bf16 %v1994, %v1993
  %v2040 = vpack.c.bf16 %v1996, %v1995
  %v2041 = vpack.c.bf16 %v1998, %v1997
  %v2042 = vpack.c.bf16 %v2000, %v1999
  %v2043 = vpack.c.bf16 %v2002, %v2001
  %v2044 = vpack.c.bf16 %v2004, %v2003
  %v2045 = vpack.c.bf16 %v2006, %v2005
  %v2046 = vpack.c.bf16 %v2008, %v2007
  %v2047 = vpack.c.bf16 %v2010, %v2009
  %v2048 = vpack.c.bf16 %v2012, %v2011
  %v2049 = vpack.c.bf16 %v2014, %v2013
  %v2050 = vpack.c.bf16 %v2016, %v2015
  %v2051 = vpack.c.bf16 %v2018, %v2017
  %v2052 = vpack.c.bf16 %v2020, %v2019
  %2085 = vrot.lane.b32.xlu0 %v2021, 64
  %v2086 = vpop.permute.xlu0 %2085
  %2087 = vrot.lane.b32.xlu0 %v2022, 64
  %v2088 = vpop.permute.xlu0 %2087
  %2089 = vrot.lane.b32.xlu0 %v2023, 64
  %v2090 = vpop.permute.xlu0 %2089
  %2091 = vrot.lane.b32.xlu0 %v2024, 64
  %v2092 = vpop.permute.xlu0 %2091
  %2093 = vrot.lane.b32.xlu0 %v2025, 64
  %v2094 = vpop.permute.xlu0 %2093
  %2095 = vrot.lane.b32.xlu0 %v2026, 64
  %v2096 = vpop.permute.xlu0 %2095
  %2097 = vrot.lane.b32.xlu0 %v2027, 64
  %v2098 = vpop.permute.xlu0 %2097
  %2099 = vrot.lane.b32.xlu0 %v2028, 64
  %v2100 = vpop.permute.xlu0 %2099
  %2101 = vrot.lane.b32.xlu0 %v2029, 64
  %v2102 = vpop.permute.xlu0 %2101
  %2103 = vrot.lane.b32.xlu0 %v2030, 64
  %v2104 = vpop.permute.xlu0 %2103
  %2105 = vrot.lane.b32.xlu0 %v2031, 64
  %v2106 = vpop.permute.xlu0 %2105
  %2107 = vrot.lane.b32.xlu0 %v2032, 64
  %v2108 = vpop.permute.xlu0 %2107
  %2109 = vrot.lane.b32.xlu0 %v2033, 64
  %v2110 = vpop.permute.xlu0 %2109
  %2111 = vrot.lane.b32.xlu0 %v2034, 64
  %v2112 = vpop.permute.xlu0 %2111
  %2113 = vrot.lane.b32.xlu0 %v2035, 64
  %v2114 = vpop.permute.xlu0 %2113
  %2115 = vrot.lane.b32.xlu0 %v2036, 64
  %v2116 = vpop.permute.xlu0 %2115
  %2117 = vrot.lane.b32.xlu0 %v2037, 64
  %v2118 = vpop.permute.xlu0 %2117
  %2119 = vrot.lane.b32.xlu0 %v2038, 64
  %v2120 = vpop.permute.xlu0 %2119
  %2121 = vrot.lane.b32.xlu0 %v2039, 64
  %v2122 = vpop.permute.xlu0 %2121
  %2123 = vrot.lane.b32.xlu0 %v2040, 64
  %v2124 = vpop.permute.xlu0 %2123
  %2125 = vrot.lane.b32.xlu0 %v2041, 64
  %v2126 = vpop.permute.xlu0 %2125
  %2127 = vrot.lane.b32.xlu0 %v2042, 64
  %v2128 = vpop.permute.xlu0 %2127
  %2129 = vrot.lane.b32.xlu0 %v2043, 64
  %v2130 = vpop.permute.xlu0 %2129
  %2131 = vrot.lane.b32.xlu0 %v2044, 64
  %v2132 = vpop.permute.xlu0 %2131
  %2133 = vrot.lane.b32.xlu0 %v2045, 64
  %v2134 = vpop.permute.xlu0 %2133
  %2135 = vrot.lane.b32.xlu0 %v2046, 64
  %v2136 = vpop.permute.xlu0 %2135
  %2137 = vrot.lane.b32.xlu0 %v2047, 64
  %v2138 = vpop.permute.xlu0 %2137
  %2139 = vrot.lane.b32.xlu0 %v2048, 64
  %v2140 = vpop.permute.xlu0 %2139
  %2141 = vrot.lane.b32.xlu0 %v2049, 64
  %v2142 = vpop.permute.xlu0 %2141
  %2143 = vrot.lane.b32.xlu0 %v2050, 64
  %v2144 = vpop.permute.xlu0 %2143
  %2145 = vrot.lane.b32.xlu0 %v2051, 64
  %v2146 = vpop.permute.xlu0 %2145
  %2147 = vrot.lane.b32.xlu0 %v2052, 64
  %v2148 = vpop.permute.xlu0 %2147
  %vm2181 = vcmask 589312
  %2182 = vst.msk [vmem:[#allocation2] sm:$0xff] %vm2181, %v2086
  %2183 = vst.msk [vmem:[#allocation2 + $0x8] sm:$0xff] %vm2181, %v2088
  %2184 = vst.msk [vmem:[#allocation2 + $0x10] sm:$0xff] %vm2181, %v2090
  %2185 = vst.msk [vmem:[#allocation2 + $0x18] sm:$0xff] %vm2181, %v2092
  %2186 = vst.msk [vmem:[#allocation2 + $0x20] sm:$0xff] %vm2181, %v2094
  %2187 = vst.msk [vmem:[#allocation2 + $0x28] sm:$0xff] %vm2181, %v2096
  %2188 = vst.msk [vmem:[#allocation2 + $0x30] sm:$0xff] %vm2181, %v2098
  %2189 = vst.msk [vmem:[#allocation2 + $0x38] sm:$0xff] %vm2181, %v2100
  %2190 = vst.msk [vmem:[#allocation2 + $0x40] sm:$0xff] %vm2181, %v2102
  %2191 = vst.msk [vmem:[#allocation2 + $0x48] sm:$0xff] %vm2181, %v2104
  %2192 = vst.msk [vmem:[#allocation2 + $0x50] sm:$0xff] %vm2181, %v2106
  %2193 = vst.msk [vmem:[#allocation2 + $0x58] sm:$0xff] %vm2181, %v2108
  %2194 = vst.msk [vmem:[#allocation2 + $0x60] sm:$0xff] %vm2181, %v2110
  %2195 = vst.msk [vmem:[#allocation2 + $0x68] sm:$0xff] %vm2181, %v2112
  %2196 = vst.msk [vmem:[#allocation2 + $0x70] sm:$0xff] %vm2181, %v2114
  %2197 = vst.msk [vmem:[#allocation2 + $0x78] sm:$0xff] %vm2181, %v2116
  %2198 = vst.msk [vmem:[#allocation2 + $0x80] sm:$0xff] %vm2181, %v2118
  %2199 = vst.msk [vmem:[#allocation2 + $0x88] sm:$0xff] %vm2181, %v2120
  %2200 = vst.msk [vmem:[#allocation2 + $0x90] sm:$0xff] %vm2181, %v2122
  %2201 = vst.msk [vmem:[#allocation2 + $0x98] sm:$0xff] %vm2181, %v2124
  %2202 = vst.msk [vmem:[#allocation2 + $0xa0] sm:$0xff] %vm2181, %v2126
  %2203 = vst.msk [vmem:[#allocation2 + $0xa8] sm:$0xff] %vm2181, %v2128
  %2204 = vst.msk [vmem:[#allocation2 + $0xb0] sm:$0xff] %vm2181, %v2130
  %2205 = vst.msk [vmem:[#allocation2 + $0xb8] sm:$0xff] %vm2181, %v2132
  %2206 = vst.msk [vmem:[#allocation2 + $0xc0] sm:$0xff] %vm2181, %v2134
  %2207 = vst.msk [vmem:[#allocation2 + $0xc8] sm:$0xff] %vm2181, %v2136
  %2208 = vst.msk [vmem:[#allocation2 + $0xd0] sm:$0xff] %vm2181, %v2138
  %2209 = vst.msk [vmem:[#allocation2 + $0xd8] sm:$0xff] %vm2181, %v2140
  %2210 = vst.msk [vmem:[#allocation2 + $0xe0] sm:$0xff] %vm2181, %v2142
  %2211 = vst.msk [vmem:[#allocation2 + $0xe8] sm:$0xff] %vm2181, %v2144
  %2212 = vst.msk [vmem:[#allocation2 + $0xf0] sm:$0xff] %vm2181, %v2146
  %2213 = vst.msk [vmem:[#allocation2 + $0xf8] sm:$0xff] %vm2181, %v2148
  %v2214 = vld [vmem:[#allocation2] sm:$0xff]
  %v2215 = vld [vmem:[#allocation2 + $0x8] sm:$0xff]
  %v2216 = vld [vmem:[#allocation2 + $0x10] sm:$0xff]
  %v2217 = vld [vmem:[#allocation2 + $0x18] sm:$0xff]
  %v2218 = vld [vmem:[#allocation2 + $0x20] sm:$0xff]
  %v2219 = vld [vmem:[#allocation2 + $0x28] sm:$0xff]
  %v2220 = vld [vmem:[#allocation2 + $0x30] sm:$0xff]
  %v2221 = vld [vmem:[#allocation2 + $0x38] sm:$0xff]
  %v2222 = vld [vmem:[#allocation2 + $0x40] sm:$0xff]
  %v2223 = vld [vmem:[#allocation2 + $0x48] sm:$0xff]
  %v2224 = vld [vmem:[#allocation2 + $0x50] sm:$0xff]
  %v2225 = vld [vmem:[#allocation2 + $0x58] sm:$0xff]
  %v2226 = vld [vmem:[#allocation2 + $0x60] sm:$0xff]
  %v2227 = vld [vmem:[#allocation2 + $0x68] sm:$0xff]
  %v2228 = vld [vmem:[#allocation2 + $0x70] sm:$0xff]
  %v2229 = vld [vmem:[#allocation2 + $0x78] sm:$0xff]
  %v2230 = vld [vmem:[#allocation2 + $0x80] sm:$0xff]
  %v2231 = vld [vmem:[#allocation2 + $0x88] sm:$0xff]
  %v2232 = vld [vmem:[#allocation2 + $0x90] sm:$0xff]
  %v2233 = vld [vmem:[#allocation2 + $0x98] sm:$0xff]
  %v2234 = vld [vmem:[#allocation2 + $0xa0] sm:$0xff]
  %v2235 = vld [vmem:[#allocation2 + $0xa8] sm:$0xff]
  %v2236 = vld [vmem:[#allocation2 + $0xb0] sm:$0xff]
  %v2237 = vld [vmem:[#allocation2 + $0xb8] sm:$0xff]
  %v2238 = vld [vmem:[#allocation2 + $0xc0] sm:$0xff]
  %v2239 = vld [vmem:[#allocation2 + $0xc8] sm:$0xff]
  %v2240 = vld [vmem:[#allocation2 + $0xd0] sm:$0xff]
  %v2241 = vld [vmem:[#allocation2 + $0xd8] sm:$0xff]
  %v2242 = vld [vmem:[#allocation2 + $0xe0] sm:$0xff]
  %v2243 = vld [vmem:[#allocation2 + $0xe8] sm:$0xff]
  %v2244 = vld [vmem:[#allocation2 + $0xf0] sm:$0xff]
  %v2245 = vld [vmem:[#allocation2 + $0xf8] sm:$0xff]
  %v2246 = vld [vmem:[%s1] sm:$0xf]
  %v2247 = vld [vmem:[%s1 + $0x4] sm:$0xf]
  %v2248 = vld [vmem:[%s1 + $0x8] sm:$0xf]
  %v2249 = vld [vmem:[%s1 + $0xc] sm:$0xf]
  %v2250 = vld [vmem:[%s1 + $0x10] sm:$0xf]
  %v2251 = vld [vmem:[%s1 + $0x14] sm:$0xf]
  %v2252 = vld [vmem:[%s1 + $0x18] sm:$0xf]
  %v2253 = vld [vmem:[%s1 + $0x1c] sm:$0xf]
  %v2254 = vld [vmem:[%s1 + $0x20] sm:$0xf]
  %v2255 = vld [vmem:[%s2] sm:$0x1]
  %v2257 = vlaneseq
  %v2258 = vshrl.u32 %v2257, 7
  %v2259 = vsub.s32 0, %v2258
  %v2260 = vrot.slane %v2255, %v2259
  %v2271 = vunpack.c.l.b16 %v2246
  %v2272 = vunpack.c.l.b16 %v2247
  %v2273 = vunpack.c.l.b16 %v2248
  %v2274 = vunpack.c.l.b16 %v2249
  %v2275 = vunpack.c.l.b16 %v2250
  %v2276 = vunpack.c.l.b16 %v2251
  %v2277 = vunpack.c.l.b16 %v2252
  %v2278 = vunpack.c.l.b16 %v2253
  %v2279 = vunpack.c.l.b16 %v2254
  %v2280 = vpack.c.b16 %v2272, %v2271
  %v2281 = vpack.c.b16 %v2274, %v2273
  %v2282 = vpack.c.b16 %v2276, %v2275
  %v2283 = vpack.c.b16 %v2278, %v2277
  %v2284 = vpack.c.b16 %v2279, %v2279
  %vm2289 = vcmask 588800
  %v2291 = vsel %vm2289, %v2214, 0
  %v2294 = vsel %vm2289, %v2215, 0
  %v2297 = vsel %vm2289, %v2216, 0
  %v2300 = vsel %vm2289, %v2217, 0
  %v2303 = vsel %vm2289, %v2218, 0
  %v2306 = vsel %vm2289, %v2219, 0
  %v2309 = vsel %vm2289, %v2220, 0
  %v2312 = vsel %vm2289, %v2221, 0
  %v2315 = vsel %vm2289, %v2222, 0
  %v2318 = vsel %vm2289, %v2223, 0
  %v2321 = vsel %vm2289, %v2224, 0
  %v2324 = vsel %vm2289, %v2225, 0
  %v2327 = vsel %vm2289, %v2226, 0
  %v2330 = vsel %vm2289, %v2227, 0
  %v2333 = vsel %vm2289, %v2228, 0
  %v2336 = vsel %vm2289, %v2229, 0
  %v2339 = vsel %vm2289, %v2230, 0
  %v2342 = vsel %vm2289, %v2231, 0
  %v2345 = vsel %vm2289, %v2232, 0
  %v2348 = vsel %vm2289, %v2233, 0
  %v2351 = vsel %vm2289, %v2234, 0
  %v2354 = vsel %vm2289, %v2235, 0
  %v2357 = vsel %vm2289, %v2236, 0
  %v2360 = vsel %vm2289, %v2237, 0
  %v2363 = vsel %vm2289, %v2238, 0
  %v2366 = vsel %vm2289, %v2239, 0
  %v2369 = vsel %vm2289, %v2240, 0
  %v2372 = vsel %vm2289, %v2241, 0
  %v2375 = vsel %vm2289, %v2242, 0
  %v2378 = vsel %vm2289, %v2243, 0
  %v2381 = vsel %vm2289, %v2244, 0
  %v2384 = vsel %vm2289, %v2245, 0
  %vm2386 = vcmask 1043456
  %v2388 = vsel %vm2386, %v2284, 0
  %2390 = vmatprep.subr.bf16.mxu0 0
  %2391 = vmatpush1.bf16.msra.mxu0 %v2280
  %2392 = vmatprep.subr.bf16.mxu0 0
  %2393 = vmatpush1.bf16.msra.mxu0 %v2281
  %2394 = vmatprep.subr.bf16.mxu0 0
  %2395 = vmatpush1.bf16.msra.mxu0 %v2282
  %2396 = vmatprep.subr.bf16.mxu0 0
  %2397 = vmatpush1.bf16.msra.mxu0 %v2283
  %2398 = vmatprep.subr.bf16.mxu0 0
  %2399 = vmatpush1.bf16.msra.mxu0 %v2388
  %2400 = vmatprep.subr.bf16.mxu0 0
  %2401 = vmatpush1.bf16.msra.mxu0 0
  %2402 = vmatprep.subr.bf16.mxu0 0
  %2403 = vmatpush1.bf16.msra.mxu0 0
  %2404 = vmatprep.subr.bf16.mxu0 0
  %2405 = vmatpush1.bf16.msra.mxu0 0
  %2406 = vmatprep.subr.bf16.mxu0 0
  %2407 = vmatpush1.bf16.msra.mxu0 0
  %2408 = vmatprep.subr.bf16.mxu0 0
  %2409 = vmatpush1.bf16.msra.mxu0 0
  %2410 = vmatprep.subr.bf16.mxu0 0
  %2411 = vmatpush1.bf16.msra.mxu0 0
  %2412 = vmatprep.subr.bf16.mxu0 0
  %2413 = vmatpush1.bf16.msra.mxu0 0
  %2414 = vmatprep.subr.bf16.mxu0 0
  %2415 = vmatpush1.bf16.msra.mxu0 0
  %2416 = vmatprep.subr.bf16.mxu0 0
  %2417 = vmatpush1.bf16.msra.mxu0 0
  %2418 = vmatprep.subr.bf16.mxu0 0
  %2419 = vmatpush1.bf16.msra.mxu0 0
  %2420 = vmatprep.subr.bf16.mxu0 0
  %2421 = vmatpush1.bf16.msra.mxu0 0
  %2422 = vmatprep.mubr.bf16.mxu0 0
  %2423 = vmatmul.mubr.bf16.gmra.mrb[0].mxu0 %v2291
  %v2424 = vpop.f32.mrb[0].mxu0
  %v2425 = vadd.f32 %v2260, %v2424
  %v2426 = vpop.f32.mrb[0].mxu0
  %v2427 = vpop.f32.mrb[0].mxu0
  %v2428 = vadd.f32 %v2260, %v2427
  %v2429 = vpop.f32.mrb[0].mxu0
  %2430 = vmatprep.mubr.bf16.mxu0 0
  %2431 = vmatmul.mubr.bf16.gmra.mrb[0].mxu0 %v2294
  %v2432 = vpop.f32.mrb[0].mxu0
  %v2433 = vadd.f32 %v2260, %v2432
  %v2434 = vpop.f32.mrb[0].mxu0
  %v2435 = vpop.f32.mrb[0].mxu0
  %v2436 = vadd.f32 %v2260, %v2435
  %v2437 = vpop.f32.mrb[0].mxu0
  %2438 = vmatprep.mubr.bf16.mxu0 0
  %2439 = vmatmul.mubr.bf16.gmra.mrb[0].mxu0 %v2297
  %v2440 = vpop.f32.mrb[0].mxu0
  %v2441 = vadd.f32 %v2260, %v2440
  %v2442 = vpop.f32.mrb[0].mxu0
  %v2443 = vpop.f32.mrb[0].mxu0
  %v2444 = vadd.f32 %v2260, %v2443
  %v2445 = vpop.f32.mrb[0].mxu0
  %2446 = vmatprep.mubr.bf16.mxu0 0
  %2447 = vmatmul.mubr.bf16.gmra.mrb[0].mxu0 %v2300
  %v2448 = vpop.f32.mrb[0].mxu0
  %v2449 = vadd.f32 %v2260, %v2448
  %v2450 = vpop.f32.mrb[0].mxu0
  %v2451 = vpop.f32.mrb[0].mxu0
  %v2452 = vadd.f32 %v2260, %v2451
  %v2453 = vpop.f32.mrb[0].mxu0
  %2454 = vmatprep.mubr.bf16.mxu0 0
  %2455 = vmatmul.mubr.bf16.gmra.mrb[0].mxu0 %v2303
  %v2456 = vpop.f32.mrb[0].mxu0
  %v2457 = vadd.f32 %v2260, %v2456
  %v2458 = vpop.f32.mrb[0].mxu0
  %v2459 = vpop.f32.mrb[0].mxu0
  %v2460 = vadd.f32 %v2260, %v2459
  %v2461 = vpop.f32.mrb[0].mxu0
  %2462 = vmatprep.mubr.bf16.mxu0 0
  %2463 = vmatmul.mubr.bf16.gmra.mrb[0].mxu0 %v2306
  %v2464 = vpop.f32.mrb[0].mxu0
  %v2465 = vadd.f32 %v2260, %v2464
  %v2466 = vpop.f32.mrb[0].mxu0
  %v2467 = vpop.f32.mrb[0].mxu0
  %v2468 = vadd.f32 %v2260, %v2467
  %v2469 = vpop.f32.mrb[0].mxu0
  %2470 = vmatprep.mubr.bf16.mxu0 0
  %2471 = vmatmul.mubr.bf16.gmra.mrb[0].mxu0 %v2309
  %v2472 = vpop.f32.mrb[0].mxu0
  %v2473 = vadd.f32 %v2260, %v2472
  %v2474 = vpop.f32.mrb[0].mxu0
  %v2475 = vpop.f32.mrb[0].mxu0
  %v2476 = vadd.f32 %v2260, %v2475
  %v2477 = vpop.f32.mrb[0].mxu0
  %2478 = vmatprep.mubr.bf16.mxu0 0
  %2479 = vmatmul.mubr.bf16.gmra.mrb[0].mxu0 %v2312
  %v2480 = vpop.f32.mrb[0].mxu0
  %v2481 = vadd.f32 %v2260, %v2480
  %v2482 = vpop.f32.mrb[0].mxu0
  %v2483 = vpop.f32.mrb[0].mxu0
  %v2484 = vadd.f32 %v2260, %v2483
  %v2485 = vpop.f32.mrb[0].mxu0
  %2486 = vmatprep.mubr.bf16.mxu0 0
  %2487 = vmatmul.mubr.bf16.gmra.mrb[0].mxu0 %v2315
  %v2488 = vpop.f32.mrb[0].mxu0
  %v2489 = vadd.f32 %v2260, %v2488
  %v2490 = vpop.f32.mrb[0].mxu0
  %v2491 = vpop.f32.mrb[0].mxu0
  %v2492 = vadd.f32 %v2260, %v2491
  %v2493 = vpop.f32.mrb[0].mxu0
  %2494 = vmatprep.mubr.bf16.mxu0 0
  %2495 = vmatmul.mubr.bf16.gmra.mrb[0].mxu0 %v2318
  %v2496 = vpop.f32.mrb[0].mxu0
  %v2497 = vadd.f32 %v2260, %v2496
  %v2498 = vpop.f32.mrb[0].mxu0
  %v2499 = vpop.f32.mrb[0].mxu0
  %v2500 = vadd.f32 %v2260, %v2499
  %v2501 = vpop.f32.mrb[0].mxu0
  %2502 = vmatprep.mubr.bf16.mxu0 0
  %2503 = vmatmul.mubr.bf16.gmra.mrb[0].mxu0 %v2321
  %v2504 = vpop.f32.mrb[0].mxu0
  %v2505 = vadd.f32 %v2260, %v2504
  %v2506 = vpop.f32.mrb[0].mxu0
  %v2507 = vpop.f32.mrb[0].mxu0
  %v2508 = vadd.f32 %v2260, %v2507
  %v2509 = vpop.f32.mrb[0].mxu0
  %2510 = vmatprep.mubr.bf16.mxu0 0
  %2511 = vmatmul.mubr.bf16.gmra.mrb[0].mxu0 %v2324
  %v2512 = vpop.f32.mrb[0].mxu0
  %v2513 = vadd.f32 %v2260, %v2512
  %v2514 = vpop.f32.mrb[0].mxu0
  %v2515 = vpop.f32.mrb[0].mxu0
  %v2516 = vadd.f32 %v2260, %v2515
  %v2517 = vpop.f32.mrb[0].mxu0
  %2518 = vmatprep.mubr.bf16.mxu0 0
  %2519 = vmatmul.mubr.bf16.gmra.mrb[0].mxu0 %v2327
  %v2520 = vpop.f32.mrb[0].mxu0
  %v2521 = vadd.f32 %v2260, %v2520
  %v2522 = vpop.f32.mrb[0].mxu0
  %v2523 = vpop.f32.mrb[0].mxu0
  %v2524 = vadd.f32 %v2260, %v2523
  %v2525 = vpop.f32.mrb[0].mxu0
  %2526 = vmatprep.mubr.bf16.mxu0 0
  %2527 = vmatmul.mubr.bf16.gmra.mrb[0].mxu0 %v2330
  %v2528 = vpop.f32.mrb[0].mxu0
  %v2529 = vadd.f32 %v2260, %v2528
  %v2530 = vpop.f32.mrb[0].mxu0
  %v2531 = vpop.f32.mrb[0].mxu0
  %v2532 = vadd.f32 %v2260, %v2531
  %v2533 = vpop.f32.mrb[0].mxu0
  %2534 = vmatprep.mubr.bf16.mxu0 0
  %2535 = vmatmul.mubr.bf16.gmra.mrb[0].mxu0 %v2333
  %v2536 = vpop.f32.mrb[0].mxu0
  %v2537 = vadd.f32 %v2260, %v2536
  %v2538 = vpop.f32.mrb[0].mxu0
  %v2539 = vpop.f32.mrb[0].mxu0
  %v2540 = vadd.f32 %v2260, %v2539
  %v2541 = vpop.f32.mrb[0].mxu0
  %2542 = vmatprep.mubr.bf16.mxu0 0
  %2543 = vmatmul.mubr.bf16.gmra.mrb[0].mxu0 %v2336
  %v2544 = vpop.f32.mrb[0].mxu0
  %v2545 = vadd.f32 %v2260, %v2544
  %v2546 = vpop.f32.mrb[0].mxu0
  %v2547 = vpop.f32.mrb[0].mxu0
  %v2548 = vadd.f32 %v2260, %v2547
  %v2549 = vpop.f32.mrb[0].mxu0
  %2550 = vmatprep.mubr.bf16.mxu0 0
  %2551 = vmatmul.mubr.bf16.gmra.mrb[0].mxu0 %v2339
  %v2552 = vpop.f32.mrb[0].mxu0
  %v2553 = vadd.f32 %v2260, %v2552
  %v2554 = vpop.f32.mrb[0].mxu0
  %v2555 = vpop.f32.mrb[0].mxu0
  %v2556 = vadd.f32 %v2260, %v2555
  %v2557 = vpop.f32.mrb[0].mxu0
  %2558 = vmatprep.mubr.bf16.mxu0 0
  %2559 = vmatmul.mubr.bf16.gmra.mrb[0].mxu0 %v2342
  %v2560 = vpop.f32.mrb[0].mxu0
  %v2561 = vadd.f32 %v2260, %v2560
  %v2562 = vpop.f32.mrb[0].mxu0
  %v2563 = vpop.f32.mrb[0].mxu0
  %v2564 = vadd.f32 %v2260, %v2563
  %v2565 = vpop.f32.mrb[0].mxu0
  %2566 = vmatprep.mubr.bf16.mxu0 0
  %2567 = vmatmul.mubr.bf16.gmra.mrb[0].mxu0 %v2345
  %v2568 = vpop.f32.mrb[0].mxu0
  %v2569 = vadd.f32 %v2260, %v2568
  %v2570 = vpop.f32.mrb[0].mxu0
  %v2571 = vpop.f32.mrb[0].mxu0
  %v2572 = vadd.f32 %v2260, %v2571
  %v2573 = vpop.f32.mrb[0].mxu0
  %2574 = vmatprep.mubr.bf16.mxu0 0
  %2575 = vmatmul.mubr.bf16.gmra.mrb[0].mxu0 %v2348
  %v2576 = vpop.f32.mrb[0].mxu0
  %v2577 = vadd.f32 %v2260, %v2576
  %v2578 = vpop.f32.mrb[0].mxu0
  %v2579 = vpop.f32.mrb[0].mxu0
  %v2580 = vadd.f32 %v2260, %v2579
  %v2581 = vpop.f32.mrb[0].mxu0
  %2582 = vmatprep.mubr.bf16.mxu0 0
  %2583 = vmatmul.mubr.bf16.gmra.mrb[0].mxu0 %v2351
  %v2584 = vpop.f32.mrb[0].mxu0
  %v2585 = vadd.f32 %v2260, %v2584
  %v2586 = vpop.f32.mrb[0].mxu0
  %v2587 = vpop.f32.mrb[0].mxu0
  %v2588 = vadd.f32 %v2260, %v2587
  %v2589 = vpop.f32.mrb[0].mxu0
  %2590 = vmatprep.mubr.bf16.mxu0 0
  %2591 = vmatmul.mubr.bf16.gmra.mrb[0].mxu0 %v2354
  %v2592 = vpop.f32.mrb[0].mxu0
  %v2593 = vadd.f32 %v2260, %v2592
  %v2594 = vpop.f32.mrb[0].mxu0
  %v2595 = vpop.f32.mrb[0].mxu0
  %v2596 = vadd.f32 %v2260, %v2595
  %v2597 = vpop.f32.mrb[0].mxu0
  %2598 = vmatprep.mubr.bf16.mxu0 0
  %2599 = vmatmul.mubr.bf16.gmra.mrb[0].mxu0 %v2357
  %v2600 = vpop.f32.mrb[0].mxu0
  %v2601 = vadd.f32 %v2260, %v2600
  %v2602 = vpop.f32.mrb[0].mxu0
  %v2603 = vpop.f32.mrb[0].mxu0
  %v2604 = vadd.f32 %v2260, %v2603
  %v2605 = vpop.f32.mrb[0].mxu0
  %2606 = vmatprep.mubr.bf16.mxu0 0
  %2607 = vmatmul.mubr.bf16.gmra.mrb[0].mxu0 %v2360
  %v2608 = vpop.f32.mrb[0].mxu0
  %v2609 = vadd.f32 %v2260, %v2608
  %v2610 = vpop.f32.mrb[0].mxu0
  %v2611 = vpop.f32.mrb[0].mxu0
  %v2612 = vadd.f32 %v2260, %v2611
  %v2613 = vpop.f32.mrb[0].mxu0
  %2614 = vmatprep.mubr.bf16.mxu0 0
  %2615 = vmatmul.mubr.bf16.gmra.mrb[0].mxu0 %v2363
  %v2616 = vpop.f32.mrb[0].mxu0
  %v2617 = vadd.f32 %v2260, %v2616
  %v2618 = vpop.f32.mrb[0].mxu0
  %v2619 = vpop.f32.mrb[0].mxu0
  %v2620 = vadd.f32 %v2260, %v2619
  %v2621 = vpop.f32.mrb[0].mxu0
  %2622 = vmatprep.mubr.bf16.mxu0 0
  %2623 = vmatmul.mubr.bf16.gmra.mrb[0].mxu0 %v2366
  %v2624 = vpop.f32.mrb[0].mxu0
  %v2625 = vadd.f32 %v2260, %v2624
  %v2626 = vpop.f32.mrb[0].mxu0
  %v2627 = vpop.f32.mrb[0].mxu0
  %v2628 = vadd.f32 %v2260, %v2627
  %v2629 = vpop.f32.mrb[0].mxu0
  %2630 = vmatprep.mubr.bf16.mxu0 0
  %2631 = vmatmul.mubr.bf16.gmra.mrb[0].mxu0 %v2369
  %v2632 = vpop.f32.mrb[0].mxu0
  %v2633 = vadd.f32 %v2260, %v2632
  %v2634 = vpop.f32.mrb[0].mxu0
  %v2635 = vpop.f32.mrb[0].mxu0
  %v2636 = vadd.f32 %v2260, %v2635
  %v2637 = vpop.f32.mrb[0].mxu0
  %2638 = vmatprep.mubr.bf16.mxu0 0
  %2639 = vmatmul.mubr.bf16.gmra.mrb[0].mxu0 %v2372
  %v2640 = vpop.f32.mrb[0].mxu0
  %v2641 = vadd.f32 %v2260, %v2640
  %v2642 = vpop.f32.mrb[0].mxu0
  %v2643 = vpop.f32.mrb[0].mxu0
  %v2644 = vadd.f32 %v2260, %v2643
  %v2645 = vpop.f32.mrb[0].mxu0
  %2646 = vmatprep.mubr.bf16.mxu0 0
  %2647 = vmatmul.mubr.bf16.gmra.mrb[0].mxu0 %v2375
  %v2648 = vpop.f32.mrb[0].mxu0
  %v2649 = vadd.f32 %v2260, %v2648
  %v2650 = vpop.f32.mrb[0].mxu0
  %v2651 = vpop.f32.mrb[0].mxu0
  %v2652 = vadd.f32 %v2260, %v2651
  %v2653 = vpop.f32.mrb[0].mxu0
  %2654 = vmatprep.mubr.bf16.mxu0 0
  %2655 = vmatmul.mubr.bf16.gmra.mrb[0].mxu0 %v2378
  %v2656 = vpop.f32.mrb[0].mxu0
  %v2657 = vadd.f32 %v2260, %v2656
  %v2658 = vpop.f32.mrb[0].mxu0
  %v2659 = vpop.f32.mrb[0].mxu0
  %v2660 = vadd.f32 %v2260, %v2659
  %v2661 = vpop.f32.mrb[0].mxu0
  %2662 = vmatprep.mubr.bf16.mxu0 0
  %2663 = vmatmul.mubr.bf16.gmra.mrb[0].mxu0 %v2381
  %v2664 = vpop.f32.mrb[0].mxu0
  %v2665 = vadd.f32 %v2260, %v2664
  %v2666 = vpop.f32.mrb[0].mxu0
  %v2667 = vpop.f32.mrb[0].mxu0
  %v2668 = vadd.f32 %v2260, %v2667
  %v2669 = vpop.f32.mrb[0].mxu0
  %2670 = vmatprep.mubr.bf16.mxu0 0
  %2671 = vmatmul.mubr.bf16.gmra.mrb[0].mxu0 %v2384
  %v2672 = vpop.f32.mrb[0].mxu0
  %v2673 = vadd.f32 %v2260, %v2672
  %v2674 = vpop.f32.mrb[0].mxu0
  %v2675 = vpop.f32.mrb[0].mxu0
  %v2676 = vadd.f32 %v2260, %v2675
  %v2677 = vpop.f32.mrb[0].mxu0
  %2678 = vdwg.mxu0
  %vm2679 = vcmask 130048
  %v2680 = vsel %vm2679, %v2425, 0.0
  %v2681 = vsel %vm2679, %v2428, 0.0
  %v2682 = vadd.f32 %v2680, %v2681
  %v2683 = vsel %vm2679, %v2433, 0.0
  %v2684 = vadd.f32 %v2682, %v2683
  %v2685 = vsel %vm2679, %v2436, 0.0
  %v2686 = vadd.f32 %v2684, %v2685
  %v2687 = vsel %vm2679, %v2441, 0.0
  %v2688 = vadd.f32 %v2686, %v2687
  %v2689 = vsel %vm2679, %v2444, 0.0
  %v2690 = vadd.f32 %v2688, %v2689
  %v2691 = vsel %vm2679, %v2449, 0.0
  %v2692 = vadd.f32 %v2690, %v2691
  %v2693 = vsel %vm2679, %v2452, 0.0
  %v2694 = vadd.f32 %v2692, %v2693
  %v2695 = vsel %vm2679, %v2457, 0.0
  %v2696 = vadd.f32 %v2694, %v2695
  %v2697 = vsel %vm2679, %v2460, 0.0
  %v2698 = vadd.f32 %v2696, %v2697
  %v2699 = vsel %vm2679, %v2465, 0.0
  %v2700 = vadd.f32 %v2698, %v2699
  %v2701 = vsel %vm2679, %v2468, 0.0
  %v2702 = vadd.f32 %v2700, %v2701
  %v2703 = vsel %vm2679, %v2473, 0.0
  %v2704 = vadd.f32 %v2702, %v2703
  %v2705 = vsel %vm2679, %v2476, 0.0
  %v2706 = vadd.f32 %v2704, %v2705
  %v2707 = vsel %vm2679, %v2481, 0.0
  %v2708 = vadd.f32 %v2706, %v2707
  %v2709 = vsel %vm2679, %v2484, 0.0
  %v2710 = vadd.f32 %v2708, %v2709
  %v2711 = vsel %vm2679, %v2489, 0.0
  %v2712 = vadd.f32 %v2710, %v2711
  %v2713 = vsel %vm2679, %v2492, 0.0
  %v2714 = vadd.f32 %v2712, %v2713
  %v2715 = vsel %vm2679, %v2497, 0.0
  %v2716 = vadd.f32 %v2714, %v2715
  %v2717 = vsel %vm2679, %v2500, 0.0
  %v2718 = vadd.f32 %v2716, %v2717
  %v2719 = vsel %vm2679, %v2505, 0.0
  %v2720 = vadd.f32 %v2718, %v2719
  %v2721 = vsel %vm2679, %v2508, 0.0
  %v2722 = vadd.f32 %v2720, %v2721
  %v2723 = vsel %vm2679, %v2513, 0.0
  %v2724 = vadd.f32 %v2722, %v2723
  %v2725 = vsel %vm2679, %v2516, 0.0
  %v2726 = vadd.f32 %v2724, %v2725
  %v2727 = vsel %vm2679, %v2521, 0.0
  %v2728 = vadd.f32 %v2726, %v2727
  %v2729 = vsel %vm2679, %v2524, 0.0
  %v2730 = vadd.f32 %v2728, %v2729
  %v2731 = vsel %vm2679, %v2529, 0.0
  %v2732 = vadd.f32 %v2730, %v2731
  %v2733 = vsel %vm2679, %v2532, 0.0
  %v2734 = vadd.f32 %v2732, %v2733
  %v2735 = vsel %vm2679, %v2537, 0.0
  %v2736 = vadd.f32 %v2734, %v2735
  %v2737 = vsel %vm2679, %v2540, 0.0
  %v2738 = vadd.f32 %v2736, %v2737
  %v2739 = vsel %vm2679, %v2545, 0.0
  %v2740 = vadd.f32 %v2738, %v2739
  %v2741 = vsel %vm2679, %v2548, 0.0
  %v2742 = vadd.f32 %v2740, %v2741
  %v2743 = vsel %vm2679, %v2553, 0.0
  %v2744 = vadd.f32 %v2742, %v2743
  %v2745 = vsel %vm2679, %v2556, 0.0
  %v2746 = vadd.f32 %v2744, %v2745
  %v2747 = vsel %vm2679, %v2561, 0.0
  %v2748 = vadd.f32 %v2746, %v2747
  %v2749 = vsel %vm2679, %v2564, 0.0
  %v2750 = vadd.f32 %v2748, %v2749
  %v2751 = vsel %vm2679, %v2569, 0.0
  %v2752 = vadd.f32 %v2750, %v2751
  %v2753 = vsel %vm2679, %v2572, 0.0
  %v2754 = vadd.f32 %v2752, %v2753
  %v2755 = vsel %vm2679, %v2577, 0.0
  %v2756 = vadd.f32 %v2754, %v2755
  %v2757 = vsel %vm2679, %v2580, 0.0
  %v2758 = vadd.f32 %v2756, %v2757
  %v2759 = vsel %vm2679, %v2585, 0.0
  %v2760 = vadd.f32 %v2758, %v2759
  %v2761 = vsel %vm2679, %v2588, 0.0
  %v2762 = vadd.f32 %v2760, %v2761
  %v2763 = vsel %vm2679, %v2593, 0.0
  %v2764 = vadd.f32 %v2762, %v2763
  %v2765 = vsel %vm2679, %v2596, 0.0
  %v2766 = vadd.f32 %v2764, %v2765
  %v2767 = vsel %vm2679, %v2601, 0.0
  %v2768 = vadd.f32 %v2766, %v2767
  %v2769 = vsel %vm2679, %v2604, 0.0
  %v2770 = vadd.f32 %v2768, %v2769
  %v2771 = vsel %vm2679, %v2609, 0.0
  %v2772 = vadd.f32 %v2770, %v2771
  %v2773 = vsel %vm2679, %v2612, 0.0
  %v2774 = vadd.f32 %v2772, %v2773
  %v2775 = vsel %vm2679, %v2617, 0.0
  %v2776 = vadd.f32 %v2774, %v2775
  %v2777 = vsel %vm2679, %v2620, 0.0
  %v2778 = vadd.f32 %v2776, %v2777
  %v2779 = vsel %vm2679, %v2625, 0.0
  %v2780 = vadd.f32 %v2778, %v2779
  %v2781 = vsel %vm2679, %v2628, 0.0
  %v2782 = vadd.f32 %v2780, %v2781
  %v2783 = vsel %vm2679, %v2633, 0.0
  %v2784 = vadd.f32 %v2782, %v2783
  %v2785 = vsel %vm2679, %v2636, 0.0
  %v2786 = vadd.f32 %v2784, %v2785
  %v2787 = vsel %vm2679, %v2641, 0.0
  %v2788 = vadd.f32 %v2786, %v2787
  %v2789 = vsel %vm2679, %v2644, 0.0
  %v2790 = vadd.f32 %v2788, %v2789
  %v2791 = vsel %vm2679, %v2649, 0.0
  %v2792 = vadd.f32 %v2790, %v2791
  %v2793 = vsel %vm2679, %v2652, 0.0
  %v2794 = vadd.f32 %v2792, %v2793
  %v2795 = vsel %vm2679, %v2657, 0.0
  %v2796 = vadd.f32 %v2794, %v2795
  %v2797 = vsel %vm2679, %v2660, 0.0
  %v2798 = vadd.f32 %v2796, %v2797
  %v2799 = vsel %vm2679, %v2665, 0.0
  %v2800 = vadd.f32 %v2798, %v2799
  %v2801 = vsel %vm2679, %v2668, 0.0
  %v2802 = vadd.f32 %v2800, %v2801
  %v2803 = vsel %vm2679, %v2673, 0.0
  %v2804 = vadd.f32 %v2802, %v2803
  %v2805 = vsel %vm2679, %v2676, 0.0
  %v2806 = vadd.f32 %v2804, %v2805
  %v2807 = vrot.slane %v2806, 4
  %v2808 = vadd.f32 %v2806, %v2807
  %v2809 = vrot.slane %v2808, 2
  %v2810 = vadd.f32 %v2808, %v2809
  %v2811 = vrot.slane %v2810, 1
  %v2812 = vadd.f32 %v2810, %v2811
  %v2813 = vmul.f32 %v2812, 0.001953125
  %v2814 = vmul.f32 %v2425, %v2425
  %v2815 = vmul.f32 %v2428, %v2428
  %v2816 = vmul.f32 %v2433, %v2433
  %v2817 = vmul.f32 %v2436, %v2436
  %v2818 = vmul.f32 %v2441, %v2441
  %v2819 = vmul.f32 %v2444, %v2444
  %v2820 = vmul.f32 %v2449, %v2449
  %v2821 = vmul.f32 %v2452, %v2452
  %v2822 = vmul.f32 %v2457, %v2457
  %v2823 = vmul.f32 %v2460, %v2460
  %v2824 = vmul.f32 %v2465, %v2465
  %v2825 = vmul.f32 %v2468, %v2468
  %v2826 = vmul.f32 %v2473, %v2473
  %v2827 = vmul.f32 %v2476, %v2476
  %v2828 = vmul.f32 %v2481, %v2481
  %v2829 = vmul.f32 %v2484, %v2484
  %v2830 = vmul.f32 %v2489, %v2489
  %v2831 = vmul.f32 %v2492, %v2492
  %v2832 = vmul.f32 %v2497, %v2497
  %v2833 = vmul.f32 %v2500, %v2500
  %v2834 = vmul.f32 %v2505, %v2505
  %v2835 = vmul.f32 %v2508, %v2508
  %v2836 = vmul.f32 %v2513, %v2513
  %v2837 = vmul.f32 %v2516, %v2516
  %v2838 = vmul.f32 %v2521, %v2521
  %v2839 = vmul.f32 %v2524, %v2524
  %v2840 = vmul.f32 %v2529, %v2529
  %v2841 = vmul.f32 %v2532, %v2532
  %v2842 = vmul.f32 %v2537, %v2537
  %v2843 = vmul.f32 %v2540, %v2540
  %v2844 = vmul.f32 %v2545, %v2545
  %v2845 = vmul.f32 %v2548, %v2548
  %v2846 = vmul.f32 %v2553, %v2553
  %v2847 = vmul.f32 %v2556, %v2556
  %v2848 = vmul.f32 %v2561, %v2561
  %v2849 = vmul.f32 %v2564, %v2564
  %v2850 = vmul.f32 %v2569, %v2569
  %v2851 = vmul.f32 %v2572, %v2572
  %v2852 = vmul.f32 %v2577, %v2577
  %v2853 = vmul.f32 %v2580, %v2580
  %v2854 = vmul.f32 %v2585, %v2585
  %v2855 = vmul.f32 %v2588, %v2588
  %v2856 = vmul.f32 %v2593, %v2593
  %v2857 = vmul.f32 %v2596, %v2596
  %v2858 = vmul.f32 %v2601, %v2601
  %v2859 = vmul.f32 %v2604, %v2604
  %v2860 = vmul.f32 %v2609, %v2609
  %v2861 = vmul.f32 %v2612, %v2612
  %v2862 = vmul.f32 %v2617, %v2617
  %v2863 = vmul.f32 %v2620, %v2620
  %v2864 = vmul.f32 %v2625, %v2625
  %v2865 = vmul.f32 %v2628, %v2628
  %v2866 = vmul.f32 %v2633, %v2633
  %v2867 = vmul.f32 %v2636, %v2636
  %v2868 = vmul.f32 %v2641, %v2641
  %v2869 = vmul.f32 %v2644, %v2644
  %v2870 = vmul.f32 %v2649, %v2649
  %v2871 = vmul.f32 %v2652, %v2652
  %v2872 = vmul.f32 %v2657, %v2657
  %v2873 = vmul.f32 %v2660, %v2660
  %v2874 = vmul.f32 %v2665, %v2665
  %v2875 = vmul.f32 %v2668, %v2668
  %v2876 = vmul.f32 %v2673, %v2673
  %v2877 = vmul.f32 %v2676, %v2676
  %v2878 = vsel %vm2679, %v2814, 0.0
  %v2879 = vsel %vm2679, %v2815, 0.0
  %v2880 = vadd.f32 %v2878, %v2879
  %v2881 = vsel %vm2679, %v2816, 0.0
  %v2882 = vadd.f32 %v2880, %v2881
  %v2883 = vsel %vm2679, %v2817, 0.0
  %v2884 = vadd.f32 %v2882, %v2883
  %v2885 = vsel %vm2679, %v2818, 0.0
  %v2886 = vadd.f32 %v2884, %v2885
  %v2887 = vsel %vm2679, %v2819, 0.0
  %v2888 = vadd.f32 %v2886, %v2887
  %v2889 = vsel %vm2679, %v2820, 0.0
  %v2890 = vadd.f32 %v2888, %v2889
  %v2891 = vsel %vm2679, %v2821, 0.0
  %v2892 = vadd.f32 %v2890, %v2891
  %v2893 = vsel %vm2679, %v2822, 0.0
  %v2894 = vadd.f32 %v2892, %v2893
  %v2895 = vsel %vm2679, %v2823, 0.0
  %v2896 = vadd.f32 %v2894, %v2895
  %v2897 = vsel %vm2679, %v2824, 0.0
  %v2898 = vadd.f32 %v2896, %v2897
  %v2899 = vsel %vm2679, %v2825, 0.0
  %v2900 = vadd.f32 %v2898, %v2899
  %v2901 = vsel %vm2679, %v2826, 0.0
  %v2902 = vadd.f32 %v2900, %v2901
  %v2903 = vsel %vm2679, %v2827, 0.0
  %v2904 = vadd.f32 %v2902, %v2903
  %v2905 = vsel %vm2679, %v2828, 0.0
  %v2906 = vadd.f32 %v2904, %v2905
  %v2907 = vsel %vm2679, %v2829, 0.0
  %v2908 = vadd.f32 %v2906, %v2907
  %v2909 = vsel %vm2679, %v2830, 0.0
  %v2910 = vadd.f32 %v2908, %v2909
  %v2911 = vsel %vm2679, %v2831, 0.0
  %v2912 = vadd.f32 %v2910, %v2911
  %v2913 = vsel %vm2679, %v2832, 0.0
  %v2914 = vadd.f32 %v2912, %v2913
  %v2915 = vsel %vm2679, %v2833, 0.0
  %v2916 = vadd.f32 %v2914, %v2915
  %v2917 = vsel %vm2679, %v2834, 0.0
  %v2918 = vadd.f32 %v2916, %v2917
  %v2919 = vsel %vm2679, %v2835, 0.0
  %v2920 = vadd.f32 %v2918, %v2919
  %v2921 = vsel %vm2679, %v2836, 0.0
  %v2922 = vadd.f32 %v2920, %v2921
  %v2923 = vsel %vm2679, %v2837, 0.0
  %v2924 = vadd.f32 %v2922, %v2923
  %v2925 = vsel %vm2679, %v2838, 0.0
  %v2926 = vadd.f32 %v2924, %v2925
  %v2927 = vsel %vm2679, %v2839, 0.0
  %v2928 = vadd.f32 %v2926, %v2927
  %v2929 = vsel %vm2679, %v2840, 0.0
  %v2930 = vadd.f32 %v2928, %v2929
  %v2931 = vsel %vm2679, %v2841, 0.0
  %v2932 = vadd.f32 %v2930, %v2931
  %v2933 = vsel %vm2679, %v2842, 0.0
  %v2934 = vadd.f32 %v2932, %v2933
  %v2935 = vsel %vm2679, %v2843, 0.0
  %v2936 = vadd.f32 %v2934, %v2935
  %v2937 = vsel %vm2679, %v2844, 0.0
  %v2938 = vadd.f32 %v2936, %v2937
  %v2939 = vsel %vm2679, %v2845, 0.0
  %v2940 = vadd.f32 %v2938, %v2939
  %v2941 = vsel %vm2679, %v2846, 0.0
  %v2942 = vadd.f32 %v2940, %v2941
  %v2943 = vsel %vm2679, %v2847, 0.0
  %v2944 = vadd.f32 %v2942, %v2943
  %v2945 = vsel %vm2679, %v2848, 0.0
  %v2946 = vadd.f32 %v2944, %v2945
  %v2947 = vsel %vm2679, %v2849, 0.0
  %v2948 = vadd.f32 %v2946, %v2947
  %v2949 = vsel %vm2679, %v2850, 0.0
  %v2950 = vadd.f32 %v2948, %v2949
  %v2951 = vsel %vm2679, %v2851, 0.0
  %v2952 = vadd.f32 %v2950, %v2951
  %v2953 = vsel %vm2679, %v2852, 0.0
  %v2954 = vadd.f32 %v2952, %v2953
  %v2955 = vsel %vm2679, %v2853, 0.0
  %v2956 = vadd.f32 %v2954, %v2955
  %v2957 = vsel %vm2679, %v2854, 0.0
  %v2958 = vadd.f32 %v2956, %v2957
  %v2959 = vsel %vm2679, %v2855, 0.0
  %v2960 = vadd.f32 %v2958, %v2959
  %v2961 = vsel %vm2679, %v2856, 0.0
  %v2962 = vadd.f32 %v2960, %v2961
  %v2963 = vsel %vm2679, %v2857, 0.0
  %v2964 = vadd.f32 %v2962, %v2963
  %v2965 = vsel %vm2679, %v2858, 0.0
  %v2966 = vadd.f32 %v2964, %v2965
  %v2967 = vsel %vm2679, %v2859, 0.0
  %v2968 = vadd.f32 %v2966, %v2967
  %v2969 = vsel %vm2679, %v2860, 0.0
  %v2970 = vadd.f32 %v2968, %v2969
  %v2971 = vsel %vm2679, %v2861, 0.0
  %v2972 = vadd.f32 %v2970, %v2971
  %v2973 = vsel %vm2679, %v2862, 0.0
  %v2974 = vadd.f32 %v2972, %v2973
  %v2975 = vsel %vm2679, %v2863, 0.0
  %v2976 = vadd.f32 %v2974, %v2975
  %v2977 = vsel %vm2679, %v2864, 0.0
  %v2978 = vadd.f32 %v2976, %v2977
  %v2979 = vsel %vm2679, %v2865, 0.0
  %v2980 = vadd.f32 %v2978, %v2979
  %v2981 = vsel %vm2679, %v2866, 0.0
  %v2982 = vadd.f32 %v2980, %v2981
  %v2983 = vsel %vm2679, %v2867, 0.0
  %v2984 = vadd.f32 %v2982, %v2983
  %v2985 = vsel %vm2679, %v2868, 0.0
  %v2986 = vadd.f32 %v2984, %v2985
  %v2987 = vsel %vm2679, %v2869, 0.0
  %v2988 = vadd.f32 %v2986, %v2987
  %v2989 = vsel %vm2679, %v2870, 0.0
  %v2990 = vadd.f32 %v2988, %v2989
  %v2991 = vsel %vm2679, %v2871, 0.0
  %v2992 = vadd.f32 %v2990, %v2991
  %v2993 = vsel %vm2679, %v2872, 0.0
  %v2994 = vadd.f32 %v2992, %v2993
  %v2995 = vsel %vm2679, %v2873, 0.0
  %v2996 = vadd.f32 %v2994, %v2995
  %v2997 = vsel %vm2679, %v2874, 0.0
  %v2998 = vadd.f32 %v2996, %v2997
  %v2999 = vsel %vm2679, %v2875, 0.0
  %v3000 = vadd.f32 %v2998, %v2999
  %v3001 = vsel %vm2679, %v2876, 0.0
  %v3002 = vadd.f32 %v3000, %v3001
  %v3003 = vsel %vm2679, %v2877, 0.0
  %v3004 = vadd.f32 %v3002, %v3003
  %v3005 = vrot.slane %v3004, 4
  %v3006 = vadd.f32 %v3004, %v3005
  %v3007 = vrot.slane %v3006, 2
  %v3008 = vadd.f32 %v3006, %v3007
  %v3009 = vrot.slane %v3008, 1
  %v3010 = vadd.f32 %v3008, %v3009
  %v3011 = vmul.f32 %v3010, 0.001953125
  %v3012 = vmul.f32 %v2813, %v2813
  %v3013 = vsub.f32 %v3011, %v3012
  %v3014 = vadd.f32 %v3013, 1e-05
  %v3015 = vrsqrt.pop %v3014
  %v3016 = vld [vmem:[%s3] sm:$0x1]
  %v3017 = vmul.f32 %v3015, %v3016
  %v3018 = vsub.f32 %v2425, %v2813
  %v3019 = vsub.f32 %v2428, %v2813
  %v3020 = vsub.f32 %v2433, %v2813
  %v3021 = vsub.f32 %v2436, %v2813
  %v3022 = vsub.f32 %v2441, %v2813
  %v3023 = vsub.f32 %v2444, %v2813
  %v3024 = vsub.f32 %v2449, %v2813
  %v3025 = vsub.f32 %v2452, %v2813
  %v3026 = vsub.f32 %v2457, %v2813
  %v3027 = vsub.f32 %v2460, %v2813
  %v3028 = vsub.f32 %v2465, %v2813
  %v3029 = vsub.f32 %v2468, %v2813
  %v3030 = vsub.f32 %v2473, %v2813
  %v3031 = vsub.f32 %v2476, %v2813
  %v3032 = vsub.f32 %v2481, %v2813
  %v3033 = vsub.f32 %v2484, %v2813
  %v3034 = vsub.f32 %v2489, %v2813
  %v3035 = vsub.f32 %v2492, %v2813
  %v3036 = vsub.f32 %v2497, %v2813
  %v3037 = vsub.f32 %v2500, %v2813
  %v3038 = vsub.f32 %v2505, %v2813
  %v3039 = vsub.f32 %v2508, %v2813
  %v3040 = vsub.f32 %v2513, %v2813
  %v3041 = vsub.f32 %v2516, %v2813
  %v3042 = vsub.f32 %v2521, %v2813
  %v3043 = vsub.f32 %v2524, %v2813
  %v3044 = vsub.f32 %v2529, %v2813
  %v3045 = vsub.f32 %v2532, %v2813
  %v3046 = vsub.f32 %v2537, %v2813
  %v3047 = vsub.f32 %v2540, %v2813
  %v3048 = vsub.f32 %v2545, %v2813
  %v3049 = vsub.f32 %v2548, %v2813
  %v3050 = vsub.f32 %v2553, %v2813
  %v3051 = vsub.f32 %v2556, %v2813
  %v3052 = vsub.f32 %v2561, %v2813
  %v3053 = vsub.f32 %v2564, %v2813
  %v3054 = vsub.f32 %v2569, %v2813
  %v3055 = vsub.f32 %v2572, %v2813
  %v3056 = vsub.f32 %v2577, %v2813
  %v3057 = vsub.f32 %v2580, %v2813
  %v3058 = vsub.f32 %v2585, %v2813
  %v3059 = vsub.f32 %v2588, %v2813
  %v3060 = vsub.f32 %v2593, %v2813
  %v3061 = vsub.f32 %v2596, %v2813
  %v3062 = vsub.f32 %v2601, %v2813
  %v3063 = vsub.f32 %v2604, %v2813
  %v3064 = vsub.f32 %v2609, %v2813
  %v3065 = vsub.f32 %v2612, %v2813
  %v3066 = vsub.f32 %v2617, %v2813
  %v3067 = vsub.f32 %v2620, %v2813
  %v3068 = vsub.f32 %v2625, %v2813
  %v3069 = vsub.f32 %v2628, %v2813
  %v3070 = vsub.f32 %v2633, %v2813
  %v3071 = vsub.f32 %v2636, %v2813
  %v3072 = vsub.f32 %v2641, %v2813
  %v3073 = vsub.f32 %v2644, %v2813
  %v3074 = vsub.f32 %v2649, %v2813
  %v3075 = vsub.f32 %v2652, %v2813
  %v3076 = vsub.f32 %v2657, %v2813
  %v3077 = vsub.f32 %v2660, %v2813
  %v3078 = vsub.f32 %v2665, %v2813
  %v3079 = vsub.f32 %v2668, %v2813
  %v3080 = vsub.f32 %v2673, %v2813
  %v3081 = vsub.f32 %v2676, %v2813
  %v3082 = vlaneseq
  %v3083 = vshrl.u32 %v3082, 7
  %v3084 = vsub.s32 0, %v3083
  %v3085 = vrot.slane %v3017, %v3084
  %v3086 = vmul.f32 %v3018, %v3085
  %v3087 = vmul.f32 %v3019, %v3085
  %v3088 = vmul.f32 %v3020, %v3085
  %v3089 = vmul.f32 %v3021, %v3085
  %v3090 = vmul.f32 %v3022, %v3085
  %v3091 = vmul.f32 %v3023, %v3085
  %v3092 = vmul.f32 %v3024, %v3085
  %v3093 = vmul.f32 %v3025, %v3085
  %v3094 = vmul.f32 %v3026, %v3085
  %v3095 = vmul.f32 %v3027, %v3085
  %v3096 = vmul.f32 %v3028, %v3085
  %v3097 = vmul.f32 %v3029, %v3085
  %v3098 = vmul.f32 %v3030, %v3085
  %v3099 = vmul.f32 %v3031, %v3085
  %v3100 = vmul.f32 %v3032, %v3085
  %v3101 = vmul.f32 %v3033, %v3085
  %v3102 = vmul.f32 %v3034, %v3085
  %v3103 = vmul.f32 %v3035, %v3085
  %v3104 = vmul.f32 %v3036, %v3085
  %v3105 = vmul.f32 %v3037, %v3085
  %v3106 = vmul.f32 %v3038, %v3085
  %v3107 = vmul.f32 %v3039, %v3085
  %v3108 = vmul.f32 %v3040, %v3085
  %v3109 = vmul.f32 %v3041, %v3085
  %v3110 = vmul.f32 %v3042, %v3085
  %v3111 = vmul.f32 %v3043, %v3085
  %v3112 = vmul.f32 %v3044, %v3085
  %v3113 = vmul.f32 %v3045, %v3085
  %v3114 = vmul.f32 %v3046, %v3085
  %v3115 = vmul.f32 %v3047, %v3085
  %v3116 = vmul.f32 %v3048, %v3085
  %v3117 = vmul.f32 %v3049, %v3085
  %v3118 = vmul.f32 %v3050, %v3085
  %v3119 = vmul.f32 %v3051, %v3085
  %v3120 = vmul.f32 %v3052, %v3085
  %v3121 = vmul.f32 %v3053, %v3085
  %v3122 = vmul.f32 %v3054, %v3085
  %v3123 = vmul.f32 %v3055, %v3085
  %v3124 = vmul.f32 %v3056, %v3085
  %v3125 = vmul.f32 %v3057, %v3085
  %v3126 = vmul.f32 %v3058, %v3085
  %v3127 = vmul.f32 %v3059, %v3085
  %v3128 = vmul.f32 %v3060, %v3085
  %v3129 = vmul.f32 %v3061, %v3085
  %v3130 = vmul.f32 %v3062, %v3085
  %v3131 = vmul.f32 %v3063, %v3085
  %v3132 = vmul.f32 %v3064, %v3085
  %v3133 = vmul.f32 %v3065, %v3085
  %v3134 = vmul.f32 %v3066, %v3085
  %v3135 = vmul.f32 %v3067, %v3085
  %v3136 = vmul.f32 %v3068, %v3085
  %v3137 = vmul.f32 %v3069, %v3085
  %v3138 = vmul.f32 %v3070, %v3085
  %v3139 = vmul.f32 %v3071, %v3085
  %v3140 = vmul.f32 %v3072, %v3085
  %v3141 = vmul.f32 %v3073, %v3085
  %v3142 = vmul.f32 %v3074, %v3085
  %v3143 = vmul.f32 %v3075, %v3085
  %v3144 = vmul.f32 %v3076, %v3085
  %v3145 = vmul.f32 %v3077, %v3085
  %v3146 = vmul.f32 %v3078, %v3085
  %v3147 = vmul.f32 %v3079, %v3085
  %v3148 = vmul.f32 %v3080, %v3085
  %v3149 = vmul.f32 %v3081, %v3085
  %v3150 = vld [vmem:[%s4] sm:$0x1]
  %v3152 = vlaneseq
  %v3153 = vshrl.u32 %v3152, 7
  %v3154 = vsub.s32 0, %v3153
  %v3155 = vrot.slane %v3150, %v3154
  %v3157 = vadd.f32 %v3086, %v3155
  %v3158 = vadd.f32 %v3087, %v3155
  %v3159 = vadd.f32 %v3088, %v3155
  %v3160 = vadd.f32 %v3089, %v3155
  %v3161 = vadd.f32 %v3090, %v3155
  %v3162 = vadd.f32 %v3091, %v3155
  %v3163 = vadd.f32 %v3092, %v3155
  %v3164 = vadd.f32 %v3093, %v3155
  %v3165 = vadd.f32 %v3094, %v3155
  %v3166 = vadd.f32 %v3095, %v3155
  %v3167 = vadd.f32 %v3096, %v3155
  %v3168 = vadd.f32 %v3097, %v3155
  %v3169 = vadd.f32 %v3098, %v3155
  %v3170 = vadd.f32 %v3099, %v3155
  %v3171 = vadd.f32 %v3100, %v3155
  %v3172 = vadd.f32 %v3101, %v3155
  %v3173 = vadd.f32 %v3102, %v3155
  %v3174 = vadd.f32 %v3103, %v3155
  %v3175 = vadd.f32 %v3104, %v3155
  %v3176 = vadd.f32 %v3105, %v3155
  %v3177 = vadd.f32 %v3106, %v3155
  %v3178 = vadd.f32 %v3107, %v3155
  %v3179 = vadd.f32 %v3108, %v3155
  %v3180 = vadd.f32 %v3109, %v3155
  %v3181 = vadd.f32 %v3110, %v3155
  %v3182 = vadd.f32 %v3111, %v3155
  %v3183 = vadd.f32 %v3112, %v3155
  %v3184 = vadd.f32 %v3113, %v3155
  %v3185 = vadd.f32 %v3114, %v3155
  %v3186 = vadd.f32 %v3115, %v3155
  %v3187 = vadd.f32 %v3116, %v3155
  %v3188 = vadd.f32 %v3117, %v3155
  %v3189 = vadd.f32 %v3118, %v3155
  %v3190 = vadd.f32 %v3119, %v3155
  %v3191 = vadd.f32 %v3120, %v3155
  %v3192 = vadd.f32 %v3121, %v3155
  %v3193 = vadd.f32 %v3122, %v3155
  %v3194 = vadd.f32 %v3123, %v3155
  %v3195 = vadd.f32 %v3124, %v3155
  %v3196 = vadd.f32 %v3125, %v3155
  %v3197 = vadd.f32 %v3126, %v3155
  %v3198 = vadd.f32 %v3127, %v3155
  %v3199 = vadd.f32 %v3128, %v3155
  %v3200 = vadd.f32 %v3129, %v3155
  %v3201 = vadd.f32 %v3130, %v3155
  %v3202 = vadd.f32 %v3131, %v3155
  %v3203 = vadd.f32 %v3132, %v3155
  %v3204 = vadd.f32 %v3133, %v3155
  %v3205 = vadd.f32 %v3134, %v3155
  %v3206 = vadd.f32 %v3135, %v3155
  %v3207 = vadd.f32 %v3136, %v3155
  %v3208 = vadd.f32 %v3137, %v3155
  %v3209 = vadd.f32 %v3138, %v3155
  %v3210 = vadd.f32 %v3139, %v3155
  %v3211 = vadd.f32 %v3140, %v3155
  %v3212 = vadd.f32 %v3141, %v3155
  %v3213 = vadd.f32 %v3142, %v3155
  %v3214 = vadd.f32 %v3143, %v3155
  %v3215 = vadd.f32 %v3144, %v3155
  %v3216 = vadd.f32 %v3145, %v3155
  %v3217 = vadd.f32 %v3146, %v3155
  %v3218 = vadd.f32 %v3147, %v3155
  %v3219 = vadd.f32 %v3148, %v3155
  %v3220 = vadd.f32 %v3149, %v3155
  %v3221 = vmax.f32 %v3157, 0.0
  %v3222 = vmax.f32 %v3158, 0.0
  %v3223 = vmax.f32 %v3159, 0.0
  %v3224 = vmax.f32 %v3160, 0.0
  %v3225 = vmax.f32 %v3161, 0.0
  %v3226 = vmax.f32 %v3162, 0.0
  %v3227 = vmax.f32 %v3163, 0.0
  %v3228 = vmax.f32 %v3164, 0.0
  %v3229 = vmax.f32 %v3165, 0.0
  %v3230 = vmax.f32 %v3166, 0.0
  %v3231 = vmax.f32 %v3167, 0.0
  %v3232 = vmax.f32 %v3168, 0.0
  %v3233 = vmax.f32 %v3169, 0.0
  %v3234 = vmax.f32 %v3170, 0.0
  %v3235 = vmax.f32 %v3171, 0.0
  %v3236 = vmax.f32 %v3172, 0.0
  %v3237 = vmax.f32 %v3173, 0.0
  %v3238 = vmax.f32 %v3174, 0.0
  %v3239 = vmax.f32 %v3175, 0.0
  %v3240 = vmax.f32 %v3176, 0.0
  %v3241 = vmax.f32 %v3177, 0.0
  %v3242 = vmax.f32 %v3178, 0.0
  %v3243 = vmax.f32 %v3179, 0.0
  %v3244 = vmax.f32 %v3180, 0.0
  %v3245 = vmax.f32 %v3181, 0.0
  %v3246 = vmax.f32 %v3182, 0.0
  %v3247 = vmax.f32 %v3183, 0.0
  %v3248 = vmax.f32 %v3184, 0.0
  %v3249 = vmax.f32 %v3185, 0.0
  %v3250 = vmax.f32 %v3186, 0.0
  %v3251 = vmax.f32 %v3187, 0.0
  %v3252 = vmax.f32 %v3188, 0.0
  %v3253 = vmax.f32 %v3189, 0.0
  %v3254 = vmax.f32 %v3190, 0.0
  %v3255 = vmax.f32 %v3191, 0.0
  %v3256 = vmax.f32 %v3192, 0.0
  %v3257 = vmax.f32 %v3193, 0.0
  %v3258 = vmax.f32 %v3194, 0.0
  %v3259 = vmax.f32 %v3195, 0.0
  %v3260 = vmax.f32 %v3196, 0.0
  %v3261 = vmax.f32 %v3197, 0.0
  %v3262 = vmax.f32 %v3198, 0.0
  %v3263 = vmax.f32 %v3199, 0.0
  %v3264 = vmax.f32 %v3200, 0.0
  %v3265 = vmax.f32 %v3201, 0.0
  %v3266 = vmax.f32 %v3202, 0.0
  %v3267 = vmax.f32 %v3203, 0.0
  %v3268 = vmax.f32 %v3204, 0.0
  %v3269 = vmax.f32 %v3205, 0.0
  %v3270 = vmax.f32 %v3206, 0.0
  %v3271 = vmax.f32 %v3207, 0.0
  %v3272 = vmax.f32 %v3208, 0.0
  %v3273 = vmax.f32 %v3209, 0.0
  %v3274 = vmax.f32 %v3210, 0.0
  %v3275 = vmax.f32 %v3211, 0.0
  %v3276 = vmax.f32 %v3212, 0.0
  %v3277 = vmax.f32 %v3213, 0.0
  %v3278 = vmax.f32 %v3214, 0.0
  %v3279 = vmax.f32 %v3215, 0.0
  %v3280 = vmax.f32 %v3216, 0.0
  %v3281 = vmax.f32 %v3217, 0.0
  %v3282 = vmax.f32 %v3218, 0.0
  %v3283 = vmax.f32 %v3219, 0.0
  %v3284 = vmax.f32 %v3220, 0.0
  %3285 = vst.msk [vmem:[#allocation3] sm:$0xff] %vm2679, 0.0
  %3286 = vst.msk [vmem:[#allocation3 + $0x8] sm:$0xff] %vm2679, 0.0
  %vm3287 = vcmask 123904
  %3288 = vst.msk [vmem:[#allocation3 + $0x10] sm:$0x3] %vm3287, 0.0
  %3289 = vst.msk [vmem:[#allocation3 + $0x1b0] sm:$0xff] %vm2679, 0.0
  %3290 = vst.msk [vmem:[#allocation3 + $0x1b8] sm:$0xff] %vm2679, 0.0
  %3291 = vst.msk [vmem:[#allocation3 + $0x1c0] sm:$0x3] %vm3287, 0.0
  %s3292 = scalar_lea.vmem [#allocation3], 408
  %3293 = vst.msk [vmem:[%s3292] sm:$0xff] %vm2679, 0.0
  %3294 = vst.msk [vmem:[%s3292 + $0x8] sm:$0xff] %vm2679, 0.0
  %3295 = vst.msk [vmem:[%s3292 + $0x10] sm:$0x3] %vm3287, 0.0
  %3296 = vst.msk [vmem:[%s3292 + $0x1b0] sm:$0xff] %vm2679, 0.0
  %3297 = vst.msk [vmem:[%s3292 + $0x1b8] sm:$0xff] %vm2679, 0.0
  %3298 = vst.msk [vmem:[%s3292 + $0x1c0] sm:$0x3] %vm3287, 0.0
  %s3299 = scalar_lea.vmem [#allocation3], 24
  %vm3300 = vcmask 122880
  %3301 = vst.msk [vmem:[%s3299] sm:$0x1] %vm3300, 0.0
  %3302 = vst.msk [vmem:[%s3299 + $0x18] sm:$0x1] %vm3300, 0.0
  %3303 = vst.msk [vmem:[%s3299 + $0x30] sm:$0x1] %vm3300, 0.0
  %3304 = vst.msk [vmem:[%s3299 + $0x48] sm:$0x1] %vm3300, 0.0
  %3305 = vst.msk [vmem:[%s3299 + $0x60] sm:$0x1] %vm3300, 0.0
  %3306 = vst.msk [vmem:[%s3299 + $0x78] sm:$0x1] %vm3300, 0.0
  %3307 = vst.msk [vmem:[%s3299 + $0x90] sm:$0x1] %vm3300, 0.0
  %3308 = vst.msk [vmem:[%s3299 + $0xa8] sm:$0x1] %vm3300, 0.0
  %3309 = vst.msk [vmem:[%s3299 + $0xc0] sm:$0x1] %vm3300, 0.0
  %3310 = vst.msk [vmem:[%s3299 + $0xd8] sm:$0x1] %vm3300, 0.0
  %3311 = vst.msk [vmem:[%s3299 + $0xf0] sm:$0x1] %vm3300, 0.0
  %3312 = vst.msk [vmem:[%s3299 + $0x108] sm:$0x1] %vm3300, 0.0
  %3313 = vst.msk [vmem:[%s3299 + $0x120] sm:$0x1] %vm3300, 0.0
  %3314 = vst.msk [vmem:[%s3299 + $0x138] sm:$0x1] %vm3300, 0.0
  %3315 = vst.msk [vmem:[%s3299 + $0x150] sm:$0x1] %vm3300, 0.0
  %3316 = vst.msk [vmem:[%s3299 + $0x168] sm:$0x1] %vm3300, 0.0
  %3317 = vst.msk [vmem:[%s3299 + $0x1b0] sm:$0x1] %vm3300, 0.0
  %3318 = vst.msk [vmem:[%s3299 + $0x1c8] sm:$0x1] %vm3300, 0.0
  %3319 = vst.msk [vmem:[%s3299 + $0x1e0] sm:$0x1] %vm3300, 0.0
  %3320 = vst.msk [vmem:[%s3299 + $0x1f8] sm:$0x1] %vm3300, 0.0
  %3321 = vst.msk [vmem:[%s3299 + $0x210] sm:$0x1] %vm3300, 0.0
  %3322 = vst.msk [vmem:[%s3299 + $0x228] sm:$0x1] %vm3300, 0.0
  %3323 = vst.msk [vmem:[%s3299 + $0x240] sm:$0x1] %vm3300, 0.0
  %3324 = vst.msk [vmem:[%s3299 + $0x258] sm:$0x1] %vm3300, 0.0
  %3325 = vst.msk [vmem:[%s3299 + $0x270] sm:$0x1] %vm3300, 0.0
  %3326 = vst.msk [vmem:[%s3299 + $0x288] sm:$0x1] %vm3300, 0.0
  %3327 = vst.msk [vmem:[%s3299 + $0x2a0] sm:$0x1] %vm3300, 0.0
  %3328 = vst.msk [vmem:[%s3299 + $0x2b8] sm:$0x1] %vm3300, 0.0
  %3329 = vst.msk [vmem:[%s3299 + $0x2d0] sm:$0x1] %vm3300, 0.0
  %3330 = vst.msk [vmem:[%s3299 + $0x2e8] sm:$0x1] %vm3300, 0.0
  %3331 = vst.msk [vmem:[%s3299 + $0x300] sm:$0x1] %vm3300, 0.0
  %3332 = vst.msk [vmem:[%s3299 + $0x318] sm:$0x1] %vm3300, 0.0
  %3333 = vst.msk [vmem:[%s3299 + $0x11] sm:$0x1] %vm3300, 0.0
  %3334 = vst.msk [vmem:[%s3299 + $0x29] sm:$0x1] %vm3300, 0.0
  %3335 = vst.msk [vmem:[%s3299 + $0x41] sm:$0x1] %vm3300, 0.0
  %3336 = vst.msk [vmem:[%s3299 + $0x59] sm:$0x1] %vm3300, 0.0
  %3337 = vst.msk [vmem:[%s3299 + $0x71] sm:$0x1] %vm3300, 0.0
  %3338 = vst.msk [vmem:[%s3299 + $0x89] sm:$0x1] %vm3300, 0.0
  %3339 = vst.msk [vmem:[%s3299 + $0xa1] sm:$0x1] %vm3300, 0.0
  %3340 = vst.msk [vmem:[%s3299 + $0xb9] sm:$0x1] %vm3300, 0.0
  %3341 = vst.msk [vmem:[%s3299 + $0xd1] sm:$0x1] %vm3300, 0.0
  %3342 = vst.msk [vmem:[%s3299 + $0xe9] sm:$0x1] %vm3300, 0.0
  %3343 = vst.msk [vmem:[%s3299 + $0x101] sm:$0x1] %vm3300, 0.0
  %3344 = vst.msk [vmem:[%s3299 + $0x119] sm:$0x1] %vm3300, 0.0
  %3345 = vst.msk [vmem:[%s3299 + $0x131] sm:$0x1] %vm3300, 0.0
  %3346 = vst.msk [vmem:[%s3299 + $0x149] sm:$0x1] %vm3300, 0.0
  %3347 = vst.msk [vmem:[%s3299 + $0x161] sm:$0x1] %vm3300, 0.0
  %3348 = vst.msk [vmem:[%s3299 + $0x179] sm:$0x1] %vm3300, 0.0
  %3349 = vst.msk [vmem:[%s3299 + $0x1c1] sm:$0x1] %vm3300, 0.0
  %3350 = vst.msk [vmem:[%s3299 + $0x1d9] sm:$0x1] %vm3300, 0.0
  %3351 = vst.msk [vmem:[%s3299 + $0x1f1] sm:$0x1] %vm3300, 0.0
  %3352 = vst.msk [vmem:[%s3299 + $0x209] sm:$0x1] %vm3300, 0.0
  %3353 = vst.msk [vmem:[%s3299 + $0x221] sm:$0x1] %vm3300, 0.0
  %3354 = vst.msk [vmem:[%s3299 + $0x239] sm:$0x1] %vm3300, 0.0
  %3355 = vst.msk [vmem:[%s3299 + $0x251] sm:$0x1] %vm3300, 0.0
  %3356 = vst.msk [vmem:[%s3299 + $0x269] sm:$0x1] %vm3300, 0.0
  %3357 = vst.msk [vmem:[%s3299 + $0x281] sm:$0x1] %vm3300, 0.0
  %3358 = vst.msk [vmem:[%s3299 + $0x299] sm:$0x1] %vm3300, 0.0
  %3359 = vst.msk [vmem:[%s3299 + $0x2b1] sm:$0x1] %vm3300, 0.0
  %3360 = vst.msk [vmem:[%s3299 + $0x2c9] sm:$0x1] %vm3300, 0.0
  %3361 = vst.msk [vmem:[%s3299 + $0x2e1] sm:$0x1] %vm3300, 0.0
  %3362 = vst.msk [vmem:[%s3299 + $0x2f9] sm:$0x1] %vm3300, 0.0
  %3363 = vst.msk [vmem:[%s3299 + $0x311] sm:$0x1] %vm3300, 0.0
  %3364 = vst.msk [vmem:[%s3299 + $0x329] sm:$0x1] %vm3300, 0.0
  %3365 = vst.msk [vmem:[%s3299 + $0x1] sm:$0xff] %vm2679, %v3221
  %3366 = vst.msk [vmem:[%s3299 + $0x9] sm:$0xff] %vm2679, %v3222
  %3367 = vst.msk [vmem:[%s3299 + $0x19] sm:$0xff] %vm2679, %v3223
  %3368 = vst.msk [vmem:[%s3299 + $0x21] sm:$0xff] %vm2679, %v3224
  %3369 = vst.msk [vmem:[%s3299 + $0x31] sm:$0xff] %vm2679, %v3225
  %3370 = vst.msk [vmem:[%s3299 + $0x39] sm:$0xff] %vm2679, %v3226
  %3371 = vst.msk [vmem:[%s3299 + $0x49] sm:$0xff] %vm2679, %v3227
  %3372 = vst.msk [vmem:[%s3299 + $0x51] sm:$0xff] %vm2679, %v3228
  %3373 = vst.msk [vmem:[%s3299 + $0x61] sm:$0xff] %vm2679, %v3229
  %3374 = vst.msk [vmem:[%s3299 + $0x69] sm:$0xff] %vm2679, %v3230
  %3375 = vst.msk [vmem:[%s3299 + $0x79] sm:$0xff] %vm2679, %v3231
  %3376 = vst.msk [vmem:[%s3299 + $0x81] sm:$0xff] %vm2679, %v3232
  %3377 = vst.msk [vmem:[%s3299 + $0x91] sm:$0xff] %vm2679, %v3233
  %3378 = vst.msk [vmem:[%s3299 + $0x99] sm:$0xff] %vm2679, %v3234
  %3379 = vst.msk [vmem:[%s3299 + $0xa9] sm:$0xff] %vm2679, %v3235
  %3380 = vst.msk [vmem:[%s3299 + $0xb1] sm:$0xff] %vm2679, %v3236
  %3381 = vst.msk [vmem:[%s3299 + $0xc1] sm:$0xff] %vm2679, %v3237
  %3382 = vst.msk [vmem:[%s3299 + $0xc9] sm:$0xff] %vm2679, %v3238
  %3383 = vst.msk [vmem:[%s3299 + $0xd9] sm:$0xff] %vm2679, %v3239
  %3384 = vst.msk [vmem:[%s3299 + $0xe1] sm:$0xff] %vm2679, %v3240
  %3385 = vst.msk [vmem:[%s3299 + $0xf1] sm:$0xff] %vm2679, %v3241
  %3386 = vst.msk [vmem:[%s3299 + $0xf9] sm:$0xff] %vm2679, %v3242
  %3387 = vst.msk [vmem:[%s3299 + $0x109] sm:$0xff] %vm2679, %v3243
  %3388 = vst.msk [vmem:[%s3299 + $0x111] sm:$0xff] %vm2679, %v3244
  %3389 = vst.msk [vmem:[%s3299 + $0x121] sm:$0xff] %vm2679, %v3245
  %3390 = vst.msk [vmem:[%s3299 + $0x129] sm:$0xff] %vm2679, %v3246
  %3391 = vst.msk [vmem:[%s3299 + $0x139] sm:$0xff] %vm2679, %v3247
  %3392 = vst.msk [vmem:[%s3299 + $0x141] sm:$0xff] %vm2679, %v3248
  %3393 = vst.msk [vmem:[%s3299 + $0x151] sm:$0xff] %vm2679, %v3249
  %3394 = vst.msk [vmem:[%s3299 + $0x159] sm:$0xff] %vm2679, %v3250
  %3395 = vst.msk [vmem:[%s3299 + $0x169] sm:$0xff] %vm2679, %v3251
  %3396 = vst.msk [vmem:[%s3299 + $0x171] sm:$0xff] %vm2679, %v3252
  %3397 = vst.msk [vmem:[%s3299 + $0x1b1] sm:$0xff] %vm2679, %v3253
  %3398 = vst.msk [vmem:[%s3299 + $0x1b9] sm:$0xff] %vm2679, %v3254
  %3399 = vst.msk [vmem:[%s3299 + $0x1c9] sm:$0xff] %vm2679, %v3255
  %3400 = vst.msk [vmem:[%s3299 + $0x1d1] sm:$0xff] %vm2679, %v3256
  %3401 = vst.msk [vmem:[%s3299 + $0x1e1] sm:$0xff] %vm2679, %v3257
  %3402 = vst.msk [vmem:[%s3299 + $0x1e9] sm:$0xff] %vm2679, %v3258
  %3403 = vst.msk [vmem:[%s3299 + $0x1f9] sm:$0xff] %vm2679, %v3259
  %3404 = vst.msk [vmem:[%s3299 + $0x201] sm:$0xff] %vm2679, %v3260
  %3405 = vst.msk [vmem:[%s3299 + $0x211] sm:$0xff] %vm2679, %v3261
  %3406 = vst.msk [vmem:[%s3299 + $0x219] sm:$0xff] %vm2679, %v3262
  %3407 = vst.msk [vmem:[%s3299 + $0x229] sm:$0xff] %vm2679, %v3263
  %3408 = vst.msk [vmem:[%s3299 + $0x231] sm:$0xff] %vm2679, %v3264
  %3409 = vst.msk [vmem:[%s3299 + $0x241] sm:$0xff] %vm2679, %v3265
  %3410 = vst.msk [vmem:[%s3299 + $0x249] sm:$0xff] %vm2679, %v3266
  %3411 = vst.msk [vmem:[%s3299 + $0x259] sm:$0xff] %vm2679, %v3267
  %3412 = vst.msk [vmem:[%s3299 + $0x261] sm:$0xff] %vm2679, %v3268
  %3413 = vst.msk [vmem:[%s3299 + $0x271] sm:$0xff] %vm2679, %v3269
  %3414 = vst.msk [vmem:[%s3299 + $0x279] sm:$0xff] %vm2679, %v3270
  %3415 = vst.msk [vmem:[%s3299 + $0x289] sm:$0xff] %vm2679, %v3271
  %3416 = vst.msk [vmem:[%s3299 + $0x291] sm:$0xff] %vm2679, %v3272
  %3417 = vst.msk [vmem:[%s3299 + $0x2a1] sm:$0xff] %vm2679, %v3273
  %3418 = vst.msk [vmem:[%s3299 + $0x2a9] sm:$0xff] %vm2679, %v3274
  %3419 = vst.msk [vmem:[%s3299 + $0x2b9] sm:$0xff] %vm2679, %v3275
  %3420 = vst.msk [vmem:[%s3299 + $0x2c1] sm:$0xff] %vm2679, %v3276
  %3421 = vst.msk [vmem:[%s3299 + $0x2d1] sm:$0xff] %vm2679, %v3277
  %3422 = vst.msk [vmem:[%s3299 + $0x2d9] sm:$0xff] %vm2679, %v3278
  %3423 = vst.msk [vmem:[%s3299 + $0x2e9] sm:$0xff] %vm2679, %v3279
  %3424 = vst.msk [vmem:[%s3299 + $0x2f1] sm:$0xff] %vm2679, %v3280
  %3425 = vst.msk [vmem:[%s3299 + $0x301] sm:$0xff] %vm2679, %v3281
  %3426 = vst.msk [vmem:[%s3299 + $0x309] sm:$0xff] %vm2679, %v3282
  %3427 = vst.msk [vmem:[%s3299 + $0x319] sm:$0xff] %vm2679, %v3283
  %3428 = vst.msk [vmem:[%s3299 + $0x321] sm:$0xff] %vm2679, %v3284
  %v3429 = vld [vmem:[#allocation3] sm:$0xff]
  %v3430 = vld [vmem:[#allocation3 + $0x8] sm:$0xff]
  %v3431 = vld [vmem:[#allocation3 + $0x18] sm:$0xff]
  %v3432 = vld [vmem:[#allocation3 + $0x20] sm:$0xff]
  %v3433 = vld [vmem:[#allocation3 + $0x30] sm:$0xff]
  %v3434 = vld [vmem:[#allocation3 + $0x38] sm:$0xff]
  %v3435 = vld [vmem:[#allocation3 + $0x48] sm:$0xff]
  %v3436 = vld [vmem:[#allocation3 + $0x50] sm:$0xff]
  %v3437 = vld [vmem:[#allocation3 + $0x60] sm:$0xff]
  %v3438 = vld [vmem:[#allocation3 + $0x68] sm:$0xff]
  %v3439 = vld [vmem:[#allocation3 + $0x78] sm:$0xff]
  %v3440 = vld [vmem:[#allocation3 + $0x80] sm:$0xff]
  %v3441 = vld [vmem:[#allocation3 + $0x90] sm:$0xff]
  %v3442 = vld [vmem:[#allocation3 + $0x98] sm:$0xff]
  %v3443 = vld [vmem:[#allocation3 + $0xa8] sm:$0xff]
  %v3444 = vld [vmem:[#allocation3 + $0xb0] sm:$0xff]
  %v3445 = vld [vmem:[#allocation3 + $0xc0] sm:$0xff]
  %v3446 = vld [vmem:[#allocation3 + $0xc8] sm:$0xff]
  %v3447 = vld [vmem:[#allocation3 + $0xd8] sm:$0xff]
  %v3448 = vld [vmem:[#allocation3 + $0xe0] sm:$0xff]
  %v3449 = vld [vmem:[#allocation3 + $0xf0] sm:$0xff]
  %v3450 = vld [vmem:[#allocation3 + $0xf8] sm:$0xff]
  %v3451 = vld [vmem:[#allocation3 + $0x108] sm:$0xff]
  %v3452 = vld [vmem:[#allocation3 + $0x110] sm:$0xff]
  %v3453 = vld [vmem:[#allocation3 + $0x120] sm:$0xff]
  %v3454 = vld [vmem:[#allocation3 + $0x128] sm:$0xff]
  %v3455 = vld [vmem:[#allocation3 + $0x138] sm:$0xff]
  %v3456 = vld [vmem:[#allocation3 + $0x140] sm:$0xff]
  %v3457 = vld [vmem:[#allocation3 + $0x150] sm:$0xff]
  %v3458 = vld [vmem:[#allocation3 + $0x158] sm:$0xff]
  %v3459 = vld [vmem:[#allocation3 + $0x168] sm:$0xff]
  %v3460 = vld [vmem:[#allocation3 + $0x170] sm:$0xff]
  %v3461 = vld [vmem:[#allocation3 + $0x1b0] sm:$0xff]
  %v3462 = vld [vmem:[#allocation3 + $0x1b8] sm:$0xff]
  %v3463 = vld [vmem:[#allocation3 + $0x1c8] sm:$0xff]
  %v3464 = vld [vmem:[#allocation3 + $0x1d0] sm:$0xff]
  %v3465 = vld [vmem:[#allocation3 + $0x1e0] sm:$0xff]
  %v3466 = vld [vmem:[#allocation3 + $0x1e8] sm:$0xff]
  %v3467 = vld [vmem:[#allocation3 + $0x1f8] sm:$0xff]
  %v3468 = vld [vmem:[#allocation3 + $0x200] sm:$0xff]
  %v3469 = vld [vmem:[#allocation3 + $0x210] sm:$0xff]
  %v3470 = vld [vmem:[#allocation3 + $0x218] sm:$0xff]
  %v3471 = vld [vmem:[#allocation3 + $0x228] sm:$0xff]
  %v3472 = vld [vmem:[#allocation3 + $0x230] sm:$0xff]
  %v3473 = vld [vmem:[#allocation3 + $0x240] sm:$0xff]
  %v3474 = vld [vmem:[#allocation3 + $0x248] sm:$0xff]
  %v3475 = vld [vmem:[#allocation3 + $0x258] sm:$0xff]
  %v3476 = vld [vmem:[#allocation3 + $0x260] sm:$0xff]
  %v3477 = vld [vmem:[#allocation3 + $0x270] sm:$0xff]
  %v3478 = vld [vmem:[#allocation3 + $0x278] sm:$0xff]
  %v3479 = vld [vmem:[#allocation3 + $0x288] sm:$0xff]
  %v3480 = vld [vmem:[#allocation3 + $0x290] sm:$0xff]
  %v3481 = vld [vmem:[#allocation3 + $0x2a0] sm:$0xff]
  %v3482 = vld [vmem:[#allocation3 + $0x2a8] sm:$0xff]
  %v3483 = vld [vmem:[#allocation3 + $0x2b8] sm:$0xff]
  %v3484 = vld [vmem:[#allocation3 + $0x2c0] sm:$0xff]
  %v3485 = vld [vmem:[#allocation3 + $0x2d0] sm:$0xff]
  %v3486 = vld [vmem:[#allocation3 + $0x2d8] sm:$0xff]
  %v3487 = vld [vmem:[#allocation3 + $0x2e8] sm:$0xff]
  %v3488 = vld [vmem:[#allocation3 + $0x2f0] sm:$0xff]
  %v3489 = vld [vmem:[#allocation3 + $0x300] sm:$0xff]
  %v3490 = vld [vmem:[#allocation3 + $0x308] sm:$0xff]
  %v3491 = vld [vmem:[#allocation3 + $0x318] sm:$0xff]
  %v3492 = vld [vmem:[#allocation3 + $0x320] sm:$0xff]
  %v3493 = vpack.c.bf16 %v3430, %v3429
  %v3494 = vpack.c.bf16 %v3432, %v3431
  %v3495 = vpack.c.bf16 %v3434, %v3433
  %v3496 = vpack.c.bf16 %v3436, %v3435
  %v3497 = vpack.c.bf16 %v3438, %v3437
  %v3498 = vpack.c.bf16 %v3440, %v3439
  %v3499 = vpack.c.bf16 %v3442, %v3441
  %v3500 = vpack.c.bf16 %v3444, %v3443
  %v3501 = vpack.c.bf16 %v3446, %v3445
  %v3502 = vpack.c.bf16 %v3448, %v3447
  %v3503 = vpack.c.bf16 %v3450, %v3449
  %v3504 = vpack.c.bf16 %v3452, %v3451
  %v3505 = vpack.c.bf16 %v3454, %v3453
  %v3506 = vpack.c.bf16 %v3456, %v3455
  %v3507 = vpack.c.bf16 %v3458, %v3457
  %v3508 = vpack.c.bf16 %v3460, %v3459
  %v3509 = vpack.c.bf16 %v3462, %v3461
  %v3510 = vpack.c.bf16 %v3464, %v3463
  %v3511 = vpack.c.bf16 %v3466, %v3465
  %v3512 = vpack.c.bf16 %v3468, %v3467
  %v3513 = vpack.c.bf16 %v3470, %v3469
  %v3514 = vpack.c.bf16 %v3472, %v3471
  %v3515 = vpack.c.bf16 %v3474, %v3473
  %v3516 = vpack.c.bf16 %v3476, %v3475
  %v3517 = vpack.c.bf16 %v3478, %v3477
  %v3518 = vpack.c.bf16 %v3480, %v3479
  %v3519 = vpack.c.bf16 %v3482, %v3481
  %v3520 = vpack.c.bf16 %v3484, %v3483
  %v3521 = vpack.c.bf16 %v3486, %v3485
  %v3522 = vpack.c.bf16 %v3488, %v3487
  %v3523 = vpack.c.bf16 %v3490, %v3489
  %v3524 = vpack.c.bf16 %v3492, %v3491
  %3525 = vst.msk [vmem:[#allocation4] sm:$0xff] %vm2679, %v3493
  %3526 = vst.msk [vmem:[#allocation4 + $0x10] sm:$0xff] %vm2679, %v3494
  %3527 = vst.msk [vmem:[#allocation4 + $0x20] sm:$0xff] %vm2679, %v3495
  %3528 = vst.msk [vmem:[#allocation4 + $0x30] sm:$0xff] %vm2679, %v3496
  %3529 = vst.msk [vmem:[#allocation4 + $0x40] sm:$0xff] %vm2679, %v3497
  %3530 = vst.msk [vmem:[#allocation4 + $0x50] sm:$0xff] %vm2679, %v3498
  %3531 = vst.msk [vmem:[#allocation4 + $0x60] sm:$0xff] %vm2679, %v3499
  %3532 = vst.msk [vmem:[#allocation4 + $0x70] sm:$0xff] %vm2679, %v3500
  %3533 = vst.msk [vmem:[#allocation4 + $0x80] sm:$0xff] %vm2679, %v3501
  %3534 = vst.msk [vmem:[#allocation4 + $0x90] sm:$0xff] %vm2679, %v3502
  %3535 = vst.msk [vmem:[#allocation4 + $0xa0] sm:$0xff] %vm2679, %v3503
  %3536 = vst.msk [vmem:[#allocation4 + $0xb0] sm:$0xff] %vm2679, %v3504
  %3537 = vst.msk [vmem:[#allocation4 + $0xc0] sm:$0xff] %vm2679, %v3505
  %3538 = vst.msk [vmem:[#allocation4 + $0xd0] sm:$0xff] %vm2679, %v3506
  %3539 = vst.msk [vmem:[#allocation4 + $0xe0] sm:$0xff] %vm2679, %v3507
  %3540 = vst.msk [vmem:[#allocation4 + $0xf0] sm:$0xff] %vm2679, %v3508
  %3541 = vst.msk [vmem:[#allocation4 + $0x100] sm:$0xff] %vm2679, %v3509
  %3542 = vst.msk [vmem:[#allocation4 + $0x110] sm:$0xff] %vm2679, %v3510
  %3543 = vst.msk [vmem:[#allocation4 + $0x120] sm:$0xff] %vm2679, %v3511
  %3544 = vst.msk [vmem:[#allocation4 + $0x130] sm:$0xff] %vm2679, %v3512
  %3545 = vst.msk [vmem:[#allocation4 + $0x140] sm:$0xff] %vm2679, %v3513
  %3546 = vst.msk [vmem:[#allocation4 + $0x150] sm:$0xff] %vm2679, %v3514
  %3547 = vst.msk [vmem:[#allocation4 + $0x160] sm:$0xff] %vm2679, %v3515
  %3548 = vst.msk [vmem:[#allocation4 + $0x170] sm:$0xff] %vm2679, %v3516
  %3549 = vst.msk [vmem:[#allocation4 + $0x180] sm:$0xff] %vm2679, %v3517
  %3550 = vst.msk [vmem:[#allocation4 + $0x190] sm:$0xff] %vm2679, %v3518
  %3551 = vst.msk [vmem:[#allocation4 + $0x1a0] sm:$0xff] %vm2679, %v3519
  %3552 = vst.msk [vmem:[#allocation4 + $0x1b0] sm:$0xff] %vm2679, %v3520
  %3553 = vst.msk [vmem:[#allocation4 + $0x1c0] sm:$0xff] %vm2679, %v3521
  %3554 = vst.msk [vmem:[#allocation4 + $0x1d0] sm:$0xff] %vm2679, %v3522
  %3555 = vst.msk [vmem:[#allocation4 + $0x1e0] sm:$0xff] %vm2679, %v3523
  %3556 = vst.msk [vmem:[#allocation4 + $0x1f0] sm:$0xff] %vm2679, %v3524
  %v3557 = vld [vmem:[#allocation3 + $0x1] sm:$0xff]
  %v3558 = vld [vmem:[#allocation3 + $0x9] sm:$0xff]
  %v3559 = vld [vmem:[#allocation3 + $0x19] sm:$0xff]
  %v3560 = vld [vmem:[#allocation3 + $0x21] sm:$0xff]
  %v3561 = vld [vmem:[#allocation3 + $0x31] sm:$0xff]
  %v3562 = vld [vmem:[#allocation3 + $0x39] sm:$0xff]
  %v3563 = vld [vmem:[#allocation3 + $0x49] sm:$0xff]
  %v3564 = vld [vmem:[#allocation3 + $0x51] sm:$0xff]
  %v3565 = vld [vmem:[#allocation3 + $0x61] sm:$0xff]
  %v3566 = vld [vmem:[#allocation3 + $0x69] sm:$0xff]
  %v3567 = vld [vmem:[#allocation3 + $0x79] sm:$0xff]
  %v3568 = vld [vmem:[#allocation3 + $0x81] sm:$0xff]
  %v3569 = vld [vmem:[#allocation3 + $0x91] sm:$0xff]
  %v3570 = vld [vmem:[#allocation3 + $0x99] sm:$0xff]
  %v3571 = vld [vmem:[#allocation3 + $0xa9] sm:$0xff]
  %v3572 = vld [vmem:[#allocation3 + $0xb1] sm:$0xff]
  %v3573 = vld [vmem:[#allocation3 + $0xc1] sm:$0xff]
  %v3574 = vld [vmem:[#allocation3 + $0xc9] sm:$0xff]
  %v3575 = vld [vmem:[#allocation3 + $0xd9] sm:$0xff]
  %v3576 = vld [vmem:[#allocation3 + $0xe1] sm:$0xff]
  %v3577 = vld [vmem:[#allocation3 + $0xf1] sm:$0xff]
  %v3578 = vld [vmem:[#allocation3 + $0xf9] sm:$0xff]
  %v3579 = vld [vmem:[#allocation3 + $0x109] sm:$0xff]
  %v3580 = vld [vmem:[#allocation3 + $0x111] sm:$0xff]
  %v3581 = vld [vmem:[#allocation3 + $0x121] sm:$0xff]
  %v3582 = vld [vmem:[#allocation3 + $0x129] sm:$0xff]
  %v3583 = vld [vmem:[#allocation3 + $0x139] sm:$0xff]
  %v3584 = vld [vmem:[#allocation3 + $0x141] sm:$0xff]
  %v3585 = vld [vmem:[#allocation3 + $0x151] sm:$0xff]
  %v3586 = vld [vmem:[#allocation3 + $0x159] sm:$0xff]
  %v3587 = vld [vmem:[#allocation3 + $0x169] sm:$0xff]
  %v3588 = vld [vmem:[#allocation3 + $0x171] sm:$0xff]
  %v3589 = vld [vmem:[#allocation3 + $0x1b1] sm:$0xff]
  %v3590 = vld [vmem:[#allocation3 + $0x1b9] sm:$0xff]
  %v3591 = vld [vmem:[#allocation3 + $0x1c9] sm:$0xff]
  %v3592 = vld [vmem:[#allocation3 + $0x1d1] sm:$0xff]
  %v3593 = vld [vmem:[#allocation3 + $0x1e1] sm:$0xff]
  %v3594 = vld [vmem:[#allocation3 + $0x1e9] sm:$0xff]
  %v3595 = vld [vmem:[#allocation3 + $0x1f9] sm:$0xff]
  %v3596 = vld [vmem:[#allocation3 + $0x201] sm:$0xff]
  %v3597 = vld [vmem:[#allocation3 + $0x211] sm:$0xff]
  %v3598 = vld [vmem:[#allocation3 + $0x219] sm:$0xff]
  %v3599 = vld [vmem:[#allocation3 + $0x229] sm:$0xff]
  %v3600 = vld [vmem:[#allocation3 + $0x231] sm:$0xff]
  %v3601 = vld [vmem:[#allocation3 + $0x241] sm:$0xff]
  %v3602 = vld [vmem:[#allocation3 + $0x249] sm:$0xff]
  %v3603 = vld [vmem:[#allocation3 + $0x259] sm:$0xff]
  %v3604 = vld [vmem:[#allocation3 + $0x261] sm:$0xff]
  %v3605 = vld [vmem:[#allocation3 + $0x271] sm:$0xff]
  %v3606 = vld [vmem:[#allocation3 + $0x279] sm:$0xff]
  %v3607 = vld [vmem:[#allocation3 + $0x289] sm:$0xff]
  %v3608 = vld [vmem:[#allocation3 + $0x291] sm:$0xff]
  %v3609 = vld [vmem:[#allocation3 + $0x2a1] sm:$0xff]
  %v3610 = vld [vmem:[#allocation3 + $0x2a9] sm:$0xff]
  %v3611 = vld [vmem:[#allocation3 + $0x2b9] sm:$0xff]
  %v3612 = vld [vmem:[#allocation3 + $0x2c1] sm:$0xff]
  %v3613 = vld [vmem:[#allocation3 + $0x2d1] sm:$0xff]
  %v3614 = vld [vmem:[#allocation3 + $0x2d9] sm:$0xff]
  %v3615 = vld [vmem:[#allocation3 + $0x2e9] sm:$0xff]
  %v3616 = vld [vmem:[#allocation3 + $0x2f1] sm:$0xff]
  %v3617 = vld [vmem:[#allocation3 + $0x301] sm:$0xff]
  %v3618 = vld [vmem:[#allocation3 + $0x309] sm:$0xff]
  %v3619 = vld [vmem:[#allocation3 + $0x319] sm:$0xff]
  %v3620 = vld [vmem:[#allocation3 + $0x321] sm:$0xff]
  %v3621 = vpack.c.bf16 %v3558, %v3557
  %v3622 = vpack.c.bf16 %v3560, %v3559
  %v3623 = vpack.c.bf16 %v3562, %v3561
  %v3624 = vpack.c.bf16 %v3564, %v3563
  %v3625 = vpack.c.bf16 %v3566, %v3565
  %v3626 = vpack.c.bf16 %v3568, %v3567
  %v3627 = vpack.c.bf16 %v3570, %v3569
  %v3628 = vpack.c.bf16 %v3572, %v3571
  %v3629 = vpack.c.bf16 %v3574, %v3573
  %v3630 = vpack.c.bf16 %v3576, %v3575
  %v3631 = vpack.c.bf16 %v3578, %v3577
  %v3632 = vpack.c.bf16 %v3580, %v3579
  %v3633 = vpack.c.bf16 %v3582, %v3581
  %v3634 = vpack.c.bf16 %v3584, %v3583
  %v3635 = vpack.c.bf16 %v3586, %v3585
  %v3636 = vpack.c.bf16 %v3588, %v3587
  %v3637 = vpack.c.bf16 %v3590, %v3589
  %v3638 = vpack.c.bf16 %v3592, %v3591
  %v3639 = vpack.c.bf16 %v3594, %v3593
  %v3640 = vpack.c.bf16 %v3596, %v3595
  %v3641 = vpack.c.bf16 %v3598, %v3597
  %v3642 = vpack.c.bf16 %v3600, %v3599
  %v3643 = vpack.c.bf16 %v3602, %v3601
  %v3644 = vpack.c.bf16 %v3604, %v3603
  %v3645 = vpack.c.bf16 %v3606, %v3605
  %v3646 = vpack.c.bf16 %v3608, %v3607
  %v3647 = vpack.c.bf16 %v3610, %v3609
  %v3648 = vpack.c.bf16 %v3612, %v3611
  %v3649 = vpack.c.bf16 %v3614, %v3613
  %v3650 = vpack.c.bf16 %v3616, %v3615
  %v3651 = vpack.c.bf16 %v3618, %v3617
  %v3652 = vpack.c.bf16 %v3620, %v3619
  %3685 = vrot.lane.b32.xlu0 %v3621, 16
  %v3686 = vpop.permute.xlu0 %3685
  %3687 = vrot.lane.b32.xlu0 %v3622, 16
  %v3688 = vpop.permute.xlu0 %3687
  %3689 = vrot.lane.b32.xlu0 %v3623, 16
  %v3690 = vpop.permute.xlu0 %3689
  %3691 = vrot.lane.b32.xlu0 %v3624, 16
  %v3692 = vpop.permute.xlu0 %3691
  %3693 = vrot.lane.b32.xlu0 %v3625, 16
  %v3694 = vpop.permute.xlu0 %3693
  %3695 = vrot.lane.b32.xlu0 %v3626, 16
  %v3696 = vpop.permute.xlu0 %3695
  %3697 = vrot.lane.b32.xlu0 %v3627, 16
  %v3698 = vpop.permute.xlu0 %3697
  %3699 = vrot.lane.b32.xlu0 %v3628, 16
  %v3700 = vpop.permute.xlu0 %3699
  %3701 = vrot.lane.b32.xlu0 %v3629, 16
  %v3702 = vpop.permute.xlu0 %3701
  %3703 = vrot.lane.b32.xlu0 %v3630, 16
  %v3704 = vpop.permute.xlu0 %3703
  %3705 = vrot.lane.b32.xlu0 %v3631, 16
  %v3706 = vpop.permute.xlu0 %3705
  %3707 = vrot.lane.b32.xlu0 %v3632, 16
  %v3708 = vpop.permute.xlu0 %3707
  %3709 = vrot.lane.b32.xlu0 %v3633, 16
  %v3710 = vpop.permute.xlu0 %3709
  %3711 = vrot.lane.b32.xlu0 %v3634, 16
  %v3712 = vpop.permute.xlu0 %3711
  %3713 = vrot.lane.b32.xlu0 %v3635, 16
  %v3714 = vpop.permute.xlu0 %3713
  %3715 = vrot.lane.b32.xlu0 %v3636, 16
  %v3716 = vpop.permute.xlu0 %3715
  %3717 = vrot.lane.b32.xlu0 %v3637, 16
  %v3718 = vpop.permute.xlu0 %3717
  %3719 = vrot.lane.b32.xlu0 %v3638, 16
  %v3720 = vpop.permute.xlu0 %3719
  %3721 = vrot.lane.b32.xlu0 %v3639, 16
  %v3722 = vpop.permute.xlu0 %3721
  %3723 = vrot.lane.b32.xlu0 %v3640, 16
  %v3724 = vpop.permute.xlu0 %3723
  %3725 = vrot.lane.b32.xlu0 %v3641, 16
  %v3726 = vpop.permute.xlu0 %3725
  %3727 = vrot.lane.b32.xlu0 %v3642, 16
  %v3728 = vpop.permute.xlu0 %3727
  %3729 = vrot.lane.b32.xlu0 %v3643, 16
  %v3730 = vpop.permute.xlu0 %3729
  %3731 = vrot.lane.b32.xlu0 %v3644, 16
  %v3732 = vpop.permute.xlu0 %3731
  %3733 = vrot.lane.b32.xlu0 %v3645, 16
  %v3734 = vpop.permute.xlu0 %3733
  %3735 = vrot.lane.b32.xlu0 %v3646, 16
  %v3736 = vpop.permute.xlu0 %3735
  %3737 = vrot.lane.b32.xlu0 %v3647, 16
  %v3738 = vpop.permute.xlu0 %3737
  %3739 = vrot.lane.b32.xlu0 %v3648, 16
  %v3740 = vpop.permute.xlu0 %3739
  %3741 = vrot.lane.b32.xlu0 %v3649, 16
  %v3742 = vpop.permute.xlu0 %3741
  %3743 = vrot.lane.b32.xlu0 %v3650, 16
  %v3744 = vpop.permute.xlu0 %3743
  %3745 = vrot.lane.b32.xlu0 %v3651, 16
  %v3746 = vpop.permute.xlu0 %3745
  %3747 = vrot.lane.b32.xlu0 %v3652, 16
  %v3748 = vpop.permute.xlu0 %3747
  %vm3781 = vcmask 261248
  %3782 = vst.msk [vmem:[#allocation4] sm:$0xff] %vm3781, %v3686
  %3783 = vst.msk [vmem:[#allocation4 + $0x10] sm:$0xff] %vm3781, %v3688
  %3784 = vst.msk [vmem:[#allocation4 + $0x20] sm:$0xff] %vm3781, %v3690
  %3785 = vst.msk [vmem:[#allocation4 + $0x30] sm:$0xff] %vm3781, %v3692
  %3786 = vst.msk [vmem:[#allocation4 + $0x40] sm:$0xff] %vm3781, %v3694
  %3787 = vst.msk [vmem:[#allocation4 + $0x50] sm:$0xff] %vm3781, %v3696
  %3788 = vst.msk [vmem:[#allocation4 + $0x60] sm:$0xff] %vm3781, %v3698
  %3789 = vst.msk [vmem:[#allocation4 + $0x70] sm:$0xff] %vm3781, %v3700
  %3790 = vst.msk [vmem:[#allocation4 + $0x80] sm:$0xff] %vm3781, %v3702
  %3791 = vst.msk [vmem:[#allocation4 + $0x90] sm:$0xff] %vm3781, %v3704
  %3792 = vst.msk [vmem:[#allocation4 + $0xa0] sm:$0xff] %vm3781, %v3706
  %3793 = vst.msk [vmem:[#allocation4 + $0xb0] sm:$0xff] %vm3781, %v3708
  %3794 = vst.msk [vmem:[#allocation4 + $0xc0] sm:$0xff] %vm3781, %v3710
  %3795 = vst.msk [vmem:[#allocation4 + $0xd0] sm:$0xff] %vm3781, %v3712
  %3796 = vst.msk [vmem:[#allocation4 + $0xe0] sm:$0xff] %vm3781, %v3714
  %3797 = vst.msk [vmem:[#allocation4 + $0xf0] sm:$0xff] %vm3781, %v3716
  %3798 = vst.msk [vmem:[#allocation4 + $0x100] sm:$0xff] %vm3781, %v3718
  %3799 = vst.msk [vmem:[#allocation4 + $0x110] sm:$0xff] %vm3781, %v3720
  %3800 = vst.msk [vmem:[#allocation4 + $0x120] sm:$0xff] %vm3781, %v3722
  %3801 = vst.msk [vmem:[#allocation4 + $0x130] sm:$0xff] %vm3781, %v3724
  %3802 = vst.msk [vmem:[#allocation4 + $0x140] sm:$0xff] %vm3781, %v3726
  %3803 = vst.msk [vmem:[#allocation4 + $0x150] sm:$0xff] %vm3781, %v3728
  %3804 = vst.msk [vmem:[#allocation4 + $0x160] sm:$0xff] %vm3781, %v3730
  %3805 = vst.msk [vmem:[#allocation4 + $0x170] sm:$0xff] %vm3781, %v3732
  %3806 = vst.msk [vmem:[#allocation4 + $0x180] sm:$0xff] %vm3781, %v3734
  %3807 = vst.msk [vmem:[#allocation4 + $0x190] sm:$0xff] %vm3781, %v3736
  %3808 = vst.msk [vmem:[#allocation4 + $0x1a0] sm:$0xff] %vm3781, %v3738
  %3809 = vst.msk [vmem:[#allocation4 + $0x1b0] sm:$0xff] %vm3781, %v3740
  %3810 = vst.msk [vmem:[#allocation4 + $0x1c0] sm:$0xff] %vm3781, %v3742
  %3811 = vst.msk [vmem:[#allocation4 + $0x1d0] sm:$0xff] %vm3781, %v3744
  %3812 = vst.msk [vmem:[#allocation4 + $0x1e0] sm:$0xff] %vm3781, %v3746
  %3813 = vst.msk [vmem:[#allocation4 + $0x1f0] sm:$0xff] %vm3781, %v3748
  %v3814 = vld [vmem:[#allocation3 + $0x2] sm:$0xff]
  %v3815 = vld [vmem:[#allocation3 + $0xa] sm:$0xff]
  %v3816 = vld [vmem:[#allocation3 + $0x1a] sm:$0xff]
  %v3817 = vld [vmem:[#allocation3 + $0x22] sm:$0xff]
  %v3818 = vld [vmem:[#allocation3 + $0x32] sm:$0xff]
  %v3819 = vld [vmem:[#allocation3 + $0x3a] sm:$0xff]
  %v3820 = vld [vmem:[#allocation3 + $0x4a] sm:$0xff]
  %v3821 = vld [vmem:[#allocation3 + $0x52] sm:$0xff]
  %v3822 = vld [vmem:[#allocation3 + $0x62] sm:$0xff]
  %v3823 = vld [vmem:[#allocation3 + $0x6a] sm:$0xff]
  %v3824 = vld [vmem:[#allocation3 + $0x7a] sm:$0xff]
  %v3825 = vld [vmem:[#allocation3 + $0x82] sm:$0xff]
  %v3826 = vld [vmem:[#allocation3 + $0x92] sm:$0xff]
  %v3827 = vld [vmem:[#allocation3 + $0x9a] sm:$0xff]
  %v3828 = vld [vmem:[#allocation3 + $0xaa] sm:$0xff]
  %v3829 = vld [vmem:[#allocation3 + $0xb2] sm:$0xff]
  %v3830 = vld [vmem:[#allocation3 + $0xc2] sm:$0xff]
  %v3831 = vld [vmem:[#allocation3 + $0xca] sm:$0xff]
  %v3832 = vld [vmem:[#allocation3 + $0xda] sm:$0xff]
  %v3833 = vld [vmem:[#allocation3 + $0xe2] sm:$0xff]
  %v3834 = vld [vmem:[#allocation3 + $0xf2] sm:$0xff]
  %v3835 = vld [vmem:[#allocation3 + $0xfa] sm:$0xff]
  %v3836 = vld [vmem:[#allocation3 + $0x10a] sm:$0xff]
  %v3837 = vld [vmem:[#allocation3 + $0x112] sm:$0xff]
  %v3838 = vld [vmem:[#allocation3 + $0x122] sm:$0xff]
  %v3839 = vld [vmem:[#allocation3 + $0x12a] sm:$0xff]
  %v3840 = vld [vmem:[#allocation3 + $0x13a] sm:$0xff]
  %v3841 = vld [vmem:[#allocation3 + $0x142] sm:$0xff]
  %v3842 = vld [vmem:[#allocation3 + $0x152] sm:$0xff]
  %v3843 = vld [vmem:[#allocation3 + $0x15a] sm:$0xff]
  %v3844 = vld [vmem:[#allocation3 + $0x16a] sm:$0xff]
  %v3845 = vld [vmem:[#allocation3 + $0x172] sm:$0xff]
  %v3846 = vld [vmem:[#allocation3 + $0x1b2] sm:$0xff]
  %v3847 = vld [vmem:[#allocation3 + $0x1ba] sm:$0xff]
  %v3848 = vld [vmem:[#allocation3 + $0x1ca] sm:$0xff]
  %v3849 = vld [vmem:[#allocation3 + $0x1d2] sm:$0xff]
  %v3850 = vld [vmem:[#allocation3 + $0x1e2] sm:$0xff]
  %v3851 = vld [vmem:[#allocation3 + $0x1ea] sm:$0xff]
  %v3852 = vld [vmem:[#allocation3 + $0x1fa] sm:$0xff]
  %v3853 = vld [vmem:[#allocation3 + $0x202] sm:$0xff]
  %v3854 = vld [vmem:[#allocation3 + $0x212] sm:$0xff]
  %v3855 = vld [vmem:[#allocation3 + $0x21a] sm:$0xff]
  %v3856 = vld [vmem:[#allocation3 + $0x22a] sm:$0xff]
  %v3857 = vld [vmem:[#allocation3 + $0x232] sm:$0xff]
  %v3858 = vld [vmem:[#allocation3 + $0x242] sm:$0xff]
  %v3859 = vld [vmem:[#allocation3 + $0x24a] sm:$0xff]
  %v3860 = vld [vmem:[#allocation3 + $0x25a] sm:$0xff]
  %v3861 = vld [vmem:[#allocation3 + $0x262] sm:$0xff]
  %v3862 = vld [vmem:[#allocation3 + $0x272] sm:$0xff]
  %v3863 = vld [vmem:[#allocation3 + $0x27a] sm:$0xff]
  %v3864 = vld [vmem:[#allocation3 + $0x28a] sm:$0xff]
  %v3865 = vld [vmem:[#allocation3 + $0x292] sm:$0xff]
  %v3866 = vld [vmem:[#allocation3 + $0x2a2] sm:$0xff]
  %v3867 = vld [vmem:[#allocation3 + $0x2aa] sm:$0xff]
  %v3868 = vld [vmem:[#allocation3 + $0x2ba] sm:$0xff]
  %v3869 = vld [vmem:[#allocation3 + $0x2c2] sm:$0xff]
  %v3870 = vld [vmem:[#allocation3 + $0x2d2] sm:$0xff]
  %v3871 = vld [vmem:[#allocation3 + $0x2da] sm:$0xff]
  %v3872 = vld [vmem:[#allocation3 + $0x2ea] sm:$0xff]
  %v3873 = vld [vmem:[#allocation3 + $0x2f2] sm:$0xff]
  %v3874 = vld [vmem:[#allocation3 + $0x302] sm:$0xff]
  %v3875 = vld [vmem:[#allocation3 + $0x30a] sm:$0xff]
  %v3876 = vld [vmem:[#allocation3 + $0x31a] sm:$0xff]
  %v3877 = vld [vmem:[#allocation3 + $0x322] sm:$0xff]
  %v3878 = vpack.c.bf16 %v3815, %v3814
  %v3879 = vpack.c.bf16 %v3817, %v3816
  %v3880 = vpack.c.bf16 %v3819, %v3818
  %v3881 = vpack.c.bf16 %v3821, %v3820
  %v3882 = vpack.c.bf16 %v3823, %v3822
  %v3883 = vpack.c.bf16 %v3825, %v3824
  %v3884 = vpack.c.bf16 %v3827, %v3826
  %v3885 = vpack.c.bf16 %v3829, %v3828
  %v3886 = vpack.c.bf16 %v3831, %v3830
  %v3887 = vpack.c.bf16 %v3833, %v3832
  %v3888 = vpack.c.bf16 %v3835, %v3834
  %v3889 = vpack.c.bf16 %v3837, %v3836
  %v3890 = vpack.c.bf16 %v3839, %v3838
  %v3891 = vpack.c.bf16 %v3841, %v3840
  %v3892 = vpack.c.bf16 %v3843, %v3842
  %v3893 = vpack.c.bf16 %v3845, %v3844
  %v3894 = vpack.c.bf16 %v3847, %v3846
  %v3895 = vpack.c.bf16 %v3849, %v3848
  %v3896 = vpack.c.bf16 %v3851, %v3850
  %v3897 = vpack.c.bf16 %v3853, %v3852
  %v3898 = vpack.c.bf16 %v3855, %v3854
  %v3899 = vpack.c.bf16 %v3857, %v3856
  %v3900 = vpack.c.bf16 %v3859, %v3858
  %v3901 = vpack.c.bf16 %v3861, %v3860
  %v3902 = vpack.c.bf16 %v3863, %v3862
  %v3903 = vpack.c.bf16 %v3865, %v3864
  %v3904 = vpack.c.bf16 %v3867, %v3866
  %v3905 = vpack.c.bf16 %v3869, %v3868
  %v3906 = vpack.c.bf16 %v3871, %v3870
  %v3907 = vpack.c.bf16 %v3873, %v3872
  %v3908 = vpack.c.bf16 %v3875, %v3874
  %v3909 = vpack.c.bf16 %v3877, %v3876
  %3942 = vrot.lane.b32.xlu0 %v3878, 32
  %v3943 = vpop.permute.xlu0 %3942
  %3944 = vrot.lane.b32.xlu0 %v3879, 32
  %v3945 = vpop.permute.xlu0 %3944
  %3946 = vrot.lane.b32.xlu0 %v3880, 32
  %v3947 = vpop.permute.xlu0 %3946
  %3948 = vrot.lane.b32.xlu0 %v3881, 32
  %v3949 = vpop.permute.xlu0 %3948
  %3950 = vrot.lane.b32.xlu0 %v3882, 32
  %v3951 = vpop.permute.xlu0 %3950
  %3952 = vrot.lane.b32.xlu0 %v3883, 32
  %v3953 = vpop.permute.xlu0 %3952
  %3954 = vrot.lane.b32.xlu0 %v3884, 32
  %v3955 = vpop.permute.xlu0 %3954
  %3956 = vrot.lane.b32.xlu0 %v3885, 32
  %v3957 = vpop.permute.xlu0 %3956
  %3958 = vrot.lane.b32.xlu0 %v3886, 32
  %v3959 = vpop.permute.xlu0 %3958
  %3960 = vrot.lane.b32.xlu0 %v3887, 32
  %v3961 = vpop.permute.xlu0 %3960
  %3962 = vrot.lane.b32.xlu0 %v3888, 32
  %v3963 = vpop.permute.xlu0 %3962
  %3964 = vrot.lane.b32.xlu0 %v3889, 32
  %v3965 = vpop.permute.xlu0 %3964
  %3966 = vrot.lane.b32.xlu0 %v3890, 32
  %v3967 = vpop.permute.xlu0 %3966
  %3968 = vrot.lane.b32.xlu0 %v3891, 32
  %v3969 = vpop.permute.xlu0 %3968
  %3970 = vrot.lane.b32.xlu0 %v3892, 32
  %v3971 = vpop.permute.xlu0 %3970
  %3972 = vrot.lane.b32.xlu0 %v3893, 32
  %v3973 = vpop.permute.xlu0 %3972
  %3974 = vrot.lane.b32.xlu0 %v3894, 32
  %v3975 = vpop.permute.xlu0 %3974
  %3976 = vrot.lane.b32.xlu0 %v3895, 32
  %v3977 = vpop.permute.xlu0 %3976
  %3978 = vrot.lane.b32.xlu0 %v3896, 32
  %v3979 = vpop.permute.xlu0 %3978
  %3980 = vrot.lane.b32.xlu0 %v3897, 32
  %v3981 = vpop.permute.xlu0 %3980
  %3982 = vrot.lane.b32.xlu0 %v3898, 32
  %v3983 = vpop.permute.xlu0 %3982
  %3984 = vrot.lane.b32.xlu0 %v3899, 32
  %v3985 = vpop.permute.xlu0 %3984
  %3986 = vrot.lane.b32.xlu0 %v3900, 32
  %v3987 = vpop.permute.xlu0 %3986
  %3988 = vrot.lane.b32.xlu0 %v3901, 32
  %v3989 = vpop.permute.xlu0 %3988
  %3990 = vrot.lane.b32.xlu0 %v3902, 32
  %v3991 = vpop.permute.xlu0 %3990
  %3992 = vrot.lane.b32.xlu0 %v3903, 32
  %v3993 = vpop.permute.xlu0 %3992
  %3994 = vrot.lane.b32.xlu0 %v3904, 32
  %v3995 = vpop.permute.xlu0 %3994
  %3996 = vrot.lane.b32.xlu0 %v3905, 32
  %v3997 = vpop.permute.xlu0 %3996
  %3998 = vrot.lane.b32.xlu0 %v3906, 32
  %v3999 = vpop.permute.xlu0 %3998
  %4000 = vrot.lane.b32.xlu0 %v3907, 32
  %v4001 = vpop.permute.xlu0 %4000
  %4002 = vrot.lane.b32.xlu0 %v3908, 32
  %v4003 = vpop.permute.xlu0 %4002
  %4004 = vrot.lane.b32.xlu0 %v3909, 32
  %v4005 = vpop.permute.xlu0 %4004
  %vm4038 = vcmask 392448
  %4039 = vst.msk [vmem:[#allocation4] sm:$0xff] %vm4038, %v3943
  %4040 = vst.msk [vmem:[#allocation4 + $0x10] sm:$0xff] %vm4038, %v3945
  %4041 = vst.msk [vmem:[#allocation4 + $0x20] sm:$0xff] %vm4038, %v3947
  %4042 = vst.msk [vmem:[#allocation4 + $0x30] sm:$0xff] %vm4038, %v3949
  %4043 = vst.msk [vmem:[#allocation4 + $0x40] sm:$0xff] %vm4038, %v3951
  %4044 = vst.msk [vmem:[#allocation4 + $0x50] sm:$0xff] %vm4038, %v3953
  %4045 = vst.msk [vmem:[#allocation4 + $0x60] sm:$0xff] %vm4038, %v3955
  %4046 = vst.msk [vmem:[#allocation4 + $0x70] sm:$0xff] %vm4038, %v3957
  %4047 = vst.msk [vmem:[#allocation4 + $0x80] sm:$0xff] %vm4038, %v3959
  %4048 = vst.msk [vmem:[#allocation4 + $0x90] sm:$0xff] %vm4038, %v3961
  %4049 = vst.msk [vmem:[#allocation4 + $0xa0] sm:$0xff] %vm4038, %v3963
  %4050 = vst.msk [vmem:[#allocation4 + $0xb0] sm:$0xff] %vm4038, %v3965
  %4051 = vst.msk [vmem:[#allocation4 + $0xc0] sm:$0xff] %vm4038, %v3967
  %4052 = vst.msk [vmem:[#allocation4 + $0xd0] sm:$0xff] %vm4038, %v3969
  %4053 = vst.msk [vmem:[#allocation4 + $0xe0] sm:$0xff] %vm4038, %v3971
  %4054 = vst.msk [vmem:[#allocation4 + $0xf0] sm:$0xff] %vm4038, %v3973
  %4055 = vst.msk [vmem:[#allocation4 + $0x100] sm:$0xff] %vm4038, %v3975
  %4056 = vst.msk [vmem:[#allocation4 + $0x110] sm:$0xff] %vm4038, %v3977
  %4057 = vst.msk [vmem:[#allocation4 + $0x120] sm:$0xff] %vm4038, %v3979
  %4058 = vst.msk [vmem:[#allocation4 + $0x130] sm:$0xff] %vm4038, %v3981
  %4059 = vst.msk [vmem:[#allocation4 + $0x140] sm:$0xff] %vm4038, %v3983
  %4060 = vst.msk [vmem:[#allocation4 + $0x150] sm:$0xff] %vm4038, %v3985
  %4061 = vst.msk [vmem:[#allocation4 + $0x160] sm:$0xff] %vm4038, %v3987
  %4062 = vst.msk [vmem:[#allocation4 + $0x170] sm:$0xff] %vm4038, %v3989
  %4063 = vst.msk [vmem:[#allocation4 + $0x180] sm:$0xff] %vm4038, %v3991
  %4064 = vst.msk [vmem:[#allocation4 + $0x190] sm:$0xff] %vm4038, %v3993
  %4065 = vst.msk [vmem:[#allocation4 + $0x1a0] sm:$0xff] %vm4038, %v3995
  %4066 = vst.msk [vmem:[#allocation4 + $0x1b0] sm:$0xff] %vm4038, %v3997
  %4067 = vst.msk [vmem:[#allocation4 + $0x1c0] sm:$0xff] %vm4038, %v3999
  %4068 = vst.msk [vmem:[#allocation4 + $0x1d0] sm:$0xff] %vm4038, %v4001
  %4069 = vst.msk [vmem:[#allocation4 + $0x1e0] sm:$0xff] %vm4038, %v4003
  %4070 = vst.msk [vmem:[#allocation4 + $0x1f0] sm:$0xff] %vm4038, %v4005
  %v4071 = vld [vmem:[%s3299] sm:$0xff]
  %v4072 = vld [vmem:[%s3299 + $0x8] sm:$0xff]
  %v4073 = vld [vmem:[%s3299 + $0x18] sm:$0xff]
  %v4074 = vld [vmem:[%s3299 + $0x20] sm:$0xff]
  %v4075 = vld [vmem:[%s3299 + $0x30] sm:$0xff]
  %v4076 = vld [vmem:[%s3299 + $0x38] sm:$0xff]
  %v4077 = vld [vmem:[%s3299 + $0x48] sm:$0xff]
  %v4078 = vld [vmem:[%s3299 + $0x50] sm:$0xff]
  %v4079 = vld [vmem:[%s3299 + $0x60] sm:$0xff]
  %v4080 = vld [vmem:[%s3299 + $0x68] sm:$0xff]
  %v4081 = vld [vmem:[%s3299 + $0x78] sm:$0xff]
  %v4082 = vld [vmem:[%s3299 + $0x80] sm:$0xff]
  %v4083 = vld [vmem:[%s3299 + $0x90] sm:$0xff]
  %v4084 = vld [vmem:[%s3299 + $0x98] sm:$0xff]
  %v4085 = vld [vmem:[%s3299 + $0xa8] sm:$0xff]
  %v4086 = vld [vmem:[%s3299 + $0xb0] sm:$0xff]
  %v4087 = vld [vmem:[%s3299 + $0xc0] sm:$0xff]
  %v4088 = vld [vmem:[%s3299 + $0xc8] sm:$0xff]
  %v4089 = vld [vmem:[%s3299 + $0xd8] sm:$0xff]
  %v4090 = vld [vmem:[%s3299 + $0xe0] sm:$0xff]
  %v4091 = vld [vmem:[%s3299 + $0xf0] sm:$0xff]
  %v4092 = vld [vmem:[%s3299 + $0xf8] sm:$0xff]
  %v4093 = vld [vmem:[%s3299 + $0x108] sm:$0xff]
  %v4094 = vld [vmem:[%s3299 + $0x110] sm:$0xff]
  %v4095 = vld [vmem:[%s3299 + $0x120] sm:$0xff]
  %v4096 = vld [vmem:[%s3299 + $0x128] sm:$0xff]
  %v4097 = vld [vmem:[%s3299 + $0x138] sm:$0xff]
  %v4098 = vld [vmem:[%s3299 + $0x140] sm:$0xff]
  %v4099 = vld [vmem:[%s3299 + $0x150] sm:$0xff]
  %v4100 = vld [vmem:[%s3299 + $0x158] sm:$0xff]
  %v4101 = vld [vmem:[%s3299 + $0x168] sm:$0xff]
  %v4102 = vld [vmem:[%s3299 + $0x170] sm:$0xff]
  %v4103 = vld [vmem:[%s3299 + $0x1b0] sm:$0xff]
  %v4104 = vld [vmem:[%s3299 + $0x1b8] sm:$0xff]
  %v4105 = vld [vmem:[%s3299 + $0x1c8] sm:$0xff]
  %v4106 = vld [vmem:[%s3299 + $0x1d0] sm:$0xff]
  %v4107 = vld [vmem:[%s3299 + $0x1e0] sm:$0xff]
  %v4108 = vld [vmem:[%s3299 + $0x1e8] sm:$0xff]
  %v4109 = vld [vmem:[%s3299 + $0x1f8] sm:$0xff]
  %v4110 = vld [vmem:[%s3299 + $0x200] sm:$0xff]
  %v4111 = vld [vmem:[%s3299 + $0x210] sm:$0xff]
  %v4112 = vld [vmem:[%s3299 + $0x218] sm:$0xff]
  %v4113 = vld [vmem:[%s3299 + $0x228] sm:$0xff]
  %v4114 = vld [vmem:[%s3299 + $0x230] sm:$0xff]
  %v4115 = vld [vmem:[%s3299 + $0x240] sm:$0xff]
  %v4116 = vld [vmem:[%s3299 + $0x248] sm:$0xff]
  %v4117 = vld [vmem:[%s3299 + $0x258] sm:$0xff]
  %v4118 = vld [vmem:[%s3299 + $0x260] sm:$0xff]
  %v4119 = vld [vmem:[%s3299 + $0x270] sm:$0xff]
  %v4120 = vld [vmem:[%s3299 + $0x278] sm:$0xff]
  %v4121 = vld [vmem:[%s3299 + $0x288] sm:$0xff]
  %v4122 = vld [vmem:[%s3299 + $0x290] sm:$0xff]
  %v4123 = vld [vmem:[%s3299 + $0x2a0] sm:$0xff]
  %v4124 = vld [vmem:[%s3299 + $0x2a8] sm:$0xff]
  %v4125 = vld [vmem:[%s3299 + $0x2b8] sm:$0xff]
  %v4126 = vld [vmem:[%s3299 + $0x2c0] sm:$0xff]
  %v4127 = vld [vmem:[%s3299 + $0x2d0] sm:$0xff]
  %v4128 = vld [vmem:[%s3299 + $0x2d8] sm:$0xff]
  %v4129 = vld [vmem:[%s3299 + $0x2e8] sm:$0xff]
  %v4130 = vld [vmem:[%s3299 + $0x2f0] sm:$0xff]
  %v4131 = vld [vmem:[%s3299 + $0x300] sm:$0xff]
  %v4132 = vld [vmem:[%s3299 + $0x308] sm:$0xff]
  %v4133 = vld [vmem:[%s3299 + $0x318] sm:$0xff]
  %v4134 = vld [vmem:[%s3299 + $0x320] sm:$0xff]
  %v4135 = vpack.c.bf16 %v4072, %v4071
  %v4136 = vpack.c.bf16 %v4074, %v4073
  %v4137 = vpack.c.bf16 %v4076, %v4075
  %v4138 = vpack.c.bf16 %v4078, %v4077
  %v4139 = vpack.c.bf16 %v4080, %v4079
  %v4140 = vpack.c.bf16 %v4082, %v4081
  %v4141 = vpack.c.bf16 %v4084, %v4083
  %v4142 = vpack.c.bf16 %v4086, %v4085
  %v4143 = vpack.c.bf16 %v4088, %v4087
  %v4144 = vpack.c.bf16 %v4090, %v4089
  %v4145 = vpack.c.bf16 %v4092, %v4091
  %v4146 = vpack.c.bf16 %v4094, %v4093
  %v4147 = vpack.c.bf16 %v4096, %v4095
  %v4148 = vpack.c.bf16 %v4098, %v4097
  %v4149 = vpack.c.bf16 %v4100, %v4099
  %v4150 = vpack.c.bf16 %v4102, %v4101
  %v4151 = vpack.c.bf16 %v4104, %v4103
  %v4152 = vpack.c.bf16 %v4106, %v4105
  %v4153 = vpack.c.bf16 %v4108, %v4107
  %v4154 = vpack.c.bf16 %v4110, %v4109
  %v4155 = vpack.c.bf16 %v4112, %v4111
  %v4156 = vpack.c.bf16 %v4114, %v4113
  %v4157 = vpack.c.bf16 %v4116, %v4115
  %v4158 = vpack.c.bf16 %v4118, %v4117
  %v4159 = vpack.c.bf16 %v4120, %v4119
  %v4160 = vpack.c.bf16 %v4122, %v4121
  %v4161 = vpack.c.bf16 %v4124, %v4123
  %v4162 = vpack.c.bf16 %v4126, %v4125
  %v4163 = vpack.c.bf16 %v4128, %v4127
  %v4164 = vpack.c.bf16 %v4130, %v4129
  %v4165 = vpack.c.bf16 %v4132, %v4131
  %v4166 = vpack.c.bf16 %v4134, %v4133
  %4199 = vrot.lane.b32.xlu0 %v4135, 48
  %v4200 = vpop.permute.xlu0 %4199
  %4201 = vrot.lane.b32.xlu0 %v4136, 48
  %v4202 = vpop.permute.xlu0 %4201
  %4203 = vrot.lane.b32.xlu0 %v4137, 48
  %v4204 = vpop.permute.xlu0 %4203
  %4205 = vrot.lane.b32.xlu0 %v4138, 48
  %v4206 = vpop.permute.xlu0 %4205
  %4207 = vrot.lane.b32.xlu0 %v4139, 48
  %v4208 = vpop.permute.xlu0 %4207
  %4209 = vrot.lane.b32.xlu0 %v4140, 48
  %v4210 = vpop.permute.xlu0 %4209
  %4211 = vrot.lane.b32.xlu0 %v4141, 48
  %v4212 = vpop.permute.xlu0 %4211
  %4213 = vrot.lane.b32.xlu0 %v4142, 48
  %v4214 = vpop.permute.xlu0 %4213
  %4215 = vrot.lane.b32.xlu0 %v4143, 48
  %v4216 = vpop.permute.xlu0 %4215
  %4217 = vrot.lane.b32.xlu0 %v4144, 48
  %v4218 = vpop.permute.xlu0 %4217
  %4219 = vrot.lane.b32.xlu0 %v4145, 48
  %v4220 = vpop.permute.xlu0 %4219
  %4221 = vrot.lane.b32.xlu0 %v4146, 48
  %v4222 = vpop.permute.xlu0 %4221
  %4223 = vrot.lane.b32.xlu0 %v4147, 48
  %v4224 = vpop.permute.xlu0 %4223
  %4225 = vrot.lane.b32.xlu0 %v4148, 48
  %v4226 = vpop.permute.xlu0 %4225
  %4227 = vrot.lane.b32.xlu0 %v4149, 48
  %v4228 = vpop.permute.xlu0 %4227
  %4229 = vrot.lane.b32.xlu0 %v4150, 48
  %v4230 = vpop.permute.xlu0 %4229
  %4231 = vrot.lane.b32.xlu0 %v4151, 48
  %v4232 = vpop.permute.xlu0 %4231
  %4233 = vrot.lane.b32.xlu0 %v4152, 48
  %v4234 = vpop.permute.xlu0 %4233
  %4235 = vrot.lane.b32.xlu0 %v4153, 48
  %v4236 = vpop.permute.xlu0 %4235
  %4237 = vrot.lane.b32.xlu0 %v4154, 48
  %v4238 = vpop.permute.xlu0 %4237
  %4239 = vrot.lane.b32.xlu0 %v4155, 48
  %v4240 = vpop.permute.xlu0 %4239
  %4241 = vrot.lane.b32.xlu0 %v4156, 48
  %v4242 = vpop.permute.xlu0 %4241
  %4243 = vrot.lane.b32.xlu0 %v4157, 48
  %v4244 = vpop.permute.xlu0 %4243
  %4245 = vrot.lane.b32.xlu0 %v4158, 48
  %v4246 = vpop.permute.xlu0 %4245
  %4247 = vrot.lane.b32.xlu0 %v4159, 48
  %v4248 = vpop.permute.xlu0 %4247
  %4249 = vrot.lane.b32.xlu0 %v4160, 48
  %v4250 = vpop.permute.xlu0 %4249
  %4251 = vrot.lane.b32.xlu0 %v4161, 48
  %v4252 = vpop.permute.xlu0 %4251
  %4253 = vrot.lane.b32.xlu0 %v4162, 48
  %v4254 = vpop.permute.xlu0 %4253
  %4255 = vrot.lane.b32.xlu0 %v4163, 48
  %v4256 = vpop.permute.xlu0 %4255
  %4257 = vrot.lane.b32.xlu0 %v4164, 48
  %v4258 = vpop.permute.xlu0 %4257
  %4259 = vrot.lane.b32.xlu0 %v4165, 48
  %v4260 = vpop.permute.xlu0 %4259
  %4261 = vrot.lane.b32.xlu0 %v4166, 48
  %v4262 = vpop.permute.xlu0 %4261
  %vm4295 = vcmask 523648
  %4296 = vst.msk [vmem:[#allocation4] sm:$0xff] %vm4295, %v4200
  %4297 = vst.msk [vmem:[#allocation4 + $0x10] sm:$0xff] %vm4295, %v4202
  %4298 = vst.msk [vmem:[#allocation4 + $0x20] sm:$0xff] %vm4295, %v4204
  %4299 = vst.msk [vmem:[#allocation4 + $0x30] sm:$0xff] %vm4295, %v4206
  %4300 = vst.msk [vmem:[#allocation4 + $0x40] sm:$0xff] %vm4295, %v4208
  %4301 = vst.msk [vmem:[#allocation4 + $0x50] sm:$0xff] %vm4295, %v4210
  %4302 = vst.msk [vmem:[#allocation4 + $0x60] sm:$0xff] %vm4295, %v4212
  %4303 = vst.msk [vmem:[#allocation4 + $0x70] sm:$0xff] %vm4295, %v4214
  %4304 = vst.msk [vmem:[#allocation4 + $0x80] sm:$0xff] %vm4295, %v4216
  %4305 = vst.msk [vmem:[#allocation4 + $0x90] sm:$0xff] %vm4295, %v4218
  %4306 = vst.msk [vmem:[#allocation4 + $0xa0] sm:$0xff] %vm4295, %v4220
  %4307 = vst.msk [vmem:[#allocation4 + $0xb0] sm:$0xff] %vm4295, %v4222
  %4308 = vst.msk [vmem:[#allocation4 + $0xc0] sm:$0xff] %vm4295, %v4224
  %4309 = vst.msk [vmem:[#allocation4 + $0xd0] sm:$0xff] %vm4295, %v4226
  %4310 = vst.msk [vmem:[#allocation4 + $0xe0] sm:$0xff] %vm4295, %v4228
  %4311 = vst.msk [vmem:[#allocation4 + $0xf0] sm:$0xff] %vm4295, %v4230
  %4312 = vst.msk [vmem:[#allocation4 + $0x100] sm:$0xff] %vm4295, %v4232
  %4313 = vst.msk [vmem:[#allocation4 + $0x110] sm:$0xff] %vm4295, %v4234
  %4314 = vst.msk [vmem:[#allocation4 + $0x120] sm:$0xff] %vm4295, %v4236
  %4315 = vst.msk [vmem:[#allocation4 + $0x130] sm:$0xff] %vm4295, %v4238
  %4316 = vst.msk [vmem:[#allocation4 + $0x140] sm:$0xff] %vm4295, %v4240
  %4317 = vst.msk [vmem:[#allocation4 + $0x150] sm:$0xff] %vm4295, %v4242
  %4318 = vst.msk [vmem:[#allocation4 + $0x160] sm:$0xff] %vm4295, %v4244
  %4319 = vst.msk [vmem:[#allocation4 + $0x170] sm:$0xff] %vm4295, %v4246
  %4320 = vst.msk [vmem:[#allocation4 + $0x180] sm:$0xff] %vm4295, %v4248
  %4321 = vst.msk [vmem:[#allocation4 + $0x190] sm:$0xff] %vm4295, %v4250
  %4322 = vst.msk [vmem:[#allocation4 + $0x1a0] sm:$0xff] %vm4295, %v4252
  %4323 = vst.msk [vmem:[#allocation4 + $0x1b0] sm:$0xff] %vm4295, %v4254
  %4324 = vst.msk [vmem:[#allocation4 + $0x1c0] sm:$0xff] %vm4295, %v4256
  %4325 = vst.msk [vmem:[#allocation4 + $0x1d0] sm:$0xff] %vm4295, %v4258
  %4326 = vst.msk [vmem:[#allocation4 + $0x1e0] sm:$0xff] %vm4295, %v4260
  %4327 = vst.msk [vmem:[#allocation4 + $0x1f0] sm:$0xff] %vm4295, %v4262
  %v4328 = vld [vmem:[%s3299 + $0x1] sm:$0xff]
  %v4329 = vld [vmem:[%s3299 + $0x9] sm:$0xff]
  %v4330 = vld [vmem:[%s3299 + $0x19] sm:$0xff]
  %v4331 = vld [vmem:[%s3299 + $0x21] sm:$0xff]
  %v4332 = vld [vmem:[%s3299 + $0x31] sm:$0xff]
  %v4333 = vld [vmem:[%s3299 + $0x39] sm:$0xff]
  %v4334 = vld [vmem:[%s3299 + $0x49] sm:$0xff]
  %v4335 = vld [vmem:[%s3299 + $0x51] sm:$0xff]
  %v4336 = vld [vmem:[%s3299 + $0x61] sm:$0xff]
  %v4337 = vld [vmem:[%s3299 + $0x69] sm:$0xff]
  %v4338 = vld [vmem:[%s3299 + $0x79] sm:$0xff]
  %v4339 = vld [vmem:[%s3299 + $0x81] sm:$0xff]
  %v4340 = vld [vmem:[%s3299 + $0x91] sm:$0xff]
  %v4341 = vld [vmem:[%s3299 + $0x99] sm:$0xff]
  %v4342 = vld [vmem:[%s3299 + $0xa9] sm:$0xff]
  %v4343 = vld [vmem:[%s3299 + $0xb1] sm:$0xff]
  %v4344 = vld [vmem:[%s3299 + $0xc1] sm:$0xff]
  %v4345 = vld [vmem:[%s3299 + $0xc9] sm:$0xff]
  %v4346 = vld [vmem:[%s3299 + $0xd9] sm:$0xff]
  %v4347 = vld [vmem:[%s3299 + $0xe1] sm:$0xff]
  %v4348 = vld [vmem:[%s3299 + $0xf1] sm:$0xff]
  %v4349 = vld [vmem:[%s3299 + $0xf9] sm:$0xff]
  %v4350 = vld [vmem:[%s3299 + $0x109] sm:$0xff]
  %v4351 = vld [vmem:[%s3299 + $0x111] sm:$0xff]
  %v4352 = vld [vmem:[%s3299 + $0x121] sm:$0xff]
  %v4353 = vld [vmem:[%s3299 + $0x129] sm:$0xff]
  %v4354 = vld [vmem:[%s3299 + $0x139] sm:$0xff]
  %v4355 = vld [vmem:[%s3299 + $0x141] sm:$0xff]
  %v4356 = vld [vmem:[%s3299 + $0x151] sm:$0xff]
  %v4357 = vld [vmem:[%s3299 + $0x159] sm:$0xff]
  %v4358 = vld [vmem:[%s3299 + $0x169] sm:$0xff]
  %v4359 = vld [vmem:[%s3299 + $0x171] sm:$0xff]
  %v4360 = vld [vmem:[%s3299 + $0x1b1] sm:$0xff]
  %v4361 = vld [vmem:[%s3299 + $0x1b9] sm:$0xff]
  %v4362 = vld [vmem:[%s3299 + $0x1c9] sm:$0xff]
  %v4363 = vld [vmem:[%s3299 + $0x1d1] sm:$0xff]
  %v4364 = vld [vmem:[%s3299 + $0x1e1] sm:$0xff]
  %v4365 = vld [vmem:[%s3299 + $0x1e9] sm:$0xff]
  %v4366 = vld [vmem:[%s3299 + $0x1f9] sm:$0xff]
  %v4367 = vld [vmem:[%s3299 + $0x201] sm:$0xff]
  %v4368 = vld [vmem:[%s3299 + $0x211] sm:$0xff]
  %v4369 = vld [vmem:[%s3299 + $0x219] sm:$0xff]
  %v4370 = vld [vmem:[%s3299 + $0x229] sm:$0xff]
  %v4371 = vld [vmem:[%s3299 + $0x231] sm:$0xff]
  %v4372 = vld [vmem:[%s3299 + $0x241] sm:$0xff]
  %v4373 = vld [vmem:[%s3299 + $0x249] sm:$0xff]
  %v4374 = vld [vmem:[%s3299 + $0x259] sm:$0xff]
  %v4375 = vld [vmem:[%s3299 + $0x261] sm:$0xff]
  %v4376 = vld [vmem:[%s3299 + $0x271] sm:$0xff]
  %v4377 = vld [vmem:[%s3299 + $0x279] sm:$0xff]
  %v4378 = vld [vmem:[%s3299 + $0x289] sm:$0xff]
  %v4379 = vld [vmem:[%s3299 + $0x291] sm:$0xff]
  %v4380 = vld [vmem:[%s3299 + $0x2a1] sm:$0xff]
  %v4381 = vld [vmem:[%s3299 + $0x2a9] sm:$0xff]
  %v4382 = vld [vmem:[%s3299 + $0x2b9] sm:$0xff]
  %v4383 = vld [vmem:[%s3299 + $0x2c1] sm:$0xff]
  %v4384 = vld [vmem:[%s3299 + $0x2d1] sm:$0xff]
  %v4385 = vld [vmem:[%s3299 + $0x2d9] sm:$0xff]
  %v4386 = vld [vmem:[%s3299 + $0x2e9] sm:$0xff]
  %v4387 = vld [vmem:[%s3299 + $0x2f1] sm:$0xff]
  %v4388 = vld [vmem:[%s3299 + $0x301] sm:$0xff]
  %v4389 = vld [vmem:[%s3299 + $0x309] sm:$0xff]
  %v4390 = vld [vmem:[%s3299 + $0x319] sm:$0xff]
  %v4391 = vld [vmem:[%s3299 + $0x321] sm:$0xff]
  %v4392 = vpack.c.bf16 %v4329, %v4328
  %v4393 = vpack.c.bf16 %v4331, %v4330
  %v4394 = vpack.c.bf16 %v4333, %v4332
  %v4395 = vpack.c.bf16 %v4335, %v4334
  %v4396 = vpack.c.bf16 %v4337, %v4336
  %v4397 = vpack.c.bf16 %v4339, %v4338
  %v4398 = vpack.c.bf16 %v4341, %v4340
  %v4399 = vpack.c.bf16 %v4343, %v4342
  %v4400 = vpack.c.bf16 %v4345, %v4344
  %v4401 = vpack.c.bf16 %v4347, %v4346
  %v4402 = vpack.c.bf16 %v4349, %v4348
  %v4403 = vpack.c.bf16 %v4351, %v4350
  %v4404 = vpack.c.bf16 %v4353, %v4352
  %v4405 = vpack.c.bf16 %v4355, %v4354
  %v4406 = vpack.c.bf16 %v4357, %v4356
  %v4407 = vpack.c.bf16 %v4359, %v4358
  %v4408 = vpack.c.bf16 %v4361, %v4360
  %v4409 = vpack.c.bf16 %v4363, %v4362
  %v4410 = vpack.c.bf16 %v4365, %v4364
  %v4411 = vpack.c.bf16 %v4367, %v4366
  %v4412 = vpack.c.bf16 %v4369, %v4368
  %v4413 = vpack.c.bf16 %v4371, %v4370
  %v4414 = vpack.c.bf16 %v4373, %v4372
  %v4415 = vpack.c.bf16 %v4375, %v4374
  %v4416 = vpack.c.bf16 %v4377, %v4376
  %v4417 = vpack.c.bf16 %v4379, %v4378
  %v4418 = vpack.c.bf16 %v4381, %v4380
  %v4419 = vpack.c.bf16 %v4383, %v4382
  %v4420 = vpack.c.bf16 %v4385, %v4384
  %v4421 = vpack.c.bf16 %v4387, %v4386
  %v4422 = vpack.c.bf16 %v4389, %v4388
  %v4423 = vpack.c.bf16 %v4391, %v4390
  %4456 = vrot.lane.b32.xlu0 %v4392, 64
  %v4457 = vpop.permute.xlu0 %4456
  %4458 = vrot.lane.b32.xlu0 %v4393, 64
  %v4459 = vpop.permute.xlu0 %4458
  %4460 = vrot.lane.b32.xlu0 %v4394, 64
  %v4461 = vpop.permute.xlu0 %4460
  %4462 = vrot.lane.b32.xlu0 %v4395, 64
  %v4463 = vpop.permute.xlu0 %4462
  %4464 = vrot.lane.b32.xlu0 %v4396, 64
  %v4465 = vpop.permute.xlu0 %4464
  %4466 = vrot.lane.b32.xlu0 %v4397, 64
  %v4467 = vpop.permute.xlu0 %4466
  %4468 = vrot.lane.b32.xlu0 %v4398, 64
  %v4469 = vpop.permute.xlu0 %4468
  %4470 = vrot.lane.b32.xlu0 %v4399, 64
  %v4471 = vpop.permute.xlu0 %4470
  %4472 = vrot.lane.b32.xlu0 %v4400, 64
  %v4473 = vpop.permute.xlu0 %4472
  %4474 = vrot.lane.b32.xlu0 %v4401, 64
  %v4475 = vpop.permute.xlu0 %4474
  %4476 = vrot.lane.b32.xlu0 %v4402, 64
  %v4477 = vpop.permute.xlu0 %4476
  %4478 = vrot.lane.b32.xlu0 %v4403, 64
  %v4479 = vpop.permute.xlu0 %4478
  %4480 = vrot.lane.b32.xlu0 %v4404, 64
  %v4481 = vpop.permute.xlu0 %4480
  %4482 = vrot.lane.b32.xlu0 %v4405, 64
  %v4483 = vpop.permute.xlu0 %4482
  %4484 = vrot.lane.b32.xlu0 %v4406, 64
  %v4485 = vpop.permute.xlu0 %4484
  %4486 = vrot.lane.b32.xlu0 %v4407, 64
  %v4487 = vpop.permute.xlu0 %4486
  %4488 = vrot.lane.b32.xlu0 %v4408, 64
  %v4489 = vpop.permute.xlu0 %4488
  %4490 = vrot.lane.b32.xlu0 %v4409, 64
  %v4491 = vpop.permute.xlu0 %4490
  %4492 = vrot.lane.b32.xlu0 %v4410, 64
  %v4493 = vpop.permute.xlu0 %4492
  %4494 = vrot.lane.b32.xlu0 %v4411, 64
  %v4495 = vpop.permute.xlu0 %4494
  %4496 = vrot.lane.b32.xlu0 %v4412, 64
  %v4497 = vpop.permute.xlu0 %4496
  %4498 = vrot.lane.b32.xlu0 %v4413, 64
  %v4499 = vpop.permute.xlu0 %4498
  %4500 = vrot.lane.b32.xlu0 %v4414, 64
  %v4501 = vpop.permute.xlu0 %4500
  %4502 = vrot.lane.b32.xlu0 %v4415, 64
  %v4503 = vpop.permute.xlu0 %4502
  %4504 = vrot.lane.b32.xlu0 %v4416, 64
  %v4505 = vpop.permute.xlu0 %4504
  %4506 = vrot.lane.b32.xlu0 %v4417, 64
  %v4507 = vpop.permute.xlu0 %4506
  %4508 = vrot.lane.b32.xlu0 %v4418, 64
  %v4509 = vpop.permute.xlu0 %4508
  %4510 = vrot.lane.b32.xlu0 %v4419, 64
  %v4511 = vpop.permute.xlu0 %4510
  %4512 = vrot.lane.b32.xlu0 %v4420, 64
  %v4513 = vpop.permute.xlu0 %4512
  %4514 = vrot.lane.b32.xlu0 %v4421, 64
  %v4515 = vpop.permute.xlu0 %4514
  %4516 = vrot.lane.b32.xlu0 %v4422, 64
  %v4517 = vpop.permute.xlu0 %4516
  %4518 = vrot.lane.b32.xlu0 %v4423, 64
  %v4519 = vpop.permute.xlu0 %4518
  %vm4552 = vcmask 654848
  %4553 = vst.msk [vmem:[#allocation4] sm:$0xff] %vm4552, %v4457
  %4554 = vst.msk [vmem:[#allocation4 + $0x10] sm:$0xff] %vm4552, %v4459
  %4555 = vst.msk [vmem:[#allocation4 + $0x20] sm:$0xff] %vm4552, %v4461
  %4556 = vst.msk [vmem:[#allocation4 + $0x30] sm:$0xff] %vm4552, %v4463
  %4557 = vst.msk [vmem:[#allocation4 + $0x40] sm:$0xff] %vm4552, %v4465
  %4558 = vst.msk [vmem:[#allocation4 + $0x50] sm:$0xff] %vm4552, %v4467
  %4559 = vst.msk [vmem:[#allocation4 + $0x60] sm:$0xff] %vm4552, %v4469
  %4560 = vst.msk [vmem:[#allocation4 + $0x70] sm:$0xff] %vm4552, %v4471
  %4561 = vst.msk [vmem:[#allocation4 + $0x80] sm:$0xff] %vm4552, %v4473
  %4562 = vst.msk [vmem:[#allocation4 + $0x90] sm:$0xff] %vm4552, %v4475
  %4563 = vst.msk [vmem:[#allocation4 + $0xa0] sm:$0xff] %vm4552, %v4477
  %4564 = vst.msk [vmem:[#allocation4 + $0xb0] sm:$0xff] %vm4552, %v4479
  %4565 = vst.msk [vmem:[#allocation4 + $0xc0] sm:$0xff] %vm4552, %v4481
  %4566 = vst.msk [vmem:[#allocation4 + $0xd0] sm:$0xff] %vm4552, %v4483
  %4567 = vst.msk [vmem:[#allocation4 + $0xe0] sm:$0xff] %vm4552, %v4485
  %4568 = vst.msk [vmem:[#allocation4 + $0xf0] sm:$0xff] %vm4552, %v4487
  %4569 = vst.msk [vmem:[#allocation4 + $0x100] sm:$0xff] %vm4552, %v4489
  %4570 = vst.msk [vmem:[#allocation4 + $0x110] sm:$0xff] %vm4552, %v4491
  %4571 = vst.msk [vmem:[#allocation4 + $0x120] sm:$0xff] %vm4552, %v4493
  %4572 = vst.msk [vmem:[#allocation4 + $0x130] sm:$0xff] %vm4552, %v4495
  %4573 = vst.msk [vmem:[#allocation4 + $0x140] sm:$0xff] %vm4552, %v4497
  %4574 = vst.msk [vmem:[#allocation4 + $0x150] sm:$0xff] %vm4552, %v4499
  %4575 = vst.msk [vmem:[#allocation4 + $0x160] sm:$0xff] %vm4552, %v4501
  %4576 = vst.msk [vmem:[#allocation4 + $0x170] sm:$0xff] %vm4552, %v4503
  %4577 = vst.msk [vmem:[#allocation4 + $0x180] sm:$0xff] %vm4552, %v4505
  %4578 = vst.msk [vmem:[#allocation4 + $0x190] sm:$0xff] %vm4552, %v4507
  %4579 = vst.msk [vmem:[#allocation4 + $0x1a0] sm:$0xff] %vm4552, %v4509
  %4580 = vst.msk [vmem:[#allocation4 + $0x1b0] sm:$0xff] %vm4552, %v4511
  %4581 = vst.msk [vmem:[#allocation4 + $0x1c0] sm:$0xff] %vm4552, %v4513
  %4582 = vst.msk [vmem:[#allocation4 + $0x1d0] sm:$0xff] %vm4552, %v4515
  %4583 = vst.msk [vmem:[#allocation4 + $0x1e0] sm:$0xff] %vm4552, %v4517
  %4584 = vst.msk [vmem:[#allocation4 + $0x1f0] sm:$0xff] %vm4552, %v4519
  %v4585 = vld [vmem:[%s3299 + $0x2] sm:$0xff]
  %v4586 = vld [vmem:[%s3299 + $0xa] sm:$0xff]
  %v4587 = vld [vmem:[%s3299 + $0x1a] sm:$0xff]
  %v4588 = vld [vmem:[%s3299 + $0x22] sm:$0xff]
  %v4589 = vld [vmem:[%s3299 + $0x32] sm:$0xff]
  %v4590 = vld [vmem:[%s3299 + $0x3a] sm:$0xff]
  %v4591 = vld [vmem:[%s3299 + $0x4a] sm:$0xff]
  %v4592 = vld [vmem:[%s3299 + $0x52] sm:$0xff]
  %v4593 = vld [vmem:[%s3299 + $0x62] sm:$0xff]
  %v4594 = vld [vmem:[%s3299 + $0x6a] sm:$0xff]
  %v4595 = vld [vmem:[%s3299 + $0x7a] sm:$0xff]
  %v4596 = vld [vmem:[%s3299 + $0x82] sm:$0xff]
  %v4597 = vld [vmem:[%s3299 + $0x92] sm:$0xff]
  %v4598 = vld [vmem:[%s3299 + $0x9a] sm:$0xff]
  %v4599 = vld [vmem:[%s3299 + $0xaa] sm:$0xff]
  %v4600 = vld [vmem:[%s3299 + $0xb2] sm:$0xff]
  %v4601 = vld [vmem:[%s3299 + $0xc2] sm:$0xff]
  %v4602 = vld [vmem:[%s3299 + $0xca] sm:$0xff]
  %v4603 = vld [vmem:[%s3299 + $0xda] sm:$0xff]
  %v4604 = vld [vmem:[%s3299 + $0xe2] sm:$0xff]
  %v4605 = vld [vmem:[%s3299 + $0xf2] sm:$0xff]
  %v4606 = vld [vmem:[%s3299 + $0xfa] sm:$0xff]
  %v4607 = vld [vmem:[%s3299 + $0x10a] sm:$0xff]
  %v4608 = vld [vmem:[%s3299 + $0x112] sm:$0xff]
  %v4609 = vld [vmem:[%s3299 + $0x122] sm:$0xff]
  %v4610 = vld [vmem:[%s3299 + $0x12a] sm:$0xff]
  %v4611 = vld [vmem:[%s3299 + $0x13a] sm:$0xff]
  %v4612 = vld [vmem:[%s3299 + $0x142] sm:$0xff]
  %v4613 = vld [vmem:[%s3299 + $0x152] sm:$0xff]
  %v4614 = vld [vmem:[%s3299 + $0x15a] sm:$0xff]
  %v4615 = vld [vmem:[%s3299 + $0x16a] sm:$0xff]
  %v4616 = vld [vmem:[%s3299 + $0x172] sm:$0xff]
  %v4617 = vld [vmem:[%s3299 + $0x1b2] sm:$0xff]
  %v4618 = vld [vmem:[%s3299 + $0x1ba] sm:$0xff]
  %v4619 = vld [vmem:[%s3299 + $0x1ca] sm:$0xff]
  %v4620 = vld [vmem:[%s3299 + $0x1d2] sm:$0xff]
  %v4621 = vld [vmem:[%s3299 + $0x1e2] sm:$0xff]
  %v4622 = vld [vmem:[%s3299 + $0x1ea] sm:$0xff]
  %v4623 = vld [vmem:[%s3299 + $0x1fa] sm:$0xff]
  %v4624 = vld [vmem:[%s3299 + $0x202] sm:$0xff]
  %v4625 = vld [vmem:[%s3299 + $0x212] sm:$0xff]
  %v4626 = vld [vmem:[%s3299 + $0x21a] sm:$0xff]
  %v4627 = vld [vmem:[%s3299 + $0x22a] sm:$0xff]
  %v4628 = vld [vmem:[%s3299 + $0x232] sm:$0xff]
  %v4629 = vld [vmem:[%s3299 + $0x242] sm:$0xff]
  %v4630 = vld [vmem:[%s3299 + $0x24a] sm:$0xff]
  %v4631 = vld [vmem:[%s3299 + $0x25a] sm:$0xff]
  %v4632 = vld [vmem:[%s3299 + $0x262] sm:$0xff]
  %v4633 = vld [vmem:[%s3299 + $0x272] sm:$0xff]
  %v4634 = vld [vmem:[%s3299 + $0x27a] sm:$0xff]
  %v4635 = vld [vmem:[%s3299 + $0x28a] sm:$0xff]
  %v4636 = vld [vmem:[%s3299 + $0x292] sm:$0xff]
  %v4637 = vld [vmem:[%s3299 + $0x2a2] sm:$0xff]
  %v4638 = vld [vmem:[%s3299 + $0x2aa] sm:$0xff]
  %v4639 = vld [vmem:[%s3299 + $0x2ba] sm:$0xff]
  %v4640 = vld [vmem:[%s3299 + $0x2c2] sm:$0xff]
  %v4641 = vld [vmem:[%s3299 + $0x2d2] sm:$0xff]
  %v4642 = vld [vmem:[%s3299 + $0x2da] sm:$0xff]
  %v4643 = vld [vmem:[%s3299 + $0x2ea] sm:$0xff]
  %v4644 = vld [vmem:[%s3299 + $0x2f2] sm:$0xff]
  %v4645 = vld [vmem:[%s3299 + $0x302] sm:$0xff]
  %v4646 = vld [vmem:[%s3299 + $0x30a] sm:$0xff]
  %v4647 = vld [vmem:[%s3299 + $0x31a] sm:$0xff]
  %v4648 = vld [vmem:[%s3299 + $0x322] sm:$0xff]
  %v4649 = vpack.c.bf16 %v4586, %v4585
  %v4650 = vpack.c.bf16 %v4588, %v4587
  %v4651 = vpack.c.bf16 %v4590, %v4589
  %v4652 = vpack.c.bf16 %v4592, %v4591
  %v4653 = vpack.c.bf16 %v4594, %v4593
  %v4654 = vpack.c.bf16 %v4596, %v4595
  %v4655 = vpack.c.bf16 %v4598, %v4597
  %v4656 = vpack.c.bf16 %v4600, %v4599
  %v4657 = vpack.c.bf16 %v4602, %v4601
  %v4658 = vpack.c.bf16 %v4604, %v4603
  %v4659 = vpack.c.bf16 %v4606, %v4605
  %v4660 = vpack.c.bf16 %v4608, %v4607
  %v4661 = vpack.c.bf16 %v4610, %v4609
  %v4662 = vpack.c.bf16 %v4612, %v4611
  %v4663 = vpack.c.bf16 %v4614, %v4613
  %v4664 = vpack.c.bf16 %v4616, %v4615
  %v4665 = vpack.c.bf16 %v4618, %v4617
  %v4666 = vpack.c.bf16 %v4620, %v4619
  %v4667 = vpack.c.bf16 %v4622, %v4621
  %v4668 = vpack.c.bf16 %v4624, %v4623
  %v4669 = vpack.c.bf16 %v4626, %v4625
  %v4670 = vpack.c.bf16 %v4628, %v4627
  %v4671 = vpack.c.bf16 %v4630, %v4629
  %v4672 = vpack.c.bf16 %v4632, %v4631
  %v4673 = vpack.c.bf16 %v4634, %v4633
  %v4674 = vpack.c.bf16 %v4636, %v4635
  %v4675 = vpack.c.bf16 %v4638, %v4637
  %v4676 = vpack.c.bf16 %v4640, %v4639
  %v4677 = vpack.c.bf16 %v4642, %v4641
  %v4678 = vpack.c.bf16 %v4644, %v4643
  %v4679 = vpack.c.bf16 %v4646, %v4645
  %v4680 = vpack.c.bf16 %v4648, %v4647
  %4713 = vrot.lane.b32.xlu0 %v4649, 80
  %v4714 = vpop.permute.xlu0 %4713
  %4715 = vrot.lane.b32.xlu0 %v4650, 80
  %v4716 = vpop.permute.xlu0 %4715
  %4717 = vrot.lane.b32.xlu0 %v4651, 80
  %v4718 = vpop.permute.xlu0 %4717
  %4719 = vrot.lane.b32.xlu0 %v4652, 80
  %v4720 = vpop.permute.xlu0 %4719
  %4721 = vrot.lane.b32.xlu0 %v4653, 80
  %v4722 = vpop.permute.xlu0 %4721
  %4723 = vrot.lane.b32.xlu0 %v4654, 80
  %v4724 = vpop.permute.xlu0 %4723
  %4725 = vrot.lane.b32.xlu0 %v4655, 80
  %v4726 = vpop.permute.xlu0 %4725
  %4727 = vrot.lane.b32.xlu0 %v4656, 80
  %v4728 = vpop.permute.xlu0 %4727
  %4729 = vrot.lane.b32.xlu0 %v4657, 80
  %v4730 = vpop.permute.xlu0 %4729
  %4731 = vrot.lane.b32.xlu0 %v4658, 80
  %v4732 = vpop.permute.xlu0 %4731
  %4733 = vrot.lane.b32.xlu0 %v4659, 80
  %v4734 = vpop.permute.xlu0 %4733
  %4735 = vrot.lane.b32.xlu0 %v4660, 80
  %v4736 = vpop.permute.xlu0 %4735
  %4737 = vrot.lane.b32.xlu0 %v4661, 80
  %v4738 = vpop.permute.xlu0 %4737
  %4739 = vrot.lane.b32.xlu0 %v4662, 80
  %v4740 = vpop.permute.xlu0 %4739
  %4741 = vrot.lane.b32.xlu0 %v4663, 80
  %v4742 = vpop.permute.xlu0 %4741
  %4743 = vrot.lane.b32.xlu0 %v4664, 80
  %v4744 = vpop.permute.xlu0 %4743
  %4745 = vrot.lane.b32.xlu0 %v4665, 80
  %v4746 = vpop.permute.xlu0 %4745
  %4747 = vrot.lane.b32.xlu0 %v4666, 80
  %v4748 = vpop.permute.xlu0 %4747
  %4749 = vrot.lane.b32.xlu0 %v4667, 80
  %v4750 = vpop.permute.xlu0 %4749
  %4751 = vrot.lane.b32.xlu0 %v4668, 80
  %v4752 = vpop.permute.xlu0 %4751
  %4753 = vrot.lane.b32.xlu0 %v4669, 80
  %v4754 = vpop.permute.xlu0 %4753
  %4755 = vrot.lane.b32.xlu0 %v4670, 80
  %v4756 = vpop.permute.xlu0 %4755
  %4757 = vrot.lane.b32.xlu0 %v4671, 80
  %v4758 = vpop.permute.xlu0 %4757
  %4759 = vrot.lane.b32.xlu0 %v4672, 80
  %v4760 = vpop.permute.xlu0 %4759
  %4761 = vrot.lane.b32.xlu0 %v4673, 80
  %v4762 = vpop.permute.xlu0 %4761
  %4763 = vrot.lane.b32.xlu0 %v4674, 80
  %v4764 = vpop.permute.xlu0 %4763
  %4765 = vrot.lane.b32.xlu0 %v4675, 80
  %v4766 = vpop.permute.xlu0 %4765
  %4767 = vrot.lane.b32.xlu0 %v4676, 80
  %v4768 = vpop.permute.xlu0 %4767
  %4769 = vrot.lane.b32.xlu0 %v4677, 80
  %v4770 = vpop.permute.xlu0 %4769
  %4771 = vrot.lane.b32.xlu0 %v4678, 80
  %v4772 = vpop.permute.xlu0 %4771
  %4773 = vrot.lane.b32.xlu0 %v4679, 80
  %v4774 = vpop.permute.xlu0 %4773
  %4775 = vrot.lane.b32.xlu0 %v4680, 80
  %v4776 = vpop.permute.xlu0 %4775
  %vm4809 = vcmask 786048
  %4810 = vst.msk [vmem:[#allocation4] sm:$0xff] %vm4809, %v4714
  %4811 = vst.msk [vmem:[#allocation4 + $0x10] sm:$0xff] %vm4809, %v4716
  %4812 = vst.msk [vmem:[#allocation4 + $0x20] sm:$0xff] %vm4809, %v4718
  %4813 = vst.msk [vmem:[#allocation4 + $0x30] sm:$0xff] %vm4809, %v4720
  %4814 = vst.msk [vmem:[#allocation4 + $0x40] sm:$0xff] %vm4809, %v4722
  %4815 = vst.msk [vmem:[#allocation4 + $0x50] sm:$0xff] %vm4809, %v4724
  %4816 = vst.msk [vmem:[#allocation4 + $0x60] sm:$0xff] %vm4809, %v4726
  %4817 = vst.msk [vmem:[#allocation4 + $0x70] sm:$0xff] %vm4809, %v4728
  %4818 = vst.msk [vmem:[#allocation4 + $0x80] sm:$0xff] %vm4809, %v4730
  %4819 = vst.msk [vmem:[#allocation4 + $0x90] sm:$0xff] %vm4809, %v4732
  %4820 = vst.msk [vmem:[#allocation4 + $0xa0] sm:$0xff] %vm4809, %v4734
  %4821 = vst.msk [vmem:[#allocation4 + $0xb0] sm:$0xff] %vm4809, %v4736
  %4822 = vst.msk [vmem:[#allocation4 + $0xc0] sm:$0xff] %vm4809, %v4738
  %4823 = vst.msk [vmem:[#allocation4 + $0xd0] sm:$0xff] %vm4809, %v4740
  %4824 = vst.msk [vmem:[#allocation4 + $0xe0] sm:$0xff] %vm4809, %v4742
  %4825 = vst.msk [vmem:[#allocation4 + $0xf0] sm:$0xff] %vm4809, %v4744
  %4826 = vst.msk [vmem:[#allocation4 + $0x100] sm:$0xff] %vm4809, %v4746
  %4827 = vst.msk [vmem:[#allocation4 + $0x110] sm:$0xff] %vm4809, %v4748
  %4828 = vst.msk [vmem:[#allocation4 + $0x120] sm:$0xff] %vm4809, %v4750
  %4829 = vst.msk [vmem:[#allocation4 + $0x130] sm:$0xff] %vm4809, %v4752
  %4830 = vst.msk [vmem:[#allocation4 + $0x140] sm:$0xff] %vm4809, %v4754
  %4831 = vst.msk [vmem:[#allocation4 + $0x150] sm:$0xff] %vm4809, %v4756
  %4832 = vst.msk [vmem:[#allocation4 + $0x160] sm:$0xff] %vm4809, %v4758
  %4833 = vst.msk [vmem:[#allocation4 + $0x170] sm:$0xff] %vm4809, %v4760
  %4834 = vst.msk [vmem:[#allocation4 + $0x180] sm:$0xff] %vm4809, %v4762
  %4835 = vst.msk [vmem:[#allocation4 + $0x190] sm:$0xff] %vm4809, %v4764
  %4836 = vst.msk [vmem:[#allocation4 + $0x1a0] sm:$0xff] %vm4809, %v4766
  %4837 = vst.msk [vmem:[#allocation4 + $0x1b0] sm:$0xff] %vm4809, %v4768
  %4838 = vst.msk [vmem:[#allocation4 + $0x1c0] sm:$0xff] %vm4809, %v4770
  %4839 = vst.msk [vmem:[#allocation4 + $0x1d0] sm:$0xff] %vm4809, %v4772
  %4840 = vst.msk [vmem:[#allocation4 + $0x1e0] sm:$0xff] %vm4809, %v4774
  %4841 = vst.msk [vmem:[#allocation4 + $0x1f0] sm:$0xff] %vm4809, %v4776
  %s4842 = scalar_lea.vmem [#allocation3], 48
  %v4843 = vld [vmem:[%s4842] sm:$0xff]
  %v4844 = vld [vmem:[%s4842 + $0x8] sm:$0xff]
  %v4845 = vld [vmem:[%s4842 + $0x18] sm:$0xff]
  %v4846 = vld [vmem:[%s4842 + $0x20] sm:$0xff]
  %v4847 = vld [vmem:[%s4842 + $0x30] sm:$0xff]
  %v4848 = vld [vmem:[%s4842 + $0x38] sm:$0xff]
  %v4849 = vld [vmem:[%s4842 + $0x48] sm:$0xff]
  %v4850 = vld [vmem:[%s4842 + $0x50] sm:$0xff]
  %v4851 = vld [vmem:[%s4842 + $0x60] sm:$0xff]
  %v4852 = vld [vmem:[%s4842 + $0x68] sm:$0xff]
  %v4853 = vld [vmem:[%s4842 + $0x78] sm:$0xff]
  %v4854 = vld [vmem:[%s4842 + $0x80] sm:$0xff]
  %v4855 = vld [vmem:[%s4842 + $0x90] sm:$0xff]
  %v4856 = vld [vmem:[%s4842 + $0x98] sm:$0xff]
  %v4857 = vld [vmem:[%s4842 + $0xa8] sm:$0xff]
  %v4858 = vld [vmem:[%s4842 + $0xb0] sm:$0xff]
  %v4859 = vld [vmem:[%s4842 + $0xc0] sm:$0xff]
  %v4860 = vld [vmem:[%s4842 + $0xc8] sm:$0xff]
  %v4861 = vld [vmem:[%s4842 + $0xd8] sm:$0xff]
  %v4862 = vld [vmem:[%s4842 + $0xe0] sm:$0xff]
  %v4863 = vld [vmem:[%s4842 + $0xf0] sm:$0xff]
  %v4864 = vld [vmem:[%s4842 + $0xf8] sm:$0xff]
  %v4865 = vld [vmem:[%s4842 + $0x108] sm:$0xff]
  %v4866 = vld [vmem:[%s4842 + $0x110] sm:$0xff]
  %v4867 = vld [vmem:[%s4842 + $0x120] sm:$0xff]
  %v4868 = vld [vmem:[%s4842 + $0x128] sm:$0xff]
  %v4869 = vld [vmem:[%s4842 + $0x138] sm:$0xff]
  %v4870 = vld [vmem:[%s4842 + $0x140] sm:$0xff]
  %v4871 = vld [vmem:[%s4842 + $0x150] sm:$0xff]
  %v4872 = vld [vmem:[%s4842 + $0x158] sm:$0xff]
  %v4873 = vld [vmem:[%s4842 + $0x168] sm:$0xff]
  %v4874 = vld [vmem:[%s4842 + $0x170] sm:$0xff]
  %v4875 = vld [vmem:[%s4842 + $0x1b0] sm:$0xff]
  %v4876 = vld [vmem:[%s4842 + $0x1b8] sm:$0xff]
  %v4877 = vld [vmem:[%s4842 + $0x1c8] sm:$0xff]
  %v4878 = vld [vmem:[%s4842 + $0x1d0] sm:$0xff]
  %v4879 = vld [vmem:[%s4842 + $0x1e0] sm:$0xff]
  %v4880 = vld [vmem:[%s4842 + $0x1e8] sm:$0xff]
  %v4881 = vld [vmem:[%s4842 + $0x1f8] sm:$0xff]
  %v4882 = vld [vmem:[%s4842 + $0x200] sm:$0xff]
  %v4883 = vld [vmem:[%s4842 + $0x210] sm:$0xff]
  %v4884 = vld [vmem:[%s4842 + $0x218] sm:$0xff]
  %v4885 = vld [vmem:[%s4842 + $0x228] sm:$0xff]
  %v4886 = vld [vmem:[%s4842 + $0x230] sm:$0xff]
  %v4887 = vld [vmem:[%s4842 + $0x240] sm:$0xff]
  %v4888 = vld [vmem:[%s4842 + $0x248] sm:$0xff]
  %v4889 = vld [vmem:[%s4842 + $0x258] sm:$0xff]
  %v4890 = vld [vmem:[%s4842 + $0x260] sm:$0xff]
  %v4891 = vld [vmem:[%s4842 + $0x270] sm:$0xff]
  %v4892 = vld [vmem:[%s4842 + $0x278] sm:$0xff]
  %v4893 = vld [vmem:[%s4842 + $0x288] sm:$0xff]
  %v4894 = vld [vmem:[%s4842 + $0x290] sm:$0xff]
  %v4895 = vld [vmem:[%s4842 + $0x2a0] sm:$0xff]
  %v4896 = vld [vmem:[%s4842 + $0x2a8] sm:$0xff]
  %v4897 = vld [vmem:[%s4842 + $0x2b8] sm:$0xff]
  %v4898 = vld [vmem:[%s4842 + $0x2c0] sm:$0xff]
  %v4899 = vld [vmem:[%s4842 + $0x2d0] sm:$0xff]
  %v4900 = vld [vmem:[%s4842 + $0x2d8] sm:$0xff]
  %v4901 = vld [vmem:[%s4842 + $0x2e8] sm:$0xff]
  %v4902 = vld [vmem:[%s4842 + $0x2f0] sm:$0xff]
  %v4903 = vld [vmem:[%s4842 + $0x300] sm:$0xff]
  %v4904 = vld [vmem:[%s4842 + $0x308] sm:$0xff]
  %v4905 = vld [vmem:[%s4842 + $0x318] sm:$0xff]
  %v4906 = vld [vmem:[%s4842 + $0x320] sm:$0xff]
  %v4907 = vpack.c.bf16 %v4844, %v4843
  %v4908 = vpack.c.bf16 %v4846, %v4845
  %v4909 = vpack.c.bf16 %v4848, %v4847
  %v4910 = vpack.c.bf16 %v4850, %v4849
  %v4911 = vpack.c.bf16 %v4852, %v4851
  %v4912 = vpack.c.bf16 %v4854, %v4853
  %v4913 = vpack.c.bf16 %v4856, %v4855
  %v4914 = vpack.c.bf16 %v4858, %v4857
  %v4915 = vpack.c.bf16 %v4860, %v4859
  %v4916 = vpack.c.bf16 %v4862, %v4861
  %v4917 = vpack.c.bf16 %v4864, %v4863
  %v4918 = vpack.c.bf16 %v4866, %v4865
  %v4919 = vpack.c.bf16 %v4868, %v4867
  %v4920 = vpack.c.bf16 %v4870, %v4869
  %v4921 = vpack.c.bf16 %v4872, %v4871
  %v4922 = vpack.c.bf16 %v4874, %v4873
  %v4923 = vpack.c.bf16 %v4876, %v4875
  %v4924 = vpack.c.bf16 %v4878, %v4877
  %v4925 = vpack.c.bf16 %v4880, %v4879
  %v4926 = vpack.c.bf16 %v4882, %v4881
  %v4927 = vpack.c.bf16 %v4884, %v4883
  %v4928 = vpack.c.bf16 %v4886, %v4885
  %v4929 = vpack.c.bf16 %v4888, %v4887
  %v4930 = vpack.c.bf16 %v4890, %v4889
  %v4931 = vpack.c.bf16 %v4892, %v4891
  %v4932 = vpack.c.bf16 %v4894, %v4893
  %v4933 = vpack.c.bf16 %v4896, %v4895
  %v4934 = vpack.c.bf16 %v4898, %v4897
  %v4935 = vpack.c.bf16 %v4900, %v4899
  %v4936 = vpack.c.bf16 %v4902, %v4901
  %v4937 = vpack.c.bf16 %v4904, %v4903
  %v4938 = vpack.c.bf16 %v4906, %v4905
  %4971 = vrot.lane.b32.xlu0 %v4907, 96
  %v4972 = vpop.permute.xlu0 %4971
  %4973 = vrot.lane.b32.xlu0 %v4908, 96
  %v4974 = vpop.permute.xlu0 %4973
  %4975 = vrot.lane.b32.xlu0 %v4909, 96
  %v4976 = vpop.permute.xlu0 %4975
  %4977 = vrot.lane.b32.xlu0 %v4910, 96
  %v4978 = vpop.permute.xlu0 %4977
  %4979 = vrot.lane.b32.xlu0 %v4911, 96
  %v4980 = vpop.permute.xlu0 %4979
  %4981 = vrot.lane.b32.xlu0 %v4912, 96
  %v4982 = vpop.permute.xlu0 %4981
  %4983 = vrot.lane.b32.xlu0 %v4913, 96
  %v4984 = vpop.permute.xlu0 %4983
  %4985 = vrot.lane.b32.xlu0 %v4914, 96
  %v4986 = vpop.permute.xlu0 %4985
  %4987 = vrot.lane.b32.xlu0 %v4915, 96
  %v4988 = vpop.permute.xlu0 %4987
  %4989 = vrot.lane.b32.xlu0 %v4916, 96
  %v4990 = vpop.permute.xlu0 %4989
  %4991 = vrot.lane.b32.xlu0 %v4917, 96
  %v4992 = vpop.permute.xlu0 %4991
  %4993 = vrot.lane.b32.xlu0 %v4918, 96
  %v4994 = vpop.permute.xlu0 %4993
  %4995 = vrot.lane.b32.xlu0 %v4919, 96
  %v4996 = vpop.permute.xlu0 %4995
  %4997 = vrot.lane.b32.xlu0 %v4920, 96
  %v4998 = vpop.permute.xlu0 %4997
  %4999 = vrot.lane.b32.xlu0 %v4921, 96
  %v5000 = vpop.permute.xlu0 %4999
  %5001 = vrot.lane.b32.xlu0 %v4922, 96
  %v5002 = vpop.permute.xlu0 %5001
  %5003 = vrot.lane.b32.xlu0 %v4923, 96
  %v5004 = vpop.permute.xlu0 %5003
  %5005 = vrot.lane.b32.xlu0 %v4924, 96
  %v5006 = vpop.permute.xlu0 %5005
  %5007 = vrot.lane.b32.xlu0 %v4925, 96
  %v5008 = vpop.permute.xlu0 %5007
  %5009 = vrot.lane.b32.xlu0 %v4926, 96
  %v5010 = vpop.permute.xlu0 %5009
  %5011 = vrot.lane.b32.xlu0 %v4927, 96
  %v5012 = vpop.permute.xlu0 %5011
  %5013 = vrot.lane.b32.xlu0 %v4928, 96
  %v5014 = vpop.permute.xlu0 %5013
  %5015 = vrot.lane.b32.xlu0 %v4929, 96
  %v5016 = vpop.permute.xlu0 %5015
  %5017 = vrot.lane.b32.xlu0 %v4930, 96
  %v5018 = vpop.permute.xlu0 %5017
  %5019 = vrot.lane.b32.xlu0 %v4931, 96
  %v5020 = vpop.permute.xlu0 %5019
  %5021 = vrot.lane.b32.xlu0 %v4932, 96
  %v5022 = vpop.permute.xlu0 %5021
  %5023 = vrot.lane.b32.xlu0 %v4933, 96
  %v5024 = vpop.permute.xlu0 %5023
  %5025 = vrot.lane.b32.xlu0 %v4934, 96
  %v5026 = vpop.permute.xlu0 %5025
  %5027 = vrot.lane.b32.xlu0 %v4935, 96
  %v5028 = vpop.permute.xlu0 %5027
  %5029 = vrot.lane.b32.xlu0 %v4936, 96
  %v5030 = vpop.permute.xlu0 %5029
  %5031 = vrot.lane.b32.xlu0 %v4937, 96
  %v5032 = vpop.permute.xlu0 %5031
  %5033 = vrot.lane.b32.xlu0 %v4938, 96
  %v5034 = vpop.permute.xlu0 %5033
  %vm5067 = vcmask 917248
  %5068 = vst.msk [vmem:[#allocation4] sm:$0xff] %vm5067, %v4972
  %5069 = vst.msk [vmem:[#allocation4 + $0x10] sm:$0xff] %vm5067, %v4974
  %5070 = vst.msk [vmem:[#allocation4 + $0x20] sm:$0xff] %vm5067, %v4976
  %5071 = vst.msk [vmem:[#allocation4 + $0x30] sm:$0xff] %vm5067, %v4978
  %5072 = vst.msk [vmem:[#allocation4 + $0x40] sm:$0xff] %vm5067, %v4980
  %5073 = vst.msk [vmem:[#allocation4 + $0x50] sm:$0xff] %vm5067, %v4982
  %5074 = vst.msk [vmem:[#allocation4 + $0x60] sm:$0xff] %vm5067, %v4984
  %5075 = vst.msk [vmem:[#allocation4 + $0x70] sm:$0xff] %vm5067, %v4986
  %5076 = vst.msk [vmem:[#allocation4 + $0x80] sm:$0xff] %vm5067, %v4988
  %5077 = vst.msk [vmem:[#allocation4 + $0x90] sm:$0xff] %vm5067, %v4990
  %5078 = vst.msk [vmem:[#allocation4 + $0xa0] sm:$0xff] %vm5067, %v4992
  %5079 = vst.msk [vmem:[#allocation4 + $0xb0] sm:$0xff] %vm5067, %v4994
  %5080 = vst.msk [vmem:[#allocation4 + $0xc0] sm:$0xff] %vm5067, %v4996
  %5081 = vst.msk [vmem:[#allocation4 + $0xd0] sm:$0xff] %vm5067, %v4998
  %5082 = vst.msk [vmem:[#allocation4 + $0xe0] sm:$0xff] %vm5067, %v5000
  %5083 = vst.msk [vmem:[#allocation4 + $0xf0] sm:$0xff] %vm5067, %v5002
  %5084 = vst.msk [vmem:[#allocation4 + $0x100] sm:$0xff] %vm5067, %v5004
  %5085 = vst.msk [vmem:[#allocation4 + $0x110] sm:$0xff] %vm5067, %v5006
  %5086 = vst.msk [vmem:[#allocation4 + $0x120] sm:$0xff] %vm5067, %v5008
  %5087 = vst.msk [vmem:[#allocation4 + $0x130] sm:$0xff] %vm5067, %v5010
  %5088 = vst.msk [vmem:[#allocation4 + $0x140] sm:$0xff] %vm5067, %v5012
  %5089 = vst.msk [vmem:[#allocation4 + $0x150] sm:$0xff] %vm5067, %v5014
  %5090 = vst.msk [vmem:[#allocation4 + $0x160] sm:$0xff] %vm5067, %v5016
  %5091 = vst.msk [vmem:[#allocation4 + $0x170] sm:$0xff] %vm5067, %v5018
  %5092 = vst.msk [vmem:[#allocation4 + $0x180] sm:$0xff] %vm5067, %v5020
  %5093 = vst.msk [vmem:[#allocation4 + $0x190] sm:$0xff] %vm5067, %v5022
  %5094 = vst.msk [vmem:[#allocation4 + $0x1a0] sm:$0xff] %vm5067, %v5024
  %5095 = vst.msk [vmem:[#allocation4 + $0x1b0] sm:$0xff] %vm5067, %v5026
  %5096 = vst.msk [vmem:[#allocation4 + $0x1c0] sm:$0xff] %vm5067, %v5028
  %5097 = vst.msk [vmem:[#allocation4 + $0x1d0] sm:$0xff] %vm5067, %v5030
  %5098 = vst.msk [vmem:[#allocation4 + $0x1e0] sm:$0xff] %vm5067, %v5032
  %5099 = vst.msk [vmem:[#allocation4 + $0x1f0] sm:$0xff] %vm5067, %v5034
  %v5100 = vld [vmem:[%s4842 + $0x1] sm:$0xff]
  %v5101 = vld [vmem:[%s4842 + $0x9] sm:$0xff]
  %v5102 = vld [vmem:[%s4842 + $0x19] sm:$0xff]
  %v5103 = vld [vmem:[%s4842 + $0x21] sm:$0xff]
  %v5104 = vld [vmem:[%s4842 + $0x31] sm:$0xff]
  %v5105 = vld [vmem:[%s4842 + $0x39] sm:$0xff]
  %v5106 = vld [vmem:[%s4842 + $0x49] sm:$0xff]
  %v5107 = vld [vmem:[%s4842 + $0x51] sm:$0xff]
  %v5108 = vld [vmem:[%s4842 + $0x61] sm:$0xff]
  %v5109 = vld [vmem:[%s4842 + $0x69] sm:$0xff]
  %v5110 = vld [vmem:[%s4842 + $0x79] sm:$0xff]
  %v5111 = vld [vmem:[%s4842 + $0x81] sm:$0xff]
  %v5112 = vld [vmem:[%s4842 + $0x91] sm:$0xff]
  %v5113 = vld [vmem:[%s4842 + $0x99] sm:$0xff]
  %v5114 = vld [vmem:[%s4842 + $0xa9] sm:$0xff]
  %v5115 = vld [vmem:[%s4842 + $0xb1] sm:$0xff]
  %v5116 = vld [vmem:[%s4842 + $0xc1] sm:$0xff]
  %v5117 = vld [vmem:[%s4842 + $0xc9] sm:$0xff]
  %v5118 = vld [vmem:[%s4842 + $0xd9] sm:$0xff]
  %v5119 = vld [vmem:[%s4842 + $0xe1] sm:$0xff]
  %v5120 = vld [vmem:[%s4842 + $0xf1] sm:$0xff]
  %v5121 = vld [vmem:[%s4842 + $0xf9] sm:$0xff]
  %v5122 = vld [vmem:[%s4842 + $0x109] sm:$0xff]
  %v5123 = vld [vmem:[%s4842 + $0x111] sm:$0xff]
  %v5124 = vld [vmem:[%s4842 + $0x121] sm:$0xff]
  %v5125 = vld [vmem:[%s4842 + $0x129] sm:$0xff]
  %v5126 = vld [vmem:[%s4842 + $0x139] sm:$0xff]
  %v5127 = vld [vmem:[%s4842 + $0x141] sm:$0xff]
  %v5128 = vld [vmem:[%s4842 + $0x151] sm:$0xff]
  %v5129 = vld [vmem:[%s4842 + $0x159] sm:$0xff]
  %v5130 = vld [vmem:[%s4842 + $0x169] sm:$0xff]
  %v5131 = vld [vmem:[%s4842 + $0x171] sm:$0xff]
  %v5132 = vld [vmem:[%s4842 + $0x1b1] sm:$0xff]
  %v5133 = vld [vmem:[%s4842 + $0x1b9] sm:$0xff]
  %v5134 = vld [vmem:[%s4842 + $0x1c9] sm:$0xff]
  %v5135 = vld [vmem:[%s4842 + $0x1d1] sm:$0xff]
  %v5136 = vld [vmem:[%s4842 + $0x1e1] sm:$0xff]
  %v5137 = vld [vmem:[%s4842 + $0x1e9] sm:$0xff]
  %v5138 = vld [vmem:[%s4842 + $0x1f9] sm:$0xff]
  %v5139 = vld [vmem:[%s4842 + $0x201] sm:$0xff]
  %v5140 = vld [vmem:[%s4842 + $0x211] sm:$0xff]
  %v5141 = vld [vmem:[%s4842 + $0x219] sm:$0xff]
  %v5142 = vld [vmem:[%s4842 + $0x229] sm:$0xff]
  %v5143 = vld [vmem:[%s4842 + $0x231] sm:$0xff]
  %v5144 = vld [vmem:[%s4842 + $0x241] sm:$0xff]
  %v5145 = vld [vmem:[%s4842 + $0x249] sm:$0xff]
  %v5146 = vld [vmem:[%s4842 + $0x259] sm:$0xff]
  %v5147 = vld [vmem:[%s4842 + $0x261] sm:$0xff]
  %v5148 = vld [vmem:[%s4842 + $0x271] sm:$0xff]
  %v5149 = vld [vmem:[%s4842 + $0x279] sm:$0xff]
  %v5150 = vld [vmem:[%s4842 + $0x289] sm:$0xff]
  %v5151 = vld [vmem:[%s4842 + $0x291] sm:$0xff]
  %v5152 = vld [vmem:[%s4842 + $0x2a1] sm:$0xff]
  %v5153 = vld [vmem:[%s4842 + $0x2a9] sm:$0xff]
  %v5154 = vld [vmem:[%s4842 + $0x2b9] sm:$0xff]
  %v5155 = vld [vmem:[%s4842 + $0x2c1] sm:$0xff]
  %v5156 = vld [vmem:[%s4842 + $0x2d1] sm:$0xff]
  %v5157 = vld [vmem:[%s4842 + $0x2d9] sm:$0xff]
  %v5158 = vld [vmem:[%s4842 + $0x2e9] sm:$0xff]
  %v5159 = vld [vmem:[%s4842 + $0x2f1] sm:$0xff]
  %v5160 = vld [vmem:[%s4842 + $0x301] sm:$0xff]
  %v5161 = vld [vmem:[%s4842 + $0x309] sm:$0xff]
  %v5162 = vld [vmem:[%s4842 + $0x319] sm:$0xff]
  %v5163 = vld [vmem:[%s4842 + $0x321] sm:$0xff]
  %v5164 = vpack.c.bf16 %v5101, %v5100
  %v5165 = vpack.c.bf16 %v5103, %v5102
  %v5166 = vpack.c.bf16 %v5105, %v5104
  %v5167 = vpack.c.bf16 %v5107, %v5106
  %v5168 = vpack.c.bf16 %v5109, %v5108
  %v5169 = vpack.c.bf16 %v5111, %v5110
  %v5170 = vpack.c.bf16 %v5113, %v5112
  %v5171 = vpack.c.bf16 %v5115, %v5114
  %v5172 = vpack.c.bf16 %v5117, %v5116
  %v5173 = vpack.c.bf16 %v5119, %v5118
  %v5174 = vpack.c.bf16 %v5121, %v5120
  %v5175 = vpack.c.bf16 %v5123, %v5122
  %v5176 = vpack.c.bf16 %v5125, %v5124
  %v5177 = vpack.c.bf16 %v5127, %v5126
  %v5178 = vpack.c.bf16 %v5129, %v5128
  %v5179 = vpack.c.bf16 %v5131, %v5130
  %v5180 = vpack.c.bf16 %v5133, %v5132
  %v5181 = vpack.c.bf16 %v5135, %v5134
  %v5182 = vpack.c.bf16 %v5137, %v5136
  %v5183 = vpack.c.bf16 %v5139, %v5138
  %v5184 = vpack.c.bf16 %v5141, %v5140
  %v5185 = vpack.c.bf16 %v5143, %v5142
  %v5186 = vpack.c.bf16 %v5145, %v5144
  %v5187 = vpack.c.bf16 %v5147, %v5146
  %v5188 = vpack.c.bf16 %v5149, %v5148
  %v5189 = vpack.c.bf16 %v5151, %v5150
  %v5190 = vpack.c.bf16 %v5153, %v5152
  %v5191 = vpack.c.bf16 %v5155, %v5154
  %v5192 = vpack.c.bf16 %v5157, %v5156
  %v5193 = vpack.c.bf16 %v5159, %v5158
  %v5194 = vpack.c.bf16 %v5161, %v5160
  %v5195 = vpack.c.bf16 %v5163, %v5162
  %5228 = vrot.lane.b32.xlu0 %v5164, 112
  %v5229 = vpop.permute.xlu0 %5228
  %5230 = vrot.lane.b32.xlu0 %v5165, 112
  %v5231 = vpop.permute.xlu0 %5230
  %5232 = vrot.lane.b32.xlu0 %v5166, 112
  %v5233 = vpop.permute.xlu0 %5232
  %5234 = vrot.lane.b32.xlu0 %v5167, 112
  %v5235 = vpop.permute.xlu0 %5234
  %5236 = vrot.lane.b32.xlu0 %v5168, 112
  %v5237 = vpop.permute.xlu0 %5236
  %5238 = vrot.lane.b32.xlu0 %v5169, 112
  %v5239 = vpop.permute.xlu0 %5238
  %5240 = vrot.lane.b32.xlu0 %v5170, 112
  %v5241 = vpop.permute.xlu0 %5240
  %5242 = vrot.lane.b32.xlu0 %v5171, 112
  %v5243 = vpop.permute.xlu0 %5242
  %5244 = vrot.lane.b32.xlu0 %v5172, 112
  %v5245 = vpop.permute.xlu0 %5244
  %5246 = vrot.lane.b32.xlu0 %v5173, 112
  %v5247 = vpop.permute.xlu0 %5246
  %5248 = vrot.lane.b32.xlu0 %v5174, 112
  %v5249 = vpop.permute.xlu0 %5248
  %5250 = vrot.lane.b32.xlu0 %v5175, 112
  %v5251 = vpop.permute.xlu0 %5250
  %5252 = vrot.lane.b32.xlu0 %v5176, 112
  %v5253 = vpop.permute.xlu0 %5252
  %5254 = vrot.lane.b32.xlu0 %v5177, 112
  %v5255 = vpop.permute.xlu0 %5254
  %5256 = vrot.lane.b32.xlu0 %v5178, 112
  %v5257 = vpop.permute.xlu0 %5256
  %5258 = vrot.lane.b32.xlu0 %v5179, 112
  %v5259 = vpop.permute.xlu0 %5258
  %5260 = vrot.lane.b32.xlu0 %v5180, 112
  %v5261 = vpop.permute.xlu0 %5260
  %5262 = vrot.lane.b32.xlu0 %v5181, 112
  %v5263 = vpop.permute.xlu0 %5262
  %5264 = vrot.lane.b32.xlu0 %v5182, 112
  %v5265 = vpop.permute.xlu0 %5264
  %5266 = vrot.lane.b32.xlu0 %v5183, 112
  %v5267 = vpop.permute.xlu0 %5266
  %5268 = vrot.lane.b32.xlu0 %v5184, 112
  %v5269 = vpop.permute.xlu0 %5268
  %5270 = vrot.lane.b32.xlu0 %v5185, 112
  %v5271 = vpop.permute.xlu0 %5270
  %5272 = vrot.lane.b32.xlu0 %v5186, 112
  %v5273 = vpop.permute.xlu0 %5272
  %5274 = vrot.lane.b32.xlu0 %v5187, 112
  %v5275 = vpop.permute.xlu0 %5274
  %5276 = vrot.lane.b32.xlu0 %v5188, 112
  %v5277 = vpop.permute.xlu0 %5276
  %5278 = vrot.lane.b32.xlu0 %v5189, 112
  %v5279 = vpop.permute.xlu0 %5278
  %5280 = vrot.lane.b32.xlu0 %v5190, 112
  %v5281 = vpop.permute.xlu0 %5280
  %5282 = vrot.lane.b32.xlu0 %v5191, 112
  %v5283 = vpop.permute.xlu0 %5282
  %5284 = vrot.lane.b32.xlu0 %v5192, 112
  %v5285 = vpop.permute.xlu0 %5284
  %5286 = vrot.lane.b32.xlu0 %v5193, 112
  %v5287 = vpop.permute.xlu0 %5286
  %5288 = vrot.lane.b32.xlu0 %v5194, 112
  %v5289 = vpop.permute.xlu0 %5288
  %5290 = vrot.lane.b32.xlu0 %v5195, 112
  %v5291 = vpop.permute.xlu0 %5290
  %vm5324 = vcmask 1048448
  %5325 = vst.msk [vmem:[#allocation4] sm:$0xff] %vm5324, %v5229
  %5326 = vst.msk [vmem:[#allocation4 + $0x10] sm:$0xff] %vm5324, %v5231
  %5327 = vst.msk [vmem:[#allocation4 + $0x20] sm:$0xff] %vm5324, %v5233
  %5328 = vst.msk [vmem:[#allocation4 + $0x30] sm:$0xff] %vm5324, %v5235
  %5329 = vst.msk [vmem:[#allocation4 + $0x40] sm:$0xff] %vm5324, %v5237
  %5330 = vst.msk [vmem:[#allocation4 + $0x50] sm:$0xff] %vm5324, %v5239
  %5331 = vst.msk [vmem:[#allocation4 + $0x60] sm:$0xff] %vm5324, %v5241
  %5332 = vst.msk [vmem:[#allocation4 + $0x70] sm:$0xff] %vm5324, %v5243
  %5333 = vst.msk [vmem:[#allocation4 + $0x80] sm:$0xff] %vm5324, %v5245
  %5334 = vst.msk [vmem:[#allocation4 + $0x90] sm:$0xff] %vm5324, %v5247
  %5335 = vst.msk [vmem:[#allocation4 + $0xa0] sm:$0xff] %vm5324, %v5249
  %5336 = vst.msk [vmem:[#allocation4 + $0xb0] sm:$0xff] %vm5324, %v5251
  %5337 = vst.msk [vmem:[#allocation4 + $0xc0] sm:$0xff] %vm5324, %v5253
  %5338 = vst.msk [vmem:[#allocation4 + $0xd0] sm:$0xff] %vm5324, %v5255
  %5339 = vst.msk [vmem:[#allocation4 + $0xe0] sm:$0xff] %vm5324, %v5257
  %5340 = vst.msk [vmem:[#allocation4 + $0xf0] sm:$0xff] %vm5324, %v5259
  %5341 = vst.msk [vmem:[#allocation4 + $0x100] sm:$0xff] %vm5324, %v5261
  %5342 = vst.msk [vmem:[#allocation4 + $0x110] sm:$0xff] %vm5324, %v5263
  %5343 = vst.msk [vmem:[#allocation4 + $0x120] sm:$0xff] %vm5324, %v5265
  %5344 = vst.msk [vmem:[#allocation4 + $0x130] sm:$0xff] %vm5324, %v5267
  %5345 = vst.msk [vmem:[#allocation4 + $0x140] sm:$0xff] %vm5324, %v5269
  %5346 = vst.msk [vmem:[#allocation4 + $0x150] sm:$0xff] %vm5324, %v5271
  %5347 = vst.msk [vmem:[#allocation4 + $0x160] sm:$0xff] %vm5324, %v5273
  %5348 = vst.msk [vmem:[#allocation4 + $0x170] sm:$0xff] %vm5324, %v5275
  %5349 = vst.msk [vmem:[#allocation4 + $0x180] sm:$0xff] %vm5324, %v5277
  %5350 = vst.msk [vmem:[#allocation4 + $0x190] sm:$0xff] %vm5324, %v5279
  %5351 = vst.msk [vmem:[#allocation4 + $0x1a0] sm:$0xff] %vm5324, %v5281
  %5352 = vst.msk [vmem:[#allocation4 + $0x1b0] sm:$0xff] %vm5324, %v5283
  %5353 = vst.msk [vmem:[#allocation4 + $0x1c0] sm:$0xff] %vm5324, %v5285
  %5354 = vst.msk [vmem:[#allocation4 + $0x1d0] sm:$0xff] %vm5324, %v5287
  %5355 = vst.msk [vmem:[#allocation4 + $0x1e0] sm:$0xff] %vm5324, %v5289
  %5356 = vst.msk [vmem:[#allocation4 + $0x1f0] sm:$0xff] %vm5324, %v5291
  %v5357 = vld [vmem:[%s4842 + $0x2] sm:$0xff]
  %v5358 = vld [vmem:[%s4842 + $0xa] sm:$0xff]
  %v5359 = vld [vmem:[%s4842 + $0x1a] sm:$0xff]
  %v5360 = vld [vmem:[%s4842 + $0x22] sm:$0xff]
  %v5361 = vld [vmem:[%s4842 + $0x32] sm:$0xff]
  %v5362 = vld [vmem:[%s4842 + $0x3a] sm:$0xff]
  %v5363 = vld [vmem:[%s4842 + $0x4a] sm:$0xff]
  %v5364 = vld [vmem:[%s4842 + $0x52] sm:$0xff]
  %v5365 = vld [vmem:[%s4842 + $0x62] sm:$0xff]
  %v5366 = vld [vmem:[%s4842 + $0x6a] sm:$0xff]
  %v5367 = vld [vmem:[%s4842 + $0x7a] sm:$0xff]
  %v5368 = vld [vmem:[%s4842 + $0x82] sm:$0xff]
  %v5369 = vld [vmem:[%s4842 + $0x92] sm:$0xff]
  %v5370 = vld [vmem:[%s4842 + $0x9a] sm:$0xff]
  %v5371 = vld [vmem:[%s4842 + $0xaa] sm:$0xff]
  %v5372 = vld [vmem:[%s4842 + $0xb2] sm:$0xff]
  %v5373 = vld [vmem:[%s4842 + $0xc2] sm:$0xff]
  %v5374 = vld [vmem:[%s4842 + $0xca] sm:$0xff]
  %v5375 = vld [vmem:[%s4842 + $0xda] sm:$0xff]
  %v5376 = vld [vmem:[%s4842 + $0xe2] sm:$0xff]
  %v5377 = vld [vmem:[%s4842 + $0xf2] sm:$0xff]
  %v5378 = vld [vmem:[%s4842 + $0xfa] sm:$0xff]
  %v5379 = vld [vmem:[%s4842 + $0x10a] sm:$0xff]
  %v5380 = vld [vmem:[%s4842 + $0x112] sm:$0xff]
  %v5381 = vld [vmem:[%s4842 + $0x122] sm:$0xff]
  %v5382 = vld [vmem:[%s4842 + $0x12a] sm:$0xff]
  %v5383 = vld [vmem:[%s4842 + $0x13a] sm:$0xff]
  %v5384 = vld [vmem:[%s4842 + $0x142] sm:$0xff]
  %v5385 = vld [vmem:[%s4842 + $0x152] sm:$0xff]
  %v5386 = vld [vmem:[%s4842 + $0x15a] sm:$0xff]
  %v5387 = vld [vmem:[%s4842 + $0x16a] sm:$0xff]
  %v5388 = vld [vmem:[%s4842 + $0x172] sm:$0xff]
  %v5389 = vld [vmem:[%s4842 + $0x1b2] sm:$0xff]
  %v5390 = vld [vmem:[%s4842 + $0x1ba] sm:$0xff]
  %v5391 = vld [vmem:[%s4842 + $0x1ca] sm:$0xff]
  %v5392 = vld [vmem:[%s4842 + $0x1d2] sm:$0xff]
  %v5393 = vld [vmem:[%s4842 + $0x1e2] sm:$0xff]
  %v5394 = vld [vmem:[%s4842 + $0x1ea] sm:$0xff]
  %v5395 = vld [vmem:[%s4842 + $0x1fa] sm:$0xff]
  %v5396 = vld [vmem:[%s4842 + $0x202] sm:$0xff]
  %v5397 = vld [vmem:[%s4842 + $0x212] sm:$0xff]
  %v5398 = vld [vmem:[%s4842 + $0x21a] sm:$0xff]
  %v5399 = vld [vmem:[%s4842 + $0x22a] sm:$0xff]
  %v5400 = vld [vmem:[%s4842 + $0x232] sm:$0xff]
  %v5401 = vld [vmem:[%s4842 + $0x242] sm:$0xff]
  %v5402 = vld [vmem:[%s4842 + $0x24a] sm:$0xff]
  %v5403 = vld [vmem:[%s4842 + $0x25a] sm:$0xff]
  %v5404 = vld [vmem:[%s4842 + $0x262] sm:$0xff]
  %v5405 = vld [vmem:[%s4842 + $0x272] sm:$0xff]
  %v5406 = vld [vmem:[%s4842 + $0x27a] sm:$0xff]
  %v5407 = vld [vmem:[%s4842 + $0x28a] sm:$0xff]
  %v5408 = vld [vmem:[%s4842 + $0x292] sm:$0xff]
  %v5409 = vld [vmem:[%s4842 + $0x2a2] sm:$0xff]
  %v5410 = vld [vmem:[%s4842 + $0x2aa] sm:$0xff]
  %v5411 = vld [vmem:[%s4842 + $0x2ba] sm:$0xff]
  %v5412 = vld [vmem:[%s4842 + $0x2c2] sm:$0xff]
  %v5413 = vld [vmem:[%s4842 + $0x2d2] sm:$0xff]
  %v5414 = vld [vmem:[%s4842 + $0x2da] sm:$0xff]
  %v5415 = vld [vmem:[%s4842 + $0x2ea] sm:$0xff]
  %v5416 = vld [vmem:[%s4842 + $0x2f2] sm:$0xff]
  %v5417 = vld [vmem:[%s4842 + $0x302] sm:$0xff]
  %v5418 = vld [vmem:[%s4842 + $0x30a] sm:$0xff]
  %v5419 = vld [vmem:[%s4842 + $0x31a] sm:$0xff]
  %v5420 = vld [vmem:[%s4842 + $0x322] sm:$0xff]
  %v5421 = vpack.c.bf16 %v5358, %v5357
  %v5422 = vpack.c.bf16 %v5360, %v5359
  %v5423 = vpack.c.bf16 %v5362, %v5361
  %v5424 = vpack.c.bf16 %v5364, %v5363
  %v5425 = vpack.c.bf16 %v5366, %v5365
  %v5426 = vpack.c.bf16 %v5368, %v5367
  %v5427 = vpack.c.bf16 %v5370, %v5369
  %v5428 = vpack.c.bf16 %v5372, %v5371
  %v5429 = vpack.c.bf16 %v5374, %v5373
  %v5430 = vpack.c.bf16 %v5376, %v5375
  %v5431 = vpack.c.bf16 %v5378, %v5377
  %v5432 = vpack.c.bf16 %v5380, %v5379
  %v5433 = vpack.c.bf16 %v5382, %v5381
  %v5434 = vpack.c.bf16 %v5384, %v5383
  %v5435 = vpack.c.bf16 %v5386, %v5385
  %v5436 = vpack.c.bf16 %v5388, %v5387
  %v5437 = vpack.c.bf16 %v5390, %v5389
  %v5438 = vpack.c.bf16 %v5392, %v5391
  %v5439 = vpack.c.bf16 %v5394, %v5393
  %v5440 = vpack.c.bf16 %v5396, %v5395
  %v5441 = vpack.c.bf16 %v5398, %v5397
  %v5442 = vpack.c.bf16 %v5400, %v5399
  %v5443 = vpack.c.bf16 %v5402, %v5401
  %v5444 = vpack.c.bf16 %v5404, %v5403
  %v5445 = vpack.c.bf16 %v5406, %v5405
  %v5446 = vpack.c.bf16 %v5408, %v5407
  %v5447 = vpack.c.bf16 %v5410, %v5409
  %v5448 = vpack.c.bf16 %v5412, %v5411
  %v5449 = vpack.c.bf16 %v5414, %v5413
  %v5450 = vpack.c.bf16 %v5416, %v5415
  %v5451 = vpack.c.bf16 %v5418, %v5417
  %v5452 = vpack.c.bf16 %v5420, %v5419
  %5453 = vst.msk [vmem:[#allocation4 + $0x8] sm:$0xff] %vm2679, %v5421
  %5454 = vst.msk [vmem:[#allocation4 + $0x18] sm:$0xff] %vm2679, %v5422
  %5455 = vst.msk [vmem:[#allocation4 + $0x28] sm:$0xff] %vm2679, %v5423
  %5456 = vst.msk [vmem:[#allocation4 + $0x38] sm:$0xff] %vm2679, %v5424
  %5457 = vst.msk [vmem:[#allocation4 + $0x48] sm:$0xff] %vm2679, %v5425
  %5458 = vst.msk [vmem:[#allocation4 + $0x58] sm:$0xff] %vm2679, %v5426
  %5459 = vst.msk [vmem:[#allocation4 + $0x68] sm:$0xff] %vm2679, %v5427
  %5460 = vst.msk [vmem:[#allocation4 + $0x78] sm:$0xff] %vm2679, %v5428
  %5461 = vst.msk [vmem:[#allocation4 + $0x88] sm:$0xff] %vm2679, %v5429
  %5462 = vst.msk [vmem:[#allocation4 + $0x98] sm:$0xff] %vm2679, %v5430
  %5463 = vst.msk [vmem:[#allocation4 + $0xa8] sm:$0xff] %vm2679, %v5431
  %5464 = vst.msk [vmem:[#allocation4 + $0xb8] sm:$0xff] %vm2679, %v5432
  %5465 = vst.msk [vmem:[#allocation4 + $0xc8] sm:$0xff] %vm2679, %v5433
  %5466 = vst.msk [vmem:[#allocation4 + $0xd8] sm:$0xff] %vm2679, %v5434
  %5467 = vst.msk [vmem:[#allocation4 + $0xe8] sm:$0xff] %vm2679, %v5435
  %5468 = vst.msk [vmem:[#allocation4 + $0xf8] sm:$0xff] %vm2679, %v5436
  %5469 = vst.msk [vmem:[#allocation4 + $0x108] sm:$0xff] %vm2679, %v5437
  %5470 = vst.msk [vmem:[#allocation4 + $0x118] sm:$0xff] %vm2679, %v5438
  %5471 = vst.msk [vmem:[#allocation4 + $0x128] sm:$0xff] %vm2679, %v5439
  %5472 = vst.msk [vmem:[#allocation4 + $0x138] sm:$0xff] %vm2679, %v5440
  %5473 = vst.msk [vmem:[#allocation4 + $0x148] sm:$0xff] %vm2679, %v5441
  %5474 = vst.msk [vmem:[#allocation4 + $0x158] sm:$0xff] %vm2679, %v5442
  %5475 = vst.msk [vmem:[#allocation4 + $0x168] sm:$0xff] %vm2679, %v5443
  %5476 = vst.msk [vmem:[#allocation4 + $0x178] sm:$0xff] %vm2679, %v5444
  %5477 = vst.msk [vmem:[#allocation4 + $0x188] sm:$0xff] %vm2679, %v5445
  %5478 = vst.msk [vmem:[#allocation4 + $0x198] sm:$0xff] %vm2679, %v5446
  %5479 = vst.msk [vmem:[#allocation4 + $0x1a8] sm:$0xff] %vm2679, %v5447
  %5480 = vst.msk [vmem:[#allocation4 + $0x1b8] sm:$0xff] %vm2679, %v5448
  %5481 = vst.msk [vmem:[#allocation4 + $0x1c8] sm:$0xff] %vm2679, %v5449
  %5482 = vst.msk [vmem:[#allocation4 + $0x1d8] sm:$0xff] %vm2679, %v5450
  %5483 = vst.msk [vmem:[#allocation4 + $0x1e8] sm:$0xff] %vm2679, %v5451
  %5484 = vst.msk [vmem:[#allocation4 + $0x1f8] sm:$0xff] %vm2679, %v5452
  %v5485 = vld [vmem:[#allocation4] sm:$0xff]
  %v5486 = vld [vmem:[#allocation4 + $0x8] sm:$0xff]
  %v5487 = vld [vmem:[#allocation4 + $0x10] sm:$0xff]
  %v5488 = vld [vmem:[#allocation4 + $0x18] sm:$0xff]
  %v5489 = vld [vmem:[#allocation4 + $0x20] sm:$0xff]
  %v5490 = vld [vmem:[#allocation4 + $0x28] sm:$0xff]
  %v5491 = vld [vmem:[#allocation4 + $0x30] sm:$0xff]
  %v5492 = vld [vmem:[#allocation4 + $0x38] sm:$0xff]
  %v5493 = vld [vmem:[#allocation4 + $0x40] sm:$0xff]
  %v5494 = vld [vmem:[#allocation4 + $0x48] sm:$0xff]
  %v5495 = vld [vmem:[#allocation4 + $0x50] sm:$0xff]
  %v5496 = vld [vmem:[#allocation4 + $0x58] sm:$0xff]
  %v5497 = vld [vmem:[#allocation4 + $0x60] sm:$0xff]
  %v5498 = vld [vmem:[#allocation4 + $0x68] sm:$0xff]
  %v5499 = vld [vmem:[#allocation4 + $0x70] sm:$0xff]
  %v5500 = vld [vmem:[#allocation4 + $0x78] sm:$0xff]
  %v5501 = vld [vmem:[#allocation4 + $0x80] sm:$0xff]
  %v5502 = vld [vmem:[#allocation4 + $0x88] sm:$0xff]
  %v5503 = vld [vmem:[#allocation4 + $0x90] sm:$0xff]
  %v5504 = vld [vmem:[#allocation4 + $0x98] sm:$0xff]
  %v5505 = vld [vmem:[#allocation4 + $0xa0] sm:$0xff]
  %v5506 = vld [vmem:[#allocation4 + $0xa8] sm:$0xff]
  %v5507 = vld [vmem:[#allocation4 + $0xb0] sm:$0xff]
  %v5508 = vld [vmem:[#allocation4 + $0xb8] sm:$0xff]
  %v5509 = vld [vmem:[#allocation4 + $0xc0] sm:$0xff]
  %v5510 = vld [vmem:[#allocation4 + $0xc8] sm:$0xff]
  %v5511 = vld [vmem:[#allocation4 + $0xd0] sm:$0xff]
  %v5512 = vld [vmem:[#allocation4 + $0xd8] sm:$0xff]
  %v5513 = vld [vmem:[#allocation4 + $0xe0] sm:$0xff]
  %v5514 = vld [vmem:[#allocation4 + $0xe8] sm:$0xff]
  %v5515 = vld [vmem:[#allocation4 + $0xf0] sm:$0xff]
  %v5516 = vld [vmem:[#allocation4 + $0xf8] sm:$0xff]
  %v5517 = vld [vmem:[#allocation4 + $0x100] sm:$0xff]
  %v5518 = vld [vmem:[#allocation4 + $0x108] sm:$0xff]
  %v5519 = vld [vmem:[#allocation4 + $0x110] sm:$0xff]
  %v5520 = vld [vmem:[#allocation4 + $0x118] sm:$0xff]
  %v5521 = vld [vmem:[#allocation4 + $0x120] sm:$0xff]
  %v5522 = vld [vmem:[#allocation4 + $0x128] sm:$0xff]
  %v5523 = vld [vmem:[#allocation4 + $0x130] sm:$0xff]
  %v5524 = vld [vmem:[#allocation4 + $0x138] sm:$0xff]
  %v5525 = vld [vmem:[#allocation4 + $0x140] sm:$0xff]
  %v5526 = vld [vmem:[#allocation4 + $0x148] sm:$0xff]
  %v5527 = vld [vmem:[#allocation4 + $0x150] sm:$0xff]
  %v5528 = vld [vmem:[#allocation4 + $0x158] sm:$0xff]
  %v5529 = vld [vmem:[#allocation4 + $0x160] sm:$0xff]
  %v5530 = vld [vmem:[#allocation4 + $0x168] sm:$0xff]
  %v5531 = vld [vmem:[#allocation4 + $0x170] sm:$0xff]
  %v5532 = vld [vmem:[#allocation4 + $0x178] sm:$0xff]
  %v5533 = vld [vmem:[#allocation4 + $0x180] sm:$0xff]
  %v5534 = vld [vmem:[#allocation4 + $0x188] sm:$0xff]
  %v5535 = vld [vmem:[#allocation4 + $0x190] sm:$0xff]
  %v5536 = vld [vmem:[#allocation4 + $0x198] sm:$0xff]
  %v5537 = vld [vmem:[#allocation4 + $0x1a0] sm:$0xff]
  %v5538 = vld [vmem:[#allocation4 + $0x1a8] sm:$0xff]
  %v5539 = vld [vmem:[#allocation4 + $0x1b0] sm:$0xff]
  %v5540 = vld [vmem:[#allocation4 + $0x1b8] sm:$0xff]
  %v5541 = vld [vmem:[#allocation4 + $0x1c0] sm:$0xff]
  %v5542 = vld [vmem:[#allocation4 + $0x1c8] sm:$0xff]
  %v5543 = vld [vmem:[#allocation4 + $0x1d0] sm:$0xff]
  %v5544 = vld [vmem:[#allocation4 + $0x1d8] sm:$0xff]
  %v5545 = vld [vmem:[#allocation4 + $0x1e0] sm:$0xff]
  %v5546 = vld [vmem:[#allocation4 + $0x1e8] sm:$0xff]
  %v5547 = vld [vmem:[#allocation4 + $0x1f0] sm:$0xff]
  %v5548 = vld [vmem:[#allocation4 + $0x1f8] sm:$0xff]
  %v5549 = vld [vmem:[%s5] sm:$0xf]
  %v5550 = vld [vmem:[%s5 + $0x4] sm:$0xf]
  %v5551 = vld [vmem:[%s5 + $0x8] sm:$0xf]
  %v5552 = vld [vmem:[%s5 + $0xc] sm:$0xf]
  %v5553 = vld [vmem:[%s5 + $0x10] sm:$0xf]
  %v5554 = vld [vmem:[%s5 + $0x14] sm:$0xf]
  %v5555 = vld [vmem:[%s5 + $0x18] sm:$0xf]
  %v5556 = vld [vmem:[%s5 + $0x1c] sm:$0xf]
  %v5557 = vld [vmem:[%s5 + $0x20] sm:$0xf]
  %v5558 = vld [vmem:[%s5 + $0x24] sm:$0xf]
  %v5559 = vld [vmem:[%s5 + $0x28] sm:$0xf]
  %v5560 = vld [vmem:[%s5 + $0x2c] sm:$0xf]
  %v5561 = vld [vmem:[%s5 + $0x30] sm:$0xf]
  %v5562 = vld [vmem:[%s5 + $0x34] sm:$0xf]
  %v5563 = vld [vmem:[%s5 + $0x38] sm:$0xf]
  %v5564 = vld [vmem:[%s5 + $0x3c] sm:$0xf]
  %v5565 = vld [vmem:[%s5 + $0x40] sm:$0xf]
  %v5566 = vld [vmem:[%s5 + $0x44] sm:$0xf]
  %v5567 = vld [vmem:[%s6] sm:$0x1]
  %v5569 = vlaneseq
  %v5570 = vshrl.u32 %v5569, 7
  %v5571 = vsub.s32 0, %v5570
  %v5572 = vrot.slane %v5567, %v5571
  %v5592 = vunpack.c.l.b16 %v5549
  %v5593 = vunpack.c.l.b16 %v5550
  %v5594 = vunpack.c.l.b16 %v5551
  %v5595 = vunpack.c.l.b16 %v5552
  %v5596 = vunpack.c.l.b16 %v5553
  %v5597 = vunpack.c.l.b16 %v5554
  %v5598 = vunpack.c.l.b16 %v5555
  %v5599 = vunpack.c.l.b16 %v5556
  %v5600 = vunpack.c.l.b16 %v5557
  %v5601 = vunpack.c.l.b16 %v5558
  %v5602 = vunpack.c.l.b16 %v5559
  %v5603 = vunpack.c.l.b16 %v5560
  %v5604 = vunpack.c.l.b16 %v5561
  %v5605 = vunpack.c.l.b16 %v5562
  %v5606 = vunpack.c.l.b16 %v5563
  %v5607 = vunpack.c.l.b16 %v5564
  %v5608 = vunpack.c.l.b16 %v5565
  %v5609 = vunpack.c.l.b16 %v5566
  %v5610 = vpack.c.b16 %v5593, %v5592
  %v5611 = vpack.c.b16 %v5595, %v5594
  %v5612 = vpack.c.b16 %v5597, %v5596
  %v5613 = vpack.c.b16 %v5599, %v5598
  %v5614 = vpack.c.b16 %v5601, %v5600
  %v5615 = vpack.c.b16 %v5603, %v5602
  %v5616 = vpack.c.b16 %v5605, %v5604
  %v5617 = vpack.c.b16 %v5607, %v5606
  %v5618 = vpack.c.b16 %v5609, %v5608
  %v5629 = vsel %vm2679, %v5486, 0
  %v5632 = vsel %vm2679, %v5488, 0
  %v5635 = vsel %vm2679, %v5490, 0
  %v5638 = vsel %vm2679, %v5492, 0
  %v5641 = vsel %vm2679, %v5494, 0
  %v5644 = vsel %vm2679, %v5496, 0
  %v5647 = vsel %vm2679, %v5498, 0
  %v5650 = vsel %vm2679, %v5500, 0
  %v5653 = vsel %vm2679, %v5502, 0
  %v5656 = vsel %vm2679, %v5504, 0
  %v5659 = vsel %vm2679, %v5506, 0
  %v5662 = vsel %vm2679, %v5508, 0
  %v5665 = vsel %vm2679, %v5510, 0
  %v5668 = vsel %vm2679, %v5512, 0
  %v5671 = vsel %vm2679, %v5514, 0
  %v5674 = vsel %vm2679, %v5516, 0
  %v5677 = vsel %vm2679, %v5518, 0
  %v5680 = vsel %vm2679, %v5520, 0
  %v5683 = vsel %vm2679, %v5522, 0
  %v5686 = vsel %vm2679, %v5524, 0
  %v5689 = vsel %vm2679, %v5526, 0
  %v5692 = vsel %vm2679, %v5528, 0
  %v5695 = vsel %vm2679, %v5530, 0
  %v5698 = vsel %vm2679, %v5532, 0
  %v5701 = vsel %vm2679, %v5534, 0
  %v5704 = vsel %vm2679, %v5536, 0
  %v5707 = vsel %vm2679, %v5538, 0
  %v5710 = vsel %vm2679, %v5540, 0
  %v5713 = vsel %vm2679, %v5542, 0
  %v5716 = vsel %vm2679, %v5544, 0
  %v5719 = vsel %vm2679, %v5546, 0
  %v5722 = vsel %vm2679, %v5548, 0
  %5724 = vmatprep.subr.bf16.mxu0 0
  %5725 = vmatpush1.bf16.msra.mxu0 %v5610
  %5726 = vmatprep.subr.bf16.mxu0 0
  %5727 = vmatpush1.bf16.msra.mxu0 %v5611
  %5728 = vmatprep.subr.bf16.mxu0 0
  %5729 = vmatpush1.bf16.msra.mxu0 %v5612
  %5730 = vmatprep.subr.bf16.mxu0 0
  %5731 = vmatpush1.bf16.msra.mxu0 %v5613
  %5732 = vmatprep.subr.bf16.mxu0 0
  %5733 = vmatpush1.bf16.msra.mxu0 %v5614
  %5734 = vmatprep.subr.bf16.mxu0 0
  %5735 = vmatpush1.bf16.msra.mxu0 %v5615
  %5736 = vmatprep.subr.bf16.mxu0 0
  %5737 = vmatpush1.bf16.msra.mxu0 %v5616
  %5738 = vmatprep.subr.bf16.mxu0 0
  %5739 = vmatpush1.bf16.msra.mxu0 %v5617
  %5740 = vmatprep.subr.bf16.mxu0 0
  %5741 = vmatpush1.bf16.msra.mxu0 %v5618
  %5742 = vmatprep.subr.bf16.mxu0 0
  %5743 = vmatpush1.bf16.msra.mxu0 0
  %5744 = vmatprep.subr.bf16.mxu0 0
  %5745 = vmatpush1.bf16.msra.mxu0 0
  %5746 = vmatprep.subr.bf16.mxu0 0
  %5747 = vmatpush1.bf16.msra.mxu0 0
  %5748 = vmatprep.subr.bf16.mxu0 0
  %5749 = vmatpush1.bf16.msra.mxu0 0
  %5750 = vmatprep.subr.bf16.mxu0 0
  %5751 = vmatpush1.bf16.msra.mxu0 0
  %5752 = vmatprep.subr.bf16.mxu0 0
  %5753 = vmatpush1.bf16.msra.mxu0 0
  %5754 = vmatprep.subr.bf16.mxu0 0
  %5755 = vmatpush1.bf16.msra.mxu0 0
  %5756 = vmatprep.mubr.bf16.mxu0 %v5629
  %5757 = vmatmul.mubr.bf16.gmra.mrb[0].mxu0 %v5485
  %v5758 = vpop.f32.mrb[0].mxu0
  %v5759 = vadd.f32 %v5572, %v5758
  %v5760 = vpop.f32.mrb[0].mxu0
  %v5761 = vpop.f32.mrb[0].mxu0
  %v5762 = vadd.f32 %v5572, %v5761
  %v5763 = vpop.f32.mrb[0].mxu0
  %5764 = vmatprep.mubr.bf16.mxu0 %v5632
  %5765 = vmatmul.mubr.bf16.gmra.mrb[0].mxu0 %v5487
  %v5766 = vpop.f32.mrb[0].mxu0
  %v5767 = vadd.f32 %v5572, %v5766
  %v5768 = vpop.f32.mrb[0].mxu0
  %v5769 = vpop.f32.mrb[0].mxu0
  %v5770 = vadd.f32 %v5572, %v5769
  %v5771 = vpop.f32.mrb[0].mxu0
  %5772 = vmatprep.mubr.bf16.mxu0 %v5635
  %5773 = vmatmul.mubr.bf16.gmra.mrb[0].mxu0 %v5489
  %v5774 = vpop.f32.mrb[0].mxu0
  %v5775 = vadd.f32 %v5572, %v5774
  %v5776 = vpop.f32.mrb[0].mxu0
  %v5777 = vpop.f32.mrb[0].mxu0
  %v5778 = vadd.f32 %v5572, %v5777
  %v5779 = vpop.f32.mrb[0].mxu0
  %5780 = vmatprep.mubr.bf16.mxu0 %v5638
  %5781 = vmatmul.mubr.bf16.gmra.mrb[0].mxu0 %v5491
  %v5782 = vpop.f32.mrb[0].mxu0
  %v5783 = vadd.f32 %v5572, %v5782
  %v5784 = vpop.f32.mrb[0].mxu0
  %v5785 = vpop.f32.mrb[0].mxu0
  %v5786 = vadd.f32 %v5572, %v5785
  %v5787 = vpop.f32.mrb[0].mxu0
  %5788 = vmatprep.mubr.bf16.mxu0 %v5641
  %5789 = vmatmul.mubr.bf16.gmra.mrb[0].mxu0 %v5493
  %v5790 = vpop.f32.mrb[0].mxu0
  %v5791 = vadd.f32 %v5572, %v5790
  %v5792 = vpop.f32.mrb[0].mxu0
  %v5793 = vpop.f32.mrb[0].mxu0
  %v5794 = vadd.f32 %v5572, %v5793
  %v5795 = vpop.f32.mrb[0].mxu0
  %5796 = vmatprep.mubr.bf16.mxu0 %v5644
  %5797 = vmatmul.mubr.bf16.gmra.mrb[0].mxu0 %v5495
  %v5798 = vpop.f32.mrb[0].mxu0
  %v5799 = vadd.f32 %v5572, %v5798
  %v5800 = vpop.f32.mrb[0].mxu0
  %v5801 = vpop.f32.mrb[0].mxu0
  %v5802 = vadd.f32 %v5572, %v5801
  %v5803 = vpop.f32.mrb[0].mxu0
  %5804 = vmatprep.mubr.bf16.mxu0 %v5647
  %5805 = vmatmul.mubr.bf16.gmra.mrb[0].mxu0 %v5497
  %v5806 = vpop.f32.mrb[0].mxu0
  %v5807 = vadd.f32 %v5572, %v5806
  %v5808 = vpop.f32.mrb[0].mxu0
  %v5809 = vpop.f32.mrb[0].mxu0
  %v5810 = vadd.f32 %v5572, %v5809
  %v5811 = vpop.f32.mrb[0].mxu0
  %5812 = vmatprep.mubr.bf16.mxu0 %v5650
  %5813 = vmatmul.mubr.bf16.gmra.mrb[0].mxu0 %v5499
  %v5814 = vpop.f32.mrb[0].mxu0
  %v5815 = vadd.f32 %v5572, %v5814
  %v5816 = vpop.f32.mrb[0].mxu0
  %v5817 = vpop.f32.mrb[0].mxu0
  %v5818 = vadd.f32 %v5572, %v5817
  %v5819 = vpop.f32.mrb[0].mxu0
  %5820 = vmatprep.mubr.bf16.mxu0 %v5653
  %5821 = vmatmul.mubr.bf16.gmra.mrb[0].mxu0 %v5501
  %v5822 = vpop.f32.mrb[0].mxu0
  %v5823 = vadd.f32 %v5572, %v5822
  %v5824 = vpop.f32.mrb[0].mxu0
  %v5825 = vpop.f32.mrb[0].mxu0
  %v5826 = vadd.f32 %v5572, %v5825
  %v5827 = vpop.f32.mrb[0].mxu0
  %5828 = vmatprep.mubr.bf16.mxu0 %v5656
  %5829 = vmatmul.mubr.bf16.gmra.mrb[0].mxu0 %v5503
  %v5830 = vpop.f32.mrb[0].mxu0
  %v5831 = vadd.f32 %v5572, %v5830
  %v5832 = vpop.f32.mrb[0].mxu0
  %v5833 = vpop.f32.mrb[0].mxu0
  %v5834 = vadd.f32 %v5572, %v5833
  %v5835 = vpop.f32.mrb[0].mxu0
  %5836 = vmatprep.mubr.bf16.mxu0 %v5659
  %5837 = vmatmul.mubr.bf16.gmra.mrb[0].mxu0 %v5505
  %v5838 = vpop.f32.mrb[0].mxu0
  %v5839 = vadd.f32 %v5572, %v5838
  %v5840 = vpop.f32.mrb[0].mxu0
  %v5841 = vpop.f32.mrb[0].mxu0
  %v5842 = vadd.f32 %v5572, %v5841
  %v5843 = vpop.f32.mrb[0].mxu0
  %5844 = vmatprep.mubr.bf16.mxu0 %v5662
  %5845 = vmatmul.mubr.bf16.gmra.mrb[0].mxu0 %v5507
  %v5846 = vpop.f32.mrb[0].mxu0
  %v5847 = vadd.f32 %v5572, %v5846
  %v5848 = vpop.f32.mrb[0].mxu0
  %v5849 = vpop.f32.mrb[0].mxu0
  %v5850 = vadd.f32 %v5572, %v5849
  %v5851 = vpop.f32.mrb[0].mxu0
  %5852 = vmatprep.mubr.bf16.mxu0 %v5665
  %5853 = vmatmul.mubr.bf16.gmra.mrb[0].mxu0 %v5509
  %v5854 = vpop.f32.mrb[0].mxu0
  %v5855 = vadd.f32 %v5572, %v5854
  %v5856 = vpop.f32.mrb[0].mxu0
  %v5857 = vpop.f32.mrb[0].mxu0
  %v5858 = vadd.f32 %v5572, %v5857
  %v5859 = vpop.f32.mrb[0].mxu0
  %5860 = vmatprep.mubr.bf16.mxu0 %v5668
  %5861 = vmatmul.mubr.bf16.gmra.mrb[0].mxu0 %v5511
  %v5862 = vpop.f32.mrb[0].mxu0
  %v5863 = vadd.f32 %v5572, %v5862
  %v5864 = vpop.f32.mrb[0].mxu0
  %v5865 = vpop.f32.mrb[0].mxu0
  %v5866 = vadd.f32 %v5572, %v5865
  %v5867 = vpop.f32.mrb[0].mxu0
  %5868 = vmatprep.mubr.bf16.mxu0 %v5671
  %5869 = vmatmul.mubr.bf16.gmra.mrb[0].mxu0 %v5513
  %v5870 = vpop.f32.mrb[0].mxu0
  %v5871 = vadd.f32 %v5572, %v5870
  %v5872 = vpop.f32.mrb[0].mxu0
  %v5873 = vpop.f32.mrb[0].mxu0
  %v5874 = vadd.f32 %v5572, %v5873
  %v5875 = vpop.f32.mrb[0].mxu0
  %5876 = vmatprep.mubr.bf16.mxu0 %v5674
  %5877 = vmatmul.mubr.bf16.gmra.mrb[0].mxu0 %v5515
  %v5878 = vpop.f32.mrb[0].mxu0
  %v5879 = vadd.f32 %v5572, %v5878
  %v5880 = vpop.f32.mrb[0].mxu0
  %v5881 = vpop.f32.mrb[0].mxu0
  %v5882 = vadd.f32 %v5572, %v5881
  %v5883 = vpop.f32.mrb[0].mxu0
  %5884 = vmatprep.mubr.bf16.mxu0 %v5677
  %5885 = vmatmul.mubr.bf16.gmra.mrb[0].mxu0 %v5517
  %v5886 = vpop.f32.mrb[0].mxu0
  %v5887 = vadd.f32 %v5572, %v5886
  %v5888 = vpop.f32.mrb[0].mxu0
  %v5889 = vpop.f32.mrb[0].mxu0
  %v5890 = vadd.f32 %v5572, %v5889
  %v5891 = vpop.f32.mrb[0].mxu0
  %5892 = vmatprep.mubr.bf16.mxu0 %v5680
  %5893 = vmatmul.mubr.bf16.gmra.mrb[0].mxu0 %v5519
  %v5894 = vpop.f32.mrb[0].mxu0
  %v5895 = vadd.f32 %v5572, %v5894
  %v5896 = vpop.f32.mrb[0].mxu0
  %v5897 = vpop.f32.mrb[0].mxu0
  %v5898 = vadd.f32 %v5572, %v5897
  %v5899 = vpop.f32.mrb[0].mxu0
  %5900 = vmatprep.mubr.bf16.mxu0 %v5683
  %5901 = vmatmul.mubr.bf16.gmra.mrb[0].mxu0 %v5521
  %v5902 = vpop.f32.mrb[0].mxu0
  %v5903 = vadd.f32 %v5572, %v5902
  %v5904 = vpop.f32.mrb[0].mxu0
  %v5905 = vpop.f32.mrb[0].mxu0
  %v5906 = vadd.f32 %v5572, %v5905
  %v5907 = vpop.f32.mrb[0].mxu0
  %5908 = vmatprep.mubr.bf16.mxu0 %v5686
  %5909 = vmatmul.mubr.bf16.gmra.mrb[0].mxu0 %v5523
  %v5910 = vpop.f32.mrb[0].mxu0
  %v5911 = vadd.f32 %v5572, %v5910
  %v5912 = vpop.f32.mrb[0].mxu0
  %v5913 = vpop.f32.mrb[0].mxu0
  %v5914 = vadd.f32 %v5572, %v5913
  %v5915 = vpop.f32.mrb[0].mxu0
  %5916 = vmatprep.mubr.bf16.mxu0 %v5689
  %5917 = vmatmul.mubr.bf16.gmra.mrb[0].mxu0 %v5525
  %v5918 = vpop.f32.mrb[0].mxu0
  %v5919 = vadd.f32 %v5572, %v5918
  %v5920 = vpop.f32.mrb[0].mxu0
  %v5921 = vpop.f32.mrb[0].mxu0
  %v5922 = vadd.f32 %v5572, %v5921
  %v5923 = vpop.f32.mrb[0].mxu0
  %5924 = vmatprep.mubr.bf16.mxu0 %v5692
  %5925 = vmatmul.mubr.bf16.gmra.mrb[0].mxu0 %v5527
  %v5926 = vpop.f32.mrb[0].mxu0
  %v5927 = vadd.f32 %v5572, %v5926
  %v5928 = vpop.f32.mrb[0].mxu0
  %v5929 = vpop.f32.mrb[0].mxu0
  %v5930 = vadd.f32 %v5572, %v5929
  %v5931 = vpop.f32.mrb[0].mxu0
  %5932 = vmatprep.mubr.bf16.mxu0 %v5695
  %5933 = vmatmul.mubr.bf16.gmra.mrb[0].mxu0 %v5529
  %v5934 = vpop.f32.mrb[0].mxu0
  %v5935 = vadd.f32 %v5572, %v5934
  %v5936 = vpop.f32.mrb[0].mxu0
  %v5937 = vpop.f32.mrb[0].mxu0
  %v5938 = vadd.f32 %v5572, %v5937
  %v5939 = vpop.f32.mrb[0].mxu0
  %5940 = vmatprep.mubr.bf16.mxu0 %v5698
  %5941 = vmatmul.mubr.bf16.gmra.mrb[0].mxu0 %v5531
  %v5942 = vpop.f32.mrb[0].mxu0
  %v5943 = vadd.f32 %v5572, %v5942
  %v5944 = vpop.f32.mrb[0].mxu0
  %v5945 = vpop.f32.mrb[0].mxu0
  %v5946 = vadd.f32 %v5572, %v5945
  %v5947 = vpop.f32.mrb[0].mxu0
  %5948 = vmatprep.mubr.bf16.mxu0 %v5701
  %5949 = vmatmul.mubr.bf16.gmra.mrb[0].mxu0 %v5533
  %v5950 = vpop.f32.mrb[0].mxu0
  %v5951 = vadd.f32 %v5572, %v5950
  %v5952 = vpop.f32.mrb[0].mxu0
  %v5953 = vpop.f32.mrb[0].mxu0
  %v5954 = vadd.f32 %v5572, %v5953
  %v5955 = vpop.f32.mrb[0].mxu0
  %5956 = vmatprep.mubr.bf16.mxu0 %v5704
  %5957 = vmatmul.mubr.bf16.gmra.mrb[0].mxu0 %v5535
  %v5958 = vpop.f32.mrb[0].mxu0
  %v5959 = vadd.f32 %v5572, %v5958
  %v5960 = vpop.f32.mrb[0].mxu0
  %v5961 = vpop.f32.mrb[0].mxu0
  %v5962 = vadd.f32 %v5572, %v5961
  %v5963 = vpop.f32.mrb[0].mxu0
  %5964 = vmatprep.mubr.bf16.mxu0 %v5707
  %5965 = vmatmul.mubr.bf16.gmra.mrb[0].mxu0 %v5537
  %v5966 = vpop.f32.mrb[0].mxu0
  %v5967 = vadd.f32 %v5572, %v5966
  %v5968 = vpop.f32.mrb[0].mxu0
  %v5969 = vpop.f32.mrb[0].mxu0
  %v5970 = vadd.f32 %v5572, %v5969
  %v5971 = vpop.f32.mrb[0].mxu0
  %5972 = vmatprep.mubr.bf16.mxu0 %v5710
  %5973 = vmatmul.mubr.bf16.gmra.mrb[0].mxu0 %v5539
  %v5974 = vpop.f32.mrb[0].mxu0
  %v5975 = vadd.f32 %v5572, %v5974
  %v5976 = vpop.f32.mrb[0].mxu0
  %v5977 = vpop.f32.mrb[0].mxu0
  %v5978 = vadd.f32 %v5572, %v5977
  %v5979 = vpop.f32.mrb[0].mxu0
  %5980 = vmatprep.mubr.bf16.mxu0 %v5713
  %5981 = vmatmul.mubr.bf16.gmra.mrb[0].mxu0 %v5541
  %v5982 = vpop.f32.mrb[0].mxu0
  %v5983 = vadd.f32 %v5572, %v5982
  %v5984 = vpop.f32.mrb[0].mxu0
  %v5985 = vpop.f32.mrb[0].mxu0
  %v5986 = vadd.f32 %v5572, %v5985
  %v5987 = vpop.f32.mrb[0].mxu0
  %5988 = vmatprep.mubr.bf16.mxu0 %v5716
  %5989 = vmatmul.mubr.bf16.gmra.mrb[0].mxu0 %v5543
  %v5990 = vpop.f32.mrb[0].mxu0
  %v5991 = vadd.f32 %v5572, %v5990
  %v5992 = vpop.f32.mrb[0].mxu0
  %v5993 = vpop.f32.mrb[0].mxu0
  %v5994 = vadd.f32 %v5572, %v5993
  %v5995 = vpop.f32.mrb[0].mxu0
  %5996 = vmatprep.mubr.bf16.mxu0 %v5719
  %5997 = vmatmul.mubr.bf16.gmra.mrb[0].mxu0 %v5545
  %v5998 = vpop.f32.mrb[0].mxu0
  %v5999 = vadd.f32 %v5572, %v5998
  %v6000 = vpop.f32.mrb[0].mxu0
  %v6001 = vpop.f32.mrb[0].mxu0
  %v6002 = vadd.f32 %v5572, %v6001
  %v6003 = vpop.f32.mrb[0].mxu0
  %6004 = vmatprep.mubr.bf16.mxu0 %v5722
  %6005 = vmatmul.mubr.bf16.gmra.mrb[0].mxu0 %v5547
  %v6006 = vpop.f32.mrb[0].mxu0
  %v6007 = vadd.f32 %v5572, %v6006
  %v6008 = vpop.f32.mrb[0].mxu0
  %v6009 = vpop.f32.mrb[0].mxu0
  %v6010 = vadd.f32 %v5572, %v6009
  %v6011 = vpop.f32.mrb[0].mxu0
  %6012 = vdwg.mxu0
  %6013 = vst.msk [vmem:[%s7] sm:$0xff] %vm123, %v5759
  %6014 = vst.msk [vmem:[%s7 + $0x8] sm:$0xff] %vm123, %v5762
  %6015 = vst.msk [vmem:[%s7 + $0x10] sm:$0xff] %vm123, %v5767
  %6016 = vst.msk [vmem:[%s7 + $0x18] sm:$0xff] %vm123, %v5770
  %6017 = vst.msk [vmem:[%s7 + $0x20] sm:$0xff] %vm123, %v5775
  %6018 = vst.msk [vmem:[%s7 + $0x28] sm:$0xff] %vm123, %v5778
  %6019 = vst.msk [vmem:[%s7 + $0x30] sm:$0xff] %vm123, %v5783
  %6020 = vst.msk [vmem:[%s7 + $0x38] sm:$0xff] %vm123, %v5786
  %6021 = vst.msk [vmem:[%s7 + $0x40] sm:$0xff] %vm123, %v5791
  %6022 = vst.msk [vmem:[%s7 + $0x48] sm:$0xff] %vm123, %v5794
  %6023 = vst.msk [vmem:[%s7 + $0x50] sm:$0xff] %vm123, %v5799
  %6024 = vst.msk [vmem:[%s7 + $0x58] sm:$0xff] %vm123, %v5802
  %6025 = vst.msk [vmem:[%s7 + $0x60] sm:$0xff] %vm123, %v5807
  %6026 = vst.msk [vmem:[%s7 + $0x68] sm:$0xff] %vm123, %v5810
  %6027 = vst.msk [vmem:[%s7 + $0x70] sm:$0xff] %vm123, %v5815
  %6028 = vst.msk [vmem:[%s7 + $0x78] sm:$0xff] %vm123, %v5818
  %6029 = vst.msk [vmem:[%s7 + $0x80] sm:$0xff] %vm123, %v5823
  %6030 = vst.msk [vmem:[%s7 + $0x88] sm:$0xff] %vm123, %v5826
  %6031 = vst.msk [vmem:[%s7 + $0x90] sm:$0xff] %vm123, %v5831
  %6032 = vst.msk [vmem:[%s7 + $0x98] sm:$0xff] %vm123, %v5834
  %6033 = vst.msk [vmem:[%s7 + $0xa0] sm:$0xff] %vm123, %v5839
  %6034 = vst.msk [vmem:[%s7 + $0xa8] sm:$0xff] %vm123, %v5842
  %6035 = vst.msk [vmem:[%s7 + $0xb0] sm:$0xff] %vm123, %v5847
  %6036 = vst.msk [vmem:[%s7 + $0xb8] sm:$0xff] %vm123, %v5850
  %6037 = vst.msk [vmem:[%s7 + $0xc0] sm:$0xff] %vm123, %v5855
  %6038 = vst.msk [vmem:[%s7 + $0xc8] sm:$0xff] %vm123, %v5858
  %6039 = vst.msk [vmem:[%s7 + $0xd0] sm:$0xff] %vm123, %v5863
  %6040 = vst.msk [vmem:[%s7 + $0xd8] sm:$0xff] %vm123, %v5866
  %6041 = vst.msk [vmem:[%s7 + $0xe0] sm:$0xff] %vm123, %v5871
  %6042 = vst.msk [vmem:[%s7 + $0xe8] sm:$0xff] %vm123, %v5874
  %6043 = vst.msk [vmem:[%s7 + $0xf0] sm:$0xff] %vm123, %v5879
  %6044 = vst.msk [vmem:[%s7 + $0xf8] sm:$0xff] %vm123, %v5882
  %6045 = vst.msk [vmem:[%s7 + $0x100] sm:$0xff] %vm123, %v5887
  %6046 = vst.msk [vmem:[%s7 + $0x108] sm:$0xff] %vm123, %v5890
  %6047 = vst.msk [vmem:[%s7 + $0x110] sm:$0xff] %vm123, %v5895
  %6048 = vst.msk [vmem:[%s7 + $0x118] sm:$0xff] %vm123, %v5898
  %6049 = vst.msk [vmem:[%s7 + $0x120] sm:$0xff] %vm123, %v5903
  %6050 = vst.msk [vmem:[%s7 + $0x128] sm:$0xff] %vm123, %v5906
  %6051 = vst.msk [vmem:[%s7 + $0x130] sm:$0xff] %vm123, %v5911
  %6052 = vst.msk [vmem:[%s7 + $0x138] sm:$0xff] %vm123, %v5914
  %6053 = vst.msk [vmem:[%s7 + $0x140] sm:$0xff] %vm123, %v5919
  %6054 = vst.msk [vmem:[%s7 + $0x148] sm:$0xff] %vm123, %v5922
  %6055 = vst.msk [vmem:[%s7 + $0x150] sm:$0xff] %vm123, %v5927
  %6056 = vst.msk [vmem:[%s7 + $0x158] sm:$0xff] %vm123, %v5930
  %6057 = vst.msk [vmem:[%s7 + $0x160] sm:$0xff] %vm123, %v5935
  %6058 = vst.msk [vmem:[%s7 + $0x168] sm:$0xff] %vm123, %v5938
  %6059 = vst.msk [vmem:[%s7 + $0x170] sm:$0xff] %vm123, %v5943
  %6060 = vst.msk [vmem:[%s7 + $0x178] sm:$0xff] %vm123, %v5946
  %6061 = vst.msk [vmem:[%s7 + $0x180] sm:$0xff] %vm123, %v5951
  %6062 = vst.msk [vmem:[%s7 + $0x188] sm:$0xff] %vm123, %v5954
  %6063 = vst.msk [vmem:[%s7 + $0x190] sm:$0xff] %vm123, %v5959
  %6064 = vst.msk [vmem:[%s7 + $0x198] sm:$0xff] %vm123, %v5962
  %6065 = vst.msk [vmem:[%s7 + $0x1a0] sm:$0xff] %vm123, %v5967
  %6066 = vst.msk [vmem:[%s7 + $0x1a8] sm:$0xff] %vm123, %v5970
  %6067 = vst.msk [vmem:[%s7 + $0x1b0] sm:$0xff] %vm123, %v5975
  %6068 = vst.msk [vmem:[%s7 + $0x1b8] sm:$0xff] %vm123, %v5978
  %6069 = vst.msk [vmem:[%s7 + $0x1c0] sm:$0xff] %vm123, %v5983
  %6070 = vst.msk [vmem:[%s7 + $0x1c8] sm:$0xff] %vm123, %v5986
  %6071 = vst.msk [vmem:[%s7 + $0x1d0] sm:$0xff] %vm123, %v5991
  %6072 = vst.msk [vmem:[%s7 + $0x1d8] sm:$0xff] %vm123, %v5994
  %6073 = vst.msk [vmem:[%s7 + $0x1e0] sm:$0xff] %vm123, %v5999
  %6074 = vst.msk [vmem:[%s7 + $0x1e8] sm:$0xff] %vm123, %v6002
  %6075 = vst.msk [vmem:[%s7 + $0x1f0] sm:$0xff] %vm123, %v6007
  %6076 = vst.msk [vmem:[%s7 + $0x1f8] sm:$0xff] %vm123, %v6010
  // Predicated region
  $region30: #{two_layer_group_conv.1} parent=0 // pred_check
    _
  $region31: #{two_layer_group_conv.1} parent=0 // pred_check_branch
    %6078 = sbr.rel (0) target = $region33
  $region32: #{two_layer_group_conv.1} parent=0 // pred_region
    _
  $region33: #{two_layer_group_conv.1} parent=0 // pred_fallthru
    _
  // Predicated region
  $region34: #{two_layer_group_conv.1} parent=0 // pred_check
    _
  $region35: #{two_layer_group_conv.1} parent=0 // pred_check_branch
    %6080 = sbr.rel (0) target = $region37
  $region36: #{two_layer_group_conv.1} parent=0 // pred_region
    _
  $region37: #{two_layer_group_conv.1} parent=0 // pred_fallthru
    _

</llo_original>
